<compile_context>
chip_gen: v7x
topology: tpu7x:2x2x1
jax: 0.10.0
libtpu: 0.0.40
codegen_flags: <defaults>
</compile_context>

<pallas_src>
import functools

import jax
import jax.numpy as jnp
from jax import lax
from jax.experimental import pallas as pl
from jax.experimental.pallas import tpu as pltpu

_BN_EPS = 1e-5
_BN_SCALE = 1.0 / (1.0 + _BN_EPS) ** 0.5   # eval BatchNorm2d(1), default stats

GP = 128          # lane group width used for packed weight columns / output slabs
NEG = -1.0e30     # mask value for padded output lanes (>= tagset_size)
_SUBLANE = 8


# --------------------------------------------------------------------------- #
#                                   kernel                                    #
# --------------------------------------------------------------------------- #
def _attention_kernel(gxe_ref,            # (TB, L*GP) pre-projected encoder GRU input (incl. bias), one GP slab per time step
                      whe_ref, bhe_ref,   # (H, GP), (1, GP): encoder GRU recurrent weights/bias, gates packed at [0:3H]
                      embp_ref,           # (GP, GP): Emb_dec @ [Wa_tag | Wc_tag*bn], cols [0:L] attn | [L:L+H] combine
                      whf_ref, bhf_ref,   # (H, GP), (1, GP): h @ [Wh_d | Wa_h], cols [0:3H] GRU gates | [3H:3H+L] attn
                      wid_ref, bid_ref,   # (H, GP), (1, GP): decoder GRU input weights/bias, gates packed at [0:3H]
                      wca_ref,            # (H, H):  Wc_app * bn
                      bc_ref,             # (1, H):  bc * bn
                      wo_ref, bo_ref,     # (H, GP), (1, GP): Wo*bn, bo with NEG mask on lanes >= T
                      res_ref,            # out: (TB, L*GP) per-step log-probs, lane slab t*GP
                      enc_ref,            # scratch: (L, TB, H) encoder states pre-projected through Wc_app
                      *, L, H, start_idx):
    TBk = res_ref.shape[0]
    f32 = jnp.float32
    H2, H3 = 2 * H, 3 * H

    def gru_gates(gx, gh, h_prev):
        # PyTorch GRU, gate order (r, z, n), packed contiguously in lanes [0:3H].
        r = jax.nn.sigmoid(gx[:, 0:H] + gh[:, 0:H])
        z = jax.nn.sigmoid(gx[:, H:H2] + gh[:, H:H2])
        n = jnp.tanh(gx[:, H2:H3] + r * gh[:, H2:H3])
        return (1.0 - z) * n + z * h_prev

    # ---------------- encoder GRU (input projection already done in XLA) ----------------
    h = jnp.zeros((TBk, H), f32)
    for t in range(L):                     # static unroll: L is a small compile-time constant
        gx = gxe_ref[:, t * GP:t * GP + H3]
        gh = jnp.dot(h, whe_ref[...], preferred_element_type=f32) + bhe_ref[...]
        h = gru_gates(gx, gh, h)
        # pre-project through attn_combine's "applied" half; park in VMEM scratch so the
        # L encoder states never have to stay live in vregs across the decoder unroll.
        enc_ref[t] = jnp.dot(h, wca_ref[...], preferred_element_type=f32)

    # ---------------- attention decoder with greedy feedback ----------------
    idx = jnp.full((TBk, 1), start_idx, jnp.int32)          # SOS tag index

    for t in range(L):                     # static unroll; steps are serially dependent
        col = lax.broadcasted_iota(jnp.int32, (TBk, GP), 1)
        onehot = (col == idx).astype(f32)

        # fused projections: tag embedding (attn + combine halves) and previous hidden
        # state (all decoder-GRU recurrent gates + attn half) -- 2 single-tile matmuls.
        tag_proj = jnp.dot(onehot, embp_ref[...], preferred_element_type=f32)        # (TB, GP)
        h_proj = jnp.dot(h, whf_ref[...], preferred_element_type=f32) + bhf_ref[...]  # (TB, GP)

        # attention softmax over the L real positions (exact)
        a = tag_proj[:, 0:L] + h_proj[:, H3:H3 + L]
        a = jnp.exp(a - jnp.max(a, axis=-1, keepdims=True))
        aw = a / jnp.sum(a, axis=-1, keepdims=True)

        # attn_applied @ Wc_app via the pre-projected encoder states:
        #   (sum_l aw_l * enc_l) @ Wc_app == sum_l aw_l * (enc_l @ Wc_app)
        app = aw[:, 0:1] * enc_ref[0]
        for l in range(1, L):
            app = app + aw[:, l:l + 1] * enc_ref[l]

        # attn_combine -> eval BatchNorm2d (scale folded into weights) -> relu
        dec_in = jnp.maximum(tag_proj[:, L:L + H] + app + bc_ref[...], 0.0)

        # decoder GRU step (recurrent half comes fused from h_proj)
        gx = jnp.dot(dec_in, wid_ref[...], preferred_element_type=f32) + bid_ref[...]
        h = gru_gates(gx, h_proj, h)

        # eval BatchNorm (folded into Wo) -> out Linear -> exact log_softmax
        logits = jnp.dot(h, wo_ref[...], preferred_element_type=f32) + bo_ref[...]    # lanes >= T hold NEG
        m = jnp.max(logits, axis=-1, keepdims=True)
        s = logits - m
        logp = s - jnp.log(jnp.sum(jnp.exp(s), axis=-1, keepdims=True))
        res_ref[:, t * GP:(t + 1) * GP] = logp          # lane-dense, unmasked (TB,128) store

        # greedy feedback: first maximal tag index feeds the next step's embedding lookup
        idx = jnp.min(jnp.where(logits == m, col, GP), axis=-1, keepdims=True)


# --------------------------------------------------------------------------- #
#                          wrapper / parameter packing                        #
# --------------------------------------------------------------------------- #
def _renorm_rows(table, max_norm):
    """Row-wise max_norm renorm identical to nn.Embedding(max_norm=...)."""
    norms = jnp.sqrt(jnp.sum(table * table, axis=1, keepdims=True))
    scale = jnp.where(norms > max_norm, max_norm / (norms + 1e-7), 1.0)
    return table * scale


def _round_up(n, m):
    return ((n + m - 1) // m) * m


def _pad_cols(w, width):
    return jnp.pad(w, ((0, 0), (0, width - w.shape[1])))


def _pad_rows(w, rows):
    return jnp.pad(w, ((0, rows - w.shape[0]), (0, 0)))


def _row(b, width):
    return _pad_cols(jnp.asarray(b, jnp.float32).reshape(1, -1), width)


def _bcast_spec(shape):
    n = len(shape)
    return pl.BlockSpec(tuple(shape), lambda b, n=n: (0,) * n)


def _pick_batch_tile(b8):
    """Batch rows per grid step: fill the MXU in M; keep >= 2 tiles for v7x's two TCs."""
    kind = ""
    try:
        kind = jax.devices()[0].device_kind.lower()
    except Exception:
        pass
    mxu_rows = 128 if any(v in kind for v in ("v2", "v3", "v4", "v5")) else 256
    n_tiles = max(1, -(-b8 // mxu_rows))
    if (("v7" in kind) or ("7x" in kind)) and b8 >= 2 * _SUBLANE:
        n_tiles = max(n_tiles, 2)          # shard the "parallel" grid axis over both TensorCores
    return _round_up(-(-b8 // n_tiles), _SUBLANE)


@jax.jit
def attention_forward(data_idx, labels, params):
    """data_idx: (B, L) int32 token indices, labels: (B, L) int32 tags."""
    w2v = params["w2v"]
    emb_dec = params["emb_dec"]
    B, L = data_idx.shape
    H = params["Wh_e"].shape[0]
    D = emb_dec.shape[1]
    T = params["Wo"].shape[1]
    H3 = 3 * H
    # single-lane-group packing requires these (holds for typical H<=40, L<=25, T<128)
    assert H3 + L <= GP and T + 1 <= GP and L >= 1

    # ---- batch tiling ----
    B8 = _round_up(B, _SUBLANE)
    TB = _pick_batch_tile(B8)
    Bp = _round_up(B8, TB)
    nb = Bp // TB

    # ---- data glue (XLA): embedding lookup (max_norm=10; eval dropout = identity) plus
    # the encoder GRU input projection as one big batch-filled matmul ----
    x_emb = _renorm_rows(w2v, 10.0)[data_idx]                                 # (B, L, E)
    gxe = jnp.einsum("ble,eg->blg", x_emb, params["Wi_e"]) + params["bi_e"]   # (B, L, 3H)
    gxe = jnp.pad(gxe, ((0, Bp - B), (0, 0), (0, GP - H3)))                   # lane-pad each time slab
    gxe = gxe.reshape(Bp, L * GP)

    # ---- weight packing: one 128-lane column group per matmul, eval-BN folded ----
    whe_p = _pad_cols(params["Wh_e"], GP)                    # (H, GP)  gates r|z|n at [0:3H]
    bhe_p = _row(params["bh_e"], GP)

    emb_rn = _renorm_rows(emb_dec, 1.0)                      # tag embeddings, max_norm=1
    Wa, Wc = params["Wa"], params["Wc"]
    Wa_tag, Wa_h = Wa[:D], Wa[D:]
    Wc_tag = Wc[:D] * _BN_SCALE                              # fold eval BatchNorm2d #2
    Wc_app = Wc[D:] * _BN_SCALE
    # fused tag projection: onehot @ (Emb_dec @ [Wa_tag | Wc_tag])   cols [0:L] | [L:L+H]
    embp = _pad_rows(_pad_cols(
        jnp.concatenate([emb_rn @ Wa_tag, emb_rn @ Wc_tag], axis=1), GP), GP)   # (GP, GP)
    # fused hidden projection: h @ [Wh_d | Wa_h]                      cols [0:3H] | [3H:3H+L]
    whf_p = _pad_cols(jnp.concatenate([params["Wh_d"], Wa_h], axis=1), GP)      # (H, GP)
    bhf_p = _row(jnp.concatenate([params["bh_d"], params["ba"]]), GP)

    wid_p = _pad_cols(params["Wi_d"], GP)                    # (H, GP)  gates at [0:3H]
    bid_p = _row(params["bi_d"], GP)
    wca_p = Wc_app                                           # (H, H)
    bc_p = (params["bc"] * _BN_SCALE).reshape(1, H)
    wo_p = _pad_cols(params["Wo"] * _BN_SCALE, GP)           # (H, GP), fold eval BatchNorm2d #1
    bo_p = jnp.full((1, GP), NEG, jnp.float32).at[:, :T].set(params["bo"])

    args = (gxe, whe_p, bhe_p, embp, whf_p, bhf_p, wid_p, bid_p, wca_p, bc_p, wo_p, bo_p)
    in_specs = [pl.BlockSpec((TB, L * GP), lambda b: (b, 0))]
    in_specs += [_bcast_spec(a.shape) for a in args[1:]]

    res = pl.pallas_call(
        functools.partial(_attention_kernel, L=L, H=H, start_idx=T),
        out_shape=jax.ShapeDtypeStruct((Bp, L * GP), jnp.float32),
        grid_spec=pltpu.PrefetchScalarGridSpec(
            num_scalar_prefetch=0,
            grid=(nb,),                                      # batch tiles -> 2nd TC on v7x
            in_specs=in_specs,
            out_specs=pl.BlockSpec((TB, L * GP), lambda b: (b, 0)),
            scratch_shapes=[pltpu.VMEM((L, TB, H), jnp.float32)]),
        compiler_params=pltpu.CompilerParams(dimension_semantics=("parallel",)),
    )(*args)

    # (Bp, L*GP) lane-packed -> PyTorch's results.view(-1, tagset_size) layout (cheap slice)
    scores = res.reshape(Bp, L, GP)[:B, :, :T].reshape(B * L, T)
    return scores, labels.reshape(-1)


# --------------------------------------------------------------------------- #
#                                    demo                                     #
# --------------------------------------------------------------------------- #
if __name__ == "__main__":
    key = jax.random.PRNGKey(0)
    B = 2            # batch
    L = 8            # padded_sentence_length (== attention max_length)
    V = 20           # vocabulary size (rows of w2v_weights)
    E = 32           # embedding_dim (w2v width)
    H = 32           # hidden_dim
    D = 16           # decoder_embedding_size
    T = 8            # tagset_size

    ks = jax.random.split(key, 20)

    def u(k, shape, scale=0.15):
        return jax.random.uniform(k, shape, jnp.float32, -scale, scale)

    params = {
        "w2v": jax.random.normal(ks[0], (V, E), jnp.float32),
        "emb_dec": jax.random.normal(ks[1], (T + 1, D), jnp.float32),
        # encoder GRU (weights stored as (in, 3H), gate order r|z|n)
        "Wi_e": u(ks[2], (E, 3 * H)), "Wh_e": u(ks[3], (H, 3 * H)),
        "bi_e": u(ks[4], (3 * H,)),   "bh_e": u(ks[5], (3 * H,)),
        # decoder GRU
        "Wi_d": u(ks[6], (H, 3 * H)), "Wh_d": u(ks[7], (H, 3 * H)),
        "bi_d": u(ks[8], (3 * H,)),   "bh_d": u(ks[9], (3 * H,)),
        # attn Linear: (D+H) -> L
        "Wa": u(ks[10], (D + H, L)),  "ba": u(ks[11], (L,)),
        # attn_combine Linear: (D+H) -> H
        "Wc": u(ks[12], (D + H, H)),  "bc": u(ks[13], (H,)),
        # out Linear: H -> T
        "Wo": u(ks[14], (H, T)),      "bo": u(ks[15], (T,)),
    }

    data_idx = jax.random.randint(ks[16], (B, L), 0, V, dtype=jnp.int32)
    labels = jax.random.randint(ks[17], (B, L), 0, T, dtype=jnp.int32)

    scores, flat_labels = attention_forward(data_idx, labels, params)
    jax.block_until_ready(scores)
    jax.block_until_ready(flat_labels)

    assert scores.shape == (B * L, T), scores.shape
    assert flat_labels.shape == (B * L,), flat_labels.shape
    assert bool(jnp.all(jnp.isfinite(scores)))
    # log-softmax rows must (log-)normalise to ~1
    assert bool(jnp.all(jnp.abs(jnp.sum(jnp.exp(scores), axis=-1) - 1.0) < 1e-4))
    print("KERNEL_OK")
</pallas_src>

<mosaic_0001>
module attributes {stable_mosaic.version = 11 : i64} {
  func.func @_attention_kernel(%arg0: i32, %arg1: memref<8x1024xf32, #tpu.memory_space<vmem>>, %arg2: memref<32x128xf32, #tpu.memory_space<vmem>>, %arg3: memref<1x128xf32, #tpu.memory_space<vmem>>, %arg4: memref<128x128xf32, #tpu.memory_space<vmem>>, %arg5: memref<32x128xf32, #tpu.memory_space<vmem>>, %arg6: memref<1x128xf32, #tpu.memory_space<vmem>>, %arg7: memref<32x128xf32, #tpu.memory_space<vmem>>, %arg8: memref<1x128xf32, #tpu.memory_space<vmem>>, %arg9: memref<32x32xf32, #tpu.memory_space<vmem>>, %arg10: memref<1x32xf32, #tpu.memory_space<vmem>>, %arg11: memref<32x128xf32, #tpu.memory_space<vmem>>, %arg12: memref<1x128xf32, #tpu.memory_space<vmem>>, %arg13: memref<8x1024xf32, #tpu.memory_space<vmem>>, %arg14: memref<8x8x32xf32, #tpu.memory_space<vmem>>) attributes {dimension_semantics = [#tpu.dimension_semantics<parallel>], iteration_bounds = array<i64: 1>, scalar_prefetch = 0 : i64, scratch_operands = 1 : i64, tpu.core_type = #tpu.core_type<tc>, window_params = [{transform_indices = @transform_0, window_bounds = array<i64: 8, 1024>}, {pipeline_mode = #tpu.pipeline_mode<synchronous>, transform_indices = @transform_1, window_bounds = array<i64: 32, 128>}, {pipeline_mode = #tpu.pipeline_mode<synchronous>, transform_indices = @transform_2, window_bounds = array<i64: 1, 128>}, {pipeline_mode = #tpu.pipeline_mode<synchronous>, transform_indices = @transform_3, window_bounds = array<i64: 128, 128>}, {pipeline_mode = #tpu.pipeline_mode<synchronous>, transform_indices = @transform_4, window_bounds = array<i64: 32, 128>}, {pipeline_mode = #tpu.pipeline_mode<synchronous>, transform_indices = @transform_5, window_bounds = array<i64: 1, 128>}, {pipeline_mode = #tpu.pipeline_mode<synchronous>, transform_indices = @transform_6, window_bounds = array<i64: 32, 128>}, {pipeline_mode = #tpu.pipeline_mode<synchronous>, transform_indices = @transform_7, window_bounds = array<i64: 1, 128>}, {pipeline_mode = #tpu.pipeline_mode<synchronous>, transform_indices = @transform_8, window_bounds = array<i64: 32, 32>}, {pipeline_mode = #tpu.pipeline_mode<synchronous>, transform_indices = @transform_9, window_bounds = array<i64: 1, 32>}, {pipeline_mode = #tpu.pipeline_mode<synchronous>, transform_indices = @transform_10, window_bounds = array<i64: 32, 128>}, {pipeline_mode = #tpu.pipeline_mode<synchronous>, transform_indices = @transform_11, window_bounds = array<i64: 1, 128>}, {transform_indices = @transform_12, window_bounds = array<i64: 8, 1024>}]} {
    %cst = arith.constant 0.000000e+00 : f32
    %0 = vector.broadcast %cst : f32 to vector<8x32xf32>
    %c0 = arith.constant 0 : index
    %c0_0 = arith.constant 0 : index
    %1 = vector.load %arg1[%c0, %c0_0] : memref<8x1024xf32, #tpu.memory_space<vmem>>, vector<8x96xf32>
    %c0_1 = arith.constant 0 : index
    %c0_2 = arith.constant 0 : index
    %2 = vector.load %arg2[%c0_1, %c0_2] : memref<32x128xf32, #tpu.memory_space<vmem>>, vector<32x128xf32>
    %cst_3 = arith.constant dense<0.000000e+00> : vector<8x128xf32>
    %3 = tpu.matmul %0, %2, %cst_3 {dimension_numbers = #tpu.dot_dimension_numbers<[1], [0], [0], [1], [0, 0, 1, 1], [], []>} : vector<8x32xf32>, vector<32x128xf32>, vector<8x128xf32> -> vector<8x128xf32>
    %c0_4 = arith.constant 0 : index
    %c0_5 = arith.constant 0 : index
    %4 = vector.load %arg3[%c0_4, %c0_5] : memref<1x128xf32, #tpu.memory_space<vmem>>, vector<1x128xf32>
    %5 = vector.broadcast %4 : vector<1x128xf32> to vector<8x128xf32>
    %6 = arith.addf %3, %5 : vector<8x128xf32>
    %7 = vector.extract_strided_slice %1 {offsets = [0, 0], sizes = [8, 32], strides = [1, 1]} : vector<8x96xf32> to vector<8x32xf32>
    %8 = vector.extract_strided_slice %6 {offsets = [0, 0], sizes = [8, 32], strides = [1, 1]} : vector<8x128xf32> to vector<8x32xf32>
    %9 = arith.addf %7, %8 : vector<8x32xf32>
    %10 = arith.negf %9 : vector<8x32xf32>
    %11 = math.exp %10 : vector<8x32xf32>
    %cst_6 = arith.constant 1.000000e+00 : f32
    %12 = vector.broadcast %cst_6 : f32 to vector<8x32xf32>
    %13 = arith.addf %12, %11 : vector<8x32xf32>
    %14 = arith.divf %12, %13 : vector<8x32xf32>
    %15 = vector.extract_strided_slice %1 {offsets = [0, 32], sizes = [8, 32], strides = [1, 1]} : vector<8x96xf32> to vector<8x32xf32>
    %16 = vector.extract_strided_slice %6 {offsets = [0, 32], sizes = [8, 32], strides = [1, 1]} : vector<8x128xf32> to vector<8x32xf32>
    %17 = arith.addf %15, %16 : vector<8x32xf32>
    %18 = arith.negf %17 : vector<8x32xf32>
    %19 = math.exp %18 : vector<8x32xf32>
    %cst_7 = arith.constant 1.000000e+00 : f32
    %20 = vector.broadcast %cst_7 : f32 to vector<8x32xf32>
    %21 = arith.addf %20, %19 : vector<8x32xf32>
    %22 = arith.divf %20, %21 : vector<8x32xf32>
    %23 = vector.extract_strided_slice %1 {offsets = [0, 64], sizes = [8, 32], strides = [1, 1]} : vector<8x96xf32> to vector<8x32xf32>
    %24 = vector.extract_strided_slice %6 {offsets = [0, 64], sizes = [8, 32], strides = [1, 1]} : vector<8x128xf32> to vector<8x32xf32>
    %25 = arith.mulf %14, %24 : vector<8x32xf32>
    %26 = arith.addf %23, %25 : vector<8x32xf32>
    %27 = math.tanh %26 : vector<8x32xf32>
    %cst_8 = arith.constant 1.000000e+00 : f32
    %28 = vector.broadcast %cst_8 : f32 to vector<8x32xf32>
    %29 = arith.subf %28, %22 : vector<8x32xf32>
    %30 = arith.mulf %29, %27 : vector<8x32xf32>
    %31 = arith.mulf %22, %0 : vector<8x32xf32>
    %32 = arith.addf %30, %31 : vector<8x32xf32>
    %c0_9 = arith.constant 0 : index
    %c0_10 = arith.constant 0 : index
    %33 = vector.load %arg9[%c0_9, %c0_10] : memref<32x32xf32, #tpu.memory_space<vmem>>, vector<32x32xf32>
    %cst_11 = arith.constant dense<0.000000e+00> : vector<8x32xf32>
    %34 = tpu.matmul %32, %33, %cst_11 {dimension_numbers = #tpu.dot_dimension_numbers<[1], [0], [0], [1], [0, 0, 1, 1], [], []>} : vector<8x32xf32>, vector<32x32xf32>, vector<8x32xf32> -> vector<8x32xf32>
    %c0_12 = arith.constant 0 : index
    %c0_13 = arith.constant 0 : index
    %c0_14 = arith.constant 0 : index
    %35 = vector.load %arg14[%c0_12, %c0_13, %c0_14] : memref<8x8x32xf32, #tpu.memory_space<vmem>>, vector<1x8x32xf32>
    %36 = vector.shape_cast %35 : vector<1x8x32xf32> to vector<8x32xf32>
    %37 = vector.shape_cast %34 : vector<8x32xf32> to vector<1x8x32xf32>
    tpu.vector_store %arg14[%c0_12, %c0_13, %c0_14], %37 {strides = array<i32>} : memref<8x8x32xf32, #tpu.memory_space<vmem>>, vector<1x8x32xf32>,
    %c0_15 = arith.constant 0 : index
    %c128 = arith.constant 128 : index
    %38 = vector.load %arg1[%c0_15, %c128] : memref<8x1024xf32, #tpu.memory_space<vmem>>, vector<8x96xf32>
    %c0_16 = arith.constant 0 : index
    %c0_17 = arith.constant 0 : index
    %39 = vector.load %arg2[%c0_16, %c0_17] : memref<32x128xf32, #tpu.memory_space<vmem>>, vector<32x128xf32>
    %cst_18 = arith.constant dense<0.000000e+00> : vector<8x128xf32>
    %40 = tpu.matmul %32, %39, %cst_18 {dimension_numbers = #tpu.dot_dimension_numbers<[1], [0], [0], [1], [0, 0, 1, 1], [], []>} : vector<8x32xf32>, vector<32x128xf32>, vector<8x128xf32> -> vector<8x128xf32>
    %c0_19 = arith.constant 0 : index
    %c0_20 = arith.constant 0 : index
    %41 = vector.load %arg3[%c0_19, %c0_20] : memref<1x128xf32, #tpu.memory_space<vmem>>, vector<1x128xf32>
    %42 = vector.broadcast %41 : vector<1x128xf32> to vector<8x128xf32>
    %43 = arith.addf %40, %42 : vector<8x128xf32>
    %44 = vector.extract_strided_slice %38 {offsets = [0, 0], sizes = [8, 32], strides = [1, 1]} : vector<8x96xf32> to vector<8x32xf32>
    %45 = vector.extract_strided_slice %43 {offsets = [0, 0], sizes = [8, 32], strides = [1, 1]} : vector<8x128xf32> to vector<8x32xf32>
    %46 = arith.addf %44, %45 : vector<8x32xf32>
    %47 = arith.negf %46 : vector<8x32xf32>
    %48 = math.exp %47 : vector<8x32xf32>
    %cst_21 = arith.constant 1.000000e+00 : f32
    %49 = vector.broadcast %cst_21 : f32 to vector<8x32xf32>
    %50 = arith.addf %49, %48 : vector<8x32xf32>
    %51 = arith.divf %49, %50 : vector<8x32xf32>
    %52 = vector.extract_strided_slice %38 {offsets = [0, 32], sizes = [8, 32], strides = [1, 1]} : vector<8x96xf32> to vector<8x32xf32>
    %53 = vector.extract_strided_slice %43 {offsets = [0, 32], sizes = [8, 32], strides = [1, 1]} : vector<8x128xf32> to vector<8x32xf32>
    %54 = arith.addf %52, %53 : vector<8x32xf32>
    %55 = arith.negf %54 : vector<8x32xf32>
    %56 = math.exp %55 : vector<8x32xf32>
    %cst_22 = arith.constant 1.000000e+00 : f32
    %57 = vector.broadcast %cst_22 : f32 to vector<8x32xf32>
    %58 = arith.addf %57, %56 : vector<8x32xf32>
    %59 = arith.divf %57, %58 : vector<8x32xf32>
    %60 = vector.extract_strided_slice %38 {offsets = [0, 64], sizes = [8, 32], strides = [1, 1]} : vector<8x96xf32> to vector<8x32xf32>
    %61 = vector.extract_strided_slice %43 {offsets = [0, 64], sizes = [8, 32], strides = [1, 1]} : vector<8x128xf32> to vector<8x32xf32>
    %62 = arith.mulf %51, %61 : vector<8x32xf32>
    %63 = arith.addf %60, %62 : vector<8x32xf32>
    %64 = math.tanh %63 : vector<8x32xf32>
    %cst_23 = arith.constant 1.000000e+00 : f32
    %65 = vector.broadcast %cst_23 : f32 to vector<8x32xf32>
    %66 = arith.subf %65, %59 : vector<8x32xf32>
    %67 = arith.mulf %66, %64 : vector<8x32xf32>
    %68 = arith.mulf %59, %32 : vector<8x32xf32>
    %69 = arith.addf %67, %68 : vector<8x32xf32>
    %c0_24 = arith.constant 0 : index
    %c0_25 = arith.constant 0 : index
    %70 = vector.load %arg9[%c0_24, %c0_25] : memref<32x32xf32, #tpu.memory_space<vmem>>, vector<32x32xf32>
    %cst_26 = arith.constant dense<0.000000e+00> : vector<8x32xf32>
    %71 = tpu.matmul %69, %70, %cst_26 {dimension_numbers = #tpu.dot_dimension_numbers<[1], [0], [0], [1], [0, 0, 1, 1], [], []>} : vector<8x32xf32>, vector<32x32xf32>, vector<8x32xf32> -> vector<8x32xf32>
    %c1 = arith.constant 1 : index
    %c0_27 = arith.constant 0 : index
    %c0_28 = arith.constant 0 : index
    %72 = vector.load %arg14[%c1, %c0_27, %c0_28] : memref<8x8x32xf32, #tpu.memory_space<vmem>>, vector<1x8x32xf32>
    %73 = vector.shape_cast %72 : vector<1x8x32xf32> to vector<8x32xf32>
    %74 = vector.shape_cast %71 : vector<8x32xf32> to vector<1x8x32xf32>
    tpu.vector_store %arg14[%c1, %c0_27, %c0_28], %74 {strides = array<i32>} : memref<8x8x32xf32, #tpu.memory_space<vmem>>, vector<1x8x32xf32>,
    %c0_29 = arith.constant 0 : index
    %c256 = arith.constant 256 : index
    %75 = vector.load %arg1[%c0_29, %c256] : memref<8x1024xf32, #tpu.memory_space<vmem>>, vector<8x96xf32>
    %c0_30 = arith.constant 0 : index
    %c0_31 = arith.constant 0 : index
    %76 = vector.load %arg2[%c0_30, %c0_31] : memref<32x128xf32, #tpu.memory_space<vmem>>, vector<32x128xf32>
    %cst_32 = arith.constant dense<0.000000e+00> : vector<8x128xf32>
    %77 = tpu.matmul %69, %76, %cst_32 {dimension_numbers = #tpu.dot_dimension_numbers<[1], [0], [0], [1], [0, 0, 1, 1], [], []>} : vector<8x32xf32>, vector<32x128xf32>, vector<8x128xf32> -> vector<8x128xf32>
    %c0_33 = arith.constant 0 : index
    %c0_34 = arith.constant 0 : index
    %78 = vector.load %arg3[%c0_33, %c0_34] : memref<1x128xf32, #tpu.memory_space<vmem>>, vector<1x128xf32>
    %79 = vector.broadcast %78 : vector<1x128xf32> to vector<8x128xf32>
    %80 = arith.addf %77, %79 : vector<8x128xf32>
    %81 = vector.extract_strided_slice %75 {offsets = [0, 0], sizes = [8, 32], strides = [1, 1]} : vector<8x96xf32> to vector<8x32xf32>
    %82 = vector.extract_strided_slice %80 {offsets = [0, 0], sizes = [8, 32], strides = [1, 1]} : vector<8x128xf32> to vector<8x32xf32>
    %83 = arith.addf %81, %82 : vector<8x32xf32>
    %84 = arith.negf %83 : vector<8x32xf32>
    %85 = math.exp %84 : vector<8x32xf32>
    %cst_35 = arith.constant 1.000000e+00 : f32
    %86 = vector.broadcast %cst_35 : f32 to vector<8x32xf32>
    %87 = arith.addf %86, %85 : vector<8x32xf32>
    %88 = arith.divf %86, %87 : vector<8x32xf32>
    %89 = vector.extract_strided_slice %75 {offsets = [0, 32], sizes = [8, 32], strides = [1, 1]} : vector<8x96xf32> to vector<8x32xf32>
    %90 = vector.extract_strided_slice %80 {offsets = [0, 32], sizes = [8, 32], strides = [1, 1]} : vector<8x128xf32> to vector<8x32xf32>
    %91 = arith.addf %89, %90 : vector<8x32xf32>
    %92 = arith.negf %91 : vector<8x32xf32>
    %93 = math.exp %92 : vector<8x32xf32>
    %cst_36 = arith.constant 1.000000e+00 : f32
    %94 = vector.broadcast %cst_36 : f32 to vector<8x32xf32>
    %95 = arith.addf %94, %93 : vector<8x32xf32>
    %96 = arith.divf %94, %95 : vector<8x32xf32>
    %97 = vector.extract_strided_slice %75 {offsets = [0, 64], sizes = [8, 32], strides = [1, 1]} : vector<8x96xf32> to vector<8x32xf32>
    %98 = vector.extract_strided_slice %80 {offsets = [0, 64], sizes = [8, 32], strides = [1, 1]} : vector<8x128xf32> to vector<8x32xf32>
    %99 = arith.mulf %88, %98 : vector<8x32xf32>
    %100 = arith.addf %97, %99 : vector<8x32xf32>
    %101 = math.tanh %100 : vector<8x32xf32>
    %cst_37 = arith.constant 1.000000e+00 : f32
    %102 = vector.broadcast %cst_37 : f32 to vector<8x32xf32>
    %103 = arith.subf %102, %96 : vector<8x32xf32>
    %104 = arith.mulf %103, %101 : vector<8x32xf32>
    %105 = arith.mulf %96, %69 : vector<8x32xf32>
    %106 = arith.addf %104, %105 : vector<8x32xf32>
    %c0_38 = arith.constant 0 : index
    %c0_39 = arith.constant 0 : index
    %107 = vector.load %arg9[%c0_38, %c0_39] : memref<32x32xf32, #tpu.memory_space<vmem>>, vector<32x32xf32>
    %cst_40 = arith.constant dense<0.000000e+00> : vector<8x32xf32>
    %108 = tpu.matmul %106, %107, %cst_40 {dimension_numbers = #tpu.dot_dimension_numbers<[1], [0], [0], [1], [0, 0, 1, 1], [], []>} : vector<8x32xf32>, vector<32x32xf32>, vector<8x32xf32> -> vector<8x32xf32>
    %c2 = arith.constant 2 : index
    %c0_41 = arith.constant 0 : index
    %c0_42 = arith.constant 0 : index
    %109 = vector.load %arg14[%c2, %c0_41, %c0_42] : memref<8x8x32xf32, #tpu.memory_space<vmem>>, vector<1x8x32xf32>
    %110 = vector.shape_cast %109 : vector<1x8x32xf32> to vector<8x32xf32>
    %111 = vector.shape_cast %108 : vector<8x32xf32> to vector<1x8x32xf32>
    tpu.vector_store %arg14[%c2, %c0_41, %c0_42], %111 {strides = array<i32>} : memref<8x8x32xf32, #tpu.memory_space<vmem>>, vector<1x8x32xf32>,
    %c0_43 = arith.constant 0 : index
    %c384 = arith.constant 384 : index
    %112 = vector.load %arg1[%c0_43, %c384] : memref<8x1024xf32, #tpu.memory_space<vmem>>, vector<8x96xf32>
    %c0_44 = arith.constant 0 : index
    %c0_45 = arith.constant 0 : index
    %113 = vector.load %arg2[%c0_44, %c0_45] : memref<32x128xf32, #tpu.memory_space<vmem>>, vector<32x128xf32>
    %cst_46 = arith.constant dense<0.000000e+00> : vector<8x128xf32>
    %114 = tpu.matmul %106, %113, %cst_46 {dimension_numbers = #tpu.dot_dimension_numbers<[1], [0], [0], [1], [0, 0, 1, 1], [], []>} : vector<8x32xf32>, vector<32x128xf32>, vector<8x128xf32> -> vector<8x128xf32>
    %c0_47 = arith.constant 0 : index
    %c0_48 = arith.constant 0 : index
    %115 = vector.load %arg3[%c0_47, %c0_48] : memref<1x128xf32, #tpu.memory_space<vmem>>, vector<1x128xf32>
    %116 = vector.broadcast %115 : vector<1x128xf32> to vector<8x128xf32>
    %117 = arith.addf %114, %116 : vector<8x128xf32>
    %118 = vector.extract_strided_slice %112 {offsets = [0, 0], sizes = [8, 32], strides = [1, 1]} : vector<8x96xf32> to vector<8x32xf32>
    %119 = vector.extract_strided_slice %117 {offsets = [0, 0], sizes = [8, 32], strides = [1, 1]} : vector<8x128xf32> to vector<8x32xf32>
    %120 = arith.addf %118, %119 : vector<8x32xf32>
    %121 = arith.negf %120 : vector<8x32xf32>
    %122 = math.exp %121 : vector<8x32xf32>
    %cst_49 = arith.constant 1.000000e+00 : f32
    %123 = vector.broadcast %cst_49 : f32 to vector<8x32xf32>
    %124 = arith.addf %123, %122 : vector<8x32xf32>
    %125 = arith.divf %123, %124 : vector<8x32xf32>
    %126 = vector.extract_strided_slice %112 {offsets = [0, 32], sizes = [8, 32], strides = [1, 1]} : vector<8x96xf32> to vector<8x32xf32>
    %127 = vector.extract_strided_slice %117 {offsets = [0, 32], sizes = [8, 32], strides = [1, 1]} : vector<8x128xf32> to vector<8x32xf32>
    %128 = arith.addf %126, %127 : vector<8x32xf32>
    %129 = arith.negf %128 : vector<8x32xf32>
    %130 = math.exp %129 : vector<8x32xf32>
    %cst_50 = arith.constant 1.000000e+00 : f32
    %131 = vector.broadcast %cst_50 : f32 to vector<8x32xf32>
    %132 = arith.addf %131, %130 : vector<8x32xf32>
    %133 = arith.divf %131, %132 : vector<8x32xf32>
    %134 = vector.extract_strided_slice %112 {offsets = [0, 64], sizes = [8, 32], strides = [1, 1]} : vector<8x96xf32> to vector<8x32xf32>
    %135 = vector.extract_strided_slice %117 {offsets = [0, 64], sizes = [8, 32], strides = [1, 1]} : vector<8x128xf32> to vector<8x32xf32>
    %136 = arith.mulf %125, %135 : vector<8x32xf32>
    %137 = arith.addf %134, %136 : vector<8x32xf32>
    %138 = math.tanh %137 : vector<8x32xf32>
    %cst_51 = arith.constant 1.000000e+00 : f32
    %139 = vector.broadcast %cst_51 : f32 to vector<8x32xf32>
    %140 = arith.subf %139, %133 : vector<8x32xf32>
    %141 = arith.mulf %140, %138 : vector<8x32xf32>
    %142 = arith.mulf %133, %106 : vector<8x32xf32>
    %143 = arith.addf %141, %142 : vector<8x32xf32>
    %c0_52 = arith.constant 0 : index
    %c0_53 = arith.constant 0 : index
    %144 = vector.load %arg9[%c0_52, %c0_53] : memref<32x32xf32, #tpu.memory_space<vmem>>, vector<32x32xf32>
    %cst_54 = arith.constant dense<0.000000e+00> : vector<8x32xf32>
    %145 = tpu.matmul %143, %144, %cst_54 {dimension_numbers = #tpu.dot_dimension_numbers<[1], [0], [0], [1], [0, 0, 1, 1], [], []>} : vector<8x32xf32>, vector<32x32xf32>, vector<8x32xf32> -> vector<8x32xf32>
    %c3 = arith.constant 3 : index
    %c0_55 = arith.constant 0 : index
    %c0_56 = arith.constant 0 : index
    %146 = vector.load %arg14[%c3, %c0_55, %c0_56] : memref<8x8x32xf32, #tpu.memory_space<vmem>>, vector<1x8x32xf32>
    %147 = vector.shape_cast %146 : vector<1x8x32xf32> to vector<8x32xf32>
    %148 = vector.shape_cast %145 : vector<8x32xf32> to vector<1x8x32xf32>
    tpu.vector_store %arg14[%c3, %c0_55, %c0_56], %148 {strides = array<i32>} : memref<8x8x32xf32, #tpu.memory_space<vmem>>, vector<1x8x32xf32>,
    %c0_57 = arith.constant 0 : index
    %c512 = arith.constant 512 : index
    %149 = vector.load %arg1[%c0_57, %c512] : memref<8x1024xf32, #tpu.memory_space<vmem>>, vector<8x96xf32>
    %c0_58 = arith.constant 0 : index
    %c0_59 = arith.constant 0 : index
    %150 = vector.load %arg2[%c0_58, %c0_59] : memref<32x128xf32, #tpu.memory_space<vmem>>, vector<32x128xf32>
    %cst_60 = arith.constant dense<0.000000e+00> : vector<8x128xf32>
    %151 = tpu.matmul %143, %150, %cst_60 {dimension_numbers = #tpu.dot_dimension_numbers<[1], [0], [0], [1], [0, 0, 1, 1], [], []>} : vector<8x32xf32>, vector<32x128xf32>, vector<8x128xf32> -> vector<8x128xf32>
    %c0_61 = arith.constant 0 : index
    %c0_62 = arith.constant 0 : index
    %152 = vector.load %arg3[%c0_61, %c0_62] : memref<1x128xf32, #tpu.memory_space<vmem>>, vector<1x128xf32>
    %153 = vector.broadcast %152 : vector<1x128xf32> to vector<8x128xf32>
    %154 = arith.addf %151, %153 : vector<8x128xf32>
    %155 = vector.extract_strided_slice %149 {offsets = [0, 0], sizes = [8, 32], strides = [1, 1]} : vector<8x96xf32> to vector<8x32xf32>
    %156 = vector.extract_strided_slice %154 {offsets = [0, 0], sizes = [8, 32], strides = [1, 1]} : vector<8x128xf32> to vector<8x32xf32>
    %157 = arith.addf %155, %156 : vector<8x32xf32>
    %158 = arith.negf %157 : vector<8x32xf32>
    %159 = math.exp %158 : vector<8x32xf32>
    %cst_63 = arith.constant 1.000000e+00 : f32
    %160 = vector.broadcast %cst_63 : f32 to vector<8x32xf32>
    %161 = arith.addf %160, %159 : vector<8x32xf32>
    %162 = arith.divf %160, %161 : vector<8x32xf32>
    %163 = vector.extract_strided_slice %149 {offsets = [0, 32], sizes = [8, 32], strides = [1, 1]} : vector<8x96xf32> to vector<8x32xf32>
    %164 = vector.extract_strided_slice %154 {offsets = [0, 32], sizes = [8, 32], strides = [1, 1]} : vector<8x128xf32> to vector<8x32xf32>
    %165 = arith.addf %163, %164 : vector<8x32xf32>
    %166 = arith.negf %165 : vector<8x32xf32>
    %167 = math.exp %166 : vector<8x32xf32>
    %cst_64 = arith.constant 1.000000e+00 : f32
    %168 = vector.broadcast %cst_64 : f32 to vector<8x32xf32>
    %169 = arith.addf %168, %167 : vector<8x32xf32>
    %170 = arith.divf %168, %169 : vector<8x32xf32>
    %171 = vector.extract_strided_slice %149 {offsets = [0, 64], sizes = [8, 32], strides = [1, 1]} : vector<8x96xf32> to vector<8x32xf32>
    %172 = vector.extract_strided_slice %154 {offsets = [0, 64], sizes = [8, 32], strides = [1, 1]} : vector<8x128xf32> to vector<8x32xf32>
    %173 = arith.mulf %162, %172 : vector<8x32xf32>
    %174 = arith.addf %171, %173 : vector<8x32xf32>
    %175 = math.tanh %174 : vector<8x32xf32>
    %cst_65 = arith.constant 1.000000e+00 : f32
    %176 = vector.broadcast %cst_65 : f32 to vector<8x32xf32>
    %177 = arith.subf %176, %170 : vector<8x32xf32>
    %178 = arith.mulf %177, %175 : vector<8x32xf32>
    %179 = arith.mulf %170, %143 : vector<8x32xf32>
    %180 = arith.addf %178, %179 : vector<8x32xf32>
    %c0_66 = arith.constant 0 : index
    %c0_67 = arith.constant 0 : index
    %181 = vector.load %arg9[%c0_66, %c0_67] : memref<32x32xf32, #tpu.memory_space<vmem>>, vector<32x32xf32>
    %cst_68 = arith.constant dense<0.000000e+00> : vector<8x32xf32>
    %182 = tpu.matmul %180, %181, %cst_68 {dimension_numbers = #tpu.dot_dimension_numbers<[1], [0], [0], [1], [0, 0, 1, 1], [], []>} : vector<8x32xf32>, vector<32x32xf32>, vector<8x32xf32> -> vector<8x32xf32>
    %c4 = arith.constant 4 : index
    %c0_69 = arith.constant 0 : index
    %c0_70 = arith.constant 0 : index
    %183 = vector.load %arg14[%c4, %c0_69, %c0_70] : memref<8x8x32xf32, #tpu.memory_space<vmem>>, vector<1x8x32xf32>
    %184 = vector.shape_cast %183 : vector<1x8x32xf32> to vector<8x32xf32>
    %185 = vector.shape_cast %182 : vector<8x32xf32> to vector<1x8x32xf32>
    tpu.vector_store %arg14[%c4, %c0_69, %c0_70], %185 {strides = array<i32>} : memref<8x8x32xf32, #tpu.memory_space<vmem>>, vector<1x8x32xf32>,
    %c0_71 = arith.constant 0 : index
    %c640 = arith.constant 640 : index
    %186 = vector.load %arg1[%c0_71, %c640] : memref<8x1024xf32, #tpu.memory_space<vmem>>, vector<8x96xf32>
    %c0_72 = arith.constant 0 : index
    %c0_73 = arith.constant 0 : index
    %187 = vector.load %arg2[%c0_72, %c0_73] : memref<32x128xf32, #tpu.memory_space<vmem>>, vector<32x128xf32>
    %cst_74 = arith.constant dense<0.000000e+00> : vector<8x128xf32>
    %188 = tpu.matmul %180, %187, %cst_74 {dimension_numbers = #tpu.dot_dimension_numbers<[1], [0], [0], [1], [0, 0, 1, 1], [], []>} : vector<8x32xf32>, vector<32x128xf32>, vector<8x128xf32> -> vector<8x128xf32>
    %c0_75 = arith.constant 0 : index
    %c0_76 = arith.constant 0 : index
    %189 = vector.load %arg3[%c0_75, %c0_76] : memref<1x128xf32, #tpu.memory_space<vmem>>, vector<1x128xf32>
    %190 = vector.broadcast %189 : vector<1x128xf32> to vector<8x128xf32>
    %191 = arith.addf %188, %190 : vector<8x128xf32>
    %192 = vector.extract_strided_slice %186 {offsets = [0, 0], sizes = [8, 32], strides = [1, 1]} : vector<8x96xf32> to vector<8x32xf32>
    %193 = vector.extract_strided_slice %191 {offsets = [0, 0], sizes = [8, 32], strides = [1, 1]} : vector<8x128xf32> to vector<8x32xf32>
    %194 = arith.addf %192, %193 : vector<8x32xf32>
    %195 = arith.negf %194 : vector<8x32xf32>
    %196 = math.exp %195 : vector<8x32xf32>
    %cst_77 = arith.constant 1.000000e+00 : f32
    %197 = vector.broadcast %cst_77 : f32 to vector<8x32xf32>
    %198 = arith.addf %197, %196 : vector<8x32xf32>
    %199 = arith.divf %197, %198 : vector<8x32xf32>
    %200 = vector.extract_strided_slice %186 {offsets = [0, 32], sizes = [8, 32], strides = [1, 1]} : vector<8x96xf32> to vector<8x32xf32>
    %201 = vector.extract_strided_slice %191 {offsets = [0, 32], sizes = [8, 32], strides = [1, 1]} : vector<8x128xf32> to vector<8x32xf32>
    %202 = arith.addf %200, %201 : vector<8x32xf32>
    %203 = arith.negf %202 : vector<8x32xf32>
    %204 = math.exp %203 : vector<8x32xf32>
    %cst_78 = arith.constant 1.000000e+00 : f32
    %205 = vector.broadcast %cst_78 : f32 to vector<8x32xf32>
    %206 = arith.addf %205, %204 : vector<8x32xf32>
    %207 = arith.divf %205, %206 : vector<8x32xf32>
    %208 = vector.extract_strided_slice %186 {offsets = [0, 64], sizes = [8, 32], strides = [1, 1]} : vector<8x96xf32> to vector<8x32xf32>
    %209 = vector.extract_strided_slice %191 {offsets = [0, 64], sizes = [8, 32], strides = [1, 1]} : vector<8x128xf32> to vector<8x32xf32>
    %210 = arith.mulf %199, %209 : vector<8x32xf32>
    %211 = arith.addf %208, %210 : vector<8x32xf32>
    %212 = math.tanh %211 : vector<8x32xf32>
    %cst_79 = arith.constant 1.000000e+00 : f32
    %213 = vector.broadcast %cst_79 : f32 to vector<8x32xf32>
    %214 = arith.subf %213, %207 : vector<8x32xf32>
    %215 = arith.mulf %214, %212 : vector<8x32xf32>
    %216 = arith.mulf %207, %180 : vector<8x32xf32>
    %217 = arith.addf %215, %216 : vector<8x32xf32>
    %c0_80 = arith.constant 0 : index
    %c0_81 = arith.constant 0 : index
    %218 = vector.load %arg9[%c0_80, %c0_81] : memref<32x32xf32, #tpu.memory_space<vmem>>, vector<32x32xf32>
    %cst_82 = arith.constant dense<0.000000e+00> : vector<8x32xf32>
    %219 = tpu.matmul %217, %218, %cst_82 {dimension_numbers = #tpu.dot_dimension_numbers<[1], [0], [0], [1], [0, 0, 1, 1], [], []>} : vector<8x32xf32>, vector<32x32xf32>, vector<8x32xf32> -> vector<8x32xf32>
    %c5 = arith.constant 5 : index
    %c0_83 = arith.constant 0 : index
    %c0_84 = arith.constant 0 : index
    %220 = vector.load %arg14[%c5, %c0_83, %c0_84] : memref<8x8x32xf32, #tpu.memory_space<vmem>>, vector<1x8x32xf32>
    %221 = vector.shape_cast %220 : vector<1x8x32xf32> to vector<8x32xf32>
    %222 = vector.shape_cast %219 : vector<8x32xf32> to vector<1x8x32xf32>
    tpu.vector_store %arg14[%c5, %c0_83, %c0_84], %222 {strides = array<i32>} : memref<8x8x32xf32, #tpu.memory_space<vmem>>, vector<1x8x32xf32>,
    %c0_85 = arith.constant 0 : index
    %c768 = arith.constant 768 : index
    %223 = vector.load %arg1[%c0_85, %c768] : memref<8x1024xf32, #tpu.memory_space<vmem>>, vector<8x96xf32>
    %c0_86 = arith.constant 0 : index
    %c0_87 = arith.constant 0 : index
    %224 = vector.load %arg2[%c0_86, %c0_87] : memref<32x128xf32, #tpu.memory_space<vmem>>, vector<32x128xf32>
    %cst_88 = arith.constant dense<0.000000e+00> : vector<8x128xf32>
    %225 = tpu.matmul %217, %224, %cst_88 {dimension_numbers = #tpu.dot_dimension_numbers<[1], [0], [0], [1], [0, 0, 1, 1], [], []>} : vector<8x32xf32>, vector<32x128xf32>, vector<8x128xf32> -> vector<8x128xf32>
    %c0_89 = arith.constant 0 : index
    %c0_90 = arith.constant 0 : index
    %226 = vector.load %arg3[%c0_89, %c0_90] : memref<1x128xf32, #tpu.memory_space<vmem>>, vector<1x128xf32>
    %227 = vector.broadcast %226 : vector<1x128xf32> to vector<8x128xf32>
    %228 = arith.addf %225, %227 : vector<8x128xf32>
    %229 = vector.extract_strided_slice %223 {offsets = [0, 0], sizes = [8, 32], strides = [1, 1]} : vector<8x96xf32> to vector<8x32xf32>
    %230 = vector.extract_strided_slice %228 {offsets = [0, 0], sizes = [8, 32], strides = [1, 1]} : vector<8x128xf32> to vector<8x32xf32>
    %231 = arith.addf %229, %230 : vector<8x32xf32>
    %232 = arith.negf %231 : vector<8x32xf32>
    %233 = math.exp %232 : vector<8x32xf32>
    %cst_91 = arith.constant 1.000000e+00 : f32
    %234 = vector.broadcast %cst_91 : f32 to vector<8x32xf32>
    %235 = arith.addf %234, %233 : vector<8x32xf32>
    %236 = arith.divf %234, %235 : vector<8x32xf32>
    %237 = vector.extract_strided_slice %223 {offsets = [0, 32], sizes = [8, 32], strides = [1, 1]} : vector<8x96xf32> to vector<8x32xf32>
    %238 = vector.extract_strided_slice %228 {offsets = [0, 32], sizes = [8, 32], strides = [1, 1]} : vector<8x128xf32> to vector<8x32xf32>
    %239 = arith.addf %237, %238 : vector<8x32xf32>
    %240 = arith.negf %239 : vector<8x32xf32>
    %241 = math.exp %240 : vector<8x32xf32>
    %cst_92 = arith.constant 1.000000e+00 : f32
    %242 = vector.broadcast %cst_92 : f32 to vector<8x32xf32>
    %243 = arith.addf %242, %241 : vector<8x32xf32>
    %244 = arith.divf %242, %243 : vector<8x32xf32>
    %245 = vector.extract_strided_slice %223 {offsets = [0, 64], sizes = [8, 32], strides = [1, 1]} : vector<8x96xf32> to vector<8x32xf32>
    %246 = vector.extract_strided_slice %228 {offsets = [0, 64], sizes = [8, 32], strides = [1, 1]} : vector<8x128xf32> to vector<8x32xf32>
    %247 = arith.mulf %236, %246 : vector<8x32xf32>
    %248 = arith.addf %245, %247 : vector<8x32xf32>
    %249 = math.tanh %248 : vector<8x32xf32>
    %cst_93 = arith.constant 1.000000e+00 : f32
    %250 = vector.broadcast %cst_93 : f32 to vector<8x32xf32>
    %251 = arith.subf %250, %244 : vector<8x32xf32>
    %252 = arith.mulf %251, %249 : vector<8x32xf32>
    %253 = arith.mulf %244, %217 : vector<8x32xf32>
    %254 = arith.addf %252, %253 : vector<8x32xf32>
    %c0_94 = arith.constant 0 : index
    %c0_95 = arith.constant 0 : index
    %255 = vector.load %arg9[%c0_94, %c0_95] : memref<32x32xf32, #tpu.memory_space<vmem>>, vector<32x32xf32>
    %cst_96 = arith.constant dense<0.000000e+00> : vector<8x32xf32>
    %256 = tpu.matmul %254, %255, %cst_96 {dimension_numbers = #tpu.dot_dimension_numbers<[1], [0], [0], [1], [0, 0, 1, 1], [], []>} : vector<8x32xf32>, vector<32x32xf32>, vector<8x32xf32> -> vector<8x32xf32>
    %c6 = arith.constant 6 : index
    %c0_97 = arith.constant 0 : index
    %c0_98 = arith.constant 0 : index
    %257 = vector.load %arg14[%c6, %c0_97, %c0_98] : memref<8x8x32xf32, #tpu.memory_space<vmem>>, vector<1x8x32xf32>
    %258 = vector.shape_cast %257 : vector<1x8x32xf32> to vector<8x32xf32>
    %259 = vector.shape_cast %256 : vector<8x32xf32> to vector<1x8x32xf32>
    tpu.vector_store %arg14[%c6, %c0_97, %c0_98], %259 {strides = array<i32>} : memref<8x8x32xf32, #tpu.memory_space<vmem>>, vector<1x8x32xf32>,
    %c0_99 = arith.constant 0 : index
    %c896 = arith.constant 896 : index
    %260 = vector.load %arg1[%c0_99, %c896] : memref<8x1024xf32, #tpu.memory_space<vmem>>, vector<8x96xf32>
    %c0_100 = arith.constant 0 : index
    %c0_101 = arith.constant 0 : index
    %261 = vector.load %arg2[%c0_100, %c0_101] : memref<32x128xf32, #tpu.memory_space<vmem>>, vector<32x128xf32>
    %cst_102 = arith.constant dense<0.000000e+00> : vector<8x128xf32>
    %262 = tpu.matmul %254, %261, %cst_102 {dimension_numbers = #tpu.dot_dimension_numbers<[1], [0], [0], [1], [0, 0, 1, 1], [], []>} : vector<8x32xf32>, vector<32x128xf32>, vector<8x128xf32> -> vector<8x128xf32>
    %c0_103 = arith.constant 0 : index
    %c0_104 = arith.constant 0 : index
    %263 = vector.load %arg3[%c0_103, %c0_104] : memref<1x128xf32, #tpu.memory_space<vmem>>, vector<1x128xf32>
    %264 = vector.broadcast %263 : vector<1x128xf32> to vector<8x128xf32>
    %265 = arith.addf %262, %264 : vector<8x128xf32>
    %266 = vector.extract_strided_slice %260 {offsets = [0, 0], sizes = [8, 32], strides = [1, 1]} : vector<8x96xf32> to vector<8x32xf32>
    %267 = vector.extract_strided_slice %265 {offsets = [0, 0], sizes = [8, 32], strides = [1, 1]} : vector<8x128xf32> to vector<8x32xf32>
    %268 = arith.addf %266, %267 : vector<8x32xf32>
    %269 = arith.negf %268 : vector<8x32xf32>
    %270 = math.exp %269 : vector<8x32xf32>
    %cst_105 = arith.constant 1.000000e+00 : f32
    %271 = vector.broadcast %cst_105 : f32 to vector<8x32xf32>
    %272 = arith.addf %271, %270 : vector<8x32xf32>
    %273 = arith.divf %271, %272 : vector<8x32xf32>
    %274 = vector.extract_strided_slice %260 {offsets = [0, 32], sizes = [8, 32], strides = [1, 1]} : vector<8x96xf32> to vector<8x32xf32>
    %275 = vector.extract_strided_slice %265 {offsets = [0, 32], sizes = [8, 32], strides = [1, 1]} : vector<8x128xf32> to vector<8x32xf32>
    %276 = arith.addf %274, %275 : vector<8x32xf32>
    %277 = arith.negf %276 : vector<8x32xf32>
    %278 = math.exp %277 : vector<8x32xf32>
    %cst_106 = arith.constant 1.000000e+00 : f32
    %279 = vector.broadcast %cst_106 : f32 to vector<8x32xf32>
    %280 = arith.addf %279, %278 : vector<8x32xf32>
    %281 = arith.divf %279, %280 : vector<8x32xf32>
    %282 = vector.extract_strided_slice %260 {offsets = [0, 64], sizes = [8, 32], strides = [1, 1]} : vector<8x96xf32> to vector<8x32xf32>
    %283 = vector.extract_strided_slice %265 {offsets = [0, 64], sizes = [8, 32], strides = [1, 1]} : vector<8x128xf32> to vector<8x32xf32>
    %284 = arith.mulf %273, %283 : vector<8x32xf32>
    %285 = arith.addf %282, %284 : vector<8x32xf32>
    %286 = math.tanh %285 : vector<8x32xf32>
    %cst_107 = arith.constant 1.000000e+00 : f32
    %287 = vector.broadcast %cst_107 : f32 to vector<8x32xf32>
    %288 = arith.subf %287, %281 : vector<8x32xf32>
    %289 = arith.mulf %288, %286 : vector<8x32xf32>
    %290 = arith.mulf %281, %254 : vector<8x32xf32>
    %291 = arith.addf %289, %290 : vector<8x32xf32>
    %c0_108 = arith.constant 0 : index
    %c0_109 = arith.constant 0 : index
    %292 = vector.load %arg9[%c0_108, %c0_109] : memref<32x32xf32, #tpu.memory_space<vmem>>, vector<32x32xf32>
    %cst_110 = arith.constant dense<0.000000e+00> : vector<8x32xf32>
    %293 = tpu.matmul %291, %292, %cst_110 {dimension_numbers = #tpu.dot_dimension_numbers<[1], [0], [0], [1], [0, 0, 1, 1], [], []>} : vector<8x32xf32>, vector<32x32xf32>, vector<8x32xf32> -> vector<8x32xf32>
    %c7 = arith.constant 7 : index
    %c0_111 = arith.constant 0 : index
    %c0_112 = arith.constant 0 : index
    %294 = vector.load %arg14[%c7, %c0_111, %c0_112] : memref<8x8x32xf32, #tpu.memory_space<vmem>>, vector<1x8x32xf32>
    %295 = vector.shape_cast %294 : vector<1x8x32xf32> to vector<8x32xf32>
    %296 = vector.shape_cast %293 : vector<8x32xf32> to vector<1x8x32xf32>
    tpu.vector_store %arg14[%c7, %c0_111, %c0_112], %296 {strides = array<i32>} : memref<8x8x32xf32, #tpu.memory_space<vmem>>, vector<1x8x32xf32>,
    %c8_i32 = arith.constant 8 : i32
    %297 = vector.broadcast %c8_i32 : i32 to vector<8x1xi32>
    %298 = tpu.iota {dimensions = array<i32: 1>} : vector<8x128xi32>
    %299 = vector.broadcast %297 : vector<8x1xi32> to vector<8x128xi32>
    %300 = arith.cmpi eq, %298, %299 : vector<8x128xi32>
    %301 = arith.extui %300 : vector<8x128xi1> to vector<8x128xi32>
    %302 = arith.sitofp %301 : vector<8x128xi32> to vector<8x128xf32>
    %c0_113 = arith.constant 0 : index
    %c0_114 = arith.constant 0 : index
    %303 = vector.load %arg4[%c0_113, %c0_114] : memref<128x128xf32, #tpu.memory_space<vmem>>, vector<128x128xf32>
    %cst_115 = arith.constant dense<0.000000e+00> : vector<8x128xf32>
    %304 = tpu.matmul %302, %303, %cst_115 {dimension_numbers = #tpu.dot_dimension_numbers<[1], [0], [0], [1], [0, 0, 1, 1], [], []>} : vector<8x128xf32>, vector<128x128xf32>, vector<8x128xf32> -> vector<8x128xf32>
    %c0_116 = arith.constant 0 : index
    %c0_117 = arith.constant 0 : index
    %305 = vector.load %arg5[%c0_116, %c0_117] : memref<32x128xf32, #tpu.memory_space<vmem>>, vector<32x128xf32>
    %cst_118 = arith.constant dense<0.000000e+00> : vector<8x128xf32>
    %306 = tpu.matmul %291, %305, %cst_118 {dimension_numbers = #tpu.dot_dimension_numbers<[1], [0], [0], [1], [0, 0, 1, 1], [], []>} : vector<8x32xf32>, vector<32x128xf32>, vector<8x128xf32> -> vector<8x128xf32>
    %c0_119 = arith.constant 0 : index
    %c0_120 = arith.constant 0 : index
    %307 = vector.load %arg6[%c0_119, %c0_120] : memref<1x128xf32, #tpu.memory_space<vmem>>, vector<1x128xf32>
    %308 = vector.broadcast %307 : vector<1x128xf32> to vector<8x128xf32>
    %309 = arith.addf %306, %308 : vector<8x128xf32>
    %310 = vector.extract_strided_slice %304 {offsets = [0, 0], sizes = [8, 8], strides = [1, 1]} : vector<8x128xf32> to vector<8x8xf32>
    %311 = vector.extract_strided_slice %309 {offsets = [0, 96], sizes = [8, 8], strides = [1, 1]} : vector<8x128xf32> to vector<8x8xf32>
    %312 = arith.addf %310, %311 : vector<8x8xf32>
    %cst_121 = arith.constant dense<0xFF800000> : vector<8xf32>
    %313 = vector.multi_reduction <maximumf>, %312, %cst_121 [1] : vector<8x8xf32> to vector<8xf32>
    %314 = vector.shape_cast %313 : vector<8xf32> to vector<8x1xf32>
    %315 = vector.broadcast %314 : vector<8x1xf32> to vector<8x8xf32>
    %316 = arith.subf %312, %315 : vector<8x8xf32>
    %317 = math.exp %316 : vector<8x8xf32>
    %cst_122 = arith.constant dense<0.000000e+00> : vector<8xf32>
    %318 = vector.multi_reduction <add>, %317, %cst_122 [1] : vector<8x8xf32> to vector<8xf32>
    %319 = vector.shape_cast %318 : vector<8xf32> to vector<8x1xf32>
    %320 = vector.broadcast %319 : vector<8x1xf32> to vector<8x8xf32>
    %321 = arith.divf %317, %320 : vector<8x8xf32>
    %322 = vector.extract_strided_slice %321 {offsets = [0, 0], sizes = [8, 1], strides = [1, 1]} : vector<8x8xf32> to vector<8x1xf32>
    %c0_123 = arith.constant 0 : index
    %c0_124 = arith.constant 0 : index
    %c0_125 = arith.constant 0 : index
    %323 = vector.load %arg14[%c0_123, %c0_124, %c0_125] : memref<8x8x32xf32, #tpu.memory_space<vmem>>, vector<1x8x32xf32>
    %324 = vector.shape_cast %323 : vector<1x8x32xf32> to vector<8x32xf32>
    %325 = vector.broadcast %322 : vector<8x1xf32> to vector<8x32xf32>
    %326 = arith.mulf %325, %324 : vector<8x32xf32>
    %327 = vector.extract_strided_slice %321 {offsets = [0, 1], sizes = [8, 1], strides = [1, 1]} : vector<8x8xf32> to vector<8x1xf32>
    %c1_126 = arith.constant 1 : index
    %c0_127 = arith.constant 0 : index
    %c0_128 = arith.constant 0 : index
    %328 = vector.load %arg14[%c1_126, %c0_127, %c0_128] : memref<8x8x32xf32, #tpu.memory_space<vmem>>, vector<1x8x32xf32>
    %329 = vector.shape_cast %328 : vector<1x8x32xf32> to vector<8x32xf32>
    %330 = vector.broadcast %327 : vector<8x1xf32> to vector<8x32xf32>
    %331 = arith.mulf %330, %329 : vector<8x32xf32>
    %332 = arith.addf %326, %331 : vector<8x32xf32>
    %333 = vector.extract_strided_slice %321 {offsets = [0, 2], sizes = [8, 1], strides = [1, 1]} : vector<8x8xf32> to vector<8x1xf32>
    %c2_129 = arith.constant 2 : index
    %c0_130 = arith.constant 0 : index
    %c0_131 = arith.constant 0 : index
    %334 = vector.load %arg14[%c2_129, %c0_130, %c0_131] : memref<8x8x32xf32, #tpu.memory_space<vmem>>, vector<1x8x32xf32>
    %335 = vector.shape_cast %334 : vector<1x8x32xf32> to vector<8x32xf32>
    %336 = vector.broadcast %333 : vector<8x1xf32> to vector<8x32xf32>
    %337 = arith.mulf %336, %335 : vector<8x32xf32>
    %338 = arith.addf %332, %337 : vector<8x32xf32>
    %339 = vector.extract_strided_slice %321 {offsets = [0, 3], sizes = [8, 1], strides = [1, 1]} : vector<8x8xf32> to vector<8x1xf32>
    %c3_132 = arith.constant 3 : index
    %c0_133 = arith.constant 0 : index
    %c0_134 = arith.constant 0 : index
    %340 = vector.load %arg14[%c3_132, %c0_133, %c0_134] : memref<8x8x32xf32, #tpu.memory_space<vmem>>, vector<1x8x32xf32>
    %341 = vector.shape_cast %340 : vector<1x8x32xf32> to vector<8x32xf32>
    %342 = vector.broadcast %339 : vector<8x1xf32> to vector<8x32xf32>
    %343 = arith.mulf %342, %341 : vector<8x32xf32>
    %344 = arith.addf %338, %343 : vector<8x32xf32>
    %345 = vector.extract_strided_slice %321 {offsets = [0, 4], sizes = [8, 1], strides = [1, 1]} : vector<8x8xf32> to vector<8x1xf32>
    %c4_135 = arith.constant 4 : index
    %c0_136 = arith.constant 0 : index
    %c0_137 = arith.constant 0 : index
    %346 = vector.load %arg14[%c4_135, %c0_136, %c0_137] : memref<8x8x32xf32, #tpu.memory_space<vmem>>, vector<1x8x32xf32>
    %347 = vector.shape_cast %346 : vector<1x8x32xf32> to vector<8x32xf32>
    %348 = vector.broadcast %345 : vector<8x1xf32> to vector<8x32xf32>
    %349 = arith.mulf %348, %347 : vector<8x32xf32>
    %350 = arith.addf %344, %349 : vector<8x32xf32>
    %351 = vector.extract_strided_slice %321 {offsets = [0, 5], sizes = [8, 1], strides = [1, 1]} : vector<8x8xf32> to vector<8x1xf32>
    %c5_138 = arith.constant 5 : index
    %c0_139 = arith.constant 0 : index
    %c0_140 = arith.constant 0 : index
    %352 = vector.load %arg14[%c5_138, %c0_139, %c0_140] : memref<8x8x32xf32, #tpu.memory_space<vmem>>, vector<1x8x32xf32>
    %353 = vector.shape_cast %352 : vector<1x8x32xf32> to vector<8x32xf32>
    %354 = vector.broadcast %351 : vector<8x1xf32> to vector<8x32xf32>
    %355 = arith.mulf %354, %353 : vector<8x32xf32>
    %356 = arith.addf %350, %355 : vector<8x32xf32>
    %357 = vector.extract_strided_slice %321 {offsets = [0, 6], sizes = [8, 1], strides = [1, 1]} : vector<8x8xf32> to vector<8x1xf32>
    %c6_141 = arith.constant 6 : index
    %c0_142 = arith.constant 0 : index
    %c0_143 = arith.constant 0 : index
    %358 = vector.load %arg14[%c6_141, %c0_142, %c0_143] : memref<8x8x32xf32, #tpu.memory_space<vmem>>, vector<1x8x32xf32>
    %359 = vector.shape_cast %358 : vector<1x8x32xf32> to vector<8x32xf32>
    %360 = vector.broadcast %357 : vector<8x1xf32> to vector<8x32xf32>
    %361 = arith.mulf %360, %359 : vector<8x32xf32>
    %362 = arith.addf %356, %361 : vector<8x32xf32>
    %363 = vector.extract_strided_slice %321 {offsets = [0, 7], sizes = [8, 1], strides = [1, 1]} : vector<8x8xf32> to vector<8x1xf32>
    %c7_144 = arith.constant 7 : index
    %c0_145 = arith.constant 0 : index
    %c0_146 = arith.constant 0 : index
    %364 = vector.load %arg14[%c7_144, %c0_145, %c0_146] : memref<8x8x32xf32, #tpu.memory_space<vmem>>, vector<1x8x32xf32>
    %365 = vector.shape_cast %364 : vector<1x8x32xf32> to vector<8x32xf32>
    %366 = vector.broadcast %363 : vector<8x1xf32> to vector<8x32xf32>
    %367 = arith.mulf %366, %365 : vector<8x32xf32>
    %368 = arith.addf %362, %367 : vector<8x32xf32>
    %369 = vector.extract_strided_slice %304 {offsets = [0, 8], sizes = [8, 32], strides = [1, 1]} : vector<8x128xf32> to vector<8x32xf32>
    %370 = arith.addf %369, %368 : vector<8x32xf32>
    %c0_147 = arith.constant 0 : index
    %c0_148 = arith.constant 0 : index
    %371 = vector.load %arg10[%c0_147, %c0_148] : memref<1x32xf32, #tpu.memory_space<vmem>>, vector<1x32xf32>
    %372 = vector.broadcast %371 : vector<1x32xf32> to vector<8x32xf32>
    %373 = arith.addf %370, %372 : vector<8x32xf32>
    %cst_149 = arith.constant 0.000000e+00 : f32
    %374 = vector.broadcast %cst_149 : f32 to vector<8x32xf32>
    %375 = arith.maximumf %373, %374 : vector<8x32xf32>
    %c0_150 = arith.constant 0 : index
    %c0_151 = arith.constant 0 : index
    %376 = vector.load %arg7[%c0_150, %c0_151] : memref<32x128xf32, #tpu.memory_space<vmem>>, vector<32x128xf32>
    %cst_152 = arith.constant dense<0.000000e+00> : vector<8x128xf32>
    %377 = tpu.matmul %375, %376, %cst_152 {dimension_numbers = #tpu.dot_dimension_numbers<[1], [0], [0], [1], [0, 0, 1, 1], [], []>} : vector<8x32xf32>, vector<32x128xf32>, vector<8x128xf32> -> vector<8x128xf32>
    %c0_153 = arith.constant 0 : index
    %c0_154 = arith.constant 0 : index
    %378 = vector.load %arg8[%c0_153, %c0_154] : memref<1x128xf32, #tpu.memory_space<vmem>>, vector<1x128xf32>
    %379 = vector.broadcast %378 : vector<1x128xf32> to vector<8x128xf32>
    %380 = arith.addf %377, %379 : vector<8x128xf32>
    %381 = vector.extract_strided_slice %380 {offsets = [0, 0], sizes = [8, 32], strides = [1, 1]} : vector<8x128xf32> to vector<8x32xf32>
    %382 = vector.extract_strided_slice %309 {offsets = [0, 0], sizes = [8, 32], strides = [1, 1]} : vector<8x128xf32> to vector<8x32xf32>
    %383 = arith.addf %381, %382 : vector<8x32xf32>
    %384 = arith.negf %383 : vector<8x32xf32>
    %385 = math.exp %384 : vector<8x32xf32>
    %cst_155 = arith.constant 1.000000e+00 : f32
    %386 = vector.broadcast %cst_155 : f32 to vector<8x32xf32>
    %387 = arith.addf %386, %385 : vector<8x32xf32>
    %388 = arith.divf %386, %387 : vector<8x32xf32>
    %389 = vector.extract_strided_slice %380 {offsets = [0, 32], sizes = [8, 32], strides = [1, 1]} : vector<8x128xf32> to vector<8x32xf32>
    %390 = vector.extract_strided_slice %309 {offsets = [0, 32], sizes = [8, 32], strides = [1, 1]} : vector<8x128xf32> to vector<8x32xf32>
    %391 = arith.addf %389, %390 : vector<8x32xf32>
    %392 = arith.negf %391 : vector<8x32xf32>
    %393 = math.exp %392 : vector<8x32xf32>
    %cst_156 = arith.constant 1.000000e+00 : f32
    %394 = vector.broadcast %cst_156 : f32 to vector<8x32xf32>
    %395 = arith.addf %394, %393 : vector<8x32xf32>
    %396 = arith.divf %394, %395 : vector<8x32xf32>
    %397 = vector.extract_strided_slice %380 {offsets = [0, 64], sizes = [8, 32], strides = [1, 1]} : vector<8x128xf32> to vector<8x32xf32>
    %398 = vector.extract_strided_slice %309 {offsets = [0, 64], sizes = [8, 32], strides = [1, 1]} : vector<8x128xf32> to vector<8x32xf32>
    %399 = arith.mulf %388, %398 : vector<8x32xf32>
    %400 = arith.addf %397, %399 : vector<8x32xf32>
    %401 = math.tanh %400 : vector<8x32xf32>
    %cst_157 = arith.constant 1.000000e+00 : f32
    %402 = vector.broadcast %cst_157 : f32 to vector<8x32xf32>
    %403 = arith.subf %402, %396 : vector<8x32xf32>
    %404 = arith.mulf %403, %401 : vector<8x32xf32>
    %405 = arith.mulf %396, %291 : vector<8x32xf32>
    %406 = arith.addf %404, %405 : vector<8x32xf32>
    %c0_158 = arith.constant 0 : index
    %c0_159 = arith.constant 0 : index
    %407 = vector.load %arg11[%c0_158, %c0_159] : memref<32x128xf32, #tpu.memory_space<vmem>>, vector<32x128xf32>
    %cst_160 = arith.constant dense<0.000000e+00> : vector<8x128xf32>
    %408 = tpu.matmul %406, %407, %cst_160 {dimension_numbers = #tpu.dot_dimension_numbers<[1], [0], [0], [1], [0, 0, 1, 1], [], []>} : vector<8x32xf32>, vector<32x128xf32>, vector<8x128xf32> -> vector<8x128xf32>
    %c0_161 = arith.constant 0 : index
    %c0_162 = arith.constant 0 : index
    %409 = vector.load %arg12[%c0_161, %c0_162] : memref<1x128xf32, #tpu.memory_space<vmem>>, vector<1x128xf32>
    %410 = vector.broadcast %409 : vector<1x128xf32> to vector<8x128xf32>
    %411 = arith.addf %408, %410 : vector<8x128xf32>
    %cst_163 = arith.constant dense<0xFF800000> : vector<8xf32>
    %412 = vector.multi_reduction <maximumf>, %411, %cst_163 [1] : vector<8x128xf32> to vector<8xf32>
    %413 = vector.shape_cast %412 : vector<8xf32> to vector<8x1xf32>
    %414 = vector.broadcast %413 : vector<8x1xf32> to vector<8x128xf32>
    %415 = arith.subf %411, %414 : vector<8x128xf32>
    %416 = math.exp %415 : vector<8x128xf32>
    %cst_164 = arith.constant dense<0.000000e+00> : vector<8xf32>
    %417 = vector.multi_reduction <add>, %416, %cst_164 [1] : vector<8x128xf32> to vector<8xf32>
    %418 = vector.shape_cast %417 : vector<8xf32> to vector<8x1xf32>
    %419 = math.log %418 : vector<8x1xf32>
    %420 = vector.broadcast %419 : vector<8x1xf32> to vector<8x128xf32>
    %421 = arith.subf %415, %420 : vector<8x128xf32>
    %c0_165 = arith.constant 0 : index
    %c0_166 = arith.constant 0 : index
    %422 = vector.load %arg13[%c0_165, %c0_166] : memref<8x1024xf32, #tpu.memory_space<vmem>>, vector<8x128xf32>
    tpu.vector_store %arg13[%c0_165, %c0_166], %421 {strides = array<i32>} : memref<8x1024xf32, #tpu.memory_space<vmem>>, vector<8x128xf32>,
    %423 = vector.broadcast %413 : vector<8x1xf32> to vector<8x128xf32>
    %424 = arith.cmpf oeq, %411, %423 : vector<8x128xf32>
    %c128_i32 = arith.constant 128 : i32
    %425 = vector.broadcast %c128_i32 : i32 to vector<8x128xi32>
    %426 = arith.select %424, %298, %425 : vector<8x128xi1>, vector<8x128xi32>
    %cst_167 = arith.constant dense<2147483647> : vector<8xi32>
    %427 = vector.multi_reduction <minsi>, %426, %cst_167 [1] : vector<8x128xi32> to vector<8xi32>
    %428 = vector.shape_cast %427 : vector<8xi32> to vector<8x1xi32>
    %429 = tpu.iota {dimensions = array<i32: 1>} : vector<8x128xi32>
    %430 = vector.broadcast %428 : vector<8x1xi32> to vector<8x128xi32>
    %431 = arith.cmpi eq, %429, %430 : vector<8x128xi32>
    %432 = arith.extui %431 : vector<8x128xi1> to vector<8x128xi32>
    %433 = arith.sitofp %432 : vector<8x128xi32> to vector<8x128xf32>
    %c0_168 = arith.constant 0 : index
    %c0_169 = arith.constant 0 : index
    %434 = vector.load %arg4[%c0_168, %c0_169] : memref<128x128xf32, #tpu.memory_space<vmem>>, vector<128x128xf32>
    %cst_170 = arith.constant dense<0.000000e+00> : vector<8x128xf32>
    %435 = tpu.matmul %433, %434, %cst_170 {dimension_numbers = #tpu.dot_dimension_numbers<[1], [0], [0], [1], [0, 0, 1, 1], [], []>} : vector<8x128xf32>, vector<128x128xf32>, vector<8x128xf32> -> vector<8x128xf32>
    %c0_171 = arith.constant 0 : index
    %c0_172 = arith.constant 0 : index
    %436 = vector.load %arg5[%c0_171, %c0_172] : memref<32x128xf32, #tpu.memory_space<vmem>>, vector<32x128xf32>
    %cst_173 = arith.constant dense<0.000000e+00> : vector<8x128xf32>
    %437 = tpu.matmul %406, %436, %cst_173 {dimension_numbers = #tpu.dot_dimension_numbers<[1], [0], [0], [1], [0, 0, 1, 1], [], []>} : vector<8x32xf32>, vector<32x128xf32>, vector<8x128xf32> -> vector<8x128xf32>
    %c0_174 = arith.constant 0 : index
    %c0_175 = arith.constant 0 : index
    %438 = vector.load %arg6[%c0_174, %c0_175] : memref<1x128xf32, #tpu.memory_space<vmem>>, vector<1x128xf32>
    %439 = vector.broadcast %438 : vector<1x128xf32> to vector<8x128xf32>
    %440 = arith.addf %437, %439 : vector<8x128xf32>
    %441 = vector.extract_strided_slice %435 {offsets = [0, 0], sizes = [8, 8], strides = [1, 1]} : vector<8x128xf32> to vector<8x8xf32>
    %442 = vector.extract_strided_slice %440 {offsets = [0, 96], sizes = [8, 8], strides = [1, 1]} : vector<8x128xf32> to vector<8x8xf32>
    %443 = arith.addf %441, %442 : vector<8x8xf32>
    %cst_176 = arith.constant dense<0xFF800000> : vector<8xf32>
    %444 = vector.multi_reduction <maximumf>, %443, %cst_176 [1] : vector<8x8xf32> to vector<8xf32>
    %445 = vector.shape_cast %444 : vector<8xf32> to vector<8x1xf32>
    %446 = vector.broadcast %445 : vector<8x1xf32> to vector<8x8xf32>
    %447 = arith.subf %443, %446 : vector<8x8xf32>
    %448 = math.exp %447 : vector<8x8xf32>
    %cst_177 = arith.constant dense<0.000000e+00> : vector<8xf32>
    %449 = vector.multi_reduction <add>, %448, %cst_177 [1] : vector<8x8xf32> to vector<8xf32>
    %450 = vector.shape_cast %449 : vector<8xf32> to vector<8x1xf32>
    %451 = vector.broadcast %450 : vector<8x1xf32> to vector<8x8xf32>
    %452 = arith.divf %448, %451 : vector<8x8xf32>
    %453 = vector.extract_strided_slice %452 {offsets = [0, 0], sizes = [8, 1], strides = [1, 1]} : vector<8x8xf32> to vector<8x1xf32>
    %c0_178 = arith.constant 0 : index
    %c0_179 = arith.constant 0 : index
    %c0_180 = arith.constant 0 : index
    %454 = vector.load %arg14[%c0_178, %c0_179, %c0_180] : memref<8x8x32xf32, #tpu.memory_space<vmem>>, vector<1x8x32xf32>
    %455 = vector.shape_cast %454 : vector<1x8x32xf32> to vector<8x32xf32>
    %456 = vector.broadcast %453 : vector<8x1xf32> to vector<8x32xf32>
    %457 = arith.mulf %456, %455 : vector<8x32xf32>
    %458 = vector.extract_strided_slice %452 {offsets = [0, 1], sizes = [8, 1], strides = [1, 1]} : vector<8x8xf32> to vector<8x1xf32>
    %c1_181 = arith.constant 1 : index
    %c0_182 = arith.constant 0 : index
    %c0_183 = arith.constant 0 : index
    %459 = vector.load %arg14[%c1_181, %c0_182, %c0_183] : memref<8x8x32xf32, #tpu.memory_space<vmem>>, vector<1x8x32xf32>
    %460 = vector.shape_cast %459 : vector<1x8x32xf32> to vector<8x32xf32>
    %461 = vector.broadcast %458 : vector<8x1xf32> to vector<8x32xf32>
    %462 = arith.mulf %461, %460 : vector<8x32xf32>
    %463 = arith.addf %457, %462 : vector<8x32xf32>
    %464 = vector.extract_strided_slice %452 {offsets = [0, 2], sizes = [8, 1], strides = [1, 1]} : vector<8x8xf32> to vector<8x1xf32>
    %c2_184 = arith.constant 2 : index
    %c0_185 = arith.constant 0 : index
    %c0_186 = arith.constant 0 : index
    %465 = vector.load %arg14[%c2_184, %c0_185, %c0_186] : memref<8x8x32xf32, #tpu.memory_space<vmem>>, vector<1x8x32xf32>
    %466 = vector.shape_cast %465 : vector<1x8x32xf32> to vector<8x32xf32>
    %467 = vector.broadcast %464 : vector<8x1xf32> to vector<8x32xf32>
    %468 = arith.mulf %467, %466 : vector<8x32xf32>
    %469 = arith.addf %463, %468 : vector<8x32xf32>
    %470 = vector.extract_strided_slice %452 {offsets = [0, 3], sizes = [8, 1], strides = [1, 1]} : vector<8x8xf32> to vector<8x1xf32>
    %c3_187 = arith.constant 3 : index
    %c0_188 = arith.constant 0 : index
    %c0_189 = arith.constant 0 : index
    %471 = vector.load %arg14[%c3_187, %c0_188, %c0_189] : memref<8x8x32xf32, #tpu.memory_space<vmem>>, vector<1x8x32xf32>
    %472 = vector.shape_cast %471 : vector<1x8x32xf32> to vector<8x32xf32>
    %473 = vector.broadcast %470 : vector<8x1xf32> to vector<8x32xf32>
    %474 = arith.mulf %473, %472 : vector<8x32xf32>
    %475 = arith.addf %469, %474 : vector<8x32xf32>
    %476 = vector.extract_strided_slice %452 {offsets = [0, 4], sizes = [8, 1], strides = [1, 1]} : vector<8x8xf32> to vector<8x1xf32>
    %c4_190 = arith.constant 4 : index
    %c0_191 = arith.constant 0 : index
    %c0_192 = arith.constant 0 : index
    %477 = vector.load %arg14[%c4_190, %c0_191, %c0_192] : memref<8x8x32xf32, #tpu.memory_space<vmem>>, vector<1x8x32xf32>
    %478 = vector.shape_cast %477 : vector<1x8x32xf32> to vector<8x32xf32>
    %479 = vector.broadcast %476 : vector<8x1xf32> to vector<8x32xf32>
    %480 = arith.mulf %479, %478 : vector<8x32xf32>
    %481 = arith.addf %475, %480 : vector<8x32xf32>
    %482 = vector.extract_strided_slice %452 {offsets = [0, 5], sizes = [8, 1], strides = [1, 1]} : vector<8x8xf32> to vector<8x1xf32>
    %c5_193 = arith.constant 5 : index
    %c0_194 = arith.constant 0 : index
    %c0_195 = arith.constant 0 : index
    %483 = vector.load %arg14[%c5_193, %c0_194, %c0_195] : memref<8x8x32xf32, #tpu.memory_space<vmem>>, vector<1x8x32xf32>
    %484 = vector.shape_cast %483 : vector<1x8x32xf32> to vector<8x32xf32>
    %485 = vector.broadcast %482 : vector<8x1xf32> to vector<8x32xf32>
    %486 = arith.mulf %485, %484 : vector<8x32xf32>
    %487 = arith.addf %481, %486 : vector<8x32xf32>
    %488 = vector.extract_strided_slice %452 {offsets = [0, 6], sizes = [8, 1], strides = [1, 1]} : vector<8x8xf32> to vector<8x1xf32>
    %c6_196 = arith.constant 6 : index
    %c0_197 = arith.constant 0 : index
    %c0_198 = arith.constant 0 : index
    %489 = vector.load %arg14[%c6_196, %c0_197, %c0_198] : memref<8x8x32xf32, #tpu.memory_space<vmem>>, vector<1x8x32xf32>
    %490 = vector.shape_cast %489 : vector<1x8x32xf32> to vector<8x32xf32>
    %491 = vector.broadcast %488 : vector<8x1xf32> to vector<8x32xf32>
    %492 = arith.mulf %491, %490 : vector<8x32xf32>
    %493 = arith.addf %487, %492 : vector<8x32xf32>
    %494 = vector.extract_strided_slice %452 {offsets = [0, 7], sizes = [8, 1], strides = [1, 1]} : vector<8x8xf32> to vector<8x1xf32>
    %c7_199 = arith.constant 7 : index
    %c0_200 = arith.constant 0 : index
    %c0_201 = arith.constant 0 : index
    %495 = vector.load %arg14[%c7_199, %c0_200, %c0_201] : memref<8x8x32xf32, #tpu.memory_space<vmem>>, vector<1x8x32xf32>
    %496 = vector.shape_cast %495 : vector<1x8x32xf32> to vector<8x32xf32>
    %497 = vector.broadcast %494 : vector<8x1xf32> to vector<8x32xf32>
    %498 = arith.mulf %497, %496 : vector<8x32xf32>
    %499 = arith.addf %493, %498 : vector<8x32xf32>
    %500 = vector.extract_strided_slice %435 {offsets = [0, 8], sizes = [8, 32], strides = [1, 1]} : vector<8x128xf32> to vector<8x32xf32>
    %501 = arith.addf %500, %499 : vector<8x32xf32>
    %c0_202 = arith.constant 0 : index
    %c0_203 = arith.constant 0 : index
    %502 = vector.load %arg10[%c0_202, %c0_203] : memref<1x32xf32, #tpu.memory_space<vmem>>, vector<1x32xf32>
    %503 = vector.broadcast %502 : vector<1x32xf32> to vector<8x32xf32>
    %504 = arith.addf %501, %503 : vector<8x32xf32>
    %cst_204 = arith.constant 0.000000e+00 : f32
    %505 = vector.broadcast %cst_204 : f32 to vector<8x32xf32>
    %506 = arith.maximumf %504, %505 : vector<8x32xf32>
    %c0_205 = arith.constant 0 : index
    %c0_206 = arith.constant 0 : index
    %507 = vector.load %arg7[%c0_205, %c0_206] : memref<32x128xf32, #tpu.memory_space<vmem>>, vector<32x128xf32>
    %cst_207 = arith.constant dense<0.000000e+00> : vector<8x128xf32>
    %508 = tpu.matmul %506, %507, %cst_207 {dimension_numbers = #tpu.dot_dimension_numbers<[1], [0], [0], [1], [0, 0, 1, 1], [], []>} : vector<8x32xf32>, vector<32x128xf32>, vector<8x128xf32> -> vector<8x128xf32>
    %c0_208 = arith.constant 0 : index
    %c0_209 = arith.constant 0 : index
    %509 = vector.load %arg8[%c0_208, %c0_209] : memref<1x128xf32, #tpu.memory_space<vmem>>, vector<1x128xf32>
    %510 = vector.broadcast %509 : vector<1x128xf32> to vector<8x128xf32>
    %511 = arith.addf %508, %510 : vector<8x128xf32>
    %512 = vector.extract_strided_slice %511 {offsets = [0, 0], sizes = [8, 32], strides = [1, 1]} : vector<8x128xf32> to vector<8x32xf32>
    %513 = vector.extract_strided_slice %440 {offsets = [0, 0], sizes = [8, 32], strides = [1, 1]} : vector<8x128xf32> to vector<8x32xf32>
    %514 = arith.addf %512, %513 : vector<8x32xf32>
    %515 = arith.negf %514 : vector<8x32xf32>
    %516 = math.exp %515 : vector<8x32xf32>
    %cst_210 = arith.constant 1.000000e+00 : f32
    %517 = vector.broadcast %cst_210 : f32 to vector<8x32xf32>
    %518 = arith.addf %517, %516 : vector<8x32xf32>
    %519 = arith.divf %517, %518 : vector<8x32xf32>
    %520 = vector.extract_strided_slice %511 {offsets = [0, 32], sizes = [8, 32], strides = [1, 1]} : vector<8x128xf32> to vector<8x32xf32>
    %521 = vector.extract_strided_slice %440 {offsets = [0, 32], sizes = [8, 32], strides = [1, 1]} : vector<8x128xf32> to vector<8x32xf32>
    %522 = arith.addf %520, %521 : vector<8x32xf32>
    %523 = arith.negf %522 : vector<8x32xf32>
    %524 = math.exp %523 : vector<8x32xf32>
    %cst_211 = arith.constant 1.000000e+00 : f32
    %525 = vector.broadcast %cst_211 : f32 to vector<8x32xf32>
    %526 = arith.addf %525, %524 : vector<8x32xf32>
    %527 = arith.divf %525, %526 : vector<8x32xf32>
    %528 = vector.extract_strided_slice %511 {offsets = [0, 64], sizes = [8, 32], strides = [1, 1]} : vector<8x128xf32> to vector<8x32xf32>
    %529 = vector.extract_strided_slice %440 {offsets = [0, 64], sizes = [8, 32], strides = [1, 1]} : vector<8x128xf32> to vector<8x32xf32>
    %530 = arith.mulf %519, %529 : vector<8x32xf32>
    %531 = arith.addf %528, %530 : vector<8x32xf32>
    %532 = math.tanh %531 : vector<8x32xf32>
    %cst_212 = arith.constant 1.000000e+00 : f32
    %533 = vector.broadcast %cst_212 : f32 to vector<8x32xf32>
    %534 = arith.subf %533, %527 : vector<8x32xf32>
    %535 = arith.mulf %534, %532 : vector<8x32xf32>
    %536 = arith.mulf %527, %406 : vector<8x32xf32>
    %537 = arith.addf %535, %536 : vector<8x32xf32>
    %c0_213 = arith.constant 0 : index
    %c0_214 = arith.constant 0 : index
    %538 = vector.load %arg11[%c0_213, %c0_214] : memref<32x128xf32, #tpu.memory_space<vmem>>, vector<32x128xf32>
    %cst_215 = arith.constant dense<0.000000e+00> : vector<8x128xf32>
    %539 = tpu.matmul %537, %538, %cst_215 {dimension_numbers = #tpu.dot_dimension_numbers<[1], [0], [0], [1], [0, 0, 1, 1], [], []>} : vector<8x32xf32>, vector<32x128xf32>, vector<8x128xf32> -> vector<8x128xf32>
    %c0_216 = arith.constant 0 : index
    %c0_217 = arith.constant 0 : index
    %540 = vector.load %arg12[%c0_216, %c0_217] : memref<1x128xf32, #tpu.memory_space<vmem>>, vector<1x128xf32>
    %541 = vector.broadcast %540 : vector<1x128xf32> to vector<8x128xf32>
    %542 = arith.addf %539, %541 : vector<8x128xf32>
    %cst_218 = arith.constant dense<0xFF800000> : vector<8xf32>
    %543 = vector.multi_reduction <maximumf>, %542, %cst_218 [1] : vector<8x128xf32> to vector<8xf32>
    %544 = vector.shape_cast %543 : vector<8xf32> to vector<8x1xf32>
    %545 = vector.broadcast %544 : vector<8x1xf32> to vector<8x128xf32>
    %546 = arith.subf %542, %545 : vector<8x128xf32>
    %547 = math.exp %546 : vector<8x128xf32>
    %cst_219 = arith.constant dense<0.000000e+00> : vector<8xf32>
    %548 = vector.multi_reduction <add>, %547, %cst_219 [1] : vector<8x128xf32> to vector<8xf32>
    %549 = vector.shape_cast %548 : vector<8xf32> to vector<8x1xf32>
    %550 = math.log %549 : vector<8x1xf32>
    %551 = vector.broadcast %550 : vector<8x1xf32> to vector<8x128xf32>
    %552 = arith.subf %546, %551 : vector<8x128xf32>
    %c0_220 = arith.constant 0 : index
    %c128_221 = arith.constant 128 : index
    %553 = vector.load %arg13[%c0_220, %c128_221] : memref<8x1024xf32, #tpu.memory_space<vmem>>, vector<8x128xf32>
    tpu.vector_store %arg13[%c0_220, %c128_221], %552 {strides = array<i32>} : memref<8x1024xf32, #tpu.memory_space<vmem>>, vector<8x128xf32>,
    %554 = vector.broadcast %544 : vector<8x1xf32> to vector<8x128xf32>
    %555 = arith.cmpf oeq, %542, %554 : vector<8x128xf32>
    %c128_i32_222 = arith.constant 128 : i32
    %556 = vector.broadcast %c128_i32_222 : i32 to vector<8x128xi32>
    %557 = arith.select %555, %429, %556 : vector<8x128xi1>, vector<8x128xi32>
    %cst_223 = arith.constant dense<2147483647> : vector<8xi32>
    %558 = vector.multi_reduction <minsi>, %557, %cst_223 [1] : vector<8x128xi32> to vector<8xi32>
    %559 = vector.shape_cast %558 : vector<8xi32> to vector<8x1xi32>
    %560 = tpu.iota {dimensions = array<i32: 1>} : vector<8x128xi32>
    %561 = vector.broadcast %559 : vector<8x1xi32> to vector<8x128xi32>
    %562 = arith.cmpi eq, %560, %561 : vector<8x128xi32>
    %563 = arith.extui %562 : vector<8x128xi1> to vector<8x128xi32>
    %564 = arith.sitofp %563 : vector<8x128xi32> to vector<8x128xf32>
    %c0_224 = arith.constant 0 : index
    %c0_225 = arith.constant 0 : index
    %565 = vector.load %arg4[%c0_224, %c0_225] : memref<128x128xf32, #tpu.memory_space<vmem>>, vector<128x128xf32>
    %cst_226 = arith.constant dense<0.000000e+00> : vector<8x128xf32>
    %566 = tpu.matmul %564, %565, %cst_226 {dimension_numbers = #tpu.dot_dimension_numbers<[1], [0], [0], [1], [0, 0, 1, 1], [], []>} : vector<8x128xf32>, vector<128x128xf32>, vector<8x128xf32> -> vector<8x128xf32>
    %c0_227 = arith.constant 0 : index
    %c0_228 = arith.constant 0 : index
    %567 = vector.load %arg5[%c0_227, %c0_228] : memref<32x128xf32, #tpu.memory_space<vmem>>, vector<32x128xf32>
    %cst_229 = arith.constant dense<0.000000e+00> : vector<8x128xf32>
    %568 = tpu.matmul %537, %567, %cst_229 {dimension_numbers = #tpu.dot_dimension_numbers<[1], [0], [0], [1], [0, 0, 1, 1], [], []>} : vector<8x32xf32>, vector<32x128xf32>, vector<8x128xf32> -> vector<8x128xf32>
    %c0_230 = arith.constant 0 : index
    %c0_231 = arith.constant 0 : index
    %569 = vector.load %arg6[%c0_230, %c0_231] : memref<1x128xf32, #tpu.memory_space<vmem>>, vector<1x128xf32>
    %570 = vector.broadcast %569 : vector<1x128xf32> to vector<8x128xf32>
    %571 = arith.addf %568, %570 : vector<8x128xf32>
    %572 = vector.extract_strided_slice %566 {offsets = [0, 0], sizes = [8, 8], strides = [1, 1]} : vector<8x128xf32> to vector<8x8xf32>
    %573 = vector.extract_strided_slice %571 {offsets = [0, 96], sizes = [8, 8], strides = [1, 1]} : vector<8x128xf32> to vector<8x8xf32>
    %574 = arith.addf %572, %573 : vector<8x8xf32>
    %cst_232 = arith.constant dense<0xFF800000> : vector<8xf32>
    %575 = vector.multi_reduction <maximumf>, %574, %cst_232 [1] : vector<8x8xf32> to vector<8xf32>
    %576 = vector.shape_cast %575 : vector<8xf32> to vector<8x1xf32>
    %577 = vector.broadcast %576 : vector<8x1xf32> to vector<8x8xf32>
    %578 = arith.subf %574, %577 : vector<8x8xf32>
    %579 = math.exp %578 : vector<8x8xf32>
    %cst_233 = arith.constant dense<0.000000e+00> : vector<8xf32>
    %580 = vector.multi_reduction <add>, %579, %cst_233 [1] : vector<8x8xf32> to vector<8xf32>
    %581 = vector.shape_cast %580 : vector<8xf32> to vector<8x1xf32>
    %582 = vector.broadcast %581 : vector<8x1xf32> to vector<8x8xf32>
    %583 = arith.divf %579, %582 : vector<8x8xf32>
    %584 = vector.extract_strided_slice %583 {offsets = [0, 0], sizes = [8, 1], strides = [1, 1]} : vector<8x8xf32> to vector<8x1xf32>
    %c0_234 = arith.constant 0 : index
    %c0_235 = arith.constant 0 : index
    %c0_236 = arith.constant 0 : index
    %585 = vector.load %arg14[%c0_234, %c0_235, %c0_236] : memref<8x8x32xf32, #tpu.memory_space<vmem>>, vector<1x8x32xf32>
    %586 = vector.shape_cast %585 : vector<1x8x32xf32> to vector<8x32xf32>
    %587 = vector.broadcast %584 : vector<8x1xf32> to vector<8x32xf32>
    %588 = arith.mulf %587, %586 : vector<8x32xf32>
    %589 = vector.extract_strided_slice %583 {offsets = [0, 1], sizes = [8, 1], strides = [1, 1]} : vector<8x8xf32> to vector<8x1xf32>
    %c1_237 = arith.constant 1 : index
    %c0_238 = arith.constant 0 : index
    %c0_239 = arith.constant 0 : index
    %590 = vector.load %arg14[%c1_237, %c0_238, %c0_239] : memref<8x8x32xf32, #tpu.memory_space<vmem>>, vector<1x8x32xf32>
    %591 = vector.shape_cast %590 : vector<1x8x32xf32> to vector<8x32xf32>
    %592 = vector.broadcast %589 : vector<8x1xf32> to vector<8x32xf32>
    %593 = arith.mulf %592, %591 : vector<8x32xf32>
    %594 = arith.addf %588, %593 : vector<8x32xf32>
    %595 = vector.extract_strided_slice %583 {offsets = [0, 2], sizes = [8, 1], strides = [1, 1]} : vector<8x8xf32> to vector<8x1xf32>
    %c2_240 = arith.constant 2 : index
    %c0_241 = arith.constant 0 : index
    %c0_242 = arith.constant 0 : index
    %596 = vector.load %arg14[%c2_240, %c0_241, %c0_242] : memref<8x8x32xf32, #tpu.memory_space<vmem>>, vector<1x8x32xf32>
    %597 = vector.shape_cast %596 : vector<1x8x32xf32> to vector<8x32xf32>
    %598 = vector.broadcast %595 : vector<8x1xf32> to vector<8x32xf32>
    %599 = arith.mulf %598, %597 : vector<8x32xf32>
    %600 = arith.addf %594, %599 : vector<8x32xf32>
    %601 = vector.extract_strided_slice %583 {offsets = [0, 3], sizes = [8, 1], strides = [1, 1]} : vector<8x8xf32> to vector<8x1xf32>
    %c3_243 = arith.constant 3 : index
    %c0_244 = arith.constant 0 : index
    %c0_245 = arith.constant 0 : index
    %602 = vector.load %arg14[%c3_243, %c0_244, %c0_245] : memref<8x8x32xf32, #tpu.memory_space<vmem>>, vector<1x8x32xf32>
    %603 = vector.shape_cast %602 : vector<1x8x32xf32> to vector<8x32xf32>
    %604 = vector.broadcast %601 : vector<8x1xf32> to vector<8x32xf32>
    %605 = arith.mulf %604, %603 : vector<8x32xf32>
    %606 = arith.addf %600, %605 : vector<8x32xf32>
    %607 = vector.extract_strided_slice %583 {offsets = [0, 4], sizes = [8, 1], strides = [1, 1]} : vector<8x8xf32> to vector<8x1xf32>
    %c4_246 = arith.constant 4 : index
    %c0_247 = arith.constant 0 : index
    %c0_248 = arith.constant 0 : index
    %608 = vector.load %arg14[%c4_246, %c0_247, %c0_248] : memref<8x8x32xf32, #tpu.memory_space<vmem>>, vector<1x8x32xf32>
    %609 = vector.shape_cast %608 : vector<1x8x32xf32> to vector<8x32xf32>
    %610 = vector.broadcast %607 : vector<8x1xf32> to vector<8x32xf32>
    %611 = arith.mulf %610, %609 : vector<8x32xf32>
    %612 = arith.addf %606, %611 : vector<8x32xf32>
    %613 = vector.extract_strided_slice %583 {offsets = [0, 5], sizes = [8, 1], strides = [1, 1]} : vector<8x8xf32> to vector<8x1xf32>
    %c5_249 = arith.constant 5 : index
    %c0_250 = arith.constant 0 : index
    %c0_251 = arith.constant 0 : index
    %614 = vector.load %arg14[%c5_249, %c0_250, %c0_251] : memref<8x8x32xf32, #tpu.memory_space<vmem>>, vector<1x8x32xf32>
    %615 = vector.shape_cast %614 : vector<1x8x32xf32> to vector<8x32xf32>
    %616 = vector.broadcast %613 : vector<8x1xf32> to vector<8x32xf32>
    %617 = arith.mulf %616, %615 : vector<8x32xf32>
    %618 = arith.addf %612, %617 : vector<8x32xf32>
    %619 = vector.extract_strided_slice %583 {offsets = [0, 6], sizes = [8, 1], strides = [1, 1]} : vector<8x8xf32> to vector<8x1xf32>
    %c6_252 = arith.constant 6 : index
    %c0_253 = arith.constant 0 : index
    %c0_254 = arith.constant 0 : index
    %620 = vector.load %arg14[%c6_252, %c0_253, %c0_254] : memref<8x8x32xf32, #tpu.memory_space<vmem>>, vector<1x8x32xf32>
    %621 = vector.shape_cast %620 : vector<1x8x32xf32> to vector<8x32xf32>
    %622 = vector.broadcast %619 : vector<8x1xf32> to vector<8x32xf32>
    %623 = arith.mulf %622, %621 : vector<8x32xf32>
    %624 = arith.addf %618, %623 : vector<8x32xf32>
    %625 = vector.extract_strided_slice %583 {offsets = [0, 7], sizes = [8, 1], strides = [1, 1]} : vector<8x8xf32> to vector<8x1xf32>
    %c7_255 = arith.constant 7 : index
    %c0_256 = arith.constant 0 : index
    %c0_257 = arith.constant 0 : index
    %626 = vector.load %arg14[%c7_255, %c0_256, %c0_257] : memref<8x8x32xf32, #tpu.memory_space<vmem>>, vector<1x8x32xf32>
    %627 = vector.shape_cast %626 : vector<1x8x32xf32> to vector<8x32xf32>
    %628 = vector.broadcast %625 : vector<8x1xf32> to vector<8x32xf32>
    %629 = arith.mulf %628, %627 : vector<8x32xf32>
    %630 = arith.addf %624, %629 : vector<8x32xf32>
    %631 = vector.extract_strided_slice %566 {offsets = [0, 8], sizes = [8, 32], strides = [1, 1]} : vector<8x128xf32> to vector<8x32xf32>
    %632 = arith.addf %631, %630 : vector<8x32xf32>
    %c0_258 = arith.constant 0 : index
    %c0_259 = arith.constant 0 : index
    %633 = vector.load %arg10[%c0_258, %c0_259] : memref<1x32xf32, #tpu.memory_space<vmem>>, vector<1x32xf32>
    %634 = vector.broadcast %633 : vector<1x32xf32> to vector<8x32xf32>
    %635 = arith.addf %632, %634 : vector<8x32xf32>
    %cst_260 = arith.constant 0.000000e+00 : f32
    %636 = vector.broadcast %cst_260 : f32 to vector<8x32xf32>
    %637 = arith.maximumf %635, %636 : vector<8x32xf32>
    %c0_261 = arith.constant 0 : index
    %c0_262 = arith.constant 0 : index
    %638 = vector.load %arg7[%c0_261, %c0_262] : memref<32x128xf32, #tpu.memory_space<vmem>>, vector<32x128xf32>
    %cst_263 = arith.constant dense<0.000000e+00> : vector<8x128xf32>
    %639 = tpu.matmul %637, %638, %cst_263 {dimension_numbers = #tpu.dot_dimension_numbers<[1], [0], [0], [1], [0, 0, 1, 1], [], []>} : vector<8x32xf32>, vector<32x128xf32>, vector<8x128xf32> -> vector<8x128xf32>
    %c0_264 = arith.constant 0 : index
    %c0_265 = arith.constant 0 : index
    %640 = vector.load %arg8[%c0_264, %c0_265] : memref<1x128xf32, #tpu.memory_space<vmem>>, vector<1x128xf32>
    %641 = vector.broadcast %640 : vector<1x128xf32> to vector<8x128xf32>
    %642 = arith.addf %639, %641 : vector<8x128xf32>
    %643 = vector.extract_strided_slice %642 {offsets = [0, 0], sizes = [8, 32], strides = [1, 1]} : vector<8x128xf32> to vector<8x32xf32>
    %644 = vector.extract_strided_slice %571 {offsets = [0, 0], sizes = [8, 32], strides = [1, 1]} : vector<8x128xf32> to vector<8x32xf32>
    %645 = arith.addf %643, %644 : vector<8x32xf32>
    %646 = arith.negf %645 : vector<8x32xf32>
    %647 = math.exp %646 : vector<8x32xf32>
    %cst_266 = arith.constant 1.000000e+00 : f32
    %648 = vector.broadcast %cst_266 : f32 to vector<8x32xf32>
    %649 = arith.addf %648, %647 : vector<8x32xf32>
    %650 = arith.divf %648, %649 : vector<8x32xf32>
    %651 = vector.extract_strided_slice %642 {offsets = [0, 32], sizes = [8, 32], strides = [1, 1]} : vector<8x128xf32> to vector<8x32xf32>
    %652 = vector.extract_strided_slice %571 {offsets = [0, 32], sizes = [8, 32], strides = [1, 1]} : vector<8x128xf32> to vector<8x32xf32>
    %653 = arith.addf %651, %652 : vector<8x32xf32>
    %654 = arith.negf %653 : vector<8x32xf32>
    %655 = math.exp %654 : vector<8x32xf32>
    %cst_267 = arith.constant 1.000000e+00 : f32
    %656 = vector.broadcast %cst_267 : f32 to vector<8x32xf32>
    %657 = arith.addf %656, %655 : vector<8x32xf32>
    %658 = arith.divf %656, %657 : vector<8x32xf32>
    %659 = vector.extract_strided_slice %642 {offsets = [0, 64], sizes = [8, 32], strides = [1, 1]} : vector<8x128xf32> to vector<8x32xf32>
    %660 = vector.extract_strided_slice %571 {offsets = [0, 64], sizes = [8, 32], strides = [1, 1]} : vector<8x128xf32> to vector<8x32xf32>
    %661 = arith.mulf %650, %660 : vector<8x32xf32>
    %662 = arith.addf %659, %661 : vector<8x32xf32>
    %663 = math.tanh %662 : vector<8x32xf32>
    %cst_268 = arith.constant 1.000000e+00 : f32
    %664 = vector.broadcast %cst_268 : f32 to vector<8x32xf32>
    %665 = arith.subf %664, %658 : vector<8x32xf32>
    %666 = arith.mulf %665, %663 : vector<8x32xf32>
    %667 = arith.mulf %658, %537 : vector<8x32xf32>
    %668 = arith.addf %666, %667 : vector<8x32xf32>
    %c0_269 = arith.constant 0 : index
    %c0_270 = arith.constant 0 : index
    %669 = vector.load %arg11[%c0_269, %c0_270] : memref<32x128xf32, #tpu.memory_space<vmem>>, vector<32x128xf32>
    %cst_271 = arith.constant dense<0.000000e+00> : vector<8x128xf32>
    %670 = tpu.matmul %668, %669, %cst_271 {dimension_numbers = #tpu.dot_dimension_numbers<[1], [0], [0], [1], [0, 0, 1, 1], [], []>} : vector<8x32xf32>, vector<32x128xf32>, vector<8x128xf32> -> vector<8x128xf32>
    %c0_272 = arith.constant 0 : index
    %c0_273 = arith.constant 0 : index
    %671 = vector.load %arg12[%c0_272, %c0_273] : memref<1x128xf32, #tpu.memory_space<vmem>>, vector<1x128xf32>
    %672 = vector.broadcast %671 : vector<1x128xf32> to vector<8x128xf32>
    %673 = arith.addf %670, %672 : vector<8x128xf32>
    %cst_274 = arith.constant dense<0xFF800000> : vector<8xf32>
    %674 = vector.multi_reduction <maximumf>, %673, %cst_274 [1] : vector<8x128xf32> to vector<8xf32>
    %675 = vector.shape_cast %674 : vector<8xf32> to vector<8x1xf32>
    %676 = vector.broadcast %675 : vector<8x1xf32> to vector<8x128xf32>
    %677 = arith.subf %673, %676 : vector<8x128xf32>
    %678 = math.exp %677 : vector<8x128xf32>
    %cst_275 = arith.constant dense<0.000000e+00> : vector<8xf32>
    %679 = vector.multi_reduction <add>, %678, %cst_275 [1] : vector<8x128xf32> to vector<8xf32>
    %680 = vector.shape_cast %679 : vector<8xf32> to vector<8x1xf32>
    %681 = math.log %680 : vector<8x1xf32>
    %682 = vector.broadcast %681 : vector<8x1xf32> to vector<8x128xf32>
    %683 = arith.subf %677, %682 : vector<8x128xf32>
    %c0_276 = arith.constant 0 : index
    %c256_277 = arith.constant 256 : index
    %684 = vector.load %arg13[%c0_276, %c256_277] : memref<8x1024xf32, #tpu.memory_space<vmem>>, vector<8x128xf32>
    tpu.vector_store %arg13[%c0_276, %c256_277], %683 {strides = array<i32>} : memref<8x1024xf32, #tpu.memory_space<vmem>>, vector<8x128xf32>,
    %685 = vector.broadcast %675 : vector<8x1xf32> to vector<8x128xf32>
    %686 = arith.cmpf oeq, %673, %685 : vector<8x128xf32>
    %c128_i32_278 = arith.constant 128 : i32
    %687 = vector.broadcast %c128_i32_278 : i32 to vector<8x128xi32>
    %688 = arith.select %686, %560, %687 : vector<8x128xi1>, vector<8x128xi32>
    %cst_279 = arith.constant dense<2147483647> : vector<8xi32>
    %689 = vector.multi_reduction <minsi>, %688, %cst_279 [1] : vector<8x128xi32> to vector<8xi32>
    %690 = vector.shape_cast %689 : vector<8xi32> to vector<8x1xi32>
    %691 = tpu.iota {dimensions = array<i32: 1>} : vector<8x128xi32>
    %692 = vector.broadcast %690 : vector<8x1xi32> to vector<8x128xi32>
    %693 = arith.cmpi eq, %691, %692 : vector<8x128xi32>
    %694 = arith.extui %693 : vector<8x128xi1> to vector<8x128xi32>
    %695 = arith.sitofp %694 : vector<8x128xi32> to vector<8x128xf32>
    %c0_280 = arith.constant 0 : index
    %c0_281 = arith.constant 0 : index
    %696 = vector.load %arg4[%c0_280, %c0_281] : memref<128x128xf32, #tpu.memory_space<vmem>>, vector<128x128xf32>
    %cst_282 = arith.constant dense<0.000000e+00> : vector<8x128xf32>
    %697 = tpu.matmul %695, %696, %cst_282 {dimension_numbers = #tpu.dot_dimension_numbers<[1], [0], [0], [1], [0, 0, 1, 1], [], []>} : vector<8x128xf32>, vector<128x128xf32>, vector<8x128xf32> -> vector<8x128xf32>
    %c0_283 = arith.constant 0 : index
    %c0_284 = arith.constant 0 : index
    %698 = vector.load %arg5[%c0_283, %c0_284] : memref<32x128xf32, #tpu.memory_space<vmem>>, vector<32x128xf32>
    %cst_285 = arith.constant dense<0.000000e+00> : vector<8x128xf32>
    %699 = tpu.matmul %668, %698, %cst_285 {dimension_numbers = #tpu.dot_dimension_numbers<[1], [0], [0], [1], [0, 0, 1, 1], [], []>} : vector<8x32xf32>, vector<32x128xf32>, vector<8x128xf32> -> vector<8x128xf32>
    %c0_286 = arith.constant 0 : index
    %c0_287 = arith.constant 0 : index
    %700 = vector.load %arg6[%c0_286, %c0_287] : memref<1x128xf32, #tpu.memory_space<vmem>>, vector<1x128xf32>
    %701 = vector.broadcast %700 : vector<1x128xf32> to vector<8x128xf32>
    %702 = arith.addf %699, %701 : vector<8x128xf32>
    %703 = vector.extract_strided_slice %697 {offsets = [0, 0], sizes = [8, 8], strides = [1, 1]} : vector<8x128xf32> to vector<8x8xf32>
    %704 = vector.extract_strided_slice %702 {offsets = [0, 96], sizes = [8, 8], strides = [1, 1]} : vector<8x128xf32> to vector<8x8xf32>
    %705 = arith.addf %703, %704 : vector<8x8xf32>
    %cst_288 = arith.constant dense<0xFF800000> : vector<8xf32>
    %706 = vector.multi_reduction <maximumf>, %705, %cst_288 [1] : vector<8x8xf32> to vector<8xf32>
    %707 = vector.shape_cast %706 : vector<8xf32> to vector<8x1xf32>
    %708 = vector.broadcast %707 : vector<8x1xf32> to vector<8x8xf32>
    %709 = arith.subf %705, %708 : vector<8x8xf32>
    %710 = math.exp %709 : vector<8x8xf32>
    %cst_289 = arith.constant dense<0.000000e+00> : vector<8xf32>
    %711 = vector.multi_reduction <add>, %710, %cst_289 [1] : vector<8x8xf32> to vector<8xf32>
    %712 = vector.shape_cast %711 : vector<8xf32> to vector<8x1xf32>
    %713 = vector.broadcast %712 : vector<8x1xf32> to vector<8x8xf32>
    %714 = arith.divf %710, %713 : vector<8x8xf32>
    %715 = vector.extract_strided_slice %714 {offsets = [0, 0], sizes = [8, 1], strides = [1, 1]} : vector<8x8xf32> to vector<8x1xf32>
    %c0_290 = arith.constant 0 : index
    %c0_291 = arith.constant 0 : index
    %c0_292 = arith.constant 0 : index
    %716 = vector.load %arg14[%c0_290, %c0_291, %c0_292] : memref<8x8x32xf32, #tpu.memory_space<vmem>>, vector<1x8x32xf32>
    %717 = vector.shape_cast %716 : vector<1x8x32xf32> to vector<8x32xf32>
    %718 = vector.broadcast %715 : vector<8x1xf32> to vector<8x32xf32>
    %719 = arith.mulf %718, %717 : vector<8x32xf32>
    %720 = vector.extract_strided_slice %714 {offsets = [0, 1], sizes = [8, 1], strides = [1, 1]} : vector<8x8xf32> to vector<8x1xf32>
    %c1_293 = arith.constant 1 : index
    %c0_294 = arith.constant 0 : index
    %c0_295 = arith.constant 0 : index
    %721 = vector.load %arg14[%c1_293, %c0_294, %c0_295] : memref<8x8x32xf32, #tpu.memory_space<vmem>>, vector<1x8x32xf32>
    %722 = vector.shape_cast %721 : vector<1x8x32xf32> to vector<8x32xf32>
    %723 = vector.broadcast %720 : vector<8x1xf32> to vector<8x32xf32>
    %724 = arith.mulf %723, %722 : vector<8x32xf32>
    %725 = arith.addf %719, %724 : vector<8x32xf32>
    %726 = vector.extract_strided_slice %714 {offsets = [0, 2], sizes = [8, 1], strides = [1, 1]} : vector<8x8xf32> to vector<8x1xf32>
    %c2_296 = arith.constant 2 : index
    %c0_297 = arith.constant 0 : index
    %c0_298 = arith.constant 0 : index
    %727 = vector.load %arg14[%c2_296, %c0_297, %c0_298] : memref<8x8x32xf32, #tpu.memory_space<vmem>>, vector<1x8x32xf32>
    %728 = vector.shape_cast %727 : vector<1x8x32xf32> to vector<8x32xf32>
    %729 = vector.broadcast %726 : vector<8x1xf32> to vector<8x32xf32>
    %730 = arith.mulf %729, %728 : vector<8x32xf32>
    %731 = arith.addf %725, %730 : vector<8x32xf32>
    %732 = vector.extract_strided_slice %714 {offsets = [0, 3], sizes = [8, 1], strides = [1, 1]} : vector<8x8xf32> to vector<8x1xf32>
    %c3_299 = arith.constant 3 : index
    %c0_300 = arith.constant 0 : index
    %c0_301 = arith.constant 0 : index
    %733 = vector.load %arg14[%c3_299, %c0_300, %c0_301] : memref<8x8x32xf32, #tpu.memory_space<vmem>>, vector<1x8x32xf32>
    %734 = vector.shape_cast %733 : vector<1x8x32xf32> to vector<8x32xf32>
    %735 = vector.broadcast %732 : vector<8x1xf32> to vector<8x32xf32>
    %736 = arith.mulf %735, %734 : vector<8x32xf32>
    %737 = arith.addf %731, %736 : vector<8x32xf32>
    %738 = vector.extract_strided_slice %714 {offsets = [0, 4], sizes = [8, 1], strides = [1, 1]} : vector<8x8xf32> to vector<8x1xf32>
    %c4_302 = arith.constant 4 : index
    %c0_303 = arith.constant 0 : index
    %c0_304 = arith.constant 0 : index
    %739 = vector.load %arg14[%c4_302, %c0_303, %c0_304] : memref<8x8x32xf32, #tpu.memory_space<vmem>>, vector<1x8x32xf32>
    %740 = vector.shape_cast %739 : vector<1x8x32xf32> to vector<8x32xf32>
    %741 = vector.broadcast %738 : vector<8x1xf32> to vector<8x32xf32>
    %742 = arith.mulf %741, %740 : vector<8x32xf32>
    %743 = arith.addf %737, %742 : vector<8x32xf32>
    %744 = vector.extract_strided_slice %714 {offsets = [0, 5], sizes = [8, 1], strides = [1, 1]} : vector<8x8xf32> to vector<8x1xf32>
    %c5_305 = arith.constant 5 : index
    %c0_306 = arith.constant 0 : index
    %c0_307 = arith.constant 0 : index
    %745 = vector.load %arg14[%c5_305, %c0_306, %c0_307] : memref<8x8x32xf32, #tpu.memory_space<vmem>>, vector<1x8x32xf32>
    %746 = vector.shape_cast %745 : vector<1x8x32xf32> to vector<8x32xf32>
    %747 = vector.broadcast %744 : vector<8x1xf32> to vector<8x32xf32>
    %748 = arith.mulf %747, %746 : vector<8x32xf32>
    %749 = arith.addf %743, %748 : vector<8x32xf32>
    %750 = vector.extract_strided_slice %714 {offsets = [0, 6], sizes = [8, 1], strides = [1, 1]} : vector<8x8xf32> to vector<8x1xf32>
    %c6_308 = arith.constant 6 : index
    %c0_309 = arith.constant 0 : index
    %c0_310 = arith.constant 0 : index
    %751 = vector.load %arg14[%c6_308, %c0_309, %c0_310] : memref<8x8x32xf32, #tpu.memory_space<vmem>>, vector<1x8x32xf32>
    %752 = vector.shape_cast %751 : vector<1x8x32xf32> to vector<8x32xf32>
    %753 = vector.broadcast %750 : vector<8x1xf32> to vector<8x32xf32>
    %754 = arith.mulf %753, %752 : vector<8x32xf32>
    %755 = arith.addf %749, %754 : vector<8x32xf32>
    %756 = vector.extract_strided_slice %714 {offsets = [0, 7], sizes = [8, 1], strides = [1, 1]} : vector<8x8xf32> to vector<8x1xf32>
    %c7_311 = arith.constant 7 : index
    %c0_312 = arith.constant 0 : index
    %c0_313 = arith.constant 0 : index
    %757 = vector.load %arg14[%c7_311, %c0_312, %c0_313] : memref<8x8x32xf32, #tpu.memory_space<vmem>>, vector<1x8x32xf32>
    %758 = vector.shape_cast %757 : vector<1x8x32xf32> to vector<8x32xf32>
    %759 = vector.broadcast %756 : vector<8x1xf32> to vector<8x32xf32>
    %760 = arith.mulf %759, %758 : vector<8x32xf32>
    %761 = arith.addf %755, %760 : vector<8x32xf32>
    %762 = vector.extract_strided_slice %697 {offsets = [0, 8], sizes = [8, 32], strides = [1, 1]} : vector<8x128xf32> to vector<8x32xf32>
    %763 = arith.addf %762, %761 : vector<8x32xf32>
    %c0_314 = arith.constant 0 : index
    %c0_315 = arith.constant 0 : index
    %764 = vector.load %arg10[%c0_314, %c0_315] : memref<1x32xf32, #tpu.memory_space<vmem>>, vector<1x32xf32>
    %765 = vector.broadcast %764 : vector<1x32xf32> to vector<8x32xf32>
    %766 = arith.addf %763, %765 : vector<8x32xf32>
    %cst_316 = arith.constant 0.000000e+00 : f32
    %767 = vector.broadcast %cst_316 : f32 to vector<8x32xf32>
    %768 = arith.maximumf %766, %767 : vector<8x32xf32>
    %c0_317 = arith.constant 0 : index
    %c0_318 = arith.constant 0 : index
    %769 = vector.load %arg7[%c0_317, %c0_318] : memref<32x128xf32, #tpu.memory_space<vmem>>, vector<32x128xf32>
    %cst_319 = arith.constant dense<0.000000e+00> : vector<8x128xf32>
    %770 = tpu.matmul %768, %769, %cst_319 {dimension_numbers = #tpu.dot_dimension_numbers<[1], [0], [0], [1], [0, 0, 1, 1], [], []>} : vector<8x32xf32>, vector<32x128xf32>, vector<8x128xf32> -> vector<8x128xf32>
    %c0_320 = arith.constant 0 : index
    %c0_321 = arith.constant 0 : index
    %771 = vector.load %arg8[%c0_320, %c0_321] : memref<1x128xf32, #tpu.memory_space<vmem>>, vector<1x128xf32>
    %772 = vector.broadcast %771 : vector<1x128xf32> to vector<8x128xf32>
    %773 = arith.addf %770, %772 : vector<8x128xf32>
    %774 = vector.extract_strided_slice %773 {offsets = [0, 0], sizes = [8, 32], strides = [1, 1]} : vector<8x128xf32> to vector<8x32xf32>
    %775 = vector.extract_strided_slice %702 {offsets = [0, 0], sizes = [8, 32], strides = [1, 1]} : vector<8x128xf32> to vector<8x32xf32>
    %776 = arith.addf %774, %775 : vector<8x32xf32>
    %777 = arith.negf %776 : vector<8x32xf32>
    %778 = math.exp %777 : vector<8x32xf32>
    %cst_322 = arith.constant 1.000000e+00 : f32
    %779 = vector.broadcast %cst_322 : f32 to vector<8x32xf32>
    %780 = arith.addf %779, %778 : vector<8x32xf32>
    %781 = arith.divf %779, %780 : vector<8x32xf32>
    %782 = vector.extract_strided_slice %773 {offsets = [0, 32], sizes = [8, 32], strides = [1, 1]} : vector<8x128xf32> to vector<8x32xf32>
    %783 = vector.extract_strided_slice %702 {offsets = [0, 32], sizes = [8, 32], strides = [1, 1]} : vector<8x128xf32> to vector<8x32xf32>
    %784 = arith.addf %782, %783 : vector<8x32xf32>
    %785 = arith.negf %784 : vector<8x32xf32>
    %786 = math.exp %785 : vector<8x32xf32>
    %cst_323 = arith.constant 1.000000e+00 : f32
    %787 = vector.broadcast %cst_323 : f32 to vector<8x32xf32>
    %788 = arith.addf %787, %786 : vector<8x32xf32>
    %789 = arith.divf %787, %788 : vector<8x32xf32>
    %790 = vector.extract_strided_slice %773 {offsets = [0, 64], sizes = [8, 32], strides = [1, 1]} : vector<8x128xf32> to vector<8x32xf32>
    %791 = vector.extract_strided_slice %702 {offsets = [0, 64], sizes = [8, 32], strides = [1, 1]} : vector<8x128xf32> to vector<8x32xf32>
    %792 = arith.mulf %781, %791 : vector<8x32xf32>
    %793 = arith.addf %790, %792 : vector<8x32xf32>
    %794 = math.tanh %793 : vector<8x32xf32>
    %cst_324 = arith.constant 1.000000e+00 : f32
    %795 = vector.broadcast %cst_324 : f32 to vector<8x32xf32>
    %796 = arith.subf %795, %789 : vector<8x32xf32>
    %797 = arith.mulf %796, %794 : vector<8x32xf32>
    %798 = arith.mulf %789, %668 : vector<8x32xf32>
    %799 = arith.addf %797, %798 : vector<8x32xf32>
    %c0_325 = arith.constant 0 : index
    %c0_326 = arith.constant 0 : index
    %800 = vector.load %arg11[%c0_325, %c0_326] : memref<32x128xf32, #tpu.memory_space<vmem>>, vector<32x128xf32>
    %cst_327 = arith.constant dense<0.000000e+00> : vector<8x128xf32>
    %801 = tpu.matmul %799, %800, %cst_327 {dimension_numbers = #tpu.dot_dimension_numbers<[1], [0], [0], [1], [0, 0, 1, 1], [], []>} : vector<8x32xf32>, vector<32x128xf32>, vector<8x128xf32> -> vector<8x128xf32>
    %c0_328 = arith.constant 0 : index
    %c0_329 = arith.constant 0 : index
    %802 = vector.load %arg12[%c0_328, %c0_329] : memref<1x128xf32, #tpu.memory_space<vmem>>, vector<1x128xf32>
    %803 = vector.broadcast %802 : vector<1x128xf32> to vector<8x128xf32>
    %804 = arith.addf %801, %803 : vector<8x128xf32>
    %cst_330 = arith.constant dense<0xFF800000> : vector<8xf32>
    %805 = vector.multi_reduction <maximumf>, %804, %cst_330 [1] : vector<8x128xf32> to vector<8xf32>
    %806 = vector.shape_cast %805 : vector<8xf32> to vector<8x1xf32>
    %807 = vector.broadcast %806 : vector<8x1xf32> to vector<8x128xf32>
    %808 = arith.subf %804, %807 : vector<8x128xf32>
    %809 = math.exp %808 : vector<8x128xf32>
    %cst_331 = arith.constant dense<0.000000e+00> : vector<8xf32>
    %810 = vector.multi_reduction <add>, %809, %cst_331 [1] : vector<8x128xf32> to vector<8xf32>
    %811 = vector.shape_cast %810 : vector<8xf32> to vector<8x1xf32>
    %812 = math.log %811 : vector<8x1xf32>
    %813 = vector.broadcast %812 : vector<8x1xf32> to vector<8x128xf32>
    %814 = arith.subf %808, %813 : vector<8x128xf32>
    %c0_332 = arith.constant 0 : index
    %c384_333 = arith.constant 384 : index
    %815 = vector.load %arg13[%c0_332, %c384_333] : memref<8x1024xf32, #tpu.memory_space<vmem>>, vector<8x128xf32>
    tpu.vector_store %arg13[%c0_332, %c384_333], %814 {strides = array<i32>} : memref<8x1024xf32, #tpu.memory_space<vmem>>, vector<8x128xf32>,
    %816 = vector.broadcast %806 : vector<8x1xf32> to vector<8x128xf32>
    %817 = arith.cmpf oeq, %804, %816 : vector<8x128xf32>
    %c128_i32_334 = arith.constant 128 : i32
    %818 = vector.broadcast %c128_i32_334 : i32 to vector<8x128xi32>
    %819 = arith.select %817, %691, %818 : vector<8x128xi1>, vector<8x128xi32>
    %cst_335 = arith.constant dense<2147483647> : vector<8xi32>
    %820 = vector.multi_reduction <minsi>, %819, %cst_335 [1] : vector<8x128xi32> to vector<8xi32>
    %821 = vector.shape_cast %820 : vector<8xi32> to vector<8x1xi32>
    %822 = tpu.iota {dimensions = array<i32: 1>} : vector<8x128xi32>
    %823 = vector.broadcast %821 : vector<8x1xi32> to vector<8x128xi32>
    %824 = arith.cmpi eq, %822, %823 : vector<8x128xi32>
    %825 = arith.extui %824 : vector<8x128xi1> to vector<8x128xi32>
    %826 = arith.sitofp %825 : vector<8x128xi32> to vector<8x128xf32>
    %c0_336 = arith.constant 0 : index
    %c0_337 = arith.constant 0 : index
    %827 = vector.load %arg4[%c0_336, %c0_337] : memref<128x128xf32, #tpu.memory_space<vmem>>, vector<128x128xf32>
    %cst_338 = arith.constant dense<0.000000e+00> : vector<8x128xf32>
    %828 = tpu.matmul %826, %827, %cst_338 {dimension_numbers = #tpu.dot_dimension_numbers<[1], [0], [0], [1], [0, 0, 1, 1], [], []>} : vector<8x128xf32>, vector<128x128xf32>, vector<8x128xf32> -> vector<8x128xf32>
    %c0_339 = arith.constant 0 : index
    %c0_340 = arith.constant 0 : index
    %829 = vector.load %arg5[%c0_339, %c0_340] : memref<32x128xf32, #tpu.memory_space<vmem>>, vector<32x128xf32>
    %cst_341 = arith.constant dense<0.000000e+00> : vector<8x128xf32>
    %830 = tpu.matmul %799, %829, %cst_341 {dimension_numbers = #tpu.dot_dimension_numbers<[1], [0], [0], [1], [0, 0, 1, 1], [], []>} : vector<8x32xf32>, vector<32x128xf32>, vector<8x128xf32> -> vector<8x128xf32>
    %c0_342 = arith.constant 0 : index
    %c0_343 = arith.constant 0 : index
    %831 = vector.load %arg6[%c0_342, %c0_343] : memref<1x128xf32, #tpu.memory_space<vmem>>, vector<1x128xf32>
    %832 = vector.broadcast %831 : vector<1x128xf32> to vector<8x128xf32>
    %833 = arith.addf %830, %832 : vector<8x128xf32>
    %834 = vector.extract_strided_slice %828 {offsets = [0, 0], sizes = [8, 8], strides = [1, 1]} : vector<8x128xf32> to vector<8x8xf32>
    %835 = vector.extract_strided_slice %833 {offsets = [0, 96], sizes = [8, 8], strides = [1, 1]} : vector<8x128xf32> to vector<8x8xf32>
    %836 = arith.addf %834, %835 : vector<8x8xf32>
    %cst_344 = arith.constant dense<0xFF800000> : vector<8xf32>
    %837 = vector.multi_reduction <maximumf>, %836, %cst_344 [1] : vector<8x8xf32> to vector<8xf32>
    %838 = vector.shape_cast %837 : vector<8xf32> to vector<8x1xf32>
    %839 = vector.broadcast %838 : vector<8x1xf32> to vector<8x8xf32>
    %840 = arith.subf %836, %839 : vector<8x8xf32>
    %841 = math.exp %840 : vector<8x8xf32>
    %cst_345 = arith.constant dense<0.000000e+00> : vector<8xf32>
    %842 = vector.multi_reduction <add>, %841, %cst_345 [1] : vector<8x8xf32> to vector<8xf32>
    %843 = vector.shape_cast %842 : vector<8xf32> to vector<8x1xf32>
    %844 = vector.broadcast %843 : vector<8x1xf32> to vector<8x8xf32>
    %845 = arith.divf %841, %844 : vector<8x8xf32>
    %846 = vector.extract_strided_slice %845 {offsets = [0, 0], sizes = [8, 1], strides = [1, 1]} : vector<8x8xf32> to vector<8x1xf32>
    %c0_346 = arith.constant 0 : index
    %c0_347 = arith.constant 0 : index
    %c0_348 = arith.constant 0 : index
    %847 = vector.load %arg14[%c0_346, %c0_347, %c0_348] : memref<8x8x32xf32, #tpu.memory_space<vmem>>, vector<1x8x32xf32>
    %848 = vector.shape_cast %847 : vector<1x8x32xf32> to vector<8x32xf32>
    %849 = vector.broadcast %846 : vector<8x1xf32> to vector<8x32xf32>
    %850 = arith.mulf %849, %848 : vector<8x32xf32>
    %851 = vector.extract_strided_slice %845 {offsets = [0, 1], sizes = [8, 1], strides = [1, 1]} : vector<8x8xf32> to vector<8x1xf32>
    %c1_349 = arith.constant 1 : index
    %c0_350 = arith.constant 0 : index
    %c0_351 = arith.constant 0 : index
    %852 = vector.load %arg14[%c1_349, %c0_350, %c0_351] : memref<8x8x32xf32, #tpu.memory_space<vmem>>, vector<1x8x32xf32>
    %853 = vector.shape_cast %852 : vector<1x8x32xf32> to vector<8x32xf32>
    %854 = vector.broadcast %851 : vector<8x1xf32> to vector<8x32xf32>
    %855 = arith.mulf %854, %853 : vector<8x32xf32>
    %856 = arith.addf %850, %855 : vector<8x32xf32>
    %857 = vector.extract_strided_slice %845 {offsets = [0, 2], sizes = [8, 1], strides = [1, 1]} : vector<8x8xf32> to vector<8x1xf32>
    %c2_352 = arith.constant 2 : index
    %c0_353 = arith.constant 0 : index
    %c0_354 = arith.constant 0 : index
    %858 = vector.load %arg14[%c2_352, %c0_353, %c0_354] : memref<8x8x32xf32, #tpu.memory_space<vmem>>, vector<1x8x32xf32>
    %859 = vector.shape_cast %858 : vector<1x8x32xf32> to vector<8x32xf32>
    %860 = vector.broadcast %857 : vector<8x1xf32> to vector<8x32xf32>
    %861 = arith.mulf %860, %859 : vector<8x32xf32>
    %862 = arith.addf %856, %861 : vector<8x32xf32>
    %863 = vector.extract_strided_slice %845 {offsets = [0, 3], sizes = [8, 1], strides = [1, 1]} : vector<8x8xf32> to vector<8x1xf32>
    %c3_355 = arith.constant 3 : index
    %c0_356 = arith.constant 0 : index
    %c0_357 = arith.constant 0 : index
    %864 = vector.load %arg14[%c3_355, %c0_356, %c0_357] : memref<8x8x32xf32, #tpu.memory_space<vmem>>, vector<1x8x32xf32>
    %865 = vector.shape_cast %864 : vector<1x8x32xf32> to vector<8x32xf32>
    %866 = vector.broadcast %863 : vector<8x1xf32> to vector<8x32xf32>
    %867 = arith.mulf %866, %865 : vector<8x32xf32>
    %868 = arith.addf %862, %867 : vector<8x32xf32>
    %869 = vector.extract_strided_slice %845 {offsets = [0, 4], sizes = [8, 1], strides = [1, 1]} : vector<8x8xf32> to vector<8x1xf32>
    %c4_358 = arith.constant 4 : index
    %c0_359 = arith.constant 0 : index
    %c0_360 = arith.constant 0 : index
    %870 = vector.load %arg14[%c4_358, %c0_359, %c0_360] : memref<8x8x32xf32, #tpu.memory_space<vmem>>, vector<1x8x32xf32>
    %871 = vector.shape_cast %870 : vector<1x8x32xf32> to vector<8x32xf32>
    %872 = vector.broadcast %869 : vector<8x1xf32> to vector<8x32xf32>
    %873 = arith.mulf %872, %871 : vector<8x32xf32>
    %874 = arith.addf %868, %873 : vector<8x32xf32>
    %875 = vector.extract_strided_slice %845 {offsets = [0, 5], sizes = [8, 1], strides = [1, 1]} : vector<8x8xf32> to vector<8x1xf32>
    %c5_361 = arith.constant 5 : index
    %c0_362 = arith.constant 0 : index
    %c0_363 = arith.constant 0 : index
    %876 = vector.load %arg14[%c5_361, %c0_362, %c0_363] : memref<8x8x32xf32, #tpu.memory_space<vmem>>, vector<1x8x32xf32>
    %877 = vector.shape_cast %876 : vector<1x8x32xf32> to vector<8x32xf32>
    %878 = vector.broadcast %875 : vector<8x1xf32> to vector<8x32xf32>
    %879 = arith.mulf %878, %877 : vector<8x32xf32>
    %880 = arith.addf %874, %879 : vector<8x32xf32>
    %881 = vector.extract_strided_slice %845 {offsets = [0, 6], sizes = [8, 1], strides = [1, 1]} : vector<8x8xf32> to vector<8x1xf32>
    %c6_364 = arith.constant 6 : index
    %c0_365 = arith.constant 0 : index
    %c0_366 = arith.constant 0 : index
    %882 = vector.load %arg14[%c6_364, %c0_365, %c0_366] : memref<8x8x32xf32, #tpu.memory_space<vmem>>, vector<1x8x32xf32>
    %883 = vector.shape_cast %882 : vector<1x8x32xf32> to vector<8x32xf32>
    %884 = vector.broadcast %881 : vector<8x1xf32> to vector<8x32xf32>
    %885 = arith.mulf %884, %883 : vector<8x32xf32>
    %886 = arith.addf %880, %885 : vector<8x32xf32>
    %887 = vector.extract_strided_slice %845 {offsets = [0, 7], sizes = [8, 1], strides = [1, 1]} : vector<8x8xf32> to vector<8x1xf32>
    %c7_367 = arith.constant 7 : index
    %c0_368 = arith.constant 0 : index
    %c0_369 = arith.constant 0 : index
    %888 = vector.load %arg14[%c7_367, %c0_368, %c0_369] : memref<8x8x32xf32, #tpu.memory_space<vmem>>, vector<1x8x32xf32>
    %889 = vector.shape_cast %888 : vector<1x8x32xf32> to vector<8x32xf32>
    %890 = vector.broadcast %887 : vector<8x1xf32> to vector<8x32xf32>
    %891 = arith.mulf %890, %889 : vector<8x32xf32>
    %892 = arith.addf %886, %891 : vector<8x32xf32>
    %893 = vector.extract_strided_slice %828 {offsets = [0, 8], sizes = [8, 32], strides = [1, 1]} : vector<8x128xf32> to vector<8x32xf32>
    %894 = arith.addf %893, %892 : vector<8x32xf32>
    %c0_370 = arith.constant 0 : index
    %c0_371 = arith.constant 0 : index
    %895 = vector.load %arg10[%c0_370, %c0_371] : memref<1x32xf32, #tpu.memory_space<vmem>>, vector<1x32xf32>
    %896 = vector.broadcast %895 : vector<1x32xf32> to vector<8x32xf32>
    %897 = arith.addf %894, %896 : vector<8x32xf32>
    %cst_372 = arith.constant 0.000000e+00 : f32
    %898 = vector.broadcast %cst_372 : f32 to vector<8x32xf32>
    %899 = arith.maximumf %897, %898 : vector<8x32xf32>
    %c0_373 = arith.constant 0 : index
    %c0_374 = arith.constant 0 : index
    %900 = vector.load %arg7[%c0_373, %c0_374] : memref<32x128xf32, #tpu.memory_space<vmem>>, vector<32x128xf32>
    %cst_375 = arith.constant dense<0.000000e+00> : vector<8x128xf32>
    %901 = tpu.matmul %899, %900, %cst_375 {dimension_numbers = #tpu.dot_dimension_numbers<[1], [0], [0], [1], [0, 0, 1, 1], [], []>} : vector<8x32xf32>, vector<32x128xf32>, vector<8x128xf32> -> vector<8x128xf32>
    %c0_376 = arith.constant 0 : index
    %c0_377 = arith.constant 0 : index
    %902 = vector.load %arg8[%c0_376, %c0_377] : memref<1x128xf32, #tpu.memory_space<vmem>>, vector<1x128xf32>
    %903 = vector.broadcast %902 : vector<1x128xf32> to vector<8x128xf32>
    %904 = arith.addf %901, %903 : vector<8x128xf32>
    %905 = vector.extract_strided_slice %904 {offsets = [0, 0], sizes = [8, 32], strides = [1, 1]} : vector<8x128xf32> to vector<8x32xf32>
    %906 = vector.extract_strided_slice %833 {offsets = [0, 0], sizes = [8, 32], strides = [1, 1]} : vector<8x128xf32> to vector<8x32xf32>
    %907 = arith.addf %905, %906 : vector<8x32xf32>
    %908 = arith.negf %907 : vector<8x32xf32>
    %909 = math.exp %908 : vector<8x32xf32>
    %cst_378 = arith.constant 1.000000e+00 : f32
    %910 = vector.broadcast %cst_378 : f32 to vector<8x32xf32>
    %911 = arith.addf %910, %909 : vector<8x32xf32>
    %912 = arith.divf %910, %911 : vector<8x32xf32>
    %913 = vector.extract_strided_slice %904 {offsets = [0, 32], sizes = [8, 32], strides = [1, 1]} : vector<8x128xf32> to vector<8x32xf32>
    %914 = vector.extract_strided_slice %833 {offsets = [0, 32], sizes = [8, 32], strides = [1, 1]} : vector<8x128xf32> to vector<8x32xf32>
    %915 = arith.addf %913, %914 : vector<8x32xf32>
    %916 = arith.negf %915 : vector<8x32xf32>
    %917 = math.exp %916 : vector<8x32xf32>
    %cst_379 = arith.constant 1.000000e+00 : f32
    %918 = vector.broadcast %cst_379 : f32 to vector<8x32xf32>
    %919 = arith.addf %918, %917 : vector<8x32xf32>
    %920 = arith.divf %918, %919 : vector<8x32xf32>
    %921 = vector.extract_strided_slice %904 {offsets = [0, 64], sizes = [8, 32], strides = [1, 1]} : vector<8x128xf32> to vector<8x32xf32>
    %922 = vector.extract_strided_slice %833 {offsets = [0, 64], sizes = [8, 32], strides = [1, 1]} : vector<8x128xf32> to vector<8x32xf32>
    %923 = arith.mulf %912, %922 : vector<8x32xf32>
    %924 = arith.addf %921, %923 : vector<8x32xf32>
    %925 = math.tanh %924 : vector<8x32xf32>
    %cst_380 = arith.constant 1.000000e+00 : f32
    %926 = vector.broadcast %cst_380 : f32 to vector<8x32xf32>
    %927 = arith.subf %926, %920 : vector<8x32xf32>
    %928 = arith.mulf %927, %925 : vector<8x32xf32>
    %929 = arith.mulf %920, %799 : vector<8x32xf32>
    %930 = arith.addf %928, %929 : vector<8x32xf32>
    %c0_381 = arith.constant 0 : index
    %c0_382 = arith.constant 0 : index
    %931 = vector.load %arg11[%c0_381, %c0_382] : memref<32x128xf32, #tpu.memory_space<vmem>>, vector<32x128xf32>
    %cst_383 = arith.constant dense<0.000000e+00> : vector<8x128xf32>
    %932 = tpu.matmul %930, %931, %cst_383 {dimension_numbers = #tpu.dot_dimension_numbers<[1], [0], [0], [1], [0, 0, 1, 1], [], []>} : vector<8x32xf32>, vector<32x128xf32>, vector<8x128xf32> -> vector<8x128xf32>
    %c0_384 = arith.constant 0 : index
    %c0_385 = arith.constant 0 : index
    %933 = vector.load %arg12[%c0_384, %c0_385] : memref<1x128xf32, #tpu.memory_space<vmem>>, vector<1x128xf32>
    %934 = vector.broadcast %933 : vector<1x128xf32> to vector<8x128xf32>
    %935 = arith.addf %932, %934 : vector<8x128xf32>
    %cst_386 = arith.constant dense<0xFF800000> : vector<8xf32>
    %936 = vector.multi_reduction <maximumf>, %935, %cst_386 [1] : vector<8x128xf32> to vector<8xf32>
    %937 = vector.shape_cast %936 : vector<8xf32> to vector<8x1xf32>
    %938 = vector.broadcast %937 : vector<8x1xf32> to vector<8x128xf32>
    %939 = arith.subf %935, %938 : vector<8x128xf32>
    %940 = math.exp %939 : vector<8x128xf32>
    %cst_387 = arith.constant dense<0.000000e+00> : vector<8xf32>
    %941 = vector.multi_reduction <add>, %940, %cst_387 [1] : vector<8x128xf32> to vector<8xf32>
    %942 = vector.shape_cast %941 : vector<8xf32> to vector<8x1xf32>
    %943 = math.log %942 : vector<8x1xf32>
    %944 = vector.broadcast %943 : vector<8x1xf32> to vector<8x128xf32>
    %945 = arith.subf %939, %944 : vector<8x128xf32>
    %c0_388 = arith.constant 0 : index
    %c512_389 = arith.constant 512 : index
    %946 = vector.load %arg13[%c0_388, %c512_389] : memref<8x1024xf32, #tpu.memory_space<vmem>>, vector<8x128xf32>
    tpu.vector_store %arg13[%c0_388, %c512_389], %945 {strides = array<i32>} : memref<8x1024xf32, #tpu.memory_space<vmem>>, vector<8x128xf32>,
    %947 = vector.broadcast %937 : vector<8x1xf32> to vector<8x128xf32>
    %948 = arith.cmpf oeq, %935, %947 : vector<8x128xf32>
    %c128_i32_390 = arith.constant 128 : i32
    %949 = vector.broadcast %c128_i32_390 : i32 to vector<8x128xi32>
    %950 = arith.select %948, %822, %949 : vector<8x128xi1>, vector<8x128xi32>
    %cst_391 = arith.constant dense<2147483647> : vector<8xi32>
    %951 = vector.multi_reduction <minsi>, %950, %cst_391 [1] : vector<8x128xi32> to vector<8xi32>
    %952 = vector.shape_cast %951 : vector<8xi32> to vector<8x1xi32>
    %953 = tpu.iota {dimensions = array<i32: 1>} : vector<8x128xi32>
    %954 = vector.broadcast %952 : vector<8x1xi32> to vector<8x128xi32>
    %955 = arith.cmpi eq, %953, %954 : vector<8x128xi32>
    %956 = arith.extui %955 : vector<8x128xi1> to vector<8x128xi32>
    %957 = arith.sitofp %956 : vector<8x128xi32> to vector<8x128xf32>
    %c0_392 = arith.constant 0 : index
    %c0_393 = arith.constant 0 : index
    %958 = vector.load %arg4[%c0_392, %c0_393] : memref<128x128xf32, #tpu.memory_space<vmem>>, vector<128x128xf32>
    %cst_394 = arith.constant dense<0.000000e+00> : vector<8x128xf32>
    %959 = tpu.matmul %957, %958, %cst_394 {dimension_numbers = #tpu.dot_dimension_numbers<[1], [0], [0], [1], [0, 0, 1, 1], [], []>} : vector<8x128xf32>, vector<128x128xf32>, vector<8x128xf32> -> vector<8x128xf32>
    %c0_395 = arith.constant 0 : index
    %c0_396 = arith.constant 0 : index
    %960 = vector.load %arg5[%c0_395, %c0_396] : memref<32x128xf32, #tpu.memory_space<vmem>>, vector<32x128xf32>
    %cst_397 = arith.constant dense<0.000000e+00> : vector<8x128xf32>
    %961 = tpu.matmul %930, %960, %cst_397 {dimension_numbers = #tpu.dot_dimension_numbers<[1], [0], [0], [1], [0, 0, 1, 1], [], []>} : vector<8x32xf32>, vector<32x128xf32>, vector<8x128xf32> -> vector<8x128xf32>
    %c0_398 = arith.constant 0 : index
    %c0_399 = arith.constant 0 : index
    %962 = vector.load %arg6[%c0_398, %c0_399] : memref<1x128xf32, #tpu.memory_space<vmem>>, vector<1x128xf32>
    %963 = vector.broadcast %962 : vector<1x128xf32> to vector<8x128xf32>
    %964 = arith.addf %961, %963 : vector<8x128xf32>
    %965 = vector.extract_strided_slice %959 {offsets = [0, 0], sizes = [8, 8], strides = [1, 1]} : vector<8x128xf32> to vector<8x8xf32>
    %966 = vector.extract_strided_slice %964 {offsets = [0, 96], sizes = [8, 8], strides = [1, 1]} : vector<8x128xf32> to vector<8x8xf32>
    %967 = arith.addf %965, %966 : vector<8x8xf32>
    %cst_400 = arith.constant dense<0xFF800000> : vector<8xf32>
    %968 = vector.multi_reduction <maximumf>, %967, %cst_400 [1] : vector<8x8xf32> to vector<8xf32>
    %969 = vector.shape_cast %968 : vector<8xf32> to vector<8x1xf32>
    %970 = vector.broadcast %969 : vector<8x1xf32> to vector<8x8xf32>
    %971 = arith.subf %967, %970 : vector<8x8xf32>
    %972 = math.exp %971 : vector<8x8xf32>
    %cst_401 = arith.constant dense<0.000000e+00> : vector<8xf32>
    %973 = vector.multi_reduction <add>, %972, %cst_401 [1] : vector<8x8xf32> to vector<8xf32>
    %974 = vector.shape_cast %973 : vector<8xf32> to vector<8x1xf32>
    %975 = vector.broadcast %974 : vector<8x1xf32> to vector<8x8xf32>
    %976 = arith.divf %972, %975 : vector<8x8xf32>
    %977 = vector.extract_strided_slice %976 {offsets = [0, 0], sizes = [8, 1], strides = [1, 1]} : vector<8x8xf32> to vector<8x1xf32>
    %c0_402 = arith.constant 0 : index
    %c0_403 = arith.constant 0 : index
    %c0_404 = arith.constant 0 : index
    %978 = vector.load %arg14[%c0_402, %c0_403, %c0_404] : memref<8x8x32xf32, #tpu.memory_space<vmem>>, vector<1x8x32xf32>
    %979 = vector.shape_cast %978 : vector<1x8x32xf32> to vector<8x32xf32>
    %980 = vector.broadcast %977 : vector<8x1xf32> to vector<8x32xf32>
    %981 = arith.mulf %980, %979 : vector<8x32xf32>
    %982 = vector.extract_strided_slice %976 {offsets = [0, 1], sizes = [8, 1], strides = [1, 1]} : vector<8x8xf32> to vector<8x1xf32>
    %c1_405 = arith.constant 1 : index
    %c0_406 = arith.constant 0 : index
    %c0_407 = arith.constant 0 : index
    %983 = vector.load %arg14[%c1_405, %c0_406, %c0_407] : memref<8x8x32xf32, #tpu.memory_space<vmem>>, vector<1x8x32xf32>
    %984 = vector.shape_cast %983 : vector<1x8x32xf32> to vector<8x32xf32>
    %985 = vector.broadcast %982 : vector<8x1xf32> to vector<8x32xf32>
    %986 = arith.mulf %985, %984 : vector<8x32xf32>
    %987 = arith.addf %981, %986 : vector<8x32xf32>
    %988 = vector.extract_strided_slice %976 {offsets = [0, 2], sizes = [8, 1], strides = [1, 1]} : vector<8x8xf32> to vector<8x1xf32>
    %c2_408 = arith.constant 2 : index
    %c0_409 = arith.constant 0 : index
    %c0_410 = arith.constant 0 : index
    %989 = vector.load %arg14[%c2_408, %c0_409, %c0_410] : memref<8x8x32xf32, #tpu.memory_space<vmem>>, vector<1x8x32xf32>
    %990 = vector.shape_cast %989 : vector<1x8x32xf32> to vector<8x32xf32>
    %991 = vector.broadcast %988 : vector<8x1xf32> to vector<8x32xf32>
    %992 = arith.mulf %991, %990 : vector<8x32xf32>
    %993 = arith.addf %987, %992 : vector<8x32xf32>
    %994 = vector.extract_strided_slice %976 {offsets = [0, 3], sizes = [8, 1], strides = [1, 1]} : vector<8x8xf32> to vector<8x1xf32>
    %c3_411 = arith.constant 3 : index
    %c0_412 = arith.constant 0 : index
    %c0_413 = arith.constant 0 : index
    %995 = vector.load %arg14[%c3_411, %c0_412, %c0_413] : memref<8x8x32xf32, #tpu.memory_space<vmem>>, vector<1x8x32xf32>
    %996 = vector.shape_cast %995 : vector<1x8x32xf32> to vector<8x32xf32>
    %997 = vector.broadcast %994 : vector<8x1xf32> to vector<8x32xf32>
    %998 = arith.mulf %997, %996 : vector<8x32xf32>
    %999 = arith.addf %993, %998 : vector<8x32xf32>
    %1000 = vector.extract_strided_slice %976 {offsets = [0, 4], sizes = [8, 1], strides = [1, 1]} : vector<8x8xf32> to vector<8x1xf32>
    %c4_414 = arith.constant 4 : index
    %c0_415 = arith.constant 0 : index
    %c0_416 = arith.constant 0 : index
    %1001 = vector.load %arg14[%c4_414, %c0_415, %c0_416] : memref<8x8x32xf32, #tpu.memory_space<vmem>>, vector<1x8x32xf32>
    %1002 = vector.shape_cast %1001 : vector<1x8x32xf32> to vector<8x32xf32>
    %1003 = vector.broadcast %1000 : vector<8x1xf32> to vector<8x32xf32>
    %1004 = arith.mulf %1003, %1002 : vector<8x32xf32>
    %1005 = arith.addf %999, %1004 : vector<8x32xf32>
    %1006 = vector.extract_strided_slice %976 {offsets = [0, 5], sizes = [8, 1], strides = [1, 1]} : vector<8x8xf32> to vector<8x1xf32>
    %c5_417 = arith.constant 5 : index
    %c0_418 = arith.constant 0 : index
    %c0_419 = arith.constant 0 : index
    %1007 = vector.load %arg14[%c5_417, %c0_418, %c0_419] : memref<8x8x32xf32, #tpu.memory_space<vmem>>, vector<1x8x32xf32>
    %1008 = vector.shape_cast %1007 : vector<1x8x32xf32> to vector<8x32xf32>
    %1009 = vector.broadcast %1006 : vector<8x1xf32> to vector<8x32xf32>
    %1010 = arith.mulf %1009, %1008 : vector<8x32xf32>
    %1011 = arith.addf %1005, %1010 : vector<8x32xf32>
    %1012 = vector.extract_strided_slice %976 {offsets = [0, 6], sizes = [8, 1], strides = [1, 1]} : vector<8x8xf32> to vector<8x1xf32>
    %c6_420 = arith.constant 6 : index
    %c0_421 = arith.constant 0 : index
    %c0_422 = arith.constant 0 : index
    %1013 = vector.load %arg14[%c6_420, %c0_421, %c0_422] : memref<8x8x32xf32, #tpu.memory_space<vmem>>, vector<1x8x32xf32>
    %1014 = vector.shape_cast %1013 : vector<1x8x32xf32> to vector<8x32xf32>
    %1015 = vector.broadcast %1012 : vector<8x1xf32> to vector<8x32xf32>
    %1016 = arith.mulf %1015, %1014 : vector<8x32xf32>
    %1017 = arith.addf %1011, %1016 : vector<8x32xf32>
    %1018 = vector.extract_strided_slice %976 {offsets = [0, 7], sizes = [8, 1], strides = [1, 1]} : vector<8x8xf32> to vector<8x1xf32>
    %c7_423 = arith.constant 7 : index
    %c0_424 = arith.constant 0 : index
    %c0_425 = arith.constant 0 : index
    %1019 = vector.load %arg14[%c7_423, %c0_424, %c0_425] : memref<8x8x32xf32, #tpu.memory_space<vmem>>, vector<1x8x32xf32>
    %1020 = vector.shape_cast %1019 : vector<1x8x32xf32> to vector<8x32xf32>
    %1021 = vector.broadcast %1018 : vector<8x1xf32> to vector<8x32xf32>
    %1022 = arith.mulf %1021, %1020 : vector<8x32xf32>
    %1023 = arith.addf %1017, %1022 : vector<8x32xf32>
    %1024 = vector.extract_strided_slice %959 {offsets = [0, 8], sizes = [8, 32], strides = [1, 1]} : vector<8x128xf32> to vector<8x32xf32>
    %1025 = arith.addf %1024, %1023 : vector<8x32xf32>
    %c0_426 = arith.constant 0 : index
    %c0_427 = arith.constant 0 : index
    %1026 = vector.load %arg10[%c0_426, %c0_427] : memref<1x32xf32, #tpu.memory_space<vmem>>, vector<1x32xf32>
    %1027 = vector.broadcast %1026 : vector<1x32xf32> to vector<8x32xf32>
    %1028 = arith.addf %1025, %1027 : vector<8x32xf32>
    %cst_428 = arith.constant 0.000000e+00 : f32
    %1029 = vector.broadcast %cst_428 : f32 to vector<8x32xf32>
    %1030 = arith.maximumf %1028, %1029 : vector<8x32xf32>
    %c0_429 = arith.constant 0 : index
    %c0_430 = arith.constant 0 : index
    %1031 = vector.load %arg7[%c0_429, %c0_430] : memref<32x128xf32, #tpu.memory_space<vmem>>, vector<32x128xf32>
    %cst_431 = arith.constant dense<0.000000e+00> : vector<8x128xf32>
    %1032 = tpu.matmul %1030, %1031, %cst_431 {dimension_numbers = #tpu.dot_dimension_numbers<[1], [0], [0], [1], [0, 0, 1, 1], [], []>} : vector<8x32xf32>, vector<32x128xf32>, vector<8x128xf32> -> vector<8x128xf32>
    %c0_432 = arith.constant 0 : index
    %c0_433 = arith.constant 0 : index
    %1033 = vector.load %arg8[%c0_432, %c0_433] : memref<1x128xf32, #tpu.memory_space<vmem>>, vector<1x128xf32>
    %1034 = vector.broadcast %1033 : vector<1x128xf32> to vector<8x128xf32>
    %1035 = arith.addf %1032, %1034 : vector<8x128xf32>
    %1036 = vector.extract_strided_slice %1035 {offsets = [0, 0], sizes = [8, 32], strides = [1, 1]} : vector<8x128xf32> to vector<8x32xf32>
    %1037 = vector.extract_strided_slice %964 {offsets = [0, 0], sizes = [8, 32], strides = [1, 1]} : vector<8x128xf32> to vector<8x32xf32>
    %1038 = arith.addf %1036, %1037 : vector<8x32xf32>
    %1039 = arith.negf %1038 : vector<8x32xf32>
    %1040 = math.exp %1039 : vector<8x32xf32>
    %cst_434 = arith.constant 1.000000e+00 : f32
    %1041 = vector.broadcast %cst_434 : f32 to vector<8x32xf32>
    %1042 = arith.addf %1041, %1040 : vector<8x32xf32>
    %1043 = arith.divf %1041, %1042 : vector<8x32xf32>
    %1044 = vector.extract_strided_slice %1035 {offsets = [0, 32], sizes = [8, 32], strides = [1, 1]} : vector<8x128xf32> to vector<8x32xf32>
    %1045 = vector.extract_strided_slice %964 {offsets = [0, 32], sizes = [8, 32], strides = [1, 1]} : vector<8x128xf32> to vector<8x32xf32>
    %1046 = arith.addf %1044, %1045 : vector<8x32xf32>
    %1047 = arith.negf %1046 : vector<8x32xf32>
    %1048 = math.exp %1047 : vector<8x32xf32>
    %cst_435 = arith.constant 1.000000e+00 : f32
    %1049 = vector.broadcast %cst_435 : f32 to vector<8x32xf32>
    %1050 = arith.addf %1049, %1048 : vector<8x32xf32>
    %1051 = arith.divf %1049, %1050 : vector<8x32xf32>
    %1052 = vector.extract_strided_slice %1035 {offsets = [0, 64], sizes = [8, 32], strides = [1, 1]} : vector<8x128xf32> to vector<8x32xf32>
    %1053 = vector.extract_strided_slice %964 {offsets = [0, 64], sizes = [8, 32], strides = [1, 1]} : vector<8x128xf32> to vector<8x32xf32>
    %1054 = arith.mulf %1043, %1053 : vector<8x32xf32>
    %1055 = arith.addf %1052, %1054 : vector<8x32xf32>
    %1056 = math.tanh %1055 : vector<8x32xf32>
    %cst_436 = arith.constant 1.000000e+00 : f32
    %1057 = vector.broadcast %cst_436 : f32 to vector<8x32xf32>
    %1058 = arith.subf %1057, %1051 : vector<8x32xf32>
    %1059 = arith.mulf %1058, %1056 : vector<8x32xf32>
    %1060 = arith.mulf %1051, %930 : vector<8x32xf32>
    %1061 = arith.addf %1059, %1060 : vector<8x32xf32>
    %c0_437 = arith.constant 0 : index
    %c0_438 = arith.constant 0 : index
    %1062 = vector.load %arg11[%c0_437, %c0_438] : memref<32x128xf32, #tpu.memory_space<vmem>>, vector<32x128xf32>
    %cst_439 = arith.constant dense<0.000000e+00> : vector<8x128xf32>
    %1063 = tpu.matmul %1061, %1062, %cst_439 {dimension_numbers = #tpu.dot_dimension_numbers<[1], [0], [0], [1], [0, 0, 1, 1], [], []>} : vector<8x32xf32>, vector<32x128xf32>, vector<8x128xf32> -> vector<8x128xf32>
    %c0_440 = arith.constant 0 : index
    %c0_441 = arith.constant 0 : index
    %1064 = vector.load %arg12[%c0_440, %c0_441] : memref<1x128xf32, #tpu.memory_space<vmem>>, vector<1x128xf32>
    %1065 = vector.broadcast %1064 : vector<1x128xf32> to vector<8x128xf32>
    %1066 = arith.addf %1063, %1065 : vector<8x128xf32>
    %cst_442 = arith.constant dense<0xFF800000> : vector<8xf32>
    %1067 = vector.multi_reduction <maximumf>, %1066, %cst_442 [1] : vector<8x128xf32> to vector<8xf32>
    %1068 = vector.shape_cast %1067 : vector<8xf32> to vector<8x1xf32>
    %1069 = vector.broadcast %1068 : vector<8x1xf32> to vector<8x128xf32>
    %1070 = arith.subf %1066, %1069 : vector<8x128xf32>
    %1071 = math.exp %1070 : vector<8x128xf32>
    %cst_443 = arith.constant dense<0.000000e+00> : vector<8xf32>
    %1072 = vector.multi_reduction <add>, %1071, %cst_443 [1] : vector<8x128xf32> to vector<8xf32>
    %1073 = vector.shape_cast %1072 : vector<8xf32> to vector<8x1xf32>
    %1074 = math.log %1073 : vector<8x1xf32>
    %1075 = vector.broadcast %1074 : vector<8x1xf32> to vector<8x128xf32>
    %1076 = arith.subf %1070, %1075 : vector<8x128xf32>
    %c0_444 = arith.constant 0 : index
    %c640_445 = arith.constant 640 : index
    %1077 = vector.load %arg13[%c0_444, %c640_445] : memref<8x1024xf32, #tpu.memory_space<vmem>>, vector<8x128xf32>
    tpu.vector_store %arg13[%c0_444, %c640_445], %1076 {strides = array<i32>} : memref<8x1024xf32, #tpu.memory_space<vmem>>, vector<8x128xf32>,
    %1078 = vector.broadcast %1068 : vector<8x1xf32> to vector<8x128xf32>
    %1079 = arith.cmpf oeq, %1066, %1078 : vector<8x128xf32>
    %c128_i32_446 = arith.constant 128 : i32
    %1080 = vector.broadcast %c128_i32_446 : i32 to vector<8x128xi32>
    %1081 = arith.select %1079, %953, %1080 : vector<8x128xi1>, vector<8x128xi32>
    %cst_447 = arith.constant dense<2147483647> : vector<8xi32>
    %1082 = vector.multi_reduction <minsi>, %1081, %cst_447 [1] : vector<8x128xi32> to vector<8xi32>
    %1083 = vector.shape_cast %1082 : vector<8xi32> to vector<8x1xi32>
    %1084 = tpu.iota {dimensions = array<i32: 1>} : vector<8x128xi32>
    %1085 = vector.broadcast %1083 : vector<8x1xi32> to vector<8x128xi32>
    %1086 = arith.cmpi eq, %1084, %1085 : vector<8x128xi32>
    %1087 = arith.extui %1086 : vector<8x128xi1> to vector<8x128xi32>
    %1088 = arith.sitofp %1087 : vector<8x128xi32> to vector<8x128xf32>
    %c0_448 = arith.constant 0 : index
    %c0_449 = arith.constant 0 : index
    %1089 = vector.load %arg4[%c0_448, %c0_449] : memref<128x128xf32, #tpu.memory_space<vmem>>, vector<128x128xf32>
    %cst_450 = arith.constant dense<0.000000e+00> : vector<8x128xf32>
    %1090 = tpu.matmul %1088, %1089, %cst_450 {dimension_numbers = #tpu.dot_dimension_numbers<[1], [0], [0], [1], [0, 0, 1, 1], [], []>} : vector<8x128xf32>, vector<128x128xf32>, vector<8x128xf32> -> vector<8x128xf32>
    %c0_451 = arith.constant 0 : index
    %c0_452 = arith.constant 0 : index
    %1091 = vector.load %arg5[%c0_451, %c0_452] : memref<32x128xf32, #tpu.memory_space<vmem>>, vector<32x128xf32>
    %cst_453 = arith.constant dense<0.000000e+00> : vector<8x128xf32>
    %1092 = tpu.matmul %1061, %1091, %cst_453 {dimension_numbers = #tpu.dot_dimension_numbers<[1], [0], [0], [1], [0, 0, 1, 1], [], []>} : vector<8x32xf32>, vector<32x128xf32>, vector<8x128xf32> -> vector<8x128xf32>
    %c0_454 = arith.constant 0 : index
    %c0_455 = arith.constant 0 : index
    %1093 = vector.load %arg6[%c0_454, %c0_455] : memref<1x128xf32, #tpu.memory_space<vmem>>, vector<1x128xf32>
    %1094 = vector.broadcast %1093 : vector<1x128xf32> to vector<8x128xf32>
    %1095 = arith.addf %1092, %1094 : vector<8x128xf32>
    %1096 = vector.extract_strided_slice %1090 {offsets = [0, 0], sizes = [8, 8], strides = [1, 1]} : vector<8x128xf32> to vector<8x8xf32>
    %1097 = vector.extract_strided_slice %1095 {offsets = [0, 96], sizes = [8, 8], strides = [1, 1]} : vector<8x128xf32> to vector<8x8xf32>
    %1098 = arith.addf %1096, %1097 : vector<8x8xf32>
    %cst_456 = arith.constant dense<0xFF800000> : vector<8xf32>
    %1099 = vector.multi_reduction <maximumf>, %1098, %cst_456 [1] : vector<8x8xf32> to vector<8xf32>
    %1100 = vector.shape_cast %1099 : vector<8xf32> to vector<8x1xf32>
    %1101 = vector.broadcast %1100 : vector<8x1xf32> to vector<8x8xf32>
    %1102 = arith.subf %1098, %1101 : vector<8x8xf32>
    %1103 = math.exp %1102 : vector<8x8xf32>
    %cst_457 = arith.constant dense<0.000000e+00> : vector<8xf32>
    %1104 = vector.multi_reduction <add>, %1103, %cst_457 [1] : vector<8x8xf32> to vector<8xf32>
    %1105 = vector.shape_cast %1104 : vector<8xf32> to vector<8x1xf32>
    %1106 = vector.broadcast %1105 : vector<8x1xf32> to vector<8x8xf32>
    %1107 = arith.divf %1103, %1106 : vector<8x8xf32>
    %1108 = vector.extract_strided_slice %1107 {offsets = [0, 0], sizes = [8, 1], strides = [1, 1]} : vector<8x8xf32> to vector<8x1xf32>
    %c0_458 = arith.constant 0 : index
    %c0_459 = arith.constant 0 : index
    %c0_460 = arith.constant 0 : index
    %1109 = vector.load %arg14[%c0_458, %c0_459, %c0_460] : memref<8x8x32xf32, #tpu.memory_space<vmem>>, vector<1x8x32xf32>
    %1110 = vector.shape_cast %1109 : vector<1x8x32xf32> to vector<8x32xf32>
    %1111 = vector.broadcast %1108 : vector<8x1xf32> to vector<8x32xf32>
    %1112 = arith.mulf %1111, %1110 : vector<8x32xf32>
    %1113 = vector.extract_strided_slice %1107 {offsets = [0, 1], sizes = [8, 1], strides = [1, 1]} : vector<8x8xf32> to vector<8x1xf32>
    %c1_461 = arith.constant 1 : index
    %c0_462 = arith.constant 0 : index
    %c0_463 = arith.constant 0 : index
    %1114 = vector.load %arg14[%c1_461, %c0_462, %c0_463] : memref<8x8x32xf32, #tpu.memory_space<vmem>>, vector<1x8x32xf32>
    %1115 = vector.shape_cast %1114 : vector<1x8x32xf32> to vector<8x32xf32>
    %1116 = vector.broadcast %1113 : vector<8x1xf32> to vector<8x32xf32>
    %1117 = arith.mulf %1116, %1115 : vector<8x32xf32>
    %1118 = arith.addf %1112, %1117 : vector<8x32xf32>
    %1119 = vector.extract_strided_slice %1107 {offsets = [0, 2], sizes = [8, 1], strides = [1, 1]} : vector<8x8xf32> to vector<8x1xf32>
    %c2_464 = arith.constant 2 : index
    %c0_465 = arith.constant 0 : index
    %c0_466 = arith.constant 0 : index
    %1120 = vector.load %arg14[%c2_464, %c0_465, %c0_466] : memref<8x8x32xf32, #tpu.memory_space<vmem>>, vector<1x8x32xf32>
    %1121 = vector.shape_cast %1120 : vector<1x8x32xf32> to vector<8x32xf32>
    %1122 = vector.broadcast %1119 : vector<8x1xf32> to vector<8x32xf32>
    %1123 = arith.mulf %1122, %1121 : vector<8x32xf32>
    %1124 = arith.addf %1118, %1123 : vector<8x32xf32>
    %1125 = vector.extract_strided_slice %1107 {offsets = [0, 3], sizes = [8, 1], strides = [1, 1]} : vector<8x8xf32> to vector<8x1xf32>
    %c3_467 = arith.constant 3 : index
    %c0_468 = arith.constant 0 : index
    %c0_469 = arith.constant 0 : index
    %1126 = vector.load %arg14[%c3_467, %c0_468, %c0_469] : memref<8x8x32xf32, #tpu.memory_space<vmem>>, vector<1x8x32xf32>
    %1127 = vector.shape_cast %1126 : vector<1x8x32xf32> to vector<8x32xf32>
    %1128 = vector.broadcast %1125 : vector<8x1xf32> to vector<8x32xf32>
    %1129 = arith.mulf %1128, %1127 : vector<8x32xf32>
    %1130 = arith.addf %1124, %1129 : vector<8x32xf32>
    %1131 = vector.extract_strided_slice %1107 {offsets = [0, 4], sizes = [8, 1], strides = [1, 1]} : vector<8x8xf32> to vector<8x1xf32>
    %c4_470 = arith.constant 4 : index
    %c0_471 = arith.constant 0 : index
    %c0_472 = arith.constant 0 : index
    %1132 = vector.load %arg14[%c4_470, %c0_471, %c0_472] : memref<8x8x32xf32, #tpu.memory_space<vmem>>, vector<1x8x32xf32>
    %1133 = vector.shape_cast %1132 : vector<1x8x32xf32> to vector<8x32xf32>
    %1134 = vector.broadcast %1131 : vector<8x1xf32> to vector<8x32xf32>
    %1135 = arith.mulf %1134, %1133 : vector<8x32xf32>
    %1136 = arith.addf %1130, %1135 : vector<8x32xf32>
    %1137 = vector.extract_strided_slice %1107 {offsets = [0, 5], sizes = [8, 1], strides = [1, 1]} : vector<8x8xf32> to vector<8x1xf32>
    %c5_473 = arith.constant 5 : index
    %c0_474 = arith.constant 0 : index
    %c0_475 = arith.constant 0 : index
    %1138 = vector.load %arg14[%c5_473, %c0_474, %c0_475] : memref<8x8x32xf32, #tpu.memory_space<vmem>>, vector<1x8x32xf32>
    %1139 = vector.shape_cast %1138 : vector<1x8x32xf32> to vector<8x32xf32>
    %1140 = vector.broadcast %1137 : vector<8x1xf32> to vector<8x32xf32>
    %1141 = arith.mulf %1140, %1139 : vector<8x32xf32>
    %1142 = arith.addf %1136, %1141 : vector<8x32xf32>
    %1143 = vector.extract_strided_slice %1107 {offsets = [0, 6], sizes = [8, 1], strides = [1, 1]} : vector<8x8xf32> to vector<8x1xf32>
    %c6_476 = arith.constant 6 : index
    %c0_477 = arith.constant 0 : index
    %c0_478 = arith.constant 0 : index
    %1144 = vector.load %arg14[%c6_476, %c0_477, %c0_478] : memref<8x8x32xf32, #tpu.memory_space<vmem>>, vector<1x8x32xf32>
    %1145 = vector.shape_cast %1144 : vector<1x8x32xf32> to vector<8x32xf32>
    %1146 = vector.broadcast %1143 : vector<8x1xf32> to vector<8x32xf32>
    %1147 = arith.mulf %1146, %1145 : vector<8x32xf32>
    %1148 = arith.addf %1142, %1147 : vector<8x32xf32>
    %1149 = vector.extract_strided_slice %1107 {offsets = [0, 7], sizes = [8, 1], strides = [1, 1]} : vector<8x8xf32> to vector<8x1xf32>
    %c7_479 = arith.constant 7 : index
    %c0_480 = arith.constant 0 : index
    %c0_481 = arith.constant 0 : index
    %1150 = vector.load %arg14[%c7_479, %c0_480, %c0_481] : memref<8x8x32xf32, #tpu.memory_space<vmem>>, vector<1x8x32xf32>
    %1151 = vector.shape_cast %1150 : vector<1x8x32xf32> to vector<8x32xf32>
    %1152 = vector.broadcast %1149 : vector<8x1xf32> to vector<8x32xf32>
    %1153 = arith.mulf %1152, %1151 : vector<8x32xf32>
    %1154 = arith.addf %1148, %1153 : vector<8x32xf32>
    %1155 = vector.extract_strided_slice %1090 {offsets = [0, 8], sizes = [8, 32], strides = [1, 1]} : vector<8x128xf32> to vector<8x32xf32>
    %1156 = arith.addf %1155, %1154 : vector<8x32xf32>
    %c0_482 = arith.constant 0 : index
    %c0_483 = arith.constant 0 : index
    %1157 = vector.load %arg10[%c0_482, %c0_483] : memref<1x32xf32, #tpu.memory_space<vmem>>, vector<1x32xf32>
    %1158 = vector.broadcast %1157 : vector<1x32xf32> to vector<8x32xf32>
    %1159 = arith.addf %1156, %1158 : vector<8x32xf32>
    %cst_484 = arith.constant 0.000000e+00 : f32
    %1160 = vector.broadcast %cst_484 : f32 to vector<8x32xf32>
    %1161 = arith.maximumf %1159, %1160 : vector<8x32xf32>
    %c0_485 = arith.constant 0 : index
    %c0_486 = arith.constant 0 : index
    %1162 = vector.load %arg7[%c0_485, %c0_486] : memref<32x128xf32, #tpu.memory_space<vmem>>, vector<32x128xf32>
    %cst_487 = arith.constant dense<0.000000e+00> : vector<8x128xf32>
    %1163 = tpu.matmul %1161, %1162, %cst_487 {dimension_numbers = #tpu.dot_dimension_numbers<[1], [0], [0], [1], [0, 0, 1, 1], [], []>} : vector<8x32xf32>, vector<32x128xf32>, vector<8x128xf32> -> vector<8x128xf32>
    %c0_488 = arith.constant 0 : index
    %c0_489 = arith.constant 0 : index
    %1164 = vector.load %arg8[%c0_488, %c0_489] : memref<1x128xf32, #tpu.memory_space<vmem>>, vector<1x128xf32>
    %1165 = vector.broadcast %1164 : vector<1x128xf32> to vector<8x128xf32>
    %1166 = arith.addf %1163, %1165 : vector<8x128xf32>
    %1167 = vector.extract_strided_slice %1166 {offsets = [0, 0], sizes = [8, 32], strides = [1, 1]} : vector<8x128xf32> to vector<8x32xf32>
    %1168 = vector.extract_strided_slice %1095 {offsets = [0, 0], sizes = [8, 32], strides = [1, 1]} : vector<8x128xf32> to vector<8x32xf32>
    %1169 = arith.addf %1167, %1168 : vector<8x32xf32>
    %1170 = arith.negf %1169 : vector<8x32xf32>
    %1171 = math.exp %1170 : vector<8x32xf32>
    %cst_490 = arith.constant 1.000000e+00 : f32
    %1172 = vector.broadcast %cst_490 : f32 to vector<8x32xf32>
    %1173 = arith.addf %1172, %1171 : vector<8x32xf32>
    %1174 = arith.divf %1172, %1173 : vector<8x32xf32>
    %1175 = vector.extract_strided_slice %1166 {offsets = [0, 32], sizes = [8, 32], strides = [1, 1]} : vector<8x128xf32> to vector<8x32xf32>
    %1176 = vector.extract_strided_slice %1095 {offsets = [0, 32], sizes = [8, 32], strides = [1, 1]} : vector<8x128xf32> to vector<8x32xf32>
    %1177 = arith.addf %1175, %1176 : vector<8x32xf32>
    %1178 = arith.negf %1177 : vector<8x32xf32>
    %1179 = math.exp %1178 : vector<8x32xf32>
    %cst_491 = arith.constant 1.000000e+00 : f32
    %1180 = vector.broadcast %cst_491 : f32 to vector<8x32xf32>
    %1181 = arith.addf %1180, %1179 : vector<8x32xf32>
    %1182 = arith.divf %1180, %1181 : vector<8x32xf32>
    %1183 = vector.extract_strided_slice %1166 {offsets = [0, 64], sizes = [8, 32], strides = [1, 1]} : vector<8x128xf32> to vector<8x32xf32>
    %1184 = vector.extract_strided_slice %1095 {offsets = [0, 64], sizes = [8, 32], strides = [1, 1]} : vector<8x128xf32> to vector<8x32xf32>
    %1185 = arith.mulf %1174, %1184 : vector<8x32xf32>
    %1186 = arith.addf %1183, %1185 : vector<8x32xf32>
    %1187 = math.tanh %1186 : vector<8x32xf32>
    %cst_492 = arith.constant 1.000000e+00 : f32
    %1188 = vector.broadcast %cst_492 : f32 to vector<8x32xf32>
    %1189 = arith.subf %1188, %1182 : vector<8x32xf32>
    %1190 = arith.mulf %1189, %1187 : vector<8x32xf32>
    %1191 = arith.mulf %1182, %1061 : vector<8x32xf32>
    %1192 = arith.addf %1190, %1191 : vector<8x32xf32>
    %c0_493 = arith.constant 0 : index
    %c0_494 = arith.constant 0 : index
    %1193 = vector.load %arg11[%c0_493, %c0_494] : memref<32x128xf32, #tpu.memory_space<vmem>>, vector<32x128xf32>
    %cst_495 = arith.constant dense<0.000000e+00> : vector<8x128xf32>
    %1194 = tpu.matmul %1192, %1193, %cst_495 {dimension_numbers = #tpu.dot_dimension_numbers<[1], [0], [0], [1], [0, 0, 1, 1], [], []>} : vector<8x32xf32>, vector<32x128xf32>, vector<8x128xf32> -> vector<8x128xf32>
    %c0_496 = arith.constant 0 : index
    %c0_497 = arith.constant 0 : index
    %1195 = vector.load %arg12[%c0_496, %c0_497] : memref<1x128xf32, #tpu.memory_space<vmem>>, vector<1x128xf32>
    %1196 = vector.broadcast %1195 : vector<1x128xf32> to vector<8x128xf32>
    %1197 = arith.addf %1194, %1196 : vector<8x128xf32>
    %cst_498 = arith.constant dense<0xFF800000> : vector<8xf32>
    %1198 = vector.multi_reduction <maximumf>, %1197, %cst_498 [1] : vector<8x128xf32> to vector<8xf32>
    %1199 = vector.shape_cast %1198 : vector<8xf32> to vector<8x1xf32>
    %1200 = vector.broadcast %1199 : vector<8x1xf32> to vector<8x128xf32>
    %1201 = arith.subf %1197, %1200 : vector<8x128xf32>
    %1202 = math.exp %1201 : vector<8x128xf32>
    %cst_499 = arith.constant dense<0.000000e+00> : vector<8xf32>
    %1203 = vector.multi_reduction <add>, %1202, %cst_499 [1] : vector<8x128xf32> to vector<8xf32>
    %1204 = vector.shape_cast %1203 : vector<8xf32> to vector<8x1xf32>
    %1205 = math.log %1204 : vector<8x1xf32>
    %1206 = vector.broadcast %1205 : vector<8x1xf32> to vector<8x128xf32>
    %1207 = arith.subf %1201, %1206 : vector<8x128xf32>
    %c0_500 = arith.constant 0 : index
    %c768_501 = arith.constant 768 : index
    %1208 = vector.load %arg13[%c0_500, %c768_501] : memref<8x1024xf32, #tpu.memory_space<vmem>>, vector<8x128xf32>
    tpu.vector_store %arg13[%c0_500, %c768_501], %1207 {strides = array<i32>} : memref<8x1024xf32, #tpu.memory_space<vmem>>, vector<8x128xf32>,
    %1209 = vector.broadcast %1199 : vector<8x1xf32> to vector<8x128xf32>
    %1210 = arith.cmpf oeq, %1197, %1209 : vector<8x128xf32>
    %c128_i32_502 = arith.constant 128 : i32
    %1211 = vector.broadcast %c128_i32_502 : i32 to vector<8x128xi32>
    %1212 = arith.select %1210, %1084, %1211 : vector<8x128xi1>, vector<8x128xi32>
    %cst_503 = arith.constant dense<2147483647> : vector<8xi32>
    %1213 = vector.multi_reduction <minsi>, %1212, %cst_503 [1] : vector<8x128xi32> to vector<8xi32>
    %1214 = vector.shape_cast %1213 : vector<8xi32> to vector<8x1xi32>
    %1215 = tpu.iota {dimensions = array<i32: 1>} : vector<8x128xi32>
    %1216 = vector.broadcast %1214 : vector<8x1xi32> to vector<8x128xi32>
    %1217 = arith.cmpi eq, %1215, %1216 : vector<8x128xi32>
    %1218 = arith.extui %1217 : vector<8x128xi1> to vector<8x128xi32>
    %1219 = arith.sitofp %1218 : vector<8x128xi32> to vector<8x128xf32>
    %c0_504 = arith.constant 0 : index
    %c0_505 = arith.constant 0 : index
    %1220 = vector.load %arg4[%c0_504, %c0_505] : memref<128x128xf32, #tpu.memory_space<vmem>>, vector<128x128xf32>
    %cst_506 = arith.constant dense<0.000000e+00> : vector<8x128xf32>
    %1221 = tpu.matmul %1219, %1220, %cst_506 {dimension_numbers = #tpu.dot_dimension_numbers<[1], [0], [0], [1], [0, 0, 1, 1], [], []>} : vector<8x128xf32>, vector<128x128xf32>, vector<8x128xf32> -> vector<8x128xf32>
    %c0_507 = arith.constant 0 : index
    %c0_508 = arith.constant 0 : index
    %1222 = vector.load %arg5[%c0_507, %c0_508] : memref<32x128xf32, #tpu.memory_space<vmem>>, vector<32x128xf32>
    %cst_509 = arith.constant dense<0.000000e+00> : vector<8x128xf32>
    %1223 = tpu.matmul %1192, %1222, %cst_509 {dimension_numbers = #tpu.dot_dimension_numbers<[1], [0], [0], [1], [0, 0, 1, 1], [], []>} : vector<8x32xf32>, vector<32x128xf32>, vector<8x128xf32> -> vector<8x128xf32>
    %c0_510 = arith.constant 0 : index
    %c0_511 = arith.constant 0 : index
    %1224 = vector.load %arg6[%c0_510, %c0_511] : memref<1x128xf32, #tpu.memory_space<vmem>>, vector<1x128xf32>
    %1225 = vector.broadcast %1224 : vector<1x128xf32> to vector<8x128xf32>
    %1226 = arith.addf %1223, %1225 : vector<8x128xf32>
    %1227 = vector.extract_strided_slice %1221 {offsets = [0, 0], sizes = [8, 8], strides = [1, 1]} : vector<8x128xf32> to vector<8x8xf32>
    %1228 = vector.extract_strided_slice %1226 {offsets = [0, 96], sizes = [8, 8], strides = [1, 1]} : vector<8x128xf32> to vector<8x8xf32>
    %1229 = arith.addf %1227, %1228 : vector<8x8xf32>
    %cst_512 = arith.constant dense<0xFF800000> : vector<8xf32>
    %1230 = vector.multi_reduction <maximumf>, %1229, %cst_512 [1] : vector<8x8xf32> to vector<8xf32>
    %1231 = vector.shape_cast %1230 : vector<8xf32> to vector<8x1xf32>
    %1232 = vector.broadcast %1231 : vector<8x1xf32> to vector<8x8xf32>
    %1233 = arith.subf %1229, %1232 : vector<8x8xf32>
    %1234 = math.exp %1233 : vector<8x8xf32>
    %cst_513 = arith.constant dense<0.000000e+00> : vector<8xf32>
    %1235 = vector.multi_reduction <add>, %1234, %cst_513 [1] : vector<8x8xf32> to vector<8xf32>
    %1236 = vector.shape_cast %1235 : vector<8xf32> to vector<8x1xf32>
    %1237 = vector.broadcast %1236 : vector<8x1xf32> to vector<8x8xf32>
    %1238 = arith.divf %1234, %1237 : vector<8x8xf32>
    %1239 = vector.extract_strided_slice %1238 {offsets = [0, 0], sizes = [8, 1], strides = [1, 1]} : vector<8x8xf32> to vector<8x1xf32>
    %c0_514 = arith.constant 0 : index
    %c0_515 = arith.constant 0 : index
    %c0_516 = arith.constant 0 : index
    %1240 = vector.load %arg14[%c0_514, %c0_515, %c0_516] : memref<8x8x32xf32, #tpu.memory_space<vmem>>, vector<1x8x32xf32>
    %1241 = vector.shape_cast %1240 : vector<1x8x32xf32> to vector<8x32xf32>
    %1242 = vector.broadcast %1239 : vector<8x1xf32> to vector<8x32xf32>
    %1243 = arith.mulf %1242, %1241 : vector<8x32xf32>
    %1244 = vector.extract_strided_slice %1238 {offsets = [0, 1], sizes = [8, 1], strides = [1, 1]} : vector<8x8xf32> to vector<8x1xf32>
    %c1_517 = arith.constant 1 : index
    %c0_518 = arith.constant 0 : index
    %c0_519 = arith.constant 0 : index
    %1245 = vector.load %arg14[%c1_517, %c0_518, %c0_519] : memref<8x8x32xf32, #tpu.memory_space<vmem>>, vector<1x8x32xf32>
    %1246 = vector.shape_cast %1245 : vector<1x8x32xf32> to vector<8x32xf32>
    %1247 = vector.broadcast %1244 : vector<8x1xf32> to vector<8x32xf32>
    %1248 = arith.mulf %1247, %1246 : vector<8x32xf32>
    %1249 = arith.addf %1243, %1248 : vector<8x32xf32>
    %1250 = vector.extract_strided_slice %1238 {offsets = [0, 2], sizes = [8, 1], strides = [1, 1]} : vector<8x8xf32> to vector<8x1xf32>
    %c2_520 = arith.constant 2 : index
    %c0_521 = arith.constant 0 : index
    %c0_522 = arith.constant 0 : index
    %1251 = vector.load %arg14[%c2_520, %c0_521, %c0_522] : memref<8x8x32xf32, #tpu.memory_space<vmem>>, vector<1x8x32xf32>
    %1252 = vector.shape_cast %1251 : vector<1x8x32xf32> to vector<8x32xf32>
    %1253 = vector.broadcast %1250 : vector<8x1xf32> to vector<8x32xf32>
    %1254 = arith.mulf %1253, %1252 : vector<8x32xf32>
    %1255 = arith.addf %1249, %1254 : vector<8x32xf32>
    %1256 = vector.extract_strided_slice %1238 {offsets = [0, 3], sizes = [8, 1], strides = [1, 1]} : vector<8x8xf32> to vector<8x1xf32>
    %c3_523 = arith.constant 3 : index
    %c0_524 = arith.constant 0 : index
    %c0_525 = arith.constant 0 : index
    %1257 = vector.load %arg14[%c3_523, %c0_524, %c0_525] : memref<8x8x32xf32, #tpu.memory_space<vmem>>, vector<1x8x32xf32>
    %1258 = vector.shape_cast %1257 : vector<1x8x32xf32> to vector<8x32xf32>
    %1259 = vector.broadcast %1256 : vector<8x1xf32> to vector<8x32xf32>
    %1260 = arith.mulf %1259, %1258 : vector<8x32xf32>
    %1261 = arith.addf %1255, %1260 : vector<8x32xf32>
    %1262 = vector.extract_strided_slice %1238 {offsets = [0, 4], sizes = [8, 1], strides = [1, 1]} : vector<8x8xf32> to vector<8x1xf32>
    %c4_526 = arith.constant 4 : index
    %c0_527 = arith.constant 0 : index
    %c0_528 = arith.constant 0 : index
    %1263 = vector.load %arg14[%c4_526, %c0_527, %c0_528] : memref<8x8x32xf32, #tpu.memory_space<vmem>>, vector<1x8x32xf32>
    %1264 = vector.shape_cast %1263 : vector<1x8x32xf32> to vector<8x32xf32>
    %1265 = vector.broadcast %1262 : vector<8x1xf32> to vector<8x32xf32>
    %1266 = arith.mulf %1265, %1264 : vector<8x32xf32>
    %1267 = arith.addf %1261, %1266 : vector<8x32xf32>
    %1268 = vector.extract_strided_slice %1238 {offsets = [0, 5], sizes = [8, 1], strides = [1, 1]} : vector<8x8xf32> to vector<8x1xf32>
    %c5_529 = arith.constant 5 : index
    %c0_530 = arith.constant 0 : index
    %c0_531 = arith.constant 0 : index
    %1269 = vector.load %arg14[%c5_529, %c0_530, %c0_531] : memref<8x8x32xf32, #tpu.memory_space<vmem>>, vector<1x8x32xf32>
    %1270 = vector.shape_cast %1269 : vector<1x8x32xf32> to vector<8x32xf32>
    %1271 = vector.broadcast %1268 : vector<8x1xf32> to vector<8x32xf32>
    %1272 = arith.mulf %1271, %1270 : vector<8x32xf32>
    %1273 = arith.addf %1267, %1272 : vector<8x32xf32>
    %1274 = vector.extract_strided_slice %1238 {offsets = [0, 6], sizes = [8, 1], strides = [1, 1]} : vector<8x8xf32> to vector<8x1xf32>
    %c6_532 = arith.constant 6 : index
    %c0_533 = arith.constant 0 : index
    %c0_534 = arith.constant 0 : index
    %1275 = vector.load %arg14[%c6_532, %c0_533, %c0_534] : memref<8x8x32xf32, #tpu.memory_space<vmem>>, vector<1x8x32xf32>
    %1276 = vector.shape_cast %1275 : vector<1x8x32xf32> to vector<8x32xf32>
    %1277 = vector.broadcast %1274 : vector<8x1xf32> to vector<8x32xf32>
    %1278 = arith.mulf %1277, %1276 : vector<8x32xf32>
    %1279 = arith.addf %1273, %1278 : vector<8x32xf32>
    %1280 = vector.extract_strided_slice %1238 {offsets = [0, 7], sizes = [8, 1], strides = [1, 1]} : vector<8x8xf32> to vector<8x1xf32>
    %c7_535 = arith.constant 7 : index
    %c0_536 = arith.constant 0 : index
    %c0_537 = arith.constant 0 : index
    %1281 = vector.load %arg14[%c7_535, %c0_536, %c0_537] : memref<8x8x32xf32, #tpu.memory_space<vmem>>, vector<1x8x32xf32>
    %1282 = vector.shape_cast %1281 : vector<1x8x32xf32> to vector<8x32xf32>
    %1283 = vector.broadcast %1280 : vector<8x1xf32> to vector<8x32xf32>
    %1284 = arith.mulf %1283, %1282 : vector<8x32xf32>
    %1285 = arith.addf %1279, %1284 : vector<8x32xf32>
    %1286 = vector.extract_strided_slice %1221 {offsets = [0, 8], sizes = [8, 32], strides = [1, 1]} : vector<8x128xf32> to vector<8x32xf32>
    %1287 = arith.addf %1286, %1285 : vector<8x32xf32>
    %c0_538 = arith.constant 0 : index
    %c0_539 = arith.constant 0 : index
    %1288 = vector.load %arg10[%c0_538, %c0_539] : memref<1x32xf32, #tpu.memory_space<vmem>>, vector<1x32xf32>
    %1289 = vector.broadcast %1288 : vector<1x32xf32> to vector<8x32xf32>
    %1290 = arith.addf %1287, %1289 : vector<8x32xf32>
    %cst_540 = arith.constant 0.000000e+00 : f32
    %1291 = vector.broadcast %cst_540 : f32 to vector<8x32xf32>
    %1292 = arith.maximumf %1290, %1291 : vector<8x32xf32>
    %c0_541 = arith.constant 0 : index
    %c0_542 = arith.constant 0 : index
    %1293 = vector.load %arg7[%c0_541, %c0_542] : memref<32x128xf32, #tpu.memory_space<vmem>>, vector<32x128xf32>
    %cst_543 = arith.constant dense<0.000000e+00> : vector<8x128xf32>
    %1294 = tpu.matmul %1292, %1293, %cst_543 {dimension_numbers = #tpu.dot_dimension_numbers<[1], [0], [0], [1], [0, 0, 1, 1], [], []>} : vector<8x32xf32>, vector<32x128xf32>, vector<8x128xf32> -> vector<8x128xf32>
    %c0_544 = arith.constant 0 : index
    %c0_545 = arith.constant 0 : index
    %1295 = vector.load %arg8[%c0_544, %c0_545] : memref<1x128xf32, #tpu.memory_space<vmem>>, vector<1x128xf32>
    %1296 = vector.broadcast %1295 : vector<1x128xf32> to vector<8x128xf32>
    %1297 = arith.addf %1294, %1296 : vector<8x128xf32>
    %1298 = vector.extract_strided_slice %1297 {offsets = [0, 0], sizes = [8, 32], strides = [1, 1]} : vector<8x128xf32> to vector<8x32xf32>
    %1299 = vector.extract_strided_slice %1226 {offsets = [0, 0], sizes = [8, 32], strides = [1, 1]} : vector<8x128xf32> to vector<8x32xf32>
    %1300 = arith.addf %1298, %1299 : vector<8x32xf32>
    %1301 = arith.negf %1300 : vector<8x32xf32>
    %1302 = math.exp %1301 : vector<8x32xf32>
    %cst_546 = arith.constant 1.000000e+00 : f32
    %1303 = vector.broadcast %cst_546 : f32 to vector<8x32xf32>
    %1304 = arith.addf %1303, %1302 : vector<8x32xf32>
    %1305 = arith.divf %1303, %1304 : vector<8x32xf32>
    %1306 = vector.extract_strided_slice %1297 {offsets = [0, 32], sizes = [8, 32], strides = [1, 1]} : vector<8x128xf32> to vector<8x32xf32>
    %1307 = vector.extract_strided_slice %1226 {offsets = [0, 32], sizes = [8, 32], strides = [1, 1]} : vector<8x128xf32> to vector<8x32xf32>
    %1308 = arith.addf %1306, %1307 : vector<8x32xf32>
    %1309 = arith.negf %1308 : vector<8x32xf32>
    %1310 = math.exp %1309 : vector<8x32xf32>
    %cst_547 = arith.constant 1.000000e+00 : f32
    %1311 = vector.broadcast %cst_547 : f32 to vector<8x32xf32>
    %1312 = arith.addf %1311, %1310 : vector<8x32xf32>
    %1313 = arith.divf %1311, %1312 : vector<8x32xf32>
    %1314 = vector.extract_strided_slice %1297 {offsets = [0, 64], sizes = [8, 32], strides = [1, 1]} : vector<8x128xf32> to vector<8x32xf32>
    %1315 = vector.extract_strided_slice %1226 {offsets = [0, 64], sizes = [8, 32], strides = [1, 1]} : vector<8x128xf32> to vector<8x32xf32>
    %1316 = arith.mulf %1305, %1315 : vector<8x32xf32>
    %1317 = arith.addf %1314, %1316 : vector<8x32xf32>
    %1318 = math.tanh %1317 : vector<8x32xf32>
    %cst_548 = arith.constant 1.000000e+00 : f32
    %1319 = vector.broadcast %cst_548 : f32 to vector<8x32xf32>
    %1320 = arith.subf %1319, %1313 : vector<8x32xf32>
    %1321 = arith.mulf %1320, %1318 : vector<8x32xf32>
    %1322 = arith.mulf %1313, %1192 : vector<8x32xf32>
    %1323 = arith.addf %1321, %1322 : vector<8x32xf32>
    %c0_549 = arith.constant 0 : index
    %c0_550 = arith.constant 0 : index
    %1324 = vector.load %arg11[%c0_549, %c0_550] : memref<32x128xf32, #tpu.memory_space<vmem>>, vector<32x128xf32>
    %cst_551 = arith.constant dense<0.000000e+00> : vector<8x128xf32>
    %1325 = tpu.matmul %1323, %1324, %cst_551 {dimension_numbers = #tpu.dot_dimension_numbers<[1], [0], [0], [1], [0, 0, 1, 1], [], []>} : vector<8x32xf32>, vector<32x128xf32>, vector<8x128xf32> -> vector<8x128xf32>
    %c0_552 = arith.constant 0 : index
    %c0_553 = arith.constant 0 : index
    %1326 = vector.load %arg12[%c0_552, %c0_553] : memref<1x128xf32, #tpu.memory_space<vmem>>, vector<1x128xf32>
    %1327 = vector.broadcast %1326 : vector<1x128xf32> to vector<8x128xf32>
    %1328 = arith.addf %1325, %1327 : vector<8x128xf32>
    %cst_554 = arith.constant dense<0xFF800000> : vector<8xf32>
    %1329 = vector.multi_reduction <maximumf>, %1328, %cst_554 [1] : vector<8x128xf32> to vector<8xf32>
    %1330 = vector.shape_cast %1329 : vector<8xf32> to vector<8x1xf32>
    %1331 = vector.broadcast %1330 : vector<8x1xf32> to vector<8x128xf32>
    %1332 = arith.subf %1328, %1331 : vector<8x128xf32>
    %1333 = math.exp %1332 : vector<8x128xf32>
    %cst_555 = arith.constant dense<0.000000e+00> : vector<8xf32>
    %1334 = vector.multi_reduction <add>, %1333, %cst_555 [1] : vector<8x128xf32> to vector<8xf32>
    %1335 = vector.shape_cast %1334 : vector<8xf32> to vector<8x1xf32>
    %1336 = math.log %1335 : vector<8x1xf32>
    %1337 = vector.broadcast %1336 : vector<8x1xf32> to vector<8x128xf32>
    %1338 = arith.subf %1332, %1337 : vector<8x128xf32>
    %c0_556 = arith.constant 0 : index
    %c896_557 = arith.constant 896 : index
    %1339 = vector.load %arg13[%c0_556, %c896_557] : memref<8x1024xf32, #tpu.memory_space<vmem>>, vector<8x128xf32>
    tpu.vector_store %arg13[%c0_556, %c896_557], %1338 {strides = array<i32>} : memref<8x1024xf32, #tpu.memory_space<vmem>>, vector<8x128xf32>,
    return
  }
  func.func @transform_0(%arg0: i32) -> (i32, i32) {
    %c0_i32 = arith.constant 0 : i32
    %c0_i32_0 = arith.constant 0 : i32
    return %arg0, %c0_i32 : i32, i32
  }
  func.func @transform_1(%arg0: i32) -> (i32, i32) {
    %c0_i32 = arith.constant 0 : i32
    %c0_i32_0 = arith.constant 0 : i32
    %c0_i32_1 = arith.constant 0 : i32
    return %c0_i32, %c0_i32_0 : i32, i32
  }
  func.func @transform_2(%arg0: i32) -> (i32, i32) {
    %c0_i32 = arith.constant 0 : i32
    %c0_i32_0 = arith.constant 0 : i32
    %c0_i32_1 = arith.constant 0 : i32
    return %c0_i32, %c0_i32_0 : i32, i32
  }
  func.func @transform_3(%arg0: i32) -> (i32, i32) {
    %c0_i32 = arith.constant 0 : i32
    %c0_i32_0 = arith.constant 0 : i32
    %c0_i32_1 = arith.constant 0 : i32
    return %c0_i32, %c0_i32_0 : i32, i32
  }
  func.func @transform_4(%arg0: i32) -> (i32, i32) {
    %c0_i32 = arith.constant 0 : i32
    %c0_i32_0 = arith.constant 0 : i32
    %c0_i32_1 = arith.constant 0 : i32
    return %c0_i32, %c0_i32_0 : i32, i32
  }
  func.func @transform_5(%arg0: i32) -> (i32, i32) {
    %c0_i32 = arith.constant 0 : i32
    %c0_i32_0 = arith.constant 0 : i32
    %c0_i32_1 = arith.constant 0 : i32
    return %c0_i32, %c0_i32_0 : i32, i32
  }
  func.func @transform_6(%arg0: i32) -> (i32, i32) {
    %c0_i32 = arith.constant 0 : i32
    %c0_i32_0 = arith.constant 0 : i32
    %c0_i32_1 = arith.constant 0 : i32
    return %c0_i32, %c0_i32_0 : i32, i32
  }
  func.func @transform_7(%arg0: i32) -> (i32, i32) {
    %c0_i32 = arith.constant 0 : i32
    %c0_i32_0 = arith.constant 0 : i32
    %c0_i32_1 = arith.constant 0 : i32
    return %c0_i32, %c0_i32_0 : i32, i32
  }
  func.func @transform_8(%arg0: i32) -> (i32, i32) {
    %c0_i32 = arith.constant 0 : i32
    %c0_i32_0 = arith.constant 0 : i32
    %c0_i32_1 = arith.constant 0 : i32
    return %c0_i32, %c0_i32_0 : i32, i32
  }
  func.func @transform_9(%arg0: i32) -> (i32, i32) {
    %c0_i32 = arith.constant 0 : i32
    %c0_i32_0 = arith.constant 0 : i32
    %c0_i32_1 = arith.constant 0 : i32
    return %c0_i32, %c0_i32_0 : i32, i32
  }
  func.func @transform_10(%arg0: i32) -> (i32, i32) {
    %c0_i32 = arith.constant 0 : i32
    %c0_i32_0 = arith.constant 0 : i32
    %c0_i32_1 = arith.constant 0 : i32
    return %c0_i32, %c0_i32_0 : i32, i32
  }
  func.func @transform_11(%arg0: i32) -> (i32, i32) {
    %c0_i32 = arith.constant 0 : i32
    %c0_i32_0 = arith.constant 0 : i32
    %c0_i32_1 = arith.constant 0 : i32
    return %c0_i32, %c0_i32_0 : i32, i32
  }
  func.func @transform_12(%arg0: i32) -> (i32, i32) {
    %c0_i32 = arith.constant 0 : i32
    %c0_i32_0 = arith.constant 0 : i32
    return %arg0, %c0_i32 : i32, i32
  }
}

</mosaic_0001>

<llo_original>
// kernel: attention_forward.1
$region0: #{attention_forward.1}
  #allocation0 [shape = 'u32[]', space=smem, size = 0x4, offset = 0x4, fixed_abs, tag = 'smem constant byte address 0x4 - core index']
  #allocation1 [shape = 'u32[144,128]{1,0:T(1,128)}', space=vmem, size = 0x12000, scoped, tag = 'internal scratch']
  #allocation2 [shape = 'f32[8,8,32]{2,1,0:T(8,128)}', space=vmem, size = 0x8000, scoped, tag = 'scratch operand']
  %s0 = inlined_call_operand.vmem [shape: f32[8,1024], index: 0, kind: input, shape index: {}]
  %s1 = inlined_call_operand.vmem [shape: f32[32,128], index: 1, kind: input, shape index: {}]
  %s2 = inlined_call_operand.vmem [shape: f32[1,128], index: 2, kind: input, shape index: {}]
  %s3 = inlined_call_operand.vmem [shape: f32[128,128], index: 3, kind: input, shape index: {}]
  %s4 = inlined_call_operand.vmem [shape: f32[32,128], index: 4, kind: input, shape index: {}]
  %s5 = inlined_call_operand.vmem [shape: f32[1,128], index: 5, kind: input, shape index: {}]
  %s6 = inlined_call_operand.vmem [shape: f32[32,128], index: 6, kind: input, shape index: {}]
  %s7 = inlined_call_operand.vmem [shape: f32[1,128], index: 7, kind: input, shape index: {}]
  %s8 = inlined_call_operand.vmem [shape: f32[32,32], index: 8, kind: input, shape index: {}]
  %s9 = inlined_call_operand.vmem [shape: f32[1,32], index: 9, kind: input, shape index: {}]
  %s10 = inlined_call_operand.vmem [shape: f32[32,128], index: 10, kind: input, shape index: {}]
  %s11 = inlined_call_operand.vmem [shape: f32[1,128], index: 11, kind: input, shape index: {}]
  %s12 = inlined_call_operand.vmem [shape: f32[8,1024], index: 12, kind: output, shape index: {}]
  %s13 = sld [smem:[#allocation0]]
  $region58: #{attention_forward.1} parent=0
    _
  %s15 = ssub.s32 1, %s13
  %s16 = scalar_select 0, %s15, %s13
  // Predicated region
  $region2: #{attention_forward.1} parent=0 // pred_check
    _
  $region3: #{attention_forward.1} parent=0 // pred_check_branch
    %18 = sbr.rel (0) target = $region5
  $region4: #{attention_forward.1} parent=0 // pred_region
    _
  $region5: #{attention_forward.1} parent=0 // pred_fallthru
    _
  // Predicated region
  $region6: #{attention_forward.1} parent=0 // pred_check
    _
  $region7: #{attention_forward.1} parent=0 // pred_check_branch
    %20 = sbr.rel (0) target = $region9
  $region8: #{attention_forward.1} parent=0 // pred_region
    _
  $region9: #{attention_forward.1} parent=0 // pred_fallthru
    _
  // Predicated region
  $region10: #{attention_forward.1} parent=0 // pred_check
    _
  $region11: #{attention_forward.1} parent=0 // pred_check_branch
    %22 = sbr.rel (0) target = $region13
  $region12: #{attention_forward.1} parent=0 // pred_region
    _
  $region13: #{attention_forward.1} parent=0 // pred_fallthru
    _
  // Predicated region
  $region14: #{attention_forward.1} parent=0 // pred_check
    _
  $region15: #{attention_forward.1} parent=0 // pred_check_branch
    %24 = sbr.rel (0) target = $region17
  $region16: #{attention_forward.1} parent=0 // pred_region
    _
  $region17: #{attention_forward.1} parent=0 // pred_fallthru
    _
  // Predicated region
  $region18: #{attention_forward.1} parent=0 // pred_check
    _
  $region19: #{attention_forward.1} parent=0 // pred_check_branch
    %26 = sbr.rel (0) target = $region21
  $region20: #{attention_forward.1} parent=0 // pred_region
    _
  $region21: #{attention_forward.1} parent=0 // pred_fallthru
    _
  // Predicated region
  $region22: #{attention_forward.1} parent=0 // pred_check
    _
  $region23: #{attention_forward.1} parent=0 // pred_check_branch
    %28 = sbr.rel (0) target = $region25
  $region24: #{attention_forward.1} parent=0 // pred_region
    _
  $region25: #{attention_forward.1} parent=0 // pred_fallthru
    _
  // Predicated region
  $region26: #{attention_forward.1} parent=0 // pred_check
    _
  $region27: #{attention_forward.1} parent=0 // pred_check_branch
    %30 = sbr.rel (0) target = $region29
  $region28: #{attention_forward.1} parent=0 // pred_region
    _
  $region29: #{attention_forward.1} parent=0 // pred_fallthru
    _
  // Predicated region
  $region30: #{attention_forward.1} parent=0 // pred_check
    _
  $region31: #{attention_forward.1} parent=0 // pred_check_branch
    %32 = sbr.rel (0) target = $region33
  $region32: #{attention_forward.1} parent=0 // pred_region
    _
  $region33: #{attention_forward.1} parent=0 // pred_fallthru
    _
  // Predicated region
  $region34: #{attention_forward.1} parent=0 // pred_check
    _
  $region35: #{attention_forward.1} parent=0 // pred_check_branch
    %34 = sbr.rel (0) target = $region37
  $region36: #{attention_forward.1} parent=0 // pred_region
    _
  $region37: #{attention_forward.1} parent=0 // pred_fallthru
    _
  // Predicated region
  $region38: #{attention_forward.1} parent=0 // pred_check
    _
  $region39: #{attention_forward.1} parent=0 // pred_check_branch
    %36 = sbr.rel (0) target = $region41
  $region40: #{attention_forward.1} parent=0 // pred_region
    _
  $region41: #{attention_forward.1} parent=0 // pred_fallthru
    _
  // Predicated region
  $region42: #{attention_forward.1} parent=0 // pred_check
    _
  $region43: #{attention_forward.1} parent=0 // pred_check_branch
    %38 = sbr.rel (0) target = $region45
  $region44: #{attention_forward.1} parent=0 // pred_region
    _
  $region45: #{attention_forward.1} parent=0 // pred_fallthru
    _
  // Predicated region
  $region46: #{attention_forward.1} parent=0 // pred_check
    _
  $region47: #{attention_forward.1} parent=0 // pred_check_branch
    %40 = sbr.rel (0) target = $region49
  $region48: #{attention_forward.1} parent=0 // pred_region
    _
  $region49: #{attention_forward.1} parent=0 // pred_fallthru
    _
  %v41 = vld [vmem:[%s0] sm:$0xff]
  %v42 = vld [vmem:[%s1] sm:$0xff]
  %v43 = vld [vmem:[%s1 + $0x8] sm:$0xff]
  %v44 = vld [vmem:[%s1 + $0x10] sm:$0xff]
  %v45 = vld [vmem:[%s1 + $0x18] sm:$0xff]
  %v46 = vld [vmem:[%s2] sm:$0x1]
  %v48 = vlaneseq
  %v49 = vshrl.u32 %v48, 7
  %v50 = vsub.s32 0, %v49
  %v51 = vrot.slane %v46, %v50
  %vm53 = vcmask 261120
  %v55 = vsel %vm53, 0.0, 0
  %57 = vmatprep.subr.mxu0 0.0
  %58 = vmatpush1.msra.mxu0 %v42
  %59 = vmatprep.subr.mxu0 0.0
  %60 = vmatpush1.msra.mxu0 %v43
  %61 = vmatprep.subr.mxu0 0.0
  %62 = vmatpush1.msra.mxu0 %v44
  %63 = vmatprep.subr.mxu0 0.0
  %64 = vmatpush1.msra.mxu0 %v45
  %65 = vmatprep.subr.mxu0 0.0
  %66 = vmatpush1.msra.mxu0 0.0
  %67 = vmatprep.subr.mxu0 0.0
  %68 = vmatpush1.msra.mxu0 0.0
  %69 = vmatprep.subr.mxu0 0.0
  %70 = vmatpush1.msra.mxu0 0.0
  %71 = vmatprep.subr.mxu0 0.0
  %72 = vmatpush1.msra.mxu0 0.0
  %73 = vmatprep.subr.mxu0 0.0
  %74 = vmatpush1.msra.mxu0 0.0
  %75 = vmatprep.subr.mxu0 0.0
  %76 = vmatpush1.msra.mxu0 0.0
  %77 = vmatprep.subr.mxu0 0.0
  %78 = vmatpush1.msra.mxu0 0.0
  %79 = vmatprep.subr.mxu0 0.0
  %80 = vmatpush1.msra.mxu0 0.0
  %81 = vmatprep.subr.mxu0 0.0
  %82 = vmatpush1.msra.mxu0 0.0
  %83 = vmatprep.subr.mxu0 0.0
  %84 = vmatpush1.msra.mxu0 0.0
  %85 = vmatprep.subr.mxu0 0.0
  %86 = vmatpush1.msra.mxu0 0.0
  %87 = vmatprep.subr.mxu0 0.0
  %88 = vmatpush1.msra.mxu0 0.0
  %89 = vmatprep.subr.mxu0 0.0
  %90 = vmatpush1.msra.mxu0 0.0
  %91 = vmatprep.subr.mxu0 0.0
  %92 = vmatpush1.msra.mxu0 0.0
  %93 = vmatprep.subr.mxu0 0.0
  %94 = vmatpush1.msra.mxu0 0.0
  %95 = vmatprep.subr.mxu0 0.0
  %96 = vmatpush1.msra.mxu0 0.0
  %97 = vmatprep.subr.mxu0 0.0
  %98 = vmatpush1.msra.mxu0 0.0
  %99 = vmatprep.subr.mxu0 0.0
  %100 = vmatpush1.msra.mxu0 0.0
  %101 = vmatprep.subr.mxu0 0.0
  %102 = vmatpush1.msra.mxu0 0.0
  %103 = vmatprep.subr.mxu0 0.0
  %104 = vmatpush1.msra.mxu0 0.0
  %105 = vmatprep.subr.mxu0 0.0
  %106 = vmatpush1.msra.mxu0 0.0
  %107 = vmatprep.subr.mxu0 0.0
  %108 = vmatpush1.msra.mxu0 0.0
  %109 = vmatprep.subr.mxu0 0.0
  %110 = vmatpush1.msra.mxu0 0.0
  %111 = vmatprep.subr.mxu0 0.0
  %112 = vmatpush1.msra.mxu0 0.0
  %113 = vmatprep.subr.mxu0 0.0
  %114 = vmatpush1.msra.mxu0 0.0
  %115 = vmatprep.subr.mxu0 0.0
  %116 = vmatpush1.msra.mxu0 0.0
  %117 = vmatprep.subr.mxu0 0.0
  %118 = vmatpush1.msra.mxu0 0.0
  %119 = vmatprep.subr.mxu0 0.0
  %120 = vmatpush1.msra.mxu0 0.0
  %121 = vmatprep.mubr.f32.mxu0 0.0
  %122 = vmatmul.mubr.f32.gmra.mrb[0].mxu0 %v55
  %v123 = vpop.f32.mrb[0].mxu0
  %v124 = vadd.f32 %v51, %v123
  %v125 = vpop.f32.mrb[0].mxu0
  %126 = vdwg.mxu0
  %v127 = vadd.f32 %v41, %v124
  %v128 = vxor.u32 %v127, 2147483648
  %v129 = vmul.f32 %v128, 1.442695
  %v130 = vpow.pop %v129
  %v131 = vadd.f32 %v130, 1.0
  %v132 = vrcp.pop %v131
  %v133 = vmul.f32 1.0, %v132
  %135 = vrot.lane.b32.xlu0 %v124, 64
  %v136 = vpop.permute.xlu0 %135
  %v138 = vmul.f32 %v133, %v136
  %140 = vrot.lane.b32.xlu0 %v138, 64
  %v141 = vpop.permute.xlu0 %140
  %v143 = vadd.f32 %v41, %v141
  %v144 = vtanh.pop %v143
  %v145 = vsub.f32 1.0, %v133
  %147 = vrot.lane.b32.xlu0 %v144, 96
  %v148 = vpop.permute.xlu0 %147
  %v150 = vmul.f32 %v145, %v148
  %v151 = vmul.f32 %v133, 0.0
  %v152 = vadd.f32 %v150, %v151
  %v153 = vld [vmem:[%s8] sm:$0xff]
  %v154 = vld [vmem:[%s8 + $0x8] sm:$0xff]
  %v155 = vld [vmem:[%s8 + $0x10] sm:$0xff]
  %v156 = vld [vmem:[%s8 + $0x18] sm:$0xff]
  %158 = vrot.lane.b32.xlu0 %v152, 96
  %v159 = vpop.permute.xlu0 %158
  %v160 = vsel %vm53, %v159, 0
  %162 = vmatprep.subr.mxu0 0.0
  %163 = vmatpush1.msra.mxu0 %v153
  %164 = vmatprep.subr.mxu0 0.0
  %165 = vmatpush1.msra.mxu0 %v154
  %166 = vmatprep.subr.mxu0 0.0
  %167 = vmatpush1.msra.mxu0 %v155
  %168 = vmatprep.subr.mxu0 0.0
  %169 = vmatpush1.msra.mxu0 %v156
  %170 = vmatprep.subr.mxu0 0.0
  %171 = vmatpush1.msra.mxu0 0.0
  %172 = vmatprep.subr.mxu0 0.0
  %173 = vmatpush1.msra.mxu0 0.0
  %174 = vmatprep.subr.mxu0 0.0
  %175 = vmatpush1.msra.mxu0 0.0
  %176 = vmatprep.subr.mxu0 0.0
  %177 = vmatpush1.msra.mxu0 0.0
  %178 = vmatprep.subr.mxu0 0.0
  %179 = vmatpush1.msra.mxu0 0.0
  %180 = vmatprep.subr.mxu0 0.0
  %181 = vmatpush1.msra.mxu0 0.0
  %182 = vmatprep.subr.mxu0 0.0
  %183 = vmatpush1.msra.mxu0 0.0
  %184 = vmatprep.subr.mxu0 0.0
  %185 = vmatpush1.msra.mxu0 0.0
  %186 = vmatprep.subr.mxu0 0.0
  %187 = vmatpush1.msra.mxu0 0.0
  %188 = vmatprep.subr.mxu0 0.0
  %189 = vmatpush1.msra.mxu0 0.0
  %190 = vmatprep.subr.mxu0 0.0
  %191 = vmatpush1.msra.mxu0 0.0
  %192 = vmatprep.subr.mxu0 0.0
  %193 = vmatpush1.msra.mxu0 0.0
  %194 = vmatprep.subr.mxu0 0.0
  %195 = vmatpush1.msra.mxu0 0.0
  %196 = vmatprep.subr.mxu0 0.0
  %197 = vmatpush1.msra.mxu0 0.0
  %198 = vmatprep.subr.mxu0 0.0
  %199 = vmatpush1.msra.mxu0 0.0
  %200 = vmatprep.subr.mxu0 0.0
  %201 = vmatpush1.msra.mxu0 0.0
  %202 = vmatprep.subr.mxu0 0.0
  %203 = vmatpush1.msra.mxu0 0.0
  %204 = vmatprep.subr.mxu0 0.0
  %205 = vmatpush1.msra.mxu0 0.0
  %206 = vmatprep.subr.mxu0 0.0
  %207 = vmatpush1.msra.mxu0 0.0
  %208 = vmatprep.subr.mxu0 0.0
  %209 = vmatpush1.msra.mxu0 0.0
  %210 = vmatprep.subr.mxu0 0.0
  %211 = vmatpush1.msra.mxu0 0.0
  %212 = vmatprep.subr.mxu0 0.0
  %213 = vmatpush1.msra.mxu0 0.0
  %214 = vmatprep.subr.mxu0 0.0
  %215 = vmatpush1.msra.mxu0 0.0
  %216 = vmatprep.subr.mxu0 0.0
  %217 = vmatpush1.msra.mxu0 0.0
  %218 = vmatprep.subr.mxu0 0.0
  %219 = vmatpush1.msra.mxu0 0.0
  %220 = vmatprep.subr.mxu0 0.0
  %221 = vmatpush1.msra.mxu0 0.0
  %222 = vmatprep.subr.mxu0 0.0
  %223 = vmatpush1.msra.mxu0 0.0
  %224 = vmatprep.subr.mxu0 0.0
  %225 = vmatpush1.msra.mxu0 0.0
  %226 = vmatprep.mubr.f32.mxu0 0.0
  %227 = vmatmul.mubr.f32.gmra.mrb[0].mxu0 %v160
  %v228 = vpop.f32.mrb[0].mxu0
  %v229 = vadd.f32 0.0, %v228
  %v230 = vpop.f32.mrb[0].mxu0
  %231 = vdwg.mxu0
  %232 = vst.msk [vmem:[#allocation2] sm:$0xff] %vm53, %v229
  %v233 = vld [vmem:[%s0 + $0x8] sm:$0xff]
  %v234 = vld [vmem:[%s1] sm:$0xff]
  %v235 = vld [vmem:[%s1 + $0x8] sm:$0xff]
  %v236 = vld [vmem:[%s1 + $0x10] sm:$0xff]
  %v237 = vld [vmem:[%s1 + $0x18] sm:$0xff]
  %v238 = vld [vmem:[%s2] sm:$0x1]
  %v240 = vlaneseq
  %v241 = vshrl.u32 %v240, 7
  %v242 = vsub.s32 0, %v241
  %v243 = vrot.slane %v238, %v242
  %245 = vmatprep.subr.mxu0 0.0
  %246 = vmatpush1.msra.mxu0 %v234
  %247 = vmatprep.subr.mxu0 0.0
  %248 = vmatpush1.msra.mxu0 %v235
  %249 = vmatprep.subr.mxu0 0.0
  %250 = vmatpush1.msra.mxu0 %v236
  %251 = vmatprep.subr.mxu0 0.0
  %252 = vmatpush1.msra.mxu0 %v237
  %253 = vmatprep.subr.mxu0 0.0
  %254 = vmatpush1.msra.mxu0 0.0
  %255 = vmatprep.subr.mxu0 0.0
  %256 = vmatpush1.msra.mxu0 0.0
  %257 = vmatprep.subr.mxu0 0.0
  %258 = vmatpush1.msra.mxu0 0.0
  %259 = vmatprep.subr.mxu0 0.0
  %260 = vmatpush1.msra.mxu0 0.0
  %261 = vmatprep.subr.mxu0 0.0
  %262 = vmatpush1.msra.mxu0 0.0
  %263 = vmatprep.subr.mxu0 0.0
  %264 = vmatpush1.msra.mxu0 0.0
  %265 = vmatprep.subr.mxu0 0.0
  %266 = vmatpush1.msra.mxu0 0.0
  %267 = vmatprep.subr.mxu0 0.0
  %268 = vmatpush1.msra.mxu0 0.0
  %269 = vmatprep.subr.mxu0 0.0
  %270 = vmatpush1.msra.mxu0 0.0
  %271 = vmatprep.subr.mxu0 0.0
  %272 = vmatpush1.msra.mxu0 0.0
  %273 = vmatprep.subr.mxu0 0.0
  %274 = vmatpush1.msra.mxu0 0.0
  %275 = vmatprep.subr.mxu0 0.0
  %276 = vmatpush1.msra.mxu0 0.0
  %277 = vmatprep.subr.mxu0 0.0
  %278 = vmatpush1.msra.mxu0 0.0
  %279 = vmatprep.subr.mxu0 0.0
  %280 = vmatpush1.msra.mxu0 0.0
  %281 = vmatprep.subr.mxu0 0.0
  %282 = vmatpush1.msra.mxu0 0.0
  %283 = vmatprep.subr.mxu0 0.0
  %284 = vmatpush1.msra.mxu0 0.0
  %285 = vmatprep.subr.mxu0 0.0
  %286 = vmatpush1.msra.mxu0 0.0
  %287 = vmatprep.subr.mxu0 0.0
  %288 = vmatpush1.msra.mxu0 0.0
  %289 = vmatprep.subr.mxu0 0.0
  %290 = vmatpush1.msra.mxu0 0.0
  %291 = vmatprep.subr.mxu0 0.0
  %292 = vmatpush1.msra.mxu0 0.0
  %293 = vmatprep.subr.mxu0 0.0
  %294 = vmatpush1.msra.mxu0 0.0
  %295 = vmatprep.subr.mxu0 0.0
  %296 = vmatpush1.msra.mxu0 0.0
  %297 = vmatprep.subr.mxu0 0.0
  %298 = vmatpush1.msra.mxu0 0.0
  %299 = vmatprep.subr.mxu0 0.0
  %300 = vmatpush1.msra.mxu0 0.0
  %301 = vmatprep.subr.mxu0 0.0
  %302 = vmatpush1.msra.mxu0 0.0
  %303 = vmatprep.subr.mxu0 0.0
  %304 = vmatpush1.msra.mxu0 0.0
  %305 = vmatprep.subr.mxu0 0.0
  %306 = vmatpush1.msra.mxu0 0.0
  %307 = vmatprep.subr.mxu0 0.0
  %308 = vmatpush1.msra.mxu0 0.0
  %309 = vmatprep.mubr.f32.mxu0 0.0
  %310 = vmatmul.mubr.f32.gmra.mrb[0].mxu0 %v160
  %v311 = vpop.f32.mrb[0].mxu0
  %v312 = vadd.f32 %v243, %v311
  %v313 = vpop.f32.mrb[0].mxu0
  %314 = vdwg.mxu0
  %v315 = vadd.f32 %v233, %v312
  %v316 = vxor.u32 %v315, 2147483648
  %v317 = vmul.f32 %v316, 1.442695
  %v318 = vpow.pop %v317
  %v319 = vadd.f32 %v318, 1.0
  %v320 = vrcp.pop %v319
  %v321 = vmul.f32 1.0, %v320
  %323 = vrot.lane.b32.xlu0 %v312, 64
  %v324 = vpop.permute.xlu0 %323
  %v326 = vmul.f32 %v321, %v324
  %328 = vrot.lane.b32.xlu0 %v326, 64
  %v329 = vpop.permute.xlu0 %328
  %v331 = vadd.f32 %v233, %v329
  %v332 = vtanh.pop %v331
  %v333 = vsub.f32 1.0, %v321
  %335 = vrot.lane.b32.xlu0 %v332, 96
  %v336 = vpop.permute.xlu0 %335
  %v338 = vmul.f32 %v333, %v336
  %v339 = vmul.f32 %v321, %v152
  %v340 = vadd.f32 %v338, %v339
  %v341 = vld [vmem:[%s8] sm:$0xff]
  %v342 = vld [vmem:[%s8 + $0x8] sm:$0xff]
  %v343 = vld [vmem:[%s8 + $0x10] sm:$0xff]
  %v344 = vld [vmem:[%s8 + $0x18] sm:$0xff]
  %346 = vrot.lane.b32.xlu0 %v340, 96
  %v347 = vpop.permute.xlu0 %346
  %v348 = vsel %vm53, %v347, 0
  %350 = vmatprep.subr.mxu0 0.0
  %351 = vmatpush1.msra.mxu0 %v341
  %352 = vmatprep.subr.mxu0 0.0
  %353 = vmatpush1.msra.mxu0 %v342
  %354 = vmatprep.subr.mxu0 0.0
  %355 = vmatpush1.msra.mxu0 %v343
  %356 = vmatprep.subr.mxu0 0.0
  %357 = vmatpush1.msra.mxu0 %v344
  %358 = vmatprep.subr.mxu0 0.0
  %359 = vmatpush1.msra.mxu0 0.0
  %360 = vmatprep.subr.mxu0 0.0
  %361 = vmatpush1.msra.mxu0 0.0
  %362 = vmatprep.subr.mxu0 0.0
  %363 = vmatpush1.msra.mxu0 0.0
  %364 = vmatprep.subr.mxu0 0.0
  %365 = vmatpush1.msra.mxu0 0.0
  %366 = vmatprep.subr.mxu0 0.0
  %367 = vmatpush1.msra.mxu0 0.0
  %368 = vmatprep.subr.mxu0 0.0
  %369 = vmatpush1.msra.mxu0 0.0
  %370 = vmatprep.subr.mxu0 0.0
  %371 = vmatpush1.msra.mxu0 0.0
  %372 = vmatprep.subr.mxu0 0.0
  %373 = vmatpush1.msra.mxu0 0.0
  %374 = vmatprep.subr.mxu0 0.0
  %375 = vmatpush1.msra.mxu0 0.0
  %376 = vmatprep.subr.mxu0 0.0
  %377 = vmatpush1.msra.mxu0 0.0
  %378 = vmatprep.subr.mxu0 0.0
  %379 = vmatpush1.msra.mxu0 0.0
  %380 = vmatprep.subr.mxu0 0.0
  %381 = vmatpush1.msra.mxu0 0.0
  %382 = vmatprep.subr.mxu0 0.0
  %383 = vmatpush1.msra.mxu0 0.0
  %384 = vmatprep.subr.mxu0 0.0
  %385 = vmatpush1.msra.mxu0 0.0
  %386 = vmatprep.subr.mxu0 0.0
  %387 = vmatpush1.msra.mxu0 0.0
  %388 = vmatprep.subr.mxu0 0.0
  %389 = vmatpush1.msra.mxu0 0.0
  %390 = vmatprep.subr.mxu0 0.0
  %391 = vmatpush1.msra.mxu0 0.0
  %392 = vmatprep.subr.mxu0 0.0
  %393 = vmatpush1.msra.mxu0 0.0
  %394 = vmatprep.subr.mxu0 0.0
  %395 = vmatpush1.msra.mxu0 0.0
  %396 = vmatprep.subr.mxu0 0.0
  %397 = vmatpush1.msra.mxu0 0.0
  %398 = vmatprep.subr.mxu0 0.0
  %399 = vmatpush1.msra.mxu0 0.0
  %400 = vmatprep.subr.mxu0 0.0
  %401 = vmatpush1.msra.mxu0 0.0
  %402 = vmatprep.subr.mxu0 0.0
  %403 = vmatpush1.msra.mxu0 0.0
  %404 = vmatprep.subr.mxu0 0.0
  %405 = vmatpush1.msra.mxu0 0.0
  %406 = vmatprep.subr.mxu0 0.0
  %407 = vmatpush1.msra.mxu0 0.0
  %408 = vmatprep.subr.mxu0 0.0
  %409 = vmatpush1.msra.mxu0 0.0
  %410 = vmatprep.subr.mxu0 0.0
  %411 = vmatpush1.msra.mxu0 0.0
  %412 = vmatprep.subr.mxu0 0.0
  %413 = vmatpush1.msra.mxu0 0.0
  %414 = vmatprep.mubr.f32.mxu0 0.0
  %415 = vmatmul.mubr.f32.gmra.mrb[0].mxu0 %v348
  %v416 = vpop.f32.mrb[0].mxu0
  %v417 = vadd.f32 0.0, %v416
  %v418 = vpop.f32.mrb[0].mxu0
  %419 = vdwg.mxu0
  %s420 = scalar_lea.vmem [#allocation2], 8
  %421 = vst.msk [vmem:[%s420] sm:$0xff] %vm53, %v417
  %v422 = vld [vmem:[%s0 + $0x10] sm:$0xff]
  %v423 = vld [vmem:[%s1] sm:$0xff]
  %v424 = vld [vmem:[%s1 + $0x8] sm:$0xff]
  %v425 = vld [vmem:[%s1 + $0x10] sm:$0xff]
  %v426 = vld [vmem:[%s1 + $0x18] sm:$0xff]
  %v427 = vld [vmem:[%s2] sm:$0x1]
  %v429 = vlaneseq
  %v430 = vshrl.u32 %v429, 7
  %v431 = vsub.s32 0, %v430
  %v432 = vrot.slane %v427, %v431
  %434 = vmatprep.subr.mxu0 0.0
  %435 = vmatpush1.msra.mxu0 %v423
  %436 = vmatprep.subr.mxu0 0.0
  %437 = vmatpush1.msra.mxu0 %v424
  %438 = vmatprep.subr.mxu0 0.0
  %439 = vmatpush1.msra.mxu0 %v425
  %440 = vmatprep.subr.mxu0 0.0
  %441 = vmatpush1.msra.mxu0 %v426
  %442 = vmatprep.subr.mxu0 0.0
  %443 = vmatpush1.msra.mxu0 0.0
  %444 = vmatprep.subr.mxu0 0.0
  %445 = vmatpush1.msra.mxu0 0.0
  %446 = vmatprep.subr.mxu0 0.0
  %447 = vmatpush1.msra.mxu0 0.0
  %448 = vmatprep.subr.mxu0 0.0
  %449 = vmatpush1.msra.mxu0 0.0
  %450 = vmatprep.subr.mxu0 0.0
  %451 = vmatpush1.msra.mxu0 0.0
  %452 = vmatprep.subr.mxu0 0.0
  %453 = vmatpush1.msra.mxu0 0.0
  %454 = vmatprep.subr.mxu0 0.0
  %455 = vmatpush1.msra.mxu0 0.0
  %456 = vmatprep.subr.mxu0 0.0
  %457 = vmatpush1.msra.mxu0 0.0
  %458 = vmatprep.subr.mxu0 0.0
  %459 = vmatpush1.msra.mxu0 0.0
  %460 = vmatprep.subr.mxu0 0.0
  %461 = vmatpush1.msra.mxu0 0.0
  %462 = vmatprep.subr.mxu0 0.0
  %463 = vmatpush1.msra.mxu0 0.0
  %464 = vmatprep.subr.mxu0 0.0
  %465 = vmatpush1.msra.mxu0 0.0
  %466 = vmatprep.subr.mxu0 0.0
  %467 = vmatpush1.msra.mxu0 0.0
  %468 = vmatprep.subr.mxu0 0.0
  %469 = vmatpush1.msra.mxu0 0.0
  %470 = vmatprep.subr.mxu0 0.0
  %471 = vmatpush1.msra.mxu0 0.0
  %472 = vmatprep.subr.mxu0 0.0
  %473 = vmatpush1.msra.mxu0 0.0
  %474 = vmatprep.subr.mxu0 0.0
  %475 = vmatpush1.msra.mxu0 0.0
  %476 = vmatprep.subr.mxu0 0.0
  %477 = vmatpush1.msra.mxu0 0.0
  %478 = vmatprep.subr.mxu0 0.0
  %479 = vmatpush1.msra.mxu0 0.0
  %480 = vmatprep.subr.mxu0 0.0
  %481 = vmatpush1.msra.mxu0 0.0
  %482 = vmatprep.subr.mxu0 0.0
  %483 = vmatpush1.msra.mxu0 0.0
  %484 = vmatprep.subr.mxu0 0.0
  %485 = vmatpush1.msra.mxu0 0.0
  %486 = vmatprep.subr.mxu0 0.0
  %487 = vmatpush1.msra.mxu0 0.0
  %488 = vmatprep.subr.mxu0 0.0
  %489 = vmatpush1.msra.mxu0 0.0
  %490 = vmatprep.subr.mxu0 0.0
  %491 = vmatpush1.msra.mxu0 0.0
  %492 = vmatprep.subr.mxu0 0.0
  %493 = vmatpush1.msra.mxu0 0.0
  %494 = vmatprep.subr.mxu0 0.0
  %495 = vmatpush1.msra.mxu0 0.0
  %496 = vmatprep.subr.mxu0 0.0
  %497 = vmatpush1.msra.mxu0 0.0
  %498 = vmatprep.mubr.f32.mxu0 0.0
  %499 = vmatmul.mubr.f32.gmra.mrb[0].mxu0 %v348
  %v500 = vpop.f32.mrb[0].mxu0
  %v501 = vadd.f32 %v432, %v500
  %v502 = vpop.f32.mrb[0].mxu0
  %503 = vdwg.mxu0
  %v504 = vadd.f32 %v422, %v501
  %v505 = vxor.u32 %v504, 2147483648
  %v506 = vmul.f32 %v505, 1.442695
  %v507 = vpow.pop %v506
  %v508 = vadd.f32 %v507, 1.0
  %v509 = vrcp.pop %v508
  %v510 = vmul.f32 1.0, %v509
  %512 = vrot.lane.b32.xlu0 %v501, 64
  %v513 = vpop.permute.xlu0 %512
  %v515 = vmul.f32 %v510, %v513
  %517 = vrot.lane.b32.xlu0 %v515, 64
  %v518 = vpop.permute.xlu0 %517
  %v520 = vadd.f32 %v422, %v518
  %v521 = vtanh.pop %v520
  %v522 = vsub.f32 1.0, %v510
  %524 = vrot.lane.b32.xlu0 %v521, 96
  %v525 = vpop.permute.xlu0 %524
  %v527 = vmul.f32 %v522, %v525
  %v528 = vmul.f32 %v510, %v340
  %v529 = vadd.f32 %v527, %v528
  %v530 = vld [vmem:[%s8] sm:$0xff]
  %v531 = vld [vmem:[%s8 + $0x8] sm:$0xff]
  %v532 = vld [vmem:[%s8 + $0x10] sm:$0xff]
  %v533 = vld [vmem:[%s8 + $0x18] sm:$0xff]
  %535 = vrot.lane.b32.xlu0 %v529, 96
  %v536 = vpop.permute.xlu0 %535
  %v537 = vsel %vm53, %v536, 0
  %539 = vmatprep.subr.mxu0 0.0
  %540 = vmatpush1.msra.mxu0 %v530
  %541 = vmatprep.subr.mxu0 0.0
  %542 = vmatpush1.msra.mxu0 %v531
  %543 = vmatprep.subr.mxu0 0.0
  %544 = vmatpush1.msra.mxu0 %v532
  %545 = vmatprep.subr.mxu0 0.0
  %546 = vmatpush1.msra.mxu0 %v533
  %547 = vmatprep.subr.mxu0 0.0
  %548 = vmatpush1.msra.mxu0 0.0
  %549 = vmatprep.subr.mxu0 0.0
  %550 = vmatpush1.msra.mxu0 0.0
  %551 = vmatprep.subr.mxu0 0.0
  %552 = vmatpush1.msra.mxu0 0.0
  %553 = vmatprep.subr.mxu0 0.0
  %554 = vmatpush1.msra.mxu0 0.0
  %555 = vmatprep.subr.mxu0 0.0
  %556 = vmatpush1.msra.mxu0 0.0
  %557 = vmatprep.subr.mxu0 0.0
  %558 = vmatpush1.msra.mxu0 0.0
  %559 = vmatprep.subr.mxu0 0.0
  %560 = vmatpush1.msra.mxu0 0.0
  %561 = vmatprep.subr.mxu0 0.0
  %562 = vmatpush1.msra.mxu0 0.0
  %563 = vmatprep.subr.mxu0 0.0
  %564 = vmatpush1.msra.mxu0 0.0
  %565 = vmatprep.subr.mxu0 0.0
  %566 = vmatpush1.msra.mxu0 0.0
  %567 = vmatprep.subr.mxu0 0.0
  %568 = vmatpush1.msra.mxu0 0.0
  %569 = vmatprep.subr.mxu0 0.0
  %570 = vmatpush1.msra.mxu0 0.0
  %571 = vmatprep.subr.mxu0 0.0
  %572 = vmatpush1.msra.mxu0 0.0
  %573 = vmatprep.subr.mxu0 0.0
  %574 = vmatpush1.msra.mxu0 0.0
  %575 = vmatprep.subr.mxu0 0.0
  %576 = vmatpush1.msra.mxu0 0.0
  %577 = vmatprep.subr.mxu0 0.0
  %578 = vmatpush1.msra.mxu0 0.0
  %579 = vmatprep.subr.mxu0 0.0
  %580 = vmatpush1.msra.mxu0 0.0
  %581 = vmatprep.subr.mxu0 0.0
  %582 = vmatpush1.msra.mxu0 0.0
  %583 = vmatprep.subr.mxu0 0.0
  %584 = vmatpush1.msra.mxu0 0.0
  %585 = vmatprep.subr.mxu0 0.0
  %586 = vmatpush1.msra.mxu0 0.0
  %587 = vmatprep.subr.mxu0 0.0
  %588 = vmatpush1.msra.mxu0 0.0
  %589 = vmatprep.subr.mxu0 0.0
  %590 = vmatpush1.msra.mxu0 0.0
  %591 = vmatprep.subr.mxu0 0.0
  %592 = vmatpush1.msra.mxu0 0.0
  %593 = vmatprep.subr.mxu0 0.0
  %594 = vmatpush1.msra.mxu0 0.0
  %595 = vmatprep.subr.mxu0 0.0
  %596 = vmatpush1.msra.mxu0 0.0
  %597 = vmatprep.subr.mxu0 0.0
  %598 = vmatpush1.msra.mxu0 0.0
  %599 = vmatprep.subr.mxu0 0.0
  %600 = vmatpush1.msra.mxu0 0.0
  %601 = vmatprep.subr.mxu0 0.0
  %602 = vmatpush1.msra.mxu0 0.0
  %603 = vmatprep.mubr.f32.mxu0 0.0
  %604 = vmatmul.mubr.f32.gmra.mrb[0].mxu0 %v537
  %v605 = vpop.f32.mrb[0].mxu0
  %v606 = vadd.f32 0.0, %v605
  %v607 = vpop.f32.mrb[0].mxu0
  %608 = vdwg.mxu0
  %s609 = scalar_lea.vmem [#allocation2], 16
  %610 = vst.msk [vmem:[%s609] sm:$0xff] %vm53, %v606
  %v611 = vld [vmem:[%s0 + $0x18] sm:$0xff]
  %v612 = vld [vmem:[%s1] sm:$0xff]
  %v613 = vld [vmem:[%s1 + $0x8] sm:$0xff]
  %v614 = vld [vmem:[%s1 + $0x10] sm:$0xff]
  %v615 = vld [vmem:[%s1 + $0x18] sm:$0xff]
  %v616 = vld [vmem:[%s2] sm:$0x1]
  %v618 = vlaneseq
  %v619 = vshrl.u32 %v618, 7
  %v620 = vsub.s32 0, %v619
  %v621 = vrot.slane %v616, %v620
  %623 = vmatprep.subr.mxu0 0.0
  %624 = vmatpush1.msra.mxu0 %v612
  %625 = vmatprep.subr.mxu0 0.0
  %626 = vmatpush1.msra.mxu0 %v613
  %627 = vmatprep.subr.mxu0 0.0
  %628 = vmatpush1.msra.mxu0 %v614
  %629 = vmatprep.subr.mxu0 0.0
  %630 = vmatpush1.msra.mxu0 %v615
  %631 = vmatprep.subr.mxu0 0.0
  %632 = vmatpush1.msra.mxu0 0.0
  %633 = vmatprep.subr.mxu0 0.0
  %634 = vmatpush1.msra.mxu0 0.0
  %635 = vmatprep.subr.mxu0 0.0
  %636 = vmatpush1.msra.mxu0 0.0
  %637 = vmatprep.subr.mxu0 0.0
  %638 = vmatpush1.msra.mxu0 0.0
  %639 = vmatprep.subr.mxu0 0.0
  %640 = vmatpush1.msra.mxu0 0.0
  %641 = vmatprep.subr.mxu0 0.0
  %642 = vmatpush1.msra.mxu0 0.0
  %643 = vmatprep.subr.mxu0 0.0
  %644 = vmatpush1.msra.mxu0 0.0
  %645 = vmatprep.subr.mxu0 0.0
  %646 = vmatpush1.msra.mxu0 0.0
  %647 = vmatprep.subr.mxu0 0.0
  %648 = vmatpush1.msra.mxu0 0.0
  %649 = vmatprep.subr.mxu0 0.0
  %650 = vmatpush1.msra.mxu0 0.0
  %651 = vmatprep.subr.mxu0 0.0
  %652 = vmatpush1.msra.mxu0 0.0
  %653 = vmatprep.subr.mxu0 0.0
  %654 = vmatpush1.msra.mxu0 0.0
  %655 = vmatprep.subr.mxu0 0.0
  %656 = vmatpush1.msra.mxu0 0.0
  %657 = vmatprep.subr.mxu0 0.0
  %658 = vmatpush1.msra.mxu0 0.0
  %659 = vmatprep.subr.mxu0 0.0
  %660 = vmatpush1.msra.mxu0 0.0
  %661 = vmatprep.subr.mxu0 0.0
  %662 = vmatpush1.msra.mxu0 0.0
  %663 = vmatprep.subr.mxu0 0.0
  %664 = vmatpush1.msra.mxu0 0.0
  %665 = vmatprep.subr.mxu0 0.0
  %666 = vmatpush1.msra.mxu0 0.0
  %667 = vmatprep.subr.mxu0 0.0
  %668 = vmatpush1.msra.mxu0 0.0
  %669 = vmatprep.subr.mxu0 0.0
  %670 = vmatpush1.msra.mxu0 0.0
  %671 = vmatprep.subr.mxu0 0.0
  %672 = vmatpush1.msra.mxu0 0.0
  %673 = vmatprep.subr.mxu0 0.0
  %674 = vmatpush1.msra.mxu0 0.0
  %675 = vmatprep.subr.mxu0 0.0
  %676 = vmatpush1.msra.mxu0 0.0
  %677 = vmatprep.subr.mxu0 0.0
  %678 = vmatpush1.msra.mxu0 0.0
  %679 = vmatprep.subr.mxu0 0.0
  %680 = vmatpush1.msra.mxu0 0.0
  %681 = vmatprep.subr.mxu0 0.0
  %682 = vmatpush1.msra.mxu0 0.0
  %683 = vmatprep.subr.mxu0 0.0
  %684 = vmatpush1.msra.mxu0 0.0
  %685 = vmatprep.subr.mxu0 0.0
  %686 = vmatpush1.msra.mxu0 0.0
  %687 = vmatprep.mubr.f32.mxu0 0.0
  %688 = vmatmul.mubr.f32.gmra.mrb[0].mxu0 %v537
  %v689 = vpop.f32.mrb[0].mxu0
  %v690 = vadd.f32 %v621, %v689
  %v691 = vpop.f32.mrb[0].mxu0
  %692 = vdwg.mxu0
  %v693 = vadd.f32 %v611, %v690
  %v694 = vxor.u32 %v693, 2147483648
  %v695 = vmul.f32 %v694, 1.442695
  %v696 = vpow.pop %v695
  %v697 = vadd.f32 %v696, 1.0
  %v698 = vrcp.pop %v697
  %v699 = vmul.f32 1.0, %v698
  %701 = vrot.lane.b32.xlu0 %v690, 64
  %v702 = vpop.permute.xlu0 %701
  %v704 = vmul.f32 %v699, %v702
  %706 = vrot.lane.b32.xlu0 %v704, 64
  %v707 = vpop.permute.xlu0 %706
  %v709 = vadd.f32 %v611, %v707
  %v710 = vtanh.pop %v709
  %v711 = vsub.f32 1.0, %v699
  %713 = vrot.lane.b32.xlu0 %v710, 96
  %v714 = vpop.permute.xlu0 %713
  %v716 = vmul.f32 %v711, %v714
  %v717 = vmul.f32 %v699, %v529
  %v718 = vadd.f32 %v716, %v717
  %v719 = vld [vmem:[%s8] sm:$0xff]
  %v720 = vld [vmem:[%s8 + $0x8] sm:$0xff]
  %v721 = vld [vmem:[%s8 + $0x10] sm:$0xff]
  %v722 = vld [vmem:[%s8 + $0x18] sm:$0xff]
  %724 = vrot.lane.b32.xlu0 %v718, 96
  %v725 = vpop.permute.xlu0 %724
  %v726 = vsel %vm53, %v725, 0
  %728 = vmatprep.subr.mxu0 0.0
  %729 = vmatpush1.msra.mxu0 %v719
  %730 = vmatprep.subr.mxu0 0.0
  %731 = vmatpush1.msra.mxu0 %v720
  %732 = vmatprep.subr.mxu0 0.0
  %733 = vmatpush1.msra.mxu0 %v721
  %734 = vmatprep.subr.mxu0 0.0
  %735 = vmatpush1.msra.mxu0 %v722
  %736 = vmatprep.subr.mxu0 0.0
  %737 = vmatpush1.msra.mxu0 0.0
  %738 = vmatprep.subr.mxu0 0.0
  %739 = vmatpush1.msra.mxu0 0.0
  %740 = vmatprep.subr.mxu0 0.0
  %741 = vmatpush1.msra.mxu0 0.0
  %742 = vmatprep.subr.mxu0 0.0
  %743 = vmatpush1.msra.mxu0 0.0
  %744 = vmatprep.subr.mxu0 0.0
  %745 = vmatpush1.msra.mxu0 0.0
  %746 = vmatprep.subr.mxu0 0.0
  %747 = vmatpush1.msra.mxu0 0.0
  %748 = vmatprep.subr.mxu0 0.0
  %749 = vmatpush1.msra.mxu0 0.0
  %750 = vmatprep.subr.mxu0 0.0
  %751 = vmatpush1.msra.mxu0 0.0
  %752 = vmatprep.subr.mxu0 0.0
  %753 = vmatpush1.msra.mxu0 0.0
  %754 = vmatprep.subr.mxu0 0.0
  %755 = vmatpush1.msra.mxu0 0.0
  %756 = vmatprep.subr.mxu0 0.0
  %757 = vmatpush1.msra.mxu0 0.0
  %758 = vmatprep.subr.mxu0 0.0
  %759 = vmatpush1.msra.mxu0 0.0
  %760 = vmatprep.subr.mxu0 0.0
  %761 = vmatpush1.msra.mxu0 0.0
  %762 = vmatprep.subr.mxu0 0.0
  %763 = vmatpush1.msra.mxu0 0.0
  %764 = vmatprep.subr.mxu0 0.0
  %765 = vmatpush1.msra.mxu0 0.0
  %766 = vmatprep.subr.mxu0 0.0
  %767 = vmatpush1.msra.mxu0 0.0
  %768 = vmatprep.subr.mxu0 0.0
  %769 = vmatpush1.msra.mxu0 0.0
  %770 = vmatprep.subr.mxu0 0.0
  %771 = vmatpush1.msra.mxu0 0.0
  %772 = vmatprep.subr.mxu0 0.0
  %773 = vmatpush1.msra.mxu0 0.0
  %774 = vmatprep.subr.mxu0 0.0
  %775 = vmatpush1.msra.mxu0 0.0
  %776 = vmatprep.subr.mxu0 0.0
  %777 = vmatpush1.msra.mxu0 0.0
  %778 = vmatprep.subr.mxu0 0.0
  %779 = vmatpush1.msra.mxu0 0.0
  %780 = vmatprep.subr.mxu0 0.0
  %781 = vmatpush1.msra.mxu0 0.0
  %782 = vmatprep.subr.mxu0 0.0
  %783 = vmatpush1.msra.mxu0 0.0
  %784 = vmatprep.subr.mxu0 0.0
  %785 = vmatpush1.msra.mxu0 0.0
  %786 = vmatprep.subr.mxu0 0.0
  %787 = vmatpush1.msra.mxu0 0.0
  %788 = vmatprep.subr.mxu0 0.0
  %789 = vmatpush1.msra.mxu0 0.0
  %790 = vmatprep.subr.mxu0 0.0
  %791 = vmatpush1.msra.mxu0 0.0
  %792 = vmatprep.mubr.f32.mxu0 0.0
  %793 = vmatmul.mubr.f32.gmra.mrb[0].mxu0 %v726
  %v794 = vpop.f32.mrb[0].mxu0
  %v795 = vadd.f32 0.0, %v794
  %v796 = vpop.f32.mrb[0].mxu0
  %797 = vdwg.mxu0
  %s798 = scalar_lea.vmem [#allocation2], 24
  %799 = vst.msk [vmem:[%s798] sm:$0xff] %vm53, %v795
  %v800 = vld [vmem:[%s0 + $0x20] sm:$0xff]
  %v801 = vld [vmem:[%s1] sm:$0xff]
  %v802 = vld [vmem:[%s1 + $0x8] sm:$0xff]
  %v803 = vld [vmem:[%s1 + $0x10] sm:$0xff]
  %v804 = vld [vmem:[%s1 + $0x18] sm:$0xff]
  %v805 = vld [vmem:[%s2] sm:$0x1]
  %v807 = vlaneseq
  %v808 = vshrl.u32 %v807, 7
  %v809 = vsub.s32 0, %v808
  %v810 = vrot.slane %v805, %v809
  %812 = vmatprep.subr.mxu0 0.0
  %813 = vmatpush1.msra.mxu0 %v801
  %814 = vmatprep.subr.mxu0 0.0
  %815 = vmatpush1.msra.mxu0 %v802
  %816 = vmatprep.subr.mxu0 0.0
  %817 = vmatpush1.msra.mxu0 %v803
  %818 = vmatprep.subr.mxu0 0.0
  %819 = vmatpush1.msra.mxu0 %v804
  %820 = vmatprep.subr.mxu0 0.0
  %821 = vmatpush1.msra.mxu0 0.0
  %822 = vmatprep.subr.mxu0 0.0
  %823 = vmatpush1.msra.mxu0 0.0
  %824 = vmatprep.subr.mxu0 0.0
  %825 = vmatpush1.msra.mxu0 0.0
  %826 = vmatprep.subr.mxu0 0.0
  %827 = vmatpush1.msra.mxu0 0.0
  %828 = vmatprep.subr.mxu0 0.0
  %829 = vmatpush1.msra.mxu0 0.0
  %830 = vmatprep.subr.mxu0 0.0
  %831 = vmatpush1.msra.mxu0 0.0
  %832 = vmatprep.subr.mxu0 0.0
  %833 = vmatpush1.msra.mxu0 0.0
  %834 = vmatprep.subr.mxu0 0.0
  %835 = vmatpush1.msra.mxu0 0.0
  %836 = vmatprep.subr.mxu0 0.0
  %837 = vmatpush1.msra.mxu0 0.0
  %838 = vmatprep.subr.mxu0 0.0
  %839 = vmatpush1.msra.mxu0 0.0
  %840 = vmatprep.subr.mxu0 0.0
  %841 = vmatpush1.msra.mxu0 0.0
  %842 = vmatprep.subr.mxu0 0.0
  %843 = vmatpush1.msra.mxu0 0.0
  %844 = vmatprep.subr.mxu0 0.0
  %845 = vmatpush1.msra.mxu0 0.0
  %846 = vmatprep.subr.mxu0 0.0
  %847 = vmatpush1.msra.mxu0 0.0
  %848 = vmatprep.subr.mxu0 0.0
  %849 = vmatpush1.msra.mxu0 0.0
  %850 = vmatprep.subr.mxu0 0.0
  %851 = vmatpush1.msra.mxu0 0.0
  %852 = vmatprep.subr.mxu0 0.0
  %853 = vmatpush1.msra.mxu0 0.0
  %854 = vmatprep.subr.mxu0 0.0
  %855 = vmatpush1.msra.mxu0 0.0
  %856 = vmatprep.subr.mxu0 0.0
  %857 = vmatpush1.msra.mxu0 0.0
  %858 = vmatprep.subr.mxu0 0.0
  %859 = vmatpush1.msra.mxu0 0.0
  %860 = vmatprep.subr.mxu0 0.0
  %861 = vmatpush1.msra.mxu0 0.0
  %862 = vmatprep.subr.mxu0 0.0
  %863 = vmatpush1.msra.mxu0 0.0
  %864 = vmatprep.subr.mxu0 0.0
  %865 = vmatpush1.msra.mxu0 0.0
  %866 = vmatprep.subr.mxu0 0.0
  %867 = vmatpush1.msra.mxu0 0.0
  %868 = vmatprep.subr.mxu0 0.0
  %869 = vmatpush1.msra.mxu0 0.0
  %870 = vmatprep.subr.mxu0 0.0
  %871 = vmatpush1.msra.mxu0 0.0
  %872 = vmatprep.subr.mxu0 0.0
  %873 = vmatpush1.msra.mxu0 0.0
  %874 = vmatprep.subr.mxu0 0.0
  %875 = vmatpush1.msra.mxu0 0.0
  %876 = vmatprep.mubr.f32.mxu0 0.0
  %877 = vmatmul.mubr.f32.gmra.mrb[0].mxu0 %v726
  %v878 = vpop.f32.mrb[0].mxu0
  %v879 = vadd.f32 %v810, %v878
  %v880 = vpop.f32.mrb[0].mxu0
  %881 = vdwg.mxu0
  %v882 = vadd.f32 %v800, %v879
  %v883 = vxor.u32 %v882, 2147483648
  %v884 = vmul.f32 %v883, 1.442695
  %v885 = vpow.pop %v884
  %v886 = vadd.f32 %v885, 1.0
  %v887 = vrcp.pop %v886
  %v888 = vmul.f32 1.0, %v887
  %890 = vrot.lane.b32.xlu0 %v879, 64
  %v891 = vpop.permute.xlu0 %890
  %v893 = vmul.f32 %v888, %v891
  %895 = vrot.lane.b32.xlu0 %v893, 64
  %v896 = vpop.permute.xlu0 %895
  %v898 = vadd.f32 %v800, %v896
  %v899 = vtanh.pop %v898
  %v900 = vsub.f32 1.0, %v888
  %902 = vrot.lane.b32.xlu0 %v899, 96
  %v903 = vpop.permute.xlu0 %902
  %v905 = vmul.f32 %v900, %v903
  %v906 = vmul.f32 %v888, %v718
  %v907 = vadd.f32 %v905, %v906
  %v908 = vld [vmem:[%s8] sm:$0xff]
  %v909 = vld [vmem:[%s8 + $0x8] sm:$0xff]
  %v910 = vld [vmem:[%s8 + $0x10] sm:$0xff]
  %v911 = vld [vmem:[%s8 + $0x18] sm:$0xff]
  %913 = vrot.lane.b32.xlu0 %v907, 96
  %v914 = vpop.permute.xlu0 %913
  %v915 = vsel %vm53, %v914, 0
  %917 = vmatprep.subr.mxu0 0.0
  %918 = vmatpush1.msra.mxu0 %v908
  %919 = vmatprep.subr.mxu0 0.0
  %920 = vmatpush1.msra.mxu0 %v909
  %921 = vmatprep.subr.mxu0 0.0
  %922 = vmatpush1.msra.mxu0 %v910
  %923 = vmatprep.subr.mxu0 0.0
  %924 = vmatpush1.msra.mxu0 %v911
  %925 = vmatprep.subr.mxu0 0.0
  %926 = vmatpush1.msra.mxu0 0.0
  %927 = vmatprep.subr.mxu0 0.0
  %928 = vmatpush1.msra.mxu0 0.0
  %929 = vmatprep.subr.mxu0 0.0
  %930 = vmatpush1.msra.mxu0 0.0
  %931 = vmatprep.subr.mxu0 0.0
  %932 = vmatpush1.msra.mxu0 0.0
  %933 = vmatprep.subr.mxu0 0.0
  %934 = vmatpush1.msra.mxu0 0.0
  %935 = vmatprep.subr.mxu0 0.0
  %936 = vmatpush1.msra.mxu0 0.0
  %937 = vmatprep.subr.mxu0 0.0
  %938 = vmatpush1.msra.mxu0 0.0
  %939 = vmatprep.subr.mxu0 0.0
  %940 = vmatpush1.msra.mxu0 0.0
  %941 = vmatprep.subr.mxu0 0.0
  %942 = vmatpush1.msra.mxu0 0.0
  %943 = vmatprep.subr.mxu0 0.0
  %944 = vmatpush1.msra.mxu0 0.0
  %945 = vmatprep.subr.mxu0 0.0
  %946 = vmatpush1.msra.mxu0 0.0
  %947 = vmatprep.subr.mxu0 0.0
  %948 = vmatpush1.msra.mxu0 0.0
  %949 = vmatprep.subr.mxu0 0.0
  %950 = vmatpush1.msra.mxu0 0.0
  %951 = vmatprep.subr.mxu0 0.0
  %952 = vmatpush1.msra.mxu0 0.0
  %953 = vmatprep.subr.mxu0 0.0
  %954 = vmatpush1.msra.mxu0 0.0
  %955 = vmatprep.subr.mxu0 0.0
  %956 = vmatpush1.msra.mxu0 0.0
  %957 = vmatprep.subr.mxu0 0.0
  %958 = vmatpush1.msra.mxu0 0.0
  %959 = vmatprep.subr.mxu0 0.0
  %960 = vmatpush1.msra.mxu0 0.0
  %961 = vmatprep.subr.mxu0 0.0
  %962 = vmatpush1.msra.mxu0 0.0
  %963 = vmatprep.subr.mxu0 0.0
  %964 = vmatpush1.msra.mxu0 0.0
  %965 = vmatprep.subr.mxu0 0.0
  %966 = vmatpush1.msra.mxu0 0.0
  %967 = vmatprep.subr.mxu0 0.0
  %968 = vmatpush1.msra.mxu0 0.0
  %969 = vmatprep.subr.mxu0 0.0
  %970 = vmatpush1.msra.mxu0 0.0
  %971 = vmatprep.subr.mxu0 0.0
  %972 = vmatpush1.msra.mxu0 0.0
  %973 = vmatprep.subr.mxu0 0.0
  %974 = vmatpush1.msra.mxu0 0.0
  %975 = vmatprep.subr.mxu0 0.0
  %976 = vmatpush1.msra.mxu0 0.0
  %977 = vmatprep.subr.mxu0 0.0
  %978 = vmatpush1.msra.mxu0 0.0
  %979 = vmatprep.subr.mxu0 0.0
  %980 = vmatpush1.msra.mxu0 0.0
  %981 = vmatprep.mubr.f32.mxu0 0.0
  %982 = vmatmul.mubr.f32.gmra.mrb[0].mxu0 %v915
  %v983 = vpop.f32.mrb[0].mxu0
  %v984 = vadd.f32 0.0, %v983
  %v985 = vpop.f32.mrb[0].mxu0
  %986 = vdwg.mxu0
  %s987 = scalar_lea.vmem [#allocation2], 32
  %988 = vst.msk [vmem:[%s987] sm:$0xff] %vm53, %v984
  %v989 = vld [vmem:[%s0 + $0x28] sm:$0xff]
  %v990 = vld [vmem:[%s1] sm:$0xff]
  %v991 = vld [vmem:[%s1 + $0x8] sm:$0xff]
  %v992 = vld [vmem:[%s1 + $0x10] sm:$0xff]
  %v993 = vld [vmem:[%s1 + $0x18] sm:$0xff]
  %v994 = vld [vmem:[%s2] sm:$0x1]
  %v996 = vlaneseq
  %v997 = vshrl.u32 %v996, 7
  %v998 = vsub.s32 0, %v997
  %v999 = vrot.slane %v994, %v998
  %1001 = vmatprep.subr.mxu0 0.0
  %1002 = vmatpush1.msra.mxu0 %v990
  %1003 = vmatprep.subr.mxu0 0.0
  %1004 = vmatpush1.msra.mxu0 %v991
  %1005 = vmatprep.subr.mxu0 0.0
  %1006 = vmatpush1.msra.mxu0 %v992
  %1007 = vmatprep.subr.mxu0 0.0
  %1008 = vmatpush1.msra.mxu0 %v993
  %1009 = vmatprep.subr.mxu0 0.0
  %1010 = vmatpush1.msra.mxu0 0.0
  %1011 = vmatprep.subr.mxu0 0.0
  %1012 = vmatpush1.msra.mxu0 0.0
  %1013 = vmatprep.subr.mxu0 0.0
  %1014 = vmatpush1.msra.mxu0 0.0
  %1015 = vmatprep.subr.mxu0 0.0
  %1016 = vmatpush1.msra.mxu0 0.0
  %1017 = vmatprep.subr.mxu0 0.0
  %1018 = vmatpush1.msra.mxu0 0.0
  %1019 = vmatprep.subr.mxu0 0.0
  %1020 = vmatpush1.msra.mxu0 0.0
  %1021 = vmatprep.subr.mxu0 0.0
  %1022 = vmatpush1.msra.mxu0 0.0
  %1023 = vmatprep.subr.mxu0 0.0
  %1024 = vmatpush1.msra.mxu0 0.0
  %1025 = vmatprep.subr.mxu0 0.0
  %1026 = vmatpush1.msra.mxu0 0.0
  %1027 = vmatprep.subr.mxu0 0.0
  %1028 = vmatpush1.msra.mxu0 0.0
  %1029 = vmatprep.subr.mxu0 0.0
  %1030 = vmatpush1.msra.mxu0 0.0
  %1031 = vmatprep.subr.mxu0 0.0
  %1032 = vmatpush1.msra.mxu0 0.0
  %1033 = vmatprep.subr.mxu0 0.0
  %1034 = vmatpush1.msra.mxu0 0.0
  %1035 = vmatprep.subr.mxu0 0.0
  %1036 = vmatpush1.msra.mxu0 0.0
  %1037 = vmatprep.subr.mxu0 0.0
  %1038 = vmatpush1.msra.mxu0 0.0
  %1039 = vmatprep.subr.mxu0 0.0
  %1040 = vmatpush1.msra.mxu0 0.0
  %1041 = vmatprep.subr.mxu0 0.0
  %1042 = vmatpush1.msra.mxu0 0.0
  %1043 = vmatprep.subr.mxu0 0.0
  %1044 = vmatpush1.msra.mxu0 0.0
  %1045 = vmatprep.subr.mxu0 0.0
  %1046 = vmatpush1.msra.mxu0 0.0
  %1047 = vmatprep.subr.mxu0 0.0
  %1048 = vmatpush1.msra.mxu0 0.0
  %1049 = vmatprep.subr.mxu0 0.0
  %1050 = vmatpush1.msra.mxu0 0.0
  %1051 = vmatprep.subr.mxu0 0.0
  %1052 = vmatpush1.msra.mxu0 0.0
  %1053 = vmatprep.subr.mxu0 0.0
  %1054 = vmatpush1.msra.mxu0 0.0
  %1055 = vmatprep.subr.mxu0 0.0
  %1056 = vmatpush1.msra.mxu0 0.0
  %1057 = vmatprep.subr.mxu0 0.0
  %1058 = vmatpush1.msra.mxu0 0.0
  %1059 = vmatprep.subr.mxu0 0.0
  %1060 = vmatpush1.msra.mxu0 0.0
  %1061 = vmatprep.subr.mxu0 0.0
  %1062 = vmatpush1.msra.mxu0 0.0
  %1063 = vmatprep.subr.mxu0 0.0
  %1064 = vmatpush1.msra.mxu0 0.0
  %1065 = vmatprep.mubr.f32.mxu0 0.0
  %1066 = vmatmul.mubr.f32.gmra.mrb[0].mxu0 %v915
  %v1067 = vpop.f32.mrb[0].mxu0
  %v1068 = vadd.f32 %v999, %v1067
  %v1069 = vpop.f32.mrb[0].mxu0
  %1070 = vdwg.mxu0
  %v1071 = vadd.f32 %v989, %v1068
  %v1072 = vxor.u32 %v1071, 2147483648
  %v1073 = vmul.f32 %v1072, 1.442695
  %v1074 = vpow.pop %v1073
  %v1075 = vadd.f32 %v1074, 1.0
  %v1076 = vrcp.pop %v1075
  %v1077 = vmul.f32 1.0, %v1076
  %1079 = vrot.lane.b32.xlu0 %v1068, 64
  %v1080 = vpop.permute.xlu0 %1079
  %v1082 = vmul.f32 %v1077, %v1080
  %1084 = vrot.lane.b32.xlu0 %v1082, 64
  %v1085 = vpop.permute.xlu0 %1084
  %v1087 = vadd.f32 %v989, %v1085
  %v1088 = vtanh.pop %v1087
  %v1089 = vsub.f32 1.0, %v1077
  %1091 = vrot.lane.b32.xlu0 %v1088, 96
  %v1092 = vpop.permute.xlu0 %1091
  %v1094 = vmul.f32 %v1089, %v1092
  %v1095 = vmul.f32 %v1077, %v907
  %v1096 = vadd.f32 %v1094, %v1095
  %v1097 = vld [vmem:[%s8] sm:$0xff]
  %v1098 = vld [vmem:[%s8 + $0x8] sm:$0xff]
  %v1099 = vld [vmem:[%s8 + $0x10] sm:$0xff]
  %v1100 = vld [vmem:[%s8 + $0x18] sm:$0xff]
  %1102 = vrot.lane.b32.xlu0 %v1096, 96
  %v1103 = vpop.permute.xlu0 %1102
  %v1104 = vsel %vm53, %v1103, 0
  %1106 = vmatprep.subr.mxu0 0.0
  %1107 = vmatpush1.msra.mxu0 %v1097
  %1108 = vmatprep.subr.mxu0 0.0
  %1109 = vmatpush1.msra.mxu0 %v1098
  %1110 = vmatprep.subr.mxu0 0.0
  %1111 = vmatpush1.msra.mxu0 %v1099
  %1112 = vmatprep.subr.mxu0 0.0
  %1113 = vmatpush1.msra.mxu0 %v1100
  %1114 = vmatprep.subr.mxu0 0.0
  %1115 = vmatpush1.msra.mxu0 0.0
  %1116 = vmatprep.subr.mxu0 0.0
  %1117 = vmatpush1.msra.mxu0 0.0
  %1118 = vmatprep.subr.mxu0 0.0
  %1119 = vmatpush1.msra.mxu0 0.0
  %1120 = vmatprep.subr.mxu0 0.0
  %1121 = vmatpush1.msra.mxu0 0.0
  %1122 = vmatprep.subr.mxu0 0.0
  %1123 = vmatpush1.msra.mxu0 0.0
  %1124 = vmatprep.subr.mxu0 0.0
  %1125 = vmatpush1.msra.mxu0 0.0
  %1126 = vmatprep.subr.mxu0 0.0
  %1127 = vmatpush1.msra.mxu0 0.0
  %1128 = vmatprep.subr.mxu0 0.0
  %1129 = vmatpush1.msra.mxu0 0.0
  %1130 = vmatprep.subr.mxu0 0.0
  %1131 = vmatpush1.msra.mxu0 0.0
  %1132 = vmatprep.subr.mxu0 0.0
  %1133 = vmatpush1.msra.mxu0 0.0
  %1134 = vmatprep.subr.mxu0 0.0
  %1135 = vmatpush1.msra.mxu0 0.0
  %1136 = vmatprep.subr.mxu0 0.0
  %1137 = vmatpush1.msra.mxu0 0.0
  %1138 = vmatprep.subr.mxu0 0.0
  %1139 = vmatpush1.msra.mxu0 0.0
  %1140 = vmatprep.subr.mxu0 0.0
  %1141 = vmatpush1.msra.mxu0 0.0
  %1142 = vmatprep.subr.mxu0 0.0
  %1143 = vmatpush1.msra.mxu0 0.0
  %1144 = vmatprep.subr.mxu0 0.0
  %1145 = vmatpush1.msra.mxu0 0.0
  %1146 = vmatprep.subr.mxu0 0.0
  %1147 = vmatpush1.msra.mxu0 0.0
  %1148 = vmatprep.subr.mxu0 0.0
  %1149 = vmatpush1.msra.mxu0 0.0
  %1150 = vmatprep.subr.mxu0 0.0
  %1151 = vmatpush1.msra.mxu0 0.0
  %1152 = vmatprep.subr.mxu0 0.0
  %1153 = vmatpush1.msra.mxu0 0.0
  %1154 = vmatprep.subr.mxu0 0.0
  %1155 = vmatpush1.msra.mxu0 0.0
  %1156 = vmatprep.subr.mxu0 0.0
  %1157 = vmatpush1.msra.mxu0 0.0
  %1158 = vmatprep.subr.mxu0 0.0
  %1159 = vmatpush1.msra.mxu0 0.0
  %1160 = vmatprep.subr.mxu0 0.0
  %1161 = vmatpush1.msra.mxu0 0.0
  %1162 = vmatprep.subr.mxu0 0.0
  %1163 = vmatpush1.msra.mxu0 0.0
  %1164 = vmatprep.subr.mxu0 0.0
  %1165 = vmatpush1.msra.mxu0 0.0
  %1166 = vmatprep.subr.mxu0 0.0
  %1167 = vmatpush1.msra.mxu0 0.0
  %1168 = vmatprep.subr.mxu0 0.0
  %1169 = vmatpush1.msra.mxu0 0.0
  %1170 = vmatprep.mubr.f32.mxu0 0.0
  %1171 = vmatmul.mubr.f32.gmra.mrb[0].mxu0 %v1104
  %v1172 = vpop.f32.mrb[0].mxu0
  %v1173 = vadd.f32 0.0, %v1172
  %v1174 = vpop.f32.mrb[0].mxu0
  %1175 = vdwg.mxu0
  %s1176 = scalar_lea.vmem [#allocation2], 40
  %1177 = vst.msk [vmem:[%s1176] sm:$0xff] %vm53, %v1173
  %v1178 = vld [vmem:[%s0 + $0x30] sm:$0xff]
  %v1179 = vld [vmem:[%s1] sm:$0xff]
  %v1180 = vld [vmem:[%s1 + $0x8] sm:$0xff]
  %v1181 = vld [vmem:[%s1 + $0x10] sm:$0xff]
  %v1182 = vld [vmem:[%s1 + $0x18] sm:$0xff]
  %v1183 = vld [vmem:[%s2] sm:$0x1]
  %v1185 = vlaneseq
  %v1186 = vshrl.u32 %v1185, 7
  %v1187 = vsub.s32 0, %v1186
  %v1188 = vrot.slane %v1183, %v1187
  %1190 = vmatprep.subr.mxu0 0.0
  %1191 = vmatpush1.msra.mxu0 %v1179
  %1192 = vmatprep.subr.mxu0 0.0
  %1193 = vmatpush1.msra.mxu0 %v1180
  %1194 = vmatprep.subr.mxu0 0.0
  %1195 = vmatpush1.msra.mxu0 %v1181
  %1196 = vmatprep.subr.mxu0 0.0
  %1197 = vmatpush1.msra.mxu0 %v1182
  %1198 = vmatprep.subr.mxu0 0.0
  %1199 = vmatpush1.msra.mxu0 0.0
  %1200 = vmatprep.subr.mxu0 0.0
  %1201 = vmatpush1.msra.mxu0 0.0
  %1202 = vmatprep.subr.mxu0 0.0
  %1203 = vmatpush1.msra.mxu0 0.0
  %1204 = vmatprep.subr.mxu0 0.0
  %1205 = vmatpush1.msra.mxu0 0.0
  %1206 = vmatprep.subr.mxu0 0.0
  %1207 = vmatpush1.msra.mxu0 0.0
  %1208 = vmatprep.subr.mxu0 0.0
  %1209 = vmatpush1.msra.mxu0 0.0
  %1210 = vmatprep.subr.mxu0 0.0
  %1211 = vmatpush1.msra.mxu0 0.0
  %1212 = vmatprep.subr.mxu0 0.0
  %1213 = vmatpush1.msra.mxu0 0.0
  %1214 = vmatprep.subr.mxu0 0.0
  %1215 = vmatpush1.msra.mxu0 0.0
  %1216 = vmatprep.subr.mxu0 0.0
  %1217 = vmatpush1.msra.mxu0 0.0
  %1218 = vmatprep.subr.mxu0 0.0
  %1219 = vmatpush1.msra.mxu0 0.0
  %1220 = vmatprep.subr.mxu0 0.0
  %1221 = vmatpush1.msra.mxu0 0.0
  %1222 = vmatprep.subr.mxu0 0.0
  %1223 = vmatpush1.msra.mxu0 0.0
  %1224 = vmatprep.subr.mxu0 0.0
  %1225 = vmatpush1.msra.mxu0 0.0
  %1226 = vmatprep.subr.mxu0 0.0
  %1227 = vmatpush1.msra.mxu0 0.0
  %1228 = vmatprep.subr.mxu0 0.0
  %1229 = vmatpush1.msra.mxu0 0.0
  %1230 = vmatprep.subr.mxu0 0.0
  %1231 = vmatpush1.msra.mxu0 0.0
  %1232 = vmatprep.subr.mxu0 0.0
  %1233 = vmatpush1.msra.mxu0 0.0
  %1234 = vmatprep.subr.mxu0 0.0
  %1235 = vmatpush1.msra.mxu0 0.0
  %1236 = vmatprep.subr.mxu0 0.0
  %1237 = vmatpush1.msra.mxu0 0.0
  %1238 = vmatprep.subr.mxu0 0.0
  %1239 = vmatpush1.msra.mxu0 0.0
  %1240 = vmatprep.subr.mxu0 0.0
  %1241 = vmatpush1.msra.mxu0 0.0
  %1242 = vmatprep.subr.mxu0 0.0
  %1243 = vmatpush1.msra.mxu0 0.0
  %1244 = vmatprep.subr.mxu0 0.0
  %1245 = vmatpush1.msra.mxu0 0.0
  %1246 = vmatprep.subr.mxu0 0.0
  %1247 = vmatpush1.msra.mxu0 0.0
  %1248 = vmatprep.subr.mxu0 0.0
  %1249 = vmatpush1.msra.mxu0 0.0
  %1250 = vmatprep.subr.mxu0 0.0
  %1251 = vmatpush1.msra.mxu0 0.0
  %1252 = vmatprep.subr.mxu0 0.0
  %1253 = vmatpush1.msra.mxu0 0.0
  %1254 = vmatprep.mubr.f32.mxu0 0.0
  %1255 = vmatmul.mubr.f32.gmra.mrb[0].mxu0 %v1104
  %v1256 = vpop.f32.mrb[0].mxu0
  %v1257 = vadd.f32 %v1188, %v1256
  %v1258 = vpop.f32.mrb[0].mxu0
  %1259 = vdwg.mxu0
  %v1260 = vadd.f32 %v1178, %v1257
  %v1261 = vxor.u32 %v1260, 2147483648
  %v1262 = vmul.f32 %v1261, 1.442695
  %v1263 = vpow.pop %v1262
  %v1264 = vadd.f32 %v1263, 1.0
  %v1265 = vrcp.pop %v1264
  %v1266 = vmul.f32 1.0, %v1265
  %1268 = vrot.lane.b32.xlu0 %v1257, 64
  %v1269 = vpop.permute.xlu0 %1268
  %v1271 = vmul.f32 %v1266, %v1269
  %1273 = vrot.lane.b32.xlu0 %v1271, 64
  %v1274 = vpop.permute.xlu0 %1273
  %v1276 = vadd.f32 %v1178, %v1274
  %v1277 = vtanh.pop %v1276
  %v1278 = vsub.f32 1.0, %v1266
  %1280 = vrot.lane.b32.xlu0 %v1277, 96
  %v1281 = vpop.permute.xlu0 %1280
  %v1283 = vmul.f32 %v1278, %v1281
  %v1284 = vmul.f32 %v1266, %v1096
  %v1285 = vadd.f32 %v1283, %v1284
  %v1286 = vld [vmem:[%s8] sm:$0xff]
  %v1287 = vld [vmem:[%s8 + $0x8] sm:$0xff]
  %v1288 = vld [vmem:[%s8 + $0x10] sm:$0xff]
  %v1289 = vld [vmem:[%s8 + $0x18] sm:$0xff]
  %1291 = vrot.lane.b32.xlu0 %v1285, 96
  %v1292 = vpop.permute.xlu0 %1291
  %v1293 = vsel %vm53, %v1292, 0
  %1295 = vmatprep.subr.mxu0 0.0
  %1296 = vmatpush1.msra.mxu0 %v1286
  %1297 = vmatprep.subr.mxu0 0.0
  %1298 = vmatpush1.msra.mxu0 %v1287
  %1299 = vmatprep.subr.mxu0 0.0
  %1300 = vmatpush1.msra.mxu0 %v1288
  %1301 = vmatprep.subr.mxu0 0.0
  %1302 = vmatpush1.msra.mxu0 %v1289
  %1303 = vmatprep.subr.mxu0 0.0
  %1304 = vmatpush1.msra.mxu0 0.0
  %1305 = vmatprep.subr.mxu0 0.0
  %1306 = vmatpush1.msra.mxu0 0.0
  %1307 = vmatprep.subr.mxu0 0.0
  %1308 = vmatpush1.msra.mxu0 0.0
  %1309 = vmatprep.subr.mxu0 0.0
  %1310 = vmatpush1.msra.mxu0 0.0
  %1311 = vmatprep.subr.mxu0 0.0
  %1312 = vmatpush1.msra.mxu0 0.0
  %1313 = vmatprep.subr.mxu0 0.0
  %1314 = vmatpush1.msra.mxu0 0.0
  %1315 = vmatprep.subr.mxu0 0.0
  %1316 = vmatpush1.msra.mxu0 0.0
  %1317 = vmatprep.subr.mxu0 0.0
  %1318 = vmatpush1.msra.mxu0 0.0
  %1319 = vmatprep.subr.mxu0 0.0
  %1320 = vmatpush1.msra.mxu0 0.0
  %1321 = vmatprep.subr.mxu0 0.0
  %1322 = vmatpush1.msra.mxu0 0.0
  %1323 = vmatprep.subr.mxu0 0.0
  %1324 = vmatpush1.msra.mxu0 0.0
  %1325 = vmatprep.subr.mxu0 0.0
  %1326 = vmatpush1.msra.mxu0 0.0
  %1327 = vmatprep.subr.mxu0 0.0
  %1328 = vmatpush1.msra.mxu0 0.0
  %1329 = vmatprep.subr.mxu0 0.0
  %1330 = vmatpush1.msra.mxu0 0.0
  %1331 = vmatprep.subr.mxu0 0.0
  %1332 = vmatpush1.msra.mxu0 0.0
  %1333 = vmatprep.subr.mxu0 0.0
  %1334 = vmatpush1.msra.mxu0 0.0
  %1335 = vmatprep.subr.mxu0 0.0
  %1336 = vmatpush1.msra.mxu0 0.0
  %1337 = vmatprep.subr.mxu0 0.0
  %1338 = vmatpush1.msra.mxu0 0.0
  %1339 = vmatprep.subr.mxu0 0.0
  %1340 = vmatpush1.msra.mxu0 0.0
  %1341 = vmatprep.subr.mxu0 0.0
  %1342 = vmatpush1.msra.mxu0 0.0
  %1343 = vmatprep.subr.mxu0 0.0
  %1344 = vmatpush1.msra.mxu0 0.0
  %1345 = vmatprep.subr.mxu0 0.0
  %1346 = vmatpush1.msra.mxu0 0.0
  %1347 = vmatprep.subr.mxu0 0.0
  %1348 = vmatpush1.msra.mxu0 0.0
  %1349 = vmatprep.subr.mxu0 0.0
  %1350 = vmatpush1.msra.mxu0 0.0
  %1351 = vmatprep.subr.mxu0 0.0
  %1352 = vmatpush1.msra.mxu0 0.0
  %1353 = vmatprep.subr.mxu0 0.0
  %1354 = vmatpush1.msra.mxu0 0.0
  %1355 = vmatprep.subr.mxu0 0.0
  %1356 = vmatpush1.msra.mxu0 0.0
  %1357 = vmatprep.subr.mxu0 0.0
  %1358 = vmatpush1.msra.mxu0 0.0
  %1359 = vmatprep.mubr.f32.mxu0 0.0
  %1360 = vmatmul.mubr.f32.gmra.mrb[0].mxu0 %v1293
  %v1361 = vpop.f32.mrb[0].mxu0
  %v1362 = vadd.f32 0.0, %v1361
  %v1363 = vpop.f32.mrb[0].mxu0
  %1364 = vdwg.mxu0
  %s1365 = scalar_lea.vmem [#allocation2], 48
  %1366 = vst.msk [vmem:[%s1365] sm:$0xff] %vm53, %v1362
  %v1367 = vld [vmem:[%s0 + $0x38] sm:$0xff]
  %v1368 = vld [vmem:[%s1] sm:$0xff]
  %v1369 = vld [vmem:[%s1 + $0x8] sm:$0xff]
  %v1370 = vld [vmem:[%s1 + $0x10] sm:$0xff]
  %v1371 = vld [vmem:[%s1 + $0x18] sm:$0xff]
  %v1372 = vld [vmem:[%s2] sm:$0x1]
  %v1374 = vlaneseq
  %v1375 = vshrl.u32 %v1374, 7
  %v1376 = vsub.s32 0, %v1375
  %v1377 = vrot.slane %v1372, %v1376
  %1379 = vmatprep.subr.mxu0 0.0
  %1380 = vmatpush1.msra.mxu0 %v1368
  %1381 = vmatprep.subr.mxu0 0.0
  %1382 = vmatpush1.msra.mxu0 %v1369
  %1383 = vmatprep.subr.mxu0 0.0
  %1384 = vmatpush1.msra.mxu0 %v1370
  %1385 = vmatprep.subr.mxu0 0.0
  %1386 = vmatpush1.msra.mxu0 %v1371
  %1387 = vmatprep.subr.mxu0 0.0
  %1388 = vmatpush1.msra.mxu0 0.0
  %1389 = vmatprep.subr.mxu0 0.0
  %1390 = vmatpush1.msra.mxu0 0.0
  %1391 = vmatprep.subr.mxu0 0.0
  %1392 = vmatpush1.msra.mxu0 0.0
  %1393 = vmatprep.subr.mxu0 0.0
  %1394 = vmatpush1.msra.mxu0 0.0
  %1395 = vmatprep.subr.mxu0 0.0
  %1396 = vmatpush1.msra.mxu0 0.0
  %1397 = vmatprep.subr.mxu0 0.0
  %1398 = vmatpush1.msra.mxu0 0.0
  %1399 = vmatprep.subr.mxu0 0.0
  %1400 = vmatpush1.msra.mxu0 0.0
  %1401 = vmatprep.subr.mxu0 0.0
  %1402 = vmatpush1.msra.mxu0 0.0
  %1403 = vmatprep.subr.mxu0 0.0
  %1404 = vmatpush1.msra.mxu0 0.0
  %1405 = vmatprep.subr.mxu0 0.0
  %1406 = vmatpush1.msra.mxu0 0.0
  %1407 = vmatprep.subr.mxu0 0.0
  %1408 = vmatpush1.msra.mxu0 0.0
  %1409 = vmatprep.subr.mxu0 0.0
  %1410 = vmatpush1.msra.mxu0 0.0
  %1411 = vmatprep.subr.mxu0 0.0
  %1412 = vmatpush1.msra.mxu0 0.0
  %1413 = vmatprep.subr.mxu0 0.0
  %1414 = vmatpush1.msra.mxu0 0.0
  %1415 = vmatprep.subr.mxu0 0.0
  %1416 = vmatpush1.msra.mxu0 0.0
  %1417 = vmatprep.subr.mxu0 0.0
  %1418 = vmatpush1.msra.mxu0 0.0
  %1419 = vmatprep.subr.mxu0 0.0
  %1420 = vmatpush1.msra.mxu0 0.0
  %1421 = vmatprep.subr.mxu0 0.0
  %1422 = vmatpush1.msra.mxu0 0.0
  %1423 = vmatprep.subr.mxu0 0.0
  %1424 = vmatpush1.msra.mxu0 0.0
  %1425 = vmatprep.subr.mxu0 0.0
  %1426 = vmatpush1.msra.mxu0 0.0
  %1427 = vmatprep.subr.mxu0 0.0
  %1428 = vmatpush1.msra.mxu0 0.0
  %1429 = vmatprep.subr.mxu0 0.0
  %1430 = vmatpush1.msra.mxu0 0.0
  %1431 = vmatprep.subr.mxu0 0.0
  %1432 = vmatpush1.msra.mxu0 0.0
  %1433 = vmatprep.subr.mxu0 0.0
  %1434 = vmatpush1.msra.mxu0 0.0
  %1435 = vmatprep.subr.mxu0 0.0
  %1436 = vmatpush1.msra.mxu0 0.0
  %1437 = vmatprep.subr.mxu0 0.0
  %1438 = vmatpush1.msra.mxu0 0.0
  %1439 = vmatprep.subr.mxu0 0.0
  %1440 = vmatpush1.msra.mxu0 0.0
  %1441 = vmatprep.subr.mxu0 0.0
  %1442 = vmatpush1.msra.mxu0 0.0
  %1443 = vmatprep.mubr.f32.mxu0 0.0
  %1444 = vmatmul.mubr.f32.gmra.mrb[0].mxu0 %v1293
  %v1445 = vpop.f32.mrb[0].mxu0
  %v1446 = vadd.f32 %v1377, %v1445
  %v1447 = vpop.f32.mrb[0].mxu0
  %1448 = vdwg.mxu0
  %v1449 = vadd.f32 %v1367, %v1446
  %v1450 = vxor.u32 %v1449, 2147483648
  %v1451 = vmul.f32 %v1450, 1.442695
  %v1452 = vpow.pop %v1451
  %v1453 = vadd.f32 %v1452, 1.0
  %v1454 = vrcp.pop %v1453
  %v1455 = vmul.f32 1.0, %v1454
  %1457 = vrot.lane.b32.xlu0 %v1446, 64
  %v1458 = vpop.permute.xlu0 %1457
  %v1460 = vmul.f32 %v1455, %v1458
  %1462 = vrot.lane.b32.xlu0 %v1460, 64
  %v1463 = vpop.permute.xlu0 %1462
  %v1465 = vadd.f32 %v1367, %v1463
  %v1466 = vtanh.pop %v1465
  %v1467 = vsub.f32 1.0, %v1455
  %1469 = vrot.lane.b32.xlu0 %v1466, 96
  %v1470 = vpop.permute.xlu0 %1469
  %v1472 = vmul.f32 %v1467, %v1470
  %v1473 = vmul.f32 %v1455, %v1285
  %v1474 = vadd.f32 %v1472, %v1473
  %v1475 = vld [vmem:[%s8] sm:$0xff]
  %v1476 = vld [vmem:[%s8 + $0x8] sm:$0xff]
  %v1477 = vld [vmem:[%s8 + $0x10] sm:$0xff]
  %v1478 = vld [vmem:[%s8 + $0x18] sm:$0xff]
  %1480 = vrot.lane.b32.xlu0 %v1474, 96
  %v1481 = vpop.permute.xlu0 %1480
  %v1482 = vsel %vm53, %v1481, 0
  %1484 = vmatprep.subr.mxu0 0.0
  %1485 = vmatpush1.msra.mxu0 %v1475
  %1486 = vmatprep.subr.mxu0 0.0
  %1487 = vmatpush1.msra.mxu0 %v1476
  %1488 = vmatprep.subr.mxu0 0.0
  %1489 = vmatpush1.msra.mxu0 %v1477
  %1490 = vmatprep.subr.mxu0 0.0
  %1491 = vmatpush1.msra.mxu0 %v1478
  %1492 = vmatprep.subr.mxu0 0.0
  %1493 = vmatpush1.msra.mxu0 0.0
  %1494 = vmatprep.subr.mxu0 0.0
  %1495 = vmatpush1.msra.mxu0 0.0
  %1496 = vmatprep.subr.mxu0 0.0
  %1497 = vmatpush1.msra.mxu0 0.0
  %1498 = vmatprep.subr.mxu0 0.0
  %1499 = vmatpush1.msra.mxu0 0.0
  %1500 = vmatprep.subr.mxu0 0.0
  %1501 = vmatpush1.msra.mxu0 0.0
  %1502 = vmatprep.subr.mxu0 0.0
  %1503 = vmatpush1.msra.mxu0 0.0
  %1504 = vmatprep.subr.mxu0 0.0
  %1505 = vmatpush1.msra.mxu0 0.0
  %1506 = vmatprep.subr.mxu0 0.0
  %1507 = vmatpush1.msra.mxu0 0.0
  %1508 = vmatprep.subr.mxu0 0.0
  %1509 = vmatpush1.msra.mxu0 0.0
  %1510 = vmatprep.subr.mxu0 0.0
  %1511 = vmatpush1.msra.mxu0 0.0
  %1512 = vmatprep.subr.mxu0 0.0
  %1513 = vmatpush1.msra.mxu0 0.0
  %1514 = vmatprep.subr.mxu0 0.0
  %1515 = vmatpush1.msra.mxu0 0.0
  %1516 = vmatprep.subr.mxu0 0.0
  %1517 = vmatpush1.msra.mxu0 0.0
  %1518 = vmatprep.subr.mxu0 0.0
  %1519 = vmatpush1.msra.mxu0 0.0
  %1520 = vmatprep.subr.mxu0 0.0
  %1521 = vmatpush1.msra.mxu0 0.0
  %1522 = vmatprep.subr.mxu0 0.0
  %1523 = vmatpush1.msra.mxu0 0.0
  %1524 = vmatprep.subr.mxu0 0.0
  %1525 = vmatpush1.msra.mxu0 0.0
  %1526 = vmatprep.subr.mxu0 0.0
  %1527 = vmatpush1.msra.mxu0 0.0
  %1528 = vmatprep.subr.mxu0 0.0
  %1529 = vmatpush1.msra.mxu0 0.0
  %1530 = vmatprep.subr.mxu0 0.0
  %1531 = vmatpush1.msra.mxu0 0.0
  %1532 = vmatprep.subr.mxu0 0.0
  %1533 = vmatpush1.msra.mxu0 0.0
  %1534 = vmatprep.subr.mxu0 0.0
  %1535 = vmatpush1.msra.mxu0 0.0
  %1536 = vmatprep.subr.mxu0 0.0
  %1537 = vmatpush1.msra.mxu0 0.0
  %1538 = vmatprep.subr.mxu0 0.0
  %1539 = vmatpush1.msra.mxu0 0.0
  %1540 = vmatprep.subr.mxu0 0.0
  %1541 = vmatpush1.msra.mxu0 0.0
  %1542 = vmatprep.subr.mxu0 0.0
  %1543 = vmatpush1.msra.mxu0 0.0
  %1544 = vmatprep.subr.mxu0 0.0
  %1545 = vmatpush1.msra.mxu0 0.0
  %1546 = vmatprep.subr.mxu0 0.0
  %1547 = vmatpush1.msra.mxu0 0.0
  %1548 = vmatprep.mubr.f32.mxu0 0.0
  %1549 = vmatmul.mubr.f32.gmra.mrb[0].mxu0 %v1482
  %v1550 = vpop.f32.mrb[0].mxu0
  %v1551 = vadd.f32 0.0, %v1550
  %v1552 = vpop.f32.mrb[0].mxu0
  %1553 = vdwg.mxu0
  %s1554 = scalar_lea.vmem [#allocation2], 56
  %1555 = vst.msk [vmem:[%s1554] sm:$0xff] %vm53, %v1551
  %v1556 = vlaneseq
  %v1557 = vand.u32 %v1556, 127
  %vm1558 = vcmp.eq.s32.totalorder %v1557, 8
  %v1559 = vsel %vm1558, 1, 0
  %v1560 = vcvt.s32.f32 %v1559
  %v1561 = vld [vmem:[%s3] sm:$0xff]
  %v1562 = vld [vmem:[%s3 + $0x8] sm:$0xff]
  %v1563 = vld [vmem:[%s3 + $0x10] sm:$0xff]
  %v1564 = vld [vmem:[%s3 + $0x18] sm:$0xff]
  %v1565 = vld [vmem:[%s3 + $0x20] sm:$0xff]
  %v1566 = vld [vmem:[%s3 + $0x28] sm:$0xff]
  %v1567 = vld [vmem:[%s3 + $0x30] sm:$0xff]
  %v1568 = vld [vmem:[%s3 + $0x38] sm:$0xff]
  %v1569 = vld [vmem:[%s3 + $0x40] sm:$0xff]
  %v1570 = vld [vmem:[%s3 + $0x48] sm:$0xff]
  %v1571 = vld [vmem:[%s3 + $0x50] sm:$0xff]
  %v1572 = vld [vmem:[%s3 + $0x58] sm:$0xff]
  %v1573 = vld [vmem:[%s3 + $0x60] sm:$0xff]
  %v1574 = vld [vmem:[%s3 + $0x68] sm:$0xff]
  %v1575 = vld [vmem:[%s3 + $0x70] sm:$0xff]
  %v1576 = vld [vmem:[%s3 + $0x78] sm:$0xff]
  %1577 = vmatprep.subr.mxu0 0.0
  %1578 = vmatpush1.msra.mxu0 %v1561
  %1579 = vmatprep.subr.mxu0 0.0
  %1580 = vmatpush1.msra.mxu0 %v1562
  %1581 = vmatprep.subr.mxu0 0.0
  %1582 = vmatpush1.msra.mxu0 %v1563
  %1583 = vmatprep.subr.mxu0 0.0
  %1584 = vmatpush1.msra.mxu0 %v1564
  %1585 = vmatprep.subr.mxu0 0.0
  %1586 = vmatpush1.msra.mxu0 %v1565
  %1587 = vmatprep.subr.mxu0 0.0
  %1588 = vmatpush1.msra.mxu0 %v1566
  %1589 = vmatprep.subr.mxu0 0.0
  %1590 = vmatpush1.msra.mxu0 %v1567
  %1591 = vmatprep.subr.mxu0 0.0
  %1592 = vmatpush1.msra.mxu0 %v1568
  %1593 = vmatprep.subr.mxu0 0.0
  %1594 = vmatpush1.msra.mxu0 %v1569
  %1595 = vmatprep.subr.mxu0 0.0
  %1596 = vmatpush1.msra.mxu0 %v1570
  %1597 = vmatprep.subr.mxu0 0.0
  %1598 = vmatpush1.msra.mxu0 %v1571
  %1599 = vmatprep.subr.mxu0 0.0
  %1600 = vmatpush1.msra.mxu0 %v1572
  %1601 = vmatprep.subr.mxu0 0.0
  %1602 = vmatpush1.msra.mxu0 %v1573
  %1603 = vmatprep.subr.mxu0 0.0
  %1604 = vmatpush1.msra.mxu0 %v1574
  %1605 = vmatprep.subr.mxu0 0.0
  %1606 = vmatpush1.msra.mxu0 %v1575
  %1607 = vmatprep.subr.mxu0 0.0
  %1608 = vmatpush1.msra.mxu0 %v1576
  %1609 = vmatprep.subr.mxu0 0.0
  %1610 = vmatpush1.msra.mxu0 0.0
  %1611 = vmatprep.subr.mxu0 0.0
  %1612 = vmatpush1.msra.mxu0 0.0
  %1613 = vmatprep.subr.mxu0 0.0
  %1614 = vmatpush1.msra.mxu0 0.0
  %1615 = vmatprep.subr.mxu0 0.0
  %1616 = vmatpush1.msra.mxu0 0.0
  %1617 = vmatprep.subr.mxu0 0.0
  %1618 = vmatpush1.msra.mxu0 0.0
  %1619 = vmatprep.subr.mxu0 0.0
  %1620 = vmatpush1.msra.mxu0 0.0
  %1621 = vmatprep.subr.mxu0 0.0
  %1622 = vmatpush1.msra.mxu0 0.0
  %1623 = vmatprep.subr.mxu0 0.0
  %1624 = vmatpush1.msra.mxu0 0.0
  %1625 = vmatprep.subr.mxu0 0.0
  %1626 = vmatpush1.msra.mxu0 0.0
  %1627 = vmatprep.subr.mxu0 0.0
  %1628 = vmatpush1.msra.mxu0 0.0
  %1629 = vmatprep.subr.mxu0 0.0
  %1630 = vmatpush1.msra.mxu0 0.0
  %1631 = vmatprep.subr.mxu0 0.0
  %1632 = vmatpush1.msra.mxu0 0.0
  %1633 = vmatprep.subr.mxu0 0.0
  %1634 = vmatpush1.msra.mxu0 0.0
  %1635 = vmatprep.subr.mxu0 0.0
  %1636 = vmatpush1.msra.mxu0 0.0
  %1637 = vmatprep.subr.mxu0 0.0
  %1638 = vmatpush1.msra.mxu0 0.0
  %1639 = vmatprep.subr.mxu0 0.0
  %1640 = vmatpush1.msra.mxu0 0.0
  %1641 = vmatprep.mubr.f32.mxu0 0.0
  %1642 = vmatmul.mubr.f32.gmra.mrb[0].mxu0 %v1560
  %v1643 = vpop.f32.mrb[0].mxu0
  %v1644 = vadd.f32 0.0, %v1643
  %v1645 = vpop.f32.mrb[0].mxu0
  %1646 = vdwg.mxu0
  %v1647 = vld [vmem:[%s4] sm:$0xff]
  %v1648 = vld [vmem:[%s4 + $0x8] sm:$0xff]
  %v1649 = vld [vmem:[%s4 + $0x10] sm:$0xff]
  %v1650 = vld [vmem:[%s4 + $0x18] sm:$0xff]
  %v1651 = vld [vmem:[%s5] sm:$0x1]
  %v1653 = vlaneseq
  %v1654 = vshrl.u32 %v1653, 7
  %v1655 = vsub.s32 0, %v1654
  %v1656 = vrot.slane %v1651, %v1655
  %1658 = vmatprep.subr.mxu0 0.0
  %1659 = vmatpush1.msra.mxu0 %v1647
  %1660 = vmatprep.subr.mxu0 0.0
  %1661 = vmatpush1.msra.mxu0 %v1648
  %1662 = vmatprep.subr.mxu0 0.0
  %1663 = vmatpush1.msra.mxu0 %v1649
  %1664 = vmatprep.subr.mxu0 0.0
  %1665 = vmatpush1.msra.mxu0 %v1650
  %1666 = vmatprep.subr.mxu0 0.0
  %1667 = vmatpush1.msra.mxu0 0.0
  %1668 = vmatprep.subr.mxu0 0.0
  %1669 = vmatpush1.msra.mxu0 0.0
  %1670 = vmatprep.subr.mxu0 0.0
  %1671 = vmatpush1.msra.mxu0 0.0
  %1672 = vmatprep.subr.mxu0 0.0
  %1673 = vmatpush1.msra.mxu0 0.0
  %1674 = vmatprep.subr.mxu0 0.0
  %1675 = vmatpush1.msra.mxu0 0.0
  %1676 = vmatprep.subr.mxu0 0.0
  %1677 = vmatpush1.msra.mxu0 0.0
  %1678 = vmatprep.subr.mxu0 0.0
  %1679 = vmatpush1.msra.mxu0 0.0
  %1680 = vmatprep.subr.mxu0 0.0
  %1681 = vmatpush1.msra.mxu0 0.0
  %1682 = vmatprep.subr.mxu0 0.0
  %1683 = vmatpush1.msra.mxu0 0.0
  %1684 = vmatprep.subr.mxu0 0.0
  %1685 = vmatpush1.msra.mxu0 0.0
  %1686 = vmatprep.subr.mxu0 0.0
  %1687 = vmatpush1.msra.mxu0 0.0
  %1688 = vmatprep.subr.mxu0 0.0
  %1689 = vmatpush1.msra.mxu0 0.0
  %1690 = vmatprep.subr.mxu0 0.0
  %1691 = vmatpush1.msra.mxu0 0.0
  %1692 = vmatprep.subr.mxu0 0.0
  %1693 = vmatpush1.msra.mxu0 0.0
  %1694 = vmatprep.subr.mxu0 0.0
  %1695 = vmatpush1.msra.mxu0 0.0
  %1696 = vmatprep.subr.mxu0 0.0
  %1697 = vmatpush1.msra.mxu0 0.0
  %1698 = vmatprep.subr.mxu0 0.0
  %1699 = vmatpush1.msra.mxu0 0.0
  %1700 = vmatprep.subr.mxu0 0.0
  %1701 = vmatpush1.msra.mxu0 0.0
  %1702 = vmatprep.subr.mxu0 0.0
  %1703 = vmatpush1.msra.mxu0 0.0
  %1704 = vmatprep.subr.mxu0 0.0
  %1705 = vmatpush1.msra.mxu0 0.0
  %1706 = vmatprep.subr.mxu0 0.0
  %1707 = vmatpush1.msra.mxu0 0.0
  %1708 = vmatprep.subr.mxu0 0.0
  %1709 = vmatpush1.msra.mxu0 0.0
  %1710 = vmatprep.subr.mxu0 0.0
  %1711 = vmatpush1.msra.mxu0 0.0
  %1712 = vmatprep.subr.mxu0 0.0
  %1713 = vmatpush1.msra.mxu0 0.0
  %1714 = vmatprep.subr.mxu0 0.0
  %1715 = vmatpush1.msra.mxu0 0.0
  %1716 = vmatprep.subr.mxu0 0.0
  %1717 = vmatpush1.msra.mxu0 0.0
  %1718 = vmatprep.subr.mxu0 0.0
  %1719 = vmatpush1.msra.mxu0 0.0
  %1720 = vmatprep.subr.mxu0 0.0
  %1721 = vmatpush1.msra.mxu0 0.0
  %1722 = vmatprep.mubr.f32.mxu0 0.0
  %1723 = vmatmul.mubr.f32.gmra.mrb[0].mxu0 %v1482
  %v1724 = vpop.f32.mrb[0].mxu0
  %v1725 = vadd.f32 %v1656, %v1724
  %v1726 = vpop.f32.mrb[0].mxu0
  %1727 = vdwg.mxu0
  %1729 = vrot.lane.b32.xlu0 %v1725, 32
  %v1730 = vpop.permute.xlu0 %1729
  %v1732 = vadd.f32 %v1644, %v1730
  %vm1733 = vcmask 64512
  %v1734 = vsel %vm1733, %v1732, -inf
  %1735 = vmax.xlane.f32.xlu0 %v1734
  %v1736 = vpop.xlane.xlu0 %1735
  %v1737 = vsub.f32 %v1732, %v1736
  %v1738 = vmul.f32 %v1737, 1.442695
  %v1739 = vpow.pop %v1738
  %v1740 = vsel %vm1733, %v1739, 0.0
  %1741 = vadd.xlane.f32.xlu0 %v1740
  %v1742 = vpop.xlane.xlu0 %1741
  %v1743 = vrcp.pop %v1742
  %v1744 = vmul.f32 %v1739, %v1743
  %v1745 = vld [vmem:[#allocation2] sm:$0xff]
  %1747 = vset.pattern.permute.xlu0 0
  %1748 = vperm.xlu0 %1747, %v1744
  %v1749 = vpop.permute.xlu0 %1748
  %v1751 = vmul.f32 %v1749, %v1745
  %v1752 = vld [vmem:[%s420] sm:$0xff]
  %1753 = vset.pattern.permute.xlu0 1
  %1754 = vperm.xlu0 %1753, %v1744
  %v1755 = vpop.permute.xlu0 %1754
  %v1757 = vmul.f32 %v1755, %v1752
  %v1758 = vadd.f32 %v1751, %v1757
  %v1759 = vld [vmem:[%s609] sm:$0xff]
  %1760 = vset.pattern.permute.xlu0 2
  %1761 = vperm.xlu0 %1760, %v1744
  %v1762 = vpop.permute.xlu0 %1761
  %v1764 = vmul.f32 %v1762, %v1759
  %v1765 = vadd.f32 %v1758, %v1764
  %v1766 = vld [vmem:[%s798] sm:$0xff]
  %1767 = vset.pattern.permute.xlu0 3
  %1768 = vperm.xlu0 %1767, %v1744
  %v1769 = vpop.permute.xlu0 %1768
  %v1771 = vmul.f32 %v1769, %v1766
  %v1772 = vadd.f32 %v1765, %v1771
  %v1773 = vld [vmem:[%s987] sm:$0xff]
  %1774 = vset.pattern.permute.xlu0 4
  %1775 = vperm.xlu0 %1774, %v1744
  %v1776 = vpop.permute.xlu0 %1775
  %v1778 = vmul.f32 %v1776, %v1773
  %v1779 = vadd.f32 %v1772, %v1778
  %v1780 = vld [vmem:[%s1176] sm:$0xff]
  %1781 = vset.pattern.permute.xlu0 5
  %1782 = vperm.xlu0 %1781, %v1744
  %v1783 = vpop.permute.xlu0 %1782
  %v1785 = vmul.f32 %v1783, %v1780
  %v1786 = vadd.f32 %v1779, %v1785
  %v1787 = vld [vmem:[%s1365] sm:$0xff]
  %1788 = vset.pattern.permute.xlu0 6
  %1789 = vperm.xlu0 %1788, %v1744
  %v1790 = vpop.permute.xlu0 %1789
  %v1792 = vmul.f32 %v1790, %v1787
  %v1793 = vadd.f32 %v1786, %v1792
  %v1794 = vld [vmem:[%s1554] sm:$0xff]
  %1795 = vset.pattern.permute.xlu0 7
  %1796 = vperm.xlu0 %1795, %v1744
  %v1797 = vpop.permute.xlu0 %1796
  %v1799 = vmul.f32 %v1797, %v1794
  %v1800 = vadd.f32 %v1793, %v1799
  %1802 = vrot.lane.b32.xlu0 %v1800, 8
  %v1803 = vpop.permute.xlu0 %1802
  %v1805 = vadd.f32 %v1644, %v1803
  %v1806 = vld [vmem:[%s9] sm:$0x1]
  %v1808 = vlaneseq
  %v1809 = vshrl.u32 %v1808, 7
  %v1810 = vsub.s32 0, %v1809
  %v1811 = vrot.slane %v1806, %v1810
  %1812 = vrot.lane.b32.xlu0 %v1811, 8
  %v1813 = vpop.permute.xlu0 %1812
  %v1815 = vadd.f32 %v1805, %v1813
  %v1816 = vmax.f32 %v1815, 0.0
  %v1817 = vld [vmem:[%s6] sm:$0xff]
  %v1818 = vld [vmem:[%s6 + $0x8] sm:$0xff]
  %v1819 = vld [vmem:[%s6 + $0x10] sm:$0xff]
  %v1820 = vld [vmem:[%s6 + $0x18] sm:$0xff]
  %v1821 = vld [vmem:[%s7] sm:$0x1]
  %v1823 = vlaneseq
  %v1824 = vshrl.u32 %v1823, 7
  %v1825 = vsub.s32 0, %v1824
  %v1826 = vrot.slane %v1821, %v1825
  %1829 = vrot.lane.b32.xlu0 %v1816, 120
  %v1830 = vpop.permute.xlu0 %1829
  %v1831 = vsel %vm53, %v1830, 0
  %1833 = vmatprep.subr.mxu0 0.0
  %1834 = vmatpush1.msra.mxu0 %v1817
  %1835 = vmatprep.subr.mxu0 0.0
  %1836 = vmatpush1.msra.mxu0 %v1818
  %1837 = vmatprep.subr.mxu0 0.0
  %1838 = vmatpush1.msra.mxu0 %v1819
  %1839 = vmatprep.subr.mxu0 0.0
  %1840 = vmatpush1.msra.mxu0 %v1820
  %1841 = vmatprep.subr.mxu0 0.0
  %1842 = vmatpush1.msra.mxu0 0.0
  %1843 = vmatprep.subr.mxu0 0.0
  %1844 = vmatpush1.msra.mxu0 0.0
  %1845 = vmatprep.subr.mxu0 0.0
  %1846 = vmatpush1.msra.mxu0 0.0
  %1847 = vmatprep.subr.mxu0 0.0
  %1848 = vmatpush1.msra.mxu0 0.0
  %1849 = vmatprep.subr.mxu0 0.0
  %1850 = vmatpush1.msra.mxu0 0.0
  %1851 = vmatprep.subr.mxu0 0.0
  %1852 = vmatpush1.msra.mxu0 0.0
  %1853 = vmatprep.subr.mxu0 0.0
  %1854 = vmatpush1.msra.mxu0 0.0
  %1855 = vmatprep.subr.mxu0 0.0
  %1856 = vmatpush1.msra.mxu0 0.0
  %1857 = vmatprep.subr.mxu0 0.0
  %1858 = vmatpush1.msra.mxu0 0.0
  %1859 = vmatprep.subr.mxu0 0.0
  %1860 = vmatpush1.msra.mxu0 0.0
  %1861 = vmatprep.subr.mxu0 0.0
  %1862 = vmatpush1.msra.mxu0 0.0
  %1863 = vmatprep.subr.mxu0 0.0
  %1864 = vmatpush1.msra.mxu0 0.0
  %1865 = vmatprep.subr.mxu0 0.0
  %1866 = vmatpush1.msra.mxu0 0.0
  %1867 = vmatprep.subr.mxu0 0.0
  %1868 = vmatpush1.msra.mxu0 0.0
  %1869 = vmatprep.subr.mxu0 0.0
  %1870 = vmatpush1.msra.mxu0 0.0
  %1871 = vmatprep.subr.mxu0 0.0
  %1872 = vmatpush1.msra.mxu0 0.0
  %1873 = vmatprep.subr.mxu0 0.0
  %1874 = vmatpush1.msra.mxu0 0.0
  %1875 = vmatprep.subr.mxu0 0.0
  %1876 = vmatpush1.msra.mxu0 0.0
  %1877 = vmatprep.subr.mxu0 0.0
  %1878 = vmatpush1.msra.mxu0 0.0
  %1879 = vmatprep.subr.mxu0 0.0
  %1880 = vmatpush1.msra.mxu0 0.0
  %1881 = vmatprep.subr.mxu0 0.0
  %1882 = vmatpush1.msra.mxu0 0.0
  %1883 = vmatprep.subr.mxu0 0.0
  %1884 = vmatpush1.msra.mxu0 0.0
  %1885 = vmatprep.subr.mxu0 0.0
  %1886 = vmatpush1.msra.mxu0 0.0
  %1887 = vmatprep.subr.mxu0 0.0
  %1888 = vmatpush1.msra.mxu0 0.0
  %1889 = vmatprep.subr.mxu0 0.0
  %1890 = vmatpush1.msra.mxu0 0.0
  %1891 = vmatprep.subr.mxu0 0.0
  %1892 = vmatpush1.msra.mxu0 0.0
  %1893 = vmatprep.subr.mxu0 0.0
  %1894 = vmatpush1.msra.mxu0 0.0
  %1895 = vmatprep.subr.mxu0 0.0
  %1896 = vmatpush1.msra.mxu0 0.0
  %1897 = vmatprep.mubr.f32.mxu0 0.0
  %1898 = vmatmul.mubr.f32.gmra.mrb[0].mxu0 %v1831
  %v1899 = vpop.f32.mrb[0].mxu0
  %v1900 = vadd.f32 %v1826, %v1899
  %v1901 = vpop.f32.mrb[0].mxu0
  %1902 = vdwg.mxu0
  %v1903 = vadd.f32 %v1900, %v1725
  %v1904 = vxor.u32 %v1903, 2147483648
  %v1905 = vmul.f32 %v1904, 1.442695
  %v1906 = vpow.pop %v1905
  %v1907 = vadd.f32 %v1906, 1.0
  %v1908 = vrcp.pop %v1907
  %v1909 = vmul.f32 1.0, %v1908
  %1910 = vrot.lane.b32.xlu0 %v1725, 64
  %v1911 = vpop.permute.xlu0 %1910
  %v1913 = vmul.f32 %v1909, %v1911
  %1915 = vrot.lane.b32.xlu0 %v1913, 64
  %v1916 = vpop.permute.xlu0 %1915
  %v1918 = vadd.f32 %v1900, %v1916
  %v1919 = vtanh.pop %v1918
  %v1920 = vsub.f32 1.0, %v1909
  %1922 = vrot.lane.b32.xlu0 %v1919, 96
  %v1923 = vpop.permute.xlu0 %1922
  %v1925 = vmul.f32 %v1920, %v1923
  %v1926 = vmul.f32 %v1909, %v1474
  %v1927 = vadd.f32 %v1925, %v1926
  %v1928 = vld [vmem:[%s10] sm:$0xff]
  %v1929 = vld [vmem:[%s10 + $0x8] sm:$0xff]
  %v1930 = vld [vmem:[%s10 + $0x10] sm:$0xff]
  %v1931 = vld [vmem:[%s10 + $0x18] sm:$0xff]
  %v1932 = vld [vmem:[%s11] sm:$0x1]
  %v1934 = vlaneseq
  %v1935 = vshrl.u32 %v1934, 7
  %v1936 = vsub.s32 0, %v1935
  %v1937 = vrot.slane %v1932, %v1936
  %1940 = vrot.lane.b32.xlu0 %v1927, 96
  %v1941 = vpop.permute.xlu0 %1940
  %v1942 = vsel %vm53, %v1941, 0
  %1944 = vmatprep.subr.mxu0 0.0
  %1945 = vmatpush1.msra.mxu0 %v1928
  %1946 = vmatprep.subr.mxu0 0.0
  %1947 = vmatpush1.msra.mxu0 %v1929
  %1948 = vmatprep.subr.mxu0 0.0
  %1949 = vmatpush1.msra.mxu0 %v1930
  %1950 = vmatprep.subr.mxu0 0.0
  %1951 = vmatpush1.msra.mxu0 %v1931
  %1952 = vmatprep.subr.mxu0 0.0
  %1953 = vmatpush1.msra.mxu0 0.0
  %1954 = vmatprep.subr.mxu0 0.0
  %1955 = vmatpush1.msra.mxu0 0.0
  %1956 = vmatprep.subr.mxu0 0.0
  %1957 = vmatpush1.msra.mxu0 0.0
  %1958 = vmatprep.subr.mxu0 0.0
  %1959 = vmatpush1.msra.mxu0 0.0
  %1960 = vmatprep.subr.mxu0 0.0
  %1961 = vmatpush1.msra.mxu0 0.0
  %1962 = vmatprep.subr.mxu0 0.0
  %1963 = vmatpush1.msra.mxu0 0.0
  %1964 = vmatprep.subr.mxu0 0.0
  %1965 = vmatpush1.msra.mxu0 0.0
  %1966 = vmatprep.subr.mxu0 0.0
  %1967 = vmatpush1.msra.mxu0 0.0
  %1968 = vmatprep.subr.mxu0 0.0
  %1969 = vmatpush1.msra.mxu0 0.0
  %1970 = vmatprep.subr.mxu0 0.0
  %1971 = vmatpush1.msra.mxu0 0.0
  %1972 = vmatprep.subr.mxu0 0.0
  %1973 = vmatpush1.msra.mxu0 0.0
  %1974 = vmatprep.subr.mxu0 0.0
  %1975 = vmatpush1.msra.mxu0 0.0
  %1976 = vmatprep.subr.mxu0 0.0
  %1977 = vmatpush1.msra.mxu0 0.0
  %1978 = vmatprep.subr.mxu0 0.0
  %1979 = vmatpush1.msra.mxu0 0.0
  %1980 = vmatprep.subr.mxu0 0.0
  %1981 = vmatpush1.msra.mxu0 0.0
  %1982 = vmatprep.subr.mxu0 0.0
  %1983 = vmatpush1.msra.mxu0 0.0
  %1984 = vmatprep.subr.mxu0 0.0
  %1985 = vmatpush1.msra.mxu0 0.0
  %1986 = vmatprep.subr.mxu0 0.0
  %1987 = vmatpush1.msra.mxu0 0.0
  %1988 = vmatprep.subr.mxu0 0.0
  %1989 = vmatpush1.msra.mxu0 0.0
  %1990 = vmatprep.subr.mxu0 0.0
  %1991 = vmatpush1.msra.mxu0 0.0
  %1992 = vmatprep.subr.mxu0 0.0
  %1993 = vmatpush1.msra.mxu0 0.0
  %1994 = vmatprep.subr.mxu0 0.0
  %1995 = vmatpush1.msra.mxu0 0.0
  %1996 = vmatprep.subr.mxu0 0.0
  %1997 = vmatpush1.msra.mxu0 0.0
  %1998 = vmatprep.subr.mxu0 0.0
  %1999 = vmatpush1.msra.mxu0 0.0
  %2000 = vmatprep.subr.mxu0 0.0
  %2001 = vmatpush1.msra.mxu0 0.0
  %2002 = vmatprep.subr.mxu0 0.0
  %2003 = vmatpush1.msra.mxu0 0.0
  %2004 = vmatprep.subr.mxu0 0.0
  %2005 = vmatpush1.msra.mxu0 0.0
  %2006 = vmatprep.subr.mxu0 0.0
  %2007 = vmatpush1.msra.mxu0 0.0
  %2008 = vmatprep.mubr.f32.mxu0 0.0
  %2009 = vmatmul.mubr.f32.gmra.mrb[0].mxu0 %v1942
  %v2010 = vpop.f32.mrb[0].mxu0
  %v2011 = vadd.f32 %v1937, %v2010
  %v2012 = vpop.f32.mrb[0].mxu0
  %2013 = vdwg.mxu0
  %2014 = vmax.xlane.f32.xlu0 %v2011
  %v2015 = vpop.xlane.xlu0 %2014
  %v2016 = vsub.f32 %v2011, %v2015
  %v2017 = vmul.f32 %v2016, 1.442695
  %v2018 = vpow.pop %v2017
  %2019 = vadd.xlane.f32.xlu0 %v2018
  %v2020 = vpop.xlane.xlu0 %2019
  %v2021 = vlog2.pop %v2020
  %v2022 = vmul.f32 %v2021, 0.6931472
  %v2023 = vsub.f32 %v2016, %v2022
  %2024 = vst [vmem:[%s12] sm:$0xff] %v2023
  %vm2025 = vcmp.eq.f32.partialorder %v2011, %v2015
  %v2026 = vsel %vm2025, %v1557, 128
  %v2027 = vand.u32 %v2026, 65535
  %v2028 = vshra.s32 %v2026, 16
  %v2029 = vcvt.s32.f32 %v2027
  %v2030 = vcvt.s32.f32 %v2028
  %2031 = vmin.xlane.f32.xlu0 %v2030
  %v2032 = vpop.xlane.xlu0 %2031
  %vm2033 = vcmp.eq.f32.partialorder %v2030, %v2032
  %v2034 = vsel %vm2033, %v2029, inf
  %2035 = vmin.xlane.f32.xlu0 %v2034
  %v2036 = vpop.xlane.xlu0 %2035
  %v2037 = vcvt.f32.s32 %v2036
  %v2038 = vcvt.f32.s32 %v2032
  %v2039 = vshll.u32 %v2038, 16
  %v2040 = vadd.s32 %v2039, %v2037
  %vm2041 = vcmp.eq.s32.totalorder %v1557, %v2040
  %v2042 = vsel %vm2041, 1, 0
  %v2043 = vcvt.s32.f32 %v2042
  %v2044 = vld [vmem:[%s3] sm:$0xff]
  %v2045 = vld [vmem:[%s3 + $0x8] sm:$0xff]
  %v2046 = vld [vmem:[%s3 + $0x10] sm:$0xff]
  %v2047 = vld [vmem:[%s3 + $0x18] sm:$0xff]
  %v2048 = vld [vmem:[%s3 + $0x20] sm:$0xff]
  %v2049 = vld [vmem:[%s3 + $0x28] sm:$0xff]
  %v2050 = vld [vmem:[%s3 + $0x30] sm:$0xff]
  %v2051 = vld [vmem:[%s3 + $0x38] sm:$0xff]
  %v2052 = vld [vmem:[%s3 + $0x40] sm:$0xff]
  %v2053 = vld [vmem:[%s3 + $0x48] sm:$0xff]
  %v2054 = vld [vmem:[%s3 + $0x50] sm:$0xff]
  %v2055 = vld [vmem:[%s3 + $0x58] sm:$0xff]
  %v2056 = vld [vmem:[%s3 + $0x60] sm:$0xff]
  %v2057 = vld [vmem:[%s3 + $0x68] sm:$0xff]
  %v2058 = vld [vmem:[%s3 + $0x70] sm:$0xff]
  %v2059 = vld [vmem:[%s3 + $0x78] sm:$0xff]
  %2060 = vmatprep.subr.mxu0 0.0
  %2061 = vmatpush1.msra.mxu0 %v2044
  %2062 = vmatprep.subr.mxu0 0.0
  %2063 = vmatpush1.msra.mxu0 %v2045
  %2064 = vmatprep.subr.mxu0 0.0
  %2065 = vmatpush1.msra.mxu0 %v2046
  %2066 = vmatprep.subr.mxu0 0.0
  %2067 = vmatpush1.msra.mxu0 %v2047
  %2068 = vmatprep.subr.mxu0 0.0
  %2069 = vmatpush1.msra.mxu0 %v2048
  %2070 = vmatprep.subr.mxu0 0.0
  %2071 = vmatpush1.msra.mxu0 %v2049
  %2072 = vmatprep.subr.mxu0 0.0
  %2073 = vmatpush1.msra.mxu0 %v2050
  %2074 = vmatprep.subr.mxu0 0.0
  %2075 = vmatpush1.msra.mxu0 %v2051
  %2076 = vmatprep.subr.mxu0 0.0
  %2077 = vmatpush1.msra.mxu0 %v2052
  %2078 = vmatprep.subr.mxu0 0.0
  %2079 = vmatpush1.msra.mxu0 %v2053
  %2080 = vmatprep.subr.mxu0 0.0
  %2081 = vmatpush1.msra.mxu0 %v2054
  %2082 = vmatprep.subr.mxu0 0.0
  %2083 = vmatpush1.msra.mxu0 %v2055
  %2084 = vmatprep.subr.mxu0 0.0
  %2085 = vmatpush1.msra.mxu0 %v2056
  %2086 = vmatprep.subr.mxu0 0.0
  %2087 = vmatpush1.msra.mxu0 %v2057
  %2088 = vmatprep.subr.mxu0 0.0
  %2089 = vmatpush1.msra.mxu0 %v2058
  %2090 = vmatprep.subr.mxu0 0.0
  %2091 = vmatpush1.msra.mxu0 %v2059
  %2092 = vmatprep.subr.mxu0 0.0
  %2093 = vmatpush1.msra.mxu0 0.0
  %2094 = vmatprep.subr.mxu0 0.0
  %2095 = vmatpush1.msra.mxu0 0.0
  %2096 = vmatprep.subr.mxu0 0.0
  %2097 = vmatpush1.msra.mxu0 0.0
  %2098 = vmatprep.subr.mxu0 0.0
  %2099 = vmatpush1.msra.mxu0 0.0
  %2100 = vmatprep.subr.mxu0 0.0
  %2101 = vmatpush1.msra.mxu0 0.0
  %2102 = vmatprep.subr.mxu0 0.0
  %2103 = vmatpush1.msra.mxu0 0.0
  %2104 = vmatprep.subr.mxu0 0.0
  %2105 = vmatpush1.msra.mxu0 0.0
  %2106 = vmatprep.subr.mxu0 0.0
  %2107 = vmatpush1.msra.mxu0 0.0
  %2108 = vmatprep.subr.mxu0 0.0
  %2109 = vmatpush1.msra.mxu0 0.0
  %2110 = vmatprep.subr.mxu0 0.0
  %2111 = vmatpush1.msra.mxu0 0.0
  %2112 = vmatprep.subr.mxu0 0.0
  %2113 = vmatpush1.msra.mxu0 0.0
  %2114 = vmatprep.subr.mxu0 0.0
  %2115 = vmatpush1.msra.mxu0 0.0
  %2116 = vmatprep.subr.mxu0 0.0
  %2117 = vmatpush1.msra.mxu0 0.0
  %2118 = vmatprep.subr.mxu0 0.0
  %2119 = vmatpush1.msra.mxu0 0.0
  %2120 = vmatprep.subr.mxu0 0.0
  %2121 = vmatpush1.msra.mxu0 0.0
  %2122 = vmatprep.subr.mxu0 0.0
  %2123 = vmatpush1.msra.mxu0 0.0
  %2124 = vmatprep.mubr.f32.mxu0 0.0
  %2125 = vmatmul.mubr.f32.gmra.mrb[0].mxu0 %v2043
  %v2126 = vpop.f32.mrb[0].mxu0
  %v2127 = vadd.f32 0.0, %v2126
  %v2128 = vpop.f32.mrb[0].mxu0
  %2129 = vdwg.mxu0
  %v2130 = vld [vmem:[%s4] sm:$0xff]
  %v2131 = vld [vmem:[%s4 + $0x8] sm:$0xff]
  %v2132 = vld [vmem:[%s4 + $0x10] sm:$0xff]
  %v2133 = vld [vmem:[%s4 + $0x18] sm:$0xff]
  %v2134 = vld [vmem:[%s5] sm:$0x1]
  %v2136 = vlaneseq
  %v2137 = vshrl.u32 %v2136, 7
  %v2138 = vsub.s32 0, %v2137
  %v2139 = vrot.slane %v2134, %v2138
  %2141 = vmatprep.subr.mxu0 0.0
  %2142 = vmatpush1.msra.mxu0 %v2130
  %2143 = vmatprep.subr.mxu0 0.0
  %2144 = vmatpush1.msra.mxu0 %v2131
  %2145 = vmatprep.subr.mxu0 0.0
  %2146 = vmatpush1.msra.mxu0 %v2132
  %2147 = vmatprep.subr.mxu0 0.0
  %2148 = vmatpush1.msra.mxu0 %v2133
  %2149 = vmatprep.subr.mxu0 0.0
  %2150 = vmatpush1.msra.mxu0 0.0
  %2151 = vmatprep.subr.mxu0 0.0
  %2152 = vmatpush1.msra.mxu0 0.0
  %2153 = vmatprep.subr.mxu0 0.0
  %2154 = vmatpush1.msra.mxu0 0.0
  %2155 = vmatprep.subr.mxu0 0.0
  %2156 = vmatpush1.msra.mxu0 0.0
  %2157 = vmatprep.subr.mxu0 0.0
  %2158 = vmatpush1.msra.mxu0 0.0
  %2159 = vmatprep.subr.mxu0 0.0
  %2160 = vmatpush1.msra.mxu0 0.0
  %2161 = vmatprep.subr.mxu0 0.0
  %2162 = vmatpush1.msra.mxu0 0.0
  %2163 = vmatprep.subr.mxu0 0.0
  %2164 = vmatpush1.msra.mxu0 0.0
  %2165 = vmatprep.subr.mxu0 0.0
  %2166 = vmatpush1.msra.mxu0 0.0
  %2167 = vmatprep.subr.mxu0 0.0
  %2168 = vmatpush1.msra.mxu0 0.0
  %2169 = vmatprep.subr.mxu0 0.0
  %2170 = vmatpush1.msra.mxu0 0.0
  %2171 = vmatprep.subr.mxu0 0.0
  %2172 = vmatpush1.msra.mxu0 0.0
  %2173 = vmatprep.subr.mxu0 0.0
  %2174 = vmatpush1.msra.mxu0 0.0
  %2175 = vmatprep.subr.mxu0 0.0
  %2176 = vmatpush1.msra.mxu0 0.0
  %2177 = vmatprep.subr.mxu0 0.0
  %2178 = vmatpush1.msra.mxu0 0.0
  %2179 = vmatprep.subr.mxu0 0.0
  %2180 = vmatpush1.msra.mxu0 0.0
  %2181 = vmatprep.subr.mxu0 0.0
  %2182 = vmatpush1.msra.mxu0 0.0
  %2183 = vmatprep.subr.mxu0 0.0
  %2184 = vmatpush1.msra.mxu0 0.0
  %2185 = vmatprep.subr.mxu0 0.0
  %2186 = vmatpush1.msra.mxu0 0.0
  %2187 = vmatprep.subr.mxu0 0.0
  %2188 = vmatpush1.msra.mxu0 0.0
  %2189 = vmatprep.subr.mxu0 0.0
  %2190 = vmatpush1.msra.mxu0 0.0
  %2191 = vmatprep.subr.mxu0 0.0
  %2192 = vmatpush1.msra.mxu0 0.0
  %2193 = vmatprep.subr.mxu0 0.0
  %2194 = vmatpush1.msra.mxu0 0.0
  %2195 = vmatprep.subr.mxu0 0.0
  %2196 = vmatpush1.msra.mxu0 0.0
  %2197 = vmatprep.subr.mxu0 0.0
  %2198 = vmatpush1.msra.mxu0 0.0
  %2199 = vmatprep.subr.mxu0 0.0
  %2200 = vmatpush1.msra.mxu0 0.0
  %2201 = vmatprep.subr.mxu0 0.0
  %2202 = vmatpush1.msra.mxu0 0.0
  %2203 = vmatprep.subr.mxu0 0.0
  %2204 = vmatpush1.msra.mxu0 0.0
  %2205 = vmatprep.mubr.f32.mxu0 0.0
  %2206 = vmatmul.mubr.f32.gmra.mrb[0].mxu0 %v1942
  %v2207 = vpop.f32.mrb[0].mxu0
  %v2208 = vadd.f32 %v2139, %v2207
  %v2209 = vpop.f32.mrb[0].mxu0
  %2210 = vdwg.mxu0
  %2212 = vrot.lane.b32.xlu0 %v2208, 32
  %v2213 = vpop.permute.xlu0 %2212
  %v2215 = vadd.f32 %v2127, %v2213
  %v2216 = vsel %vm1733, %v2215, -inf
  %2217 = vmax.xlane.f32.xlu0 %v2216
  %v2218 = vpop.xlane.xlu0 %2217
  %v2219 = vsub.f32 %v2215, %v2218
  %v2220 = vmul.f32 %v2219, 1.442695
  %v2221 = vpow.pop %v2220
  %v2222 = vsel %vm1733, %v2221, 0.0
  %2223 = vadd.xlane.f32.xlu0 %v2222
  %v2224 = vpop.xlane.xlu0 %2223
  %v2225 = vrcp.pop %v2224
  %v2226 = vmul.f32 %v2221, %v2225
  %v2227 = vld [vmem:[#allocation2] sm:$0xff]
  %2229 = vset.pattern.permute.xlu0 0
  %2230 = vperm.xlu0 %2229, %v2226
  %v2231 = vpop.permute.xlu0 %2230
  %v2233 = vmul.f32 %v2231, %v2227
  %v2234 = vld [vmem:[%s420] sm:$0xff]
  %2235 = vset.pattern.permute.xlu0 1
  %2236 = vperm.xlu0 %2235, %v2226
  %v2237 = vpop.permute.xlu0 %2236
  %v2239 = vmul.f32 %v2237, %v2234
  %v2240 = vadd.f32 %v2233, %v2239
  %v2241 = vld [vmem:[%s609] sm:$0xff]
  %2242 = vset.pattern.permute.xlu0 2
  %2243 = vperm.xlu0 %2242, %v2226
  %v2244 = vpop.permute.xlu0 %2243
  %v2246 = vmul.f32 %v2244, %v2241
  %v2247 = vadd.f32 %v2240, %v2246
  %v2248 = vld [vmem:[%s798] sm:$0xff]
  %2249 = vset.pattern.permute.xlu0 3
  %2250 = vperm.xlu0 %2249, %v2226
  %v2251 = vpop.permute.xlu0 %2250
  %v2253 = vmul.f32 %v2251, %v2248
  %v2254 = vadd.f32 %v2247, %v2253
  %v2255 = vld [vmem:[%s987] sm:$0xff]
  %2256 = vset.pattern.permute.xlu0 4
  %2257 = vperm.xlu0 %2256, %v2226
  %v2258 = vpop.permute.xlu0 %2257
  %v2260 = vmul.f32 %v2258, %v2255
  %v2261 = vadd.f32 %v2254, %v2260
  %v2262 = vld [vmem:[%s1176] sm:$0xff]
  %2263 = vset.pattern.permute.xlu0 5
  %2264 = vperm.xlu0 %2263, %v2226
  %v2265 = vpop.permute.xlu0 %2264
  %v2267 = vmul.f32 %v2265, %v2262
  %v2268 = vadd.f32 %v2261, %v2267
  %v2269 = vld [vmem:[%s1365] sm:$0xff]
  %2270 = vset.pattern.permute.xlu0 6
  %2271 = vperm.xlu0 %2270, %v2226
  %v2272 = vpop.permute.xlu0 %2271
  %v2274 = vmul.f32 %v2272, %v2269
  %v2275 = vadd.f32 %v2268, %v2274
  %v2276 = vld [vmem:[%s1554] sm:$0xff]
  %2277 = vset.pattern.permute.xlu0 7
  %2278 = vperm.xlu0 %2277, %v2226
  %v2279 = vpop.permute.xlu0 %2278
  %v2281 = vmul.f32 %v2279, %v2276
  %v2282 = vadd.f32 %v2275, %v2281
  %2284 = vrot.lane.b32.xlu0 %v2282, 8
  %v2285 = vpop.permute.xlu0 %2284
  %v2287 = vadd.f32 %v2127, %v2285
  %v2288 = vld [vmem:[%s9] sm:$0x1]
  %v2290 = vlaneseq
  %v2291 = vshrl.u32 %v2290, 7
  %v2292 = vsub.s32 0, %v2291
  %v2293 = vrot.slane %v2288, %v2292
  %2294 = vrot.lane.b32.xlu0 %v2293, 8
  %v2295 = vpop.permute.xlu0 %2294
  %v2297 = vadd.f32 %v2287, %v2295
  %v2298 = vmax.f32 %v2297, 0.0
  %v2299 = vld [vmem:[%s6] sm:$0xff]
  %v2300 = vld [vmem:[%s6 + $0x8] sm:$0xff]
  %v2301 = vld [vmem:[%s6 + $0x10] sm:$0xff]
  %v2302 = vld [vmem:[%s6 + $0x18] sm:$0xff]
  %v2303 = vld [vmem:[%s7] sm:$0x1]
  %v2305 = vlaneseq
  %v2306 = vshrl.u32 %v2305, 7
  %v2307 = vsub.s32 0, %v2306
  %v2308 = vrot.slane %v2303, %v2307
  %2311 = vrot.lane.b32.xlu0 %v2298, 120
  %v2312 = vpop.permute.xlu0 %2311
  %v2313 = vsel %vm53, %v2312, 0
  %2315 = vmatprep.subr.mxu0 0.0
  %2316 = vmatpush1.msra.mxu0 %v2299
  %2317 = vmatprep.subr.mxu0 0.0
  %2318 = vmatpush1.msra.mxu0 %v2300
  %2319 = vmatprep.subr.mxu0 0.0
  %2320 = vmatpush1.msra.mxu0 %v2301
  %2321 = vmatprep.subr.mxu0 0.0
  %2322 = vmatpush1.msra.mxu0 %v2302
  %2323 = vmatprep.subr.mxu0 0.0
  %2324 = vmatpush1.msra.mxu0 0.0
  %2325 = vmatprep.subr.mxu0 0.0
  %2326 = vmatpush1.msra.mxu0 0.0
  %2327 = vmatprep.subr.mxu0 0.0
  %2328 = vmatpush1.msra.mxu0 0.0
  %2329 = vmatprep.subr.mxu0 0.0
  %2330 = vmatpush1.msra.mxu0 0.0
  %2331 = vmatprep.subr.mxu0 0.0
  %2332 = vmatpush1.msra.mxu0 0.0
  %2333 = vmatprep.subr.mxu0 0.0
  %2334 = vmatpush1.msra.mxu0 0.0
  %2335 = vmatprep.subr.mxu0 0.0
  %2336 = vmatpush1.msra.mxu0 0.0
  %2337 = vmatprep.subr.mxu0 0.0
  %2338 = vmatpush1.msra.mxu0 0.0
  %2339 = vmatprep.subr.mxu0 0.0
  %2340 = vmatpush1.msra.mxu0 0.0
  %2341 = vmatprep.subr.mxu0 0.0
  %2342 = vmatpush1.msra.mxu0 0.0
  %2343 = vmatprep.subr.mxu0 0.0
  %2344 = vmatpush1.msra.mxu0 0.0
  %2345 = vmatprep.subr.mxu0 0.0
  %2346 = vmatpush1.msra.mxu0 0.0
  %2347 = vmatprep.subr.mxu0 0.0
  %2348 = vmatpush1.msra.mxu0 0.0
  %2349 = vmatprep.subr.mxu0 0.0
  %2350 = vmatpush1.msra.mxu0 0.0
  %2351 = vmatprep.subr.mxu0 0.0
  %2352 = vmatpush1.msra.mxu0 0.0
  %2353 = vmatprep.subr.mxu0 0.0
  %2354 = vmatpush1.msra.mxu0 0.0
  %2355 = vmatprep.subr.mxu0 0.0
  %2356 = vmatpush1.msra.mxu0 0.0
  %2357 = vmatprep.subr.mxu0 0.0
  %2358 = vmatpush1.msra.mxu0 0.0
  %2359 = vmatprep.subr.mxu0 0.0
  %2360 = vmatpush1.msra.mxu0 0.0
  %2361 = vmatprep.subr.mxu0 0.0
  %2362 = vmatpush1.msra.mxu0 0.0
  %2363 = vmatprep.subr.mxu0 0.0
  %2364 = vmatpush1.msra.mxu0 0.0
  %2365 = vmatprep.subr.mxu0 0.0
  %2366 = vmatpush1.msra.mxu0 0.0
  %2367 = vmatprep.subr.mxu0 0.0
  %2368 = vmatpush1.msra.mxu0 0.0
  %2369 = vmatprep.subr.mxu0 0.0
  %2370 = vmatpush1.msra.mxu0 0.0
  %2371 = vmatprep.subr.mxu0 0.0
  %2372 = vmatpush1.msra.mxu0 0.0
  %2373 = vmatprep.subr.mxu0 0.0
  %2374 = vmatpush1.msra.mxu0 0.0
  %2375 = vmatprep.subr.mxu0 0.0
  %2376 = vmatpush1.msra.mxu0 0.0
  %2377 = vmatprep.subr.mxu0 0.0
  %2378 = vmatpush1.msra.mxu0 0.0
  %2379 = vmatprep.mubr.f32.mxu0 0.0
  %2380 = vmatmul.mubr.f32.gmra.mrb[0].mxu0 %v2313
  %v2381 = vpop.f32.mrb[0].mxu0
  %v2382 = vadd.f32 %v2308, %v2381
  %v2383 = vpop.f32.mrb[0].mxu0
  %2384 = vdwg.mxu0
  %v2385 = vadd.f32 %v2382, %v2208
  %v2386 = vxor.u32 %v2385, 2147483648
  %v2387 = vmul.f32 %v2386, 1.442695
  %v2388 = vpow.pop %v2387
  %v2389 = vadd.f32 %v2388, 1.0
  %v2390 = vrcp.pop %v2389
  %v2391 = vmul.f32 1.0, %v2390
  %2392 = vrot.lane.b32.xlu0 %v2208, 64
  %v2393 = vpop.permute.xlu0 %2392
  %v2395 = vmul.f32 %v2391, %v2393
  %2397 = vrot.lane.b32.xlu0 %v2395, 64
  %v2398 = vpop.permute.xlu0 %2397
  %v2400 = vadd.f32 %v2382, %v2398
  %v2401 = vtanh.pop %v2400
  %v2402 = vsub.f32 1.0, %v2391
  %2404 = vrot.lane.b32.xlu0 %v2401, 96
  %v2405 = vpop.permute.xlu0 %2404
  %v2407 = vmul.f32 %v2402, %v2405
  %v2408 = vmul.f32 %v2391, %v1927
  %v2409 = vadd.f32 %v2407, %v2408
  %v2410 = vld [vmem:[%s10] sm:$0xff]
  %v2411 = vld [vmem:[%s10 + $0x8] sm:$0xff]
  %v2412 = vld [vmem:[%s10 + $0x10] sm:$0xff]
  %v2413 = vld [vmem:[%s10 + $0x18] sm:$0xff]
  %v2414 = vld [vmem:[%s11] sm:$0x1]
  %v2416 = vlaneseq
  %v2417 = vshrl.u32 %v2416, 7
  %v2418 = vsub.s32 0, %v2417
  %v2419 = vrot.slane %v2414, %v2418
  %2422 = vrot.lane.b32.xlu0 %v2409, 96
  %v2423 = vpop.permute.xlu0 %2422
  %v2424 = vsel %vm53, %v2423, 0
  %2426 = vmatprep.subr.mxu0 0.0
  %2427 = vmatpush1.msra.mxu0 %v2410
  %2428 = vmatprep.subr.mxu0 0.0
  %2429 = vmatpush1.msra.mxu0 %v2411
  %2430 = vmatprep.subr.mxu0 0.0
  %2431 = vmatpush1.msra.mxu0 %v2412
  %2432 = vmatprep.subr.mxu0 0.0
  %2433 = vmatpush1.msra.mxu0 %v2413
  %2434 = vmatprep.subr.mxu0 0.0
  %2435 = vmatpush1.msra.mxu0 0.0
  %2436 = vmatprep.subr.mxu0 0.0
  %2437 = vmatpush1.msra.mxu0 0.0
  %2438 = vmatprep.subr.mxu0 0.0
  %2439 = vmatpush1.msra.mxu0 0.0
  %2440 = vmatprep.subr.mxu0 0.0
  %2441 = vmatpush1.msra.mxu0 0.0
  %2442 = vmatprep.subr.mxu0 0.0
  %2443 = vmatpush1.msra.mxu0 0.0
  %2444 = vmatprep.subr.mxu0 0.0
  %2445 = vmatpush1.msra.mxu0 0.0
  %2446 = vmatprep.subr.mxu0 0.0
  %2447 = vmatpush1.msra.mxu0 0.0
  %2448 = vmatprep.subr.mxu0 0.0
  %2449 = vmatpush1.msra.mxu0 0.0
  %2450 = vmatprep.subr.mxu0 0.0
  %2451 = vmatpush1.msra.mxu0 0.0
  %2452 = vmatprep.subr.mxu0 0.0
  %2453 = vmatpush1.msra.mxu0 0.0
  %2454 = vmatprep.subr.mxu0 0.0
  %2455 = vmatpush1.msra.mxu0 0.0
  %2456 = vmatprep.subr.mxu0 0.0
  %2457 = vmatpush1.msra.mxu0 0.0
  %2458 = vmatprep.subr.mxu0 0.0
  %2459 = vmatpush1.msra.mxu0 0.0
  %2460 = vmatprep.subr.mxu0 0.0
  %2461 = vmatpush1.msra.mxu0 0.0
  %2462 = vmatprep.subr.mxu0 0.0
  %2463 = vmatpush1.msra.mxu0 0.0
  %2464 = vmatprep.subr.mxu0 0.0
  %2465 = vmatpush1.msra.mxu0 0.0
  %2466 = vmatprep.subr.mxu0 0.0
  %2467 = vmatpush1.msra.mxu0 0.0
  %2468 = vmatprep.subr.mxu0 0.0
  %2469 = vmatpush1.msra.mxu0 0.0
  %2470 = vmatprep.subr.mxu0 0.0
  %2471 = vmatpush1.msra.mxu0 0.0
  %2472 = vmatprep.subr.mxu0 0.0
  %2473 = vmatpush1.msra.mxu0 0.0
  %2474 = vmatprep.subr.mxu0 0.0
  %2475 = vmatpush1.msra.mxu0 0.0
  %2476 = vmatprep.subr.mxu0 0.0
  %2477 = vmatpush1.msra.mxu0 0.0
  %2478 = vmatprep.subr.mxu0 0.0
  %2479 = vmatpush1.msra.mxu0 0.0
  %2480 = vmatprep.subr.mxu0 0.0
  %2481 = vmatpush1.msra.mxu0 0.0
  %2482 = vmatprep.subr.mxu0 0.0
  %2483 = vmatpush1.msra.mxu0 0.0
  %2484 = vmatprep.subr.mxu0 0.0
  %2485 = vmatpush1.msra.mxu0 0.0
  %2486 = vmatprep.subr.mxu0 0.0
  %2487 = vmatpush1.msra.mxu0 0.0
  %2488 = vmatprep.subr.mxu0 0.0
  %2489 = vmatpush1.msra.mxu0 0.0
  %2490 = vmatprep.mubr.f32.mxu0 0.0
  %2491 = vmatmul.mubr.f32.gmra.mrb[0].mxu0 %v2424
  %v2492 = vpop.f32.mrb[0].mxu0
  %v2493 = vadd.f32 %v2419, %v2492
  %v2494 = vpop.f32.mrb[0].mxu0
  %2495 = vdwg.mxu0
  %2496 = vmax.xlane.f32.xlu0 %v2493
  %v2497 = vpop.xlane.xlu0 %2496
  %v2498 = vsub.f32 %v2493, %v2497
  %v2499 = vmul.f32 %v2498, 1.442695
  %v2500 = vpow.pop %v2499
  %2501 = vadd.xlane.f32.xlu0 %v2500
  %v2502 = vpop.xlane.xlu0 %2501
  %v2503 = vlog2.pop %v2502
  %v2504 = vmul.f32 %v2503, 0.6931472
  %v2505 = vsub.f32 %v2498, %v2504
  %2506 = vst [vmem:[%s12 + $0x8] sm:$0xff] %v2505
  %vm2507 = vcmp.eq.f32.partialorder %v2493, %v2497
  %v2508 = vsel %vm2507, %v1557, 128
  %v2509 = vand.u32 %v2508, 65535
  %v2510 = vshra.s32 %v2508, 16
  %v2511 = vcvt.s32.f32 %v2509
  %v2512 = vcvt.s32.f32 %v2510
  %2513 = vmin.xlane.f32.xlu0 %v2512
  %v2514 = vpop.xlane.xlu0 %2513
  %vm2515 = vcmp.eq.f32.partialorder %v2512, %v2514
  %v2516 = vsel %vm2515, %v2511, inf
  %2517 = vmin.xlane.f32.xlu0 %v2516
  %v2518 = vpop.xlane.xlu0 %2517
  %v2519 = vcvt.f32.s32 %v2518
  %v2520 = vcvt.f32.s32 %v2514
  %v2521 = vshll.u32 %v2520, 16
  %v2522 = vadd.s32 %v2521, %v2519
  %vm2523 = vcmp.eq.s32.totalorder %v1557, %v2522
  %v2524 = vsel %vm2523, 1, 0
  %v2525 = vcvt.s32.f32 %v2524
  %v2526 = vld [vmem:[%s3] sm:$0xff]
  %v2527 = vld [vmem:[%s3 + $0x8] sm:$0xff]
  %v2528 = vld [vmem:[%s3 + $0x10] sm:$0xff]
  %v2529 = vld [vmem:[%s3 + $0x18] sm:$0xff]
  %v2530 = vld [vmem:[%s3 + $0x20] sm:$0xff]
  %v2531 = vld [vmem:[%s3 + $0x28] sm:$0xff]
  %v2532 = vld [vmem:[%s3 + $0x30] sm:$0xff]
  %v2533 = vld [vmem:[%s3 + $0x38] sm:$0xff]
  %v2534 = vld [vmem:[%s3 + $0x40] sm:$0xff]
  %v2535 = vld [vmem:[%s3 + $0x48] sm:$0xff]
  %v2536 = vld [vmem:[%s3 + $0x50] sm:$0xff]
  %v2537 = vld [vmem:[%s3 + $0x58] sm:$0xff]
  %v2538 = vld [vmem:[%s3 + $0x60] sm:$0xff]
  %v2539 = vld [vmem:[%s3 + $0x68] sm:$0xff]
  %v2540 = vld [vmem:[%s3 + $0x70] sm:$0xff]
  %v2541 = vld [vmem:[%s3 + $0x78] sm:$0xff]
  %2542 = vmatprep.subr.mxu0 0.0
  %2543 = vmatpush1.msra.mxu0 %v2526
  %2544 = vmatprep.subr.mxu0 0.0
  %2545 = vmatpush1.msra.mxu0 %v2527
  %2546 = vmatprep.subr.mxu0 0.0
  %2547 = vmatpush1.msra.mxu0 %v2528
  %2548 = vmatprep.subr.mxu0 0.0
  %2549 = vmatpush1.msra.mxu0 %v2529
  %2550 = vmatprep.subr.mxu0 0.0
  %2551 = vmatpush1.msra.mxu0 %v2530
  %2552 = vmatprep.subr.mxu0 0.0
  %2553 = vmatpush1.msra.mxu0 %v2531
  %2554 = vmatprep.subr.mxu0 0.0
  %2555 = vmatpush1.msra.mxu0 %v2532
  %2556 = vmatprep.subr.mxu0 0.0
  %2557 = vmatpush1.msra.mxu0 %v2533
  %2558 = vmatprep.subr.mxu0 0.0
  %2559 = vmatpush1.msra.mxu0 %v2534
  %2560 = vmatprep.subr.mxu0 0.0
  %2561 = vmatpush1.msra.mxu0 %v2535
  %2562 = vmatprep.subr.mxu0 0.0
  %2563 = vmatpush1.msra.mxu0 %v2536
  %2564 = vmatprep.subr.mxu0 0.0
  %2565 = vmatpush1.msra.mxu0 %v2537
  %2566 = vmatprep.subr.mxu0 0.0
  %2567 = vmatpush1.msra.mxu0 %v2538
  %2568 = vmatprep.subr.mxu0 0.0
  %2569 = vmatpush1.msra.mxu0 %v2539
  %2570 = vmatprep.subr.mxu0 0.0
  %2571 = vmatpush1.msra.mxu0 %v2540
  %2572 = vmatprep.subr.mxu0 0.0
  %2573 = vmatpush1.msra.mxu0 %v2541
  %2574 = vmatprep.subr.mxu0 0.0
  %2575 = vmatpush1.msra.mxu0 0.0
  %2576 = vmatprep.subr.mxu0 0.0
  %2577 = vmatpush1.msra.mxu0 0.0
  %2578 = vmatprep.subr.mxu0 0.0
  %2579 = vmatpush1.msra.mxu0 0.0
  %2580 = vmatprep.subr.mxu0 0.0
  %2581 = vmatpush1.msra.mxu0 0.0
  %2582 = vmatprep.subr.mxu0 0.0
  %2583 = vmatpush1.msra.mxu0 0.0
  %2584 = vmatprep.subr.mxu0 0.0
  %2585 = vmatpush1.msra.mxu0 0.0
  %2586 = vmatprep.subr.mxu0 0.0
  %2587 = vmatpush1.msra.mxu0 0.0
  %2588 = vmatprep.subr.mxu0 0.0
  %2589 = vmatpush1.msra.mxu0 0.0
  %2590 = vmatprep.subr.mxu0 0.0
  %2591 = vmatpush1.msra.mxu0 0.0
  %2592 = vmatprep.subr.mxu0 0.0
  %2593 = vmatpush1.msra.mxu0 0.0
  %2594 = vmatprep.subr.mxu0 0.0
  %2595 = vmatpush1.msra.mxu0 0.0
  %2596 = vmatprep.subr.mxu0 0.0
  %2597 = vmatpush1.msra.mxu0 0.0
  %2598 = vmatprep.subr.mxu0 0.0
  %2599 = vmatpush1.msra.mxu0 0.0
  %2600 = vmatprep.subr.mxu0 0.0
  %2601 = vmatpush1.msra.mxu0 0.0
  %2602 = vmatprep.subr.mxu0 0.0
  %2603 = vmatpush1.msra.mxu0 0.0
  %2604 = vmatprep.subr.mxu0 0.0
  %2605 = vmatpush1.msra.mxu0 0.0
  %2606 = vmatprep.mubr.f32.mxu0 0.0
  %2607 = vmatmul.mubr.f32.gmra.mrb[0].mxu0 %v2525
  %v2608 = vpop.f32.mrb[0].mxu0
  %v2609 = vadd.f32 0.0, %v2608
  %v2610 = vpop.f32.mrb[0].mxu0
  %2611 = vdwg.mxu0
  %v2612 = vld [vmem:[%s4] sm:$0xff]
  %v2613 = vld [vmem:[%s4 + $0x8] sm:$0xff]
  %v2614 = vld [vmem:[%s4 + $0x10] sm:$0xff]
  %v2615 = vld [vmem:[%s4 + $0x18] sm:$0xff]
  %v2616 = vld [vmem:[%s5] sm:$0x1]
  %v2618 = vlaneseq
  %v2619 = vshrl.u32 %v2618, 7
  %v2620 = vsub.s32 0, %v2619
  %v2621 = vrot.slane %v2616, %v2620
  %2623 = vmatprep.subr.mxu0 0.0
  %2624 = vmatpush1.msra.mxu0 %v2612
  %2625 = vmatprep.subr.mxu0 0.0
  %2626 = vmatpush1.msra.mxu0 %v2613
  %2627 = vmatprep.subr.mxu0 0.0
  %2628 = vmatpush1.msra.mxu0 %v2614
  %2629 = vmatprep.subr.mxu0 0.0
  %2630 = vmatpush1.msra.mxu0 %v2615
  %2631 = vmatprep.subr.mxu0 0.0
  %2632 = vmatpush1.msra.mxu0 0.0
  %2633 = vmatprep.subr.mxu0 0.0
  %2634 = vmatpush1.msra.mxu0 0.0
  %2635 = vmatprep.subr.mxu0 0.0
  %2636 = vmatpush1.msra.mxu0 0.0
  %2637 = vmatprep.subr.mxu0 0.0
  %2638 = vmatpush1.msra.mxu0 0.0
  %2639 = vmatprep.subr.mxu0 0.0
  %2640 = vmatpush1.msra.mxu0 0.0
  %2641 = vmatprep.subr.mxu0 0.0
  %2642 = vmatpush1.msra.mxu0 0.0
  %2643 = vmatprep.subr.mxu0 0.0
  %2644 = vmatpush1.msra.mxu0 0.0
  %2645 = vmatprep.subr.mxu0 0.0
  %2646 = vmatpush1.msra.mxu0 0.0
  %2647 = vmatprep.subr.mxu0 0.0
  %2648 = vmatpush1.msra.mxu0 0.0
  %2649 = vmatprep.subr.mxu0 0.0
  %2650 = vmatpush1.msra.mxu0 0.0
  %2651 = vmatprep.subr.mxu0 0.0
  %2652 = vmatpush1.msra.mxu0 0.0
  %2653 = vmatprep.subr.mxu0 0.0
  %2654 = vmatpush1.msra.mxu0 0.0
  %2655 = vmatprep.subr.mxu0 0.0
  %2656 = vmatpush1.msra.mxu0 0.0
  %2657 = vmatprep.subr.mxu0 0.0
  %2658 = vmatpush1.msra.mxu0 0.0
  %2659 = vmatprep.subr.mxu0 0.0
  %2660 = vmatpush1.msra.mxu0 0.0
  %2661 = vmatprep.subr.mxu0 0.0
  %2662 = vmatpush1.msra.mxu0 0.0
  %2663 = vmatprep.subr.mxu0 0.0
  %2664 = vmatpush1.msra.mxu0 0.0
  %2665 = vmatprep.subr.mxu0 0.0
  %2666 = vmatpush1.msra.mxu0 0.0
  %2667 = vmatprep.subr.mxu0 0.0
  %2668 = vmatpush1.msra.mxu0 0.0
  %2669 = vmatprep.subr.mxu0 0.0
  %2670 = vmatpush1.msra.mxu0 0.0
  %2671 = vmatprep.subr.mxu0 0.0
  %2672 = vmatpush1.msra.mxu0 0.0
  %2673 = vmatprep.subr.mxu0 0.0
  %2674 = vmatpush1.msra.mxu0 0.0
  %2675 = vmatprep.subr.mxu0 0.0
  %2676 = vmatpush1.msra.mxu0 0.0
  %2677 = vmatprep.subr.mxu0 0.0
  %2678 = vmatpush1.msra.mxu0 0.0
  %2679 = vmatprep.subr.mxu0 0.0
  %2680 = vmatpush1.msra.mxu0 0.0
  %2681 = vmatprep.subr.mxu0 0.0
  %2682 = vmatpush1.msra.mxu0 0.0
  %2683 = vmatprep.subr.mxu0 0.0
  %2684 = vmatpush1.msra.mxu0 0.0
  %2685 = vmatprep.subr.mxu0 0.0
  %2686 = vmatpush1.msra.mxu0 0.0
  %2687 = vmatprep.mubr.f32.mxu0 0.0
  %2688 = vmatmul.mubr.f32.gmra.mrb[0].mxu0 %v2424
  %v2689 = vpop.f32.mrb[0].mxu0
  %v2690 = vadd.f32 %v2621, %v2689
  %v2691 = vpop.f32.mrb[0].mxu0
  %2692 = vdwg.mxu0
  %2694 = vrot.lane.b32.xlu0 %v2690, 32
  %v2695 = vpop.permute.xlu0 %2694
  %v2697 = vadd.f32 %v2609, %v2695
  %v2698 = vsel %vm1733, %v2697, -inf
  %2699 = vmax.xlane.f32.xlu0 %v2698
  %v2700 = vpop.xlane.xlu0 %2699
  %v2701 = vsub.f32 %v2697, %v2700
  %v2702 = vmul.f32 %v2701, 1.442695
  %v2703 = vpow.pop %v2702
  %v2704 = vsel %vm1733, %v2703, 0.0
  %2705 = vadd.xlane.f32.xlu0 %v2704
  %v2706 = vpop.xlane.xlu0 %2705
  %v2707 = vrcp.pop %v2706
  %v2708 = vmul.f32 %v2703, %v2707
  %v2709 = vld [vmem:[#allocation2] sm:$0xff]
  %2711 = vset.pattern.permute.xlu0 0
  %2712 = vperm.xlu0 %2711, %v2708
  %v2713 = vpop.permute.xlu0 %2712
  %v2715 = vmul.f32 %v2713, %v2709
  %v2716 = vld [vmem:[%s420] sm:$0xff]
  %2717 = vset.pattern.permute.xlu0 1
  %2718 = vperm.xlu0 %2717, %v2708
  %v2719 = vpop.permute.xlu0 %2718
  %v2721 = vmul.f32 %v2719, %v2716
  %v2722 = vadd.f32 %v2715, %v2721
  %v2723 = vld [vmem:[%s609] sm:$0xff]
  %2724 = vset.pattern.permute.xlu0 2
  %2725 = vperm.xlu0 %2724, %v2708
  %v2726 = vpop.permute.xlu0 %2725
  %v2728 = vmul.f32 %v2726, %v2723
  %v2729 = vadd.f32 %v2722, %v2728
  %v2730 = vld [vmem:[%s798] sm:$0xff]
  %2731 = vset.pattern.permute.xlu0 3
  %2732 = vperm.xlu0 %2731, %v2708
  %v2733 = vpop.permute.xlu0 %2732
  %v2735 = vmul.f32 %v2733, %v2730
  %v2736 = vadd.f32 %v2729, %v2735
  %v2737 = vld [vmem:[%s987] sm:$0xff]
  %2738 = vset.pattern.permute.xlu0 4
  %2739 = vperm.xlu0 %2738, %v2708
  %v2740 = vpop.permute.xlu0 %2739
  %v2742 = vmul.f32 %v2740, %v2737
  %v2743 = vadd.f32 %v2736, %v2742
  %v2744 = vld [vmem:[%s1176] sm:$0xff]
  %2745 = vset.pattern.permute.xlu0 5
  %2746 = vperm.xlu0 %2745, %v2708
  %v2747 = vpop.permute.xlu0 %2746
  %v2749 = vmul.f32 %v2747, %v2744
  %v2750 = vadd.f32 %v2743, %v2749
  %v2751 = vld [vmem:[%s1365] sm:$0xff]
  %2752 = vset.pattern.permute.xlu0 6
  %2753 = vperm.xlu0 %2752, %v2708
  %v2754 = vpop.permute.xlu0 %2753
  %v2756 = vmul.f32 %v2754, %v2751
  %v2757 = vadd.f32 %v2750, %v2756
  %v2758 = vld [vmem:[%s1554] sm:$0xff]
  %2759 = vset.pattern.permute.xlu0 7
  %2760 = vperm.xlu0 %2759, %v2708
  %v2761 = vpop.permute.xlu0 %2760
  %v2763 = vmul.f32 %v2761, %v2758
  %v2764 = vadd.f32 %v2757, %v2763
  %2766 = vrot.lane.b32.xlu0 %v2764, 8
  %v2767 = vpop.permute.xlu0 %2766
  %v2769 = vadd.f32 %v2609, %v2767
  %v2770 = vld [vmem:[%s9] sm:$0x1]
  %v2772 = vlaneseq
  %v2773 = vshrl.u32 %v2772, 7
  %v2774 = vsub.s32 0, %v2773
  %v2775 = vrot.slane %v2770, %v2774
  %2776 = vrot.lane.b32.xlu0 %v2775, 8
  %v2777 = vpop.permute.xlu0 %2776
  %v2779 = vadd.f32 %v2769, %v2777
  %v2780 = vmax.f32 %v2779, 0.0
  %v2781 = vld [vmem:[%s6] sm:$0xff]
  %v2782 = vld [vmem:[%s6 + $0x8] sm:$0xff]
  %v2783 = vld [vmem:[%s6 + $0x10] sm:$0xff]
  %v2784 = vld [vmem:[%s6 + $0x18] sm:$0xff]
  %v2785 = vld [vmem:[%s7] sm:$0x1]
  %v2787 = vlaneseq
  %v2788 = vshrl.u32 %v2787, 7
  %v2789 = vsub.s32 0, %v2788
  %v2790 = vrot.slane %v2785, %v2789
  %2793 = vrot.lane.b32.xlu0 %v2780, 120
  %v2794 = vpop.permute.xlu0 %2793
  %v2795 = vsel %vm53, %v2794, 0
  %2797 = vmatprep.subr.mxu0 0.0
  %2798 = vmatpush1.msra.mxu0 %v2781
  %2799 = vmatprep.subr.mxu0 0.0
  %2800 = vmatpush1.msra.mxu0 %v2782
  %2801 = vmatprep.subr.mxu0 0.0
  %2802 = vmatpush1.msra.mxu0 %v2783
  %2803 = vmatprep.subr.mxu0 0.0
  %2804 = vmatpush1.msra.mxu0 %v2784
  %2805 = vmatprep.subr.mxu0 0.0
  %2806 = vmatpush1.msra.mxu0 0.0
  %2807 = vmatprep.subr.mxu0 0.0
  %2808 = vmatpush1.msra.mxu0 0.0
  %2809 = vmatprep.subr.mxu0 0.0
  %2810 = vmatpush1.msra.mxu0 0.0
  %2811 = vmatprep.subr.mxu0 0.0
  %2812 = vmatpush1.msra.mxu0 0.0
  %2813 = vmatprep.subr.mxu0 0.0
  %2814 = vmatpush1.msra.mxu0 0.0
  %2815 = vmatprep.subr.mxu0 0.0
  %2816 = vmatpush1.msra.mxu0 0.0
  %2817 = vmatprep.subr.mxu0 0.0
  %2818 = vmatpush1.msra.mxu0 0.0
  %2819 = vmatprep.subr.mxu0 0.0
  %2820 = vmatpush1.msra.mxu0 0.0
  %2821 = vmatprep.subr.mxu0 0.0
  %2822 = vmatpush1.msra.mxu0 0.0
  %2823 = vmatprep.subr.mxu0 0.0
  %2824 = vmatpush1.msra.mxu0 0.0
  %2825 = vmatprep.subr.mxu0 0.0
  %2826 = vmatpush1.msra.mxu0 0.0
  %2827 = vmatprep.subr.mxu0 0.0
  %2828 = vmatpush1.msra.mxu0 0.0
  %2829 = vmatprep.subr.mxu0 0.0
  %2830 = vmatpush1.msra.mxu0 0.0
  %2831 = vmatprep.subr.mxu0 0.0
  %2832 = vmatpush1.msra.mxu0 0.0
  %2833 = vmatprep.subr.mxu0 0.0
  %2834 = vmatpush1.msra.mxu0 0.0
  %2835 = vmatprep.subr.mxu0 0.0
  %2836 = vmatpush1.msra.mxu0 0.0
  %2837 = vmatprep.subr.mxu0 0.0
  %2838 = vmatpush1.msra.mxu0 0.0
  %2839 = vmatprep.subr.mxu0 0.0
  %2840 = vmatpush1.msra.mxu0 0.0
  %2841 = vmatprep.subr.mxu0 0.0
  %2842 = vmatpush1.msra.mxu0 0.0
  %2843 = vmatprep.subr.mxu0 0.0
  %2844 = vmatpush1.msra.mxu0 0.0
  %2845 = vmatprep.subr.mxu0 0.0
  %2846 = vmatpush1.msra.mxu0 0.0
  %2847 = vmatprep.subr.mxu0 0.0
  %2848 = vmatpush1.msra.mxu0 0.0
  %2849 = vmatprep.subr.mxu0 0.0
  %2850 = vmatpush1.msra.mxu0 0.0
  %2851 = vmatprep.subr.mxu0 0.0
  %2852 = vmatpush1.msra.mxu0 0.0
  %2853 = vmatprep.subr.mxu0 0.0
  %2854 = vmatpush1.msra.mxu0 0.0
  %2855 = vmatprep.subr.mxu0 0.0
  %2856 = vmatpush1.msra.mxu0 0.0
  %2857 = vmatprep.subr.mxu0 0.0
  %2858 = vmatpush1.msra.mxu0 0.0
  %2859 = vmatprep.subr.mxu0 0.0
  %2860 = vmatpush1.msra.mxu0 0.0
  %2861 = vmatprep.mubr.f32.mxu0 0.0
  %2862 = vmatmul.mubr.f32.gmra.mrb[0].mxu0 %v2795
  %v2863 = vpop.f32.mrb[0].mxu0
  %v2864 = vadd.f32 %v2790, %v2863
  %v2865 = vpop.f32.mrb[0].mxu0
  %2866 = vdwg.mxu0
  %v2867 = vadd.f32 %v2864, %v2690
  %v2868 = vxor.u32 %v2867, 2147483648
  %v2869 = vmul.f32 %v2868, 1.442695
  %v2870 = vpow.pop %v2869
  %v2871 = vadd.f32 %v2870, 1.0
  %v2872 = vrcp.pop %v2871
  %v2873 = vmul.f32 1.0, %v2872
  %2874 = vrot.lane.b32.xlu0 %v2690, 64
  %v2875 = vpop.permute.xlu0 %2874
  %v2877 = vmul.f32 %v2873, %v2875
  %2879 = vrot.lane.b32.xlu0 %v2877, 64
  %v2880 = vpop.permute.xlu0 %2879
  %v2882 = vadd.f32 %v2864, %v2880
  %v2883 = vtanh.pop %v2882
  %v2884 = vsub.f32 1.0, %v2873
  %2886 = vrot.lane.b32.xlu0 %v2883, 96
  %v2887 = vpop.permute.xlu0 %2886
  %v2889 = vmul.f32 %v2884, %v2887
  %v2890 = vmul.f32 %v2873, %v2409
  %v2891 = vadd.f32 %v2889, %v2890
  %v2892 = vld [vmem:[%s10] sm:$0xff]
  %v2893 = vld [vmem:[%s10 + $0x8] sm:$0xff]
  %v2894 = vld [vmem:[%s10 + $0x10] sm:$0xff]
  %v2895 = vld [vmem:[%s10 + $0x18] sm:$0xff]
  %v2896 = vld [vmem:[%s11] sm:$0x1]
  %v2898 = vlaneseq
  %v2899 = vshrl.u32 %v2898, 7
  %v2900 = vsub.s32 0, %v2899
  %v2901 = vrot.slane %v2896, %v2900
  %2904 = vrot.lane.b32.xlu0 %v2891, 96
  %v2905 = vpop.permute.xlu0 %2904
  %v2906 = vsel %vm53, %v2905, 0
  %2908 = vmatprep.subr.mxu0 0.0
  %2909 = vmatpush1.msra.mxu0 %v2892
  %2910 = vmatprep.subr.mxu0 0.0
  %2911 = vmatpush1.msra.mxu0 %v2893
  %2912 = vmatprep.subr.mxu0 0.0
  %2913 = vmatpush1.msra.mxu0 %v2894
  %2914 = vmatprep.subr.mxu0 0.0
  %2915 = vmatpush1.msra.mxu0 %v2895
  %2916 = vmatprep.subr.mxu0 0.0
  %2917 = vmatpush1.msra.mxu0 0.0
  %2918 = vmatprep.subr.mxu0 0.0
  %2919 = vmatpush1.msra.mxu0 0.0
  %2920 = vmatprep.subr.mxu0 0.0
  %2921 = vmatpush1.msra.mxu0 0.0
  %2922 = vmatprep.subr.mxu0 0.0
  %2923 = vmatpush1.msra.mxu0 0.0
  %2924 = vmatprep.subr.mxu0 0.0
  %2925 = vmatpush1.msra.mxu0 0.0
  %2926 = vmatprep.subr.mxu0 0.0
  %2927 = vmatpush1.msra.mxu0 0.0
  %2928 = vmatprep.subr.mxu0 0.0
  %2929 = vmatpush1.msra.mxu0 0.0
  %2930 = vmatprep.subr.mxu0 0.0
  %2931 = vmatpush1.msra.mxu0 0.0
  %2932 = vmatprep.subr.mxu0 0.0
  %2933 = vmatpush1.msra.mxu0 0.0
  %2934 = vmatprep.subr.mxu0 0.0
  %2935 = vmatpush1.msra.mxu0 0.0
  %2936 = vmatprep.subr.mxu0 0.0
  %2937 = vmatpush1.msra.mxu0 0.0
  %2938 = vmatprep.subr.mxu0 0.0
  %2939 = vmatpush1.msra.mxu0 0.0
  %2940 = vmatprep.subr.mxu0 0.0
  %2941 = vmatpush1.msra.mxu0 0.0
  %2942 = vmatprep.subr.mxu0 0.0
  %2943 = vmatpush1.msra.mxu0 0.0
  %2944 = vmatprep.subr.mxu0 0.0
  %2945 = vmatpush1.msra.mxu0 0.0
  %2946 = vmatprep.subr.mxu0 0.0
  %2947 = vmatpush1.msra.mxu0 0.0
  %2948 = vmatprep.subr.mxu0 0.0
  %2949 = vmatpush1.msra.mxu0 0.0
  %2950 = vmatprep.subr.mxu0 0.0
  %2951 = vmatpush1.msra.mxu0 0.0
  %2952 = vmatprep.subr.mxu0 0.0
  %2953 = vmatpush1.msra.mxu0 0.0
  %2954 = vmatprep.subr.mxu0 0.0
  %2955 = vmatpush1.msra.mxu0 0.0
  %2956 = vmatprep.subr.mxu0 0.0
  %2957 = vmatpush1.msra.mxu0 0.0
  %2958 = vmatprep.subr.mxu0 0.0
  %2959 = vmatpush1.msra.mxu0 0.0
  %2960 = vmatprep.subr.mxu0 0.0
  %2961 = vmatpush1.msra.mxu0 0.0
  %2962 = vmatprep.subr.mxu0 0.0
  %2963 = vmatpush1.msra.mxu0 0.0
  %2964 = vmatprep.subr.mxu0 0.0
  %2965 = vmatpush1.msra.mxu0 0.0
  %2966 = vmatprep.subr.mxu0 0.0
  %2967 = vmatpush1.msra.mxu0 0.0
  %2968 = vmatprep.subr.mxu0 0.0
  %2969 = vmatpush1.msra.mxu0 0.0
  %2970 = vmatprep.subr.mxu0 0.0
  %2971 = vmatpush1.msra.mxu0 0.0
  %2972 = vmatprep.mubr.f32.mxu0 0.0
  %2973 = vmatmul.mubr.f32.gmra.mrb[0].mxu0 %v2906
  %v2974 = vpop.f32.mrb[0].mxu0
  %v2975 = vadd.f32 %v2901, %v2974
  %v2976 = vpop.f32.mrb[0].mxu0
  %2977 = vdwg.mxu0
  %2978 = vmax.xlane.f32.xlu0 %v2975
  %v2979 = vpop.xlane.xlu0 %2978
  %v2980 = vsub.f32 %v2975, %v2979
  %v2981 = vmul.f32 %v2980, 1.442695
  %v2982 = vpow.pop %v2981
  %2983 = vadd.xlane.f32.xlu0 %v2982
  %v2984 = vpop.xlane.xlu0 %2983
  %v2985 = vlog2.pop %v2984
  %v2986 = vmul.f32 %v2985, 0.6931472
  %v2987 = vsub.f32 %v2980, %v2986
  %2988 = vst [vmem:[%s12 + $0x10] sm:$0xff] %v2987
  %vm2989 = vcmp.eq.f32.partialorder %v2975, %v2979
  %v2990 = vsel %vm2989, %v1557, 128
  %v2991 = vand.u32 %v2990, 65535
  %v2992 = vshra.s32 %v2990, 16
  %v2993 = vcvt.s32.f32 %v2991
  %v2994 = vcvt.s32.f32 %v2992
  %2995 = vmin.xlane.f32.xlu0 %v2994
  %v2996 = vpop.xlane.xlu0 %2995
  %vm2997 = vcmp.eq.f32.partialorder %v2994, %v2996
  %v2998 = vsel %vm2997, %v2993, inf
  %2999 = vmin.xlane.f32.xlu0 %v2998
  %v3000 = vpop.xlane.xlu0 %2999
  %v3001 = vcvt.f32.s32 %v3000
  %v3002 = vcvt.f32.s32 %v2996
  %v3003 = vshll.u32 %v3002, 16
  %v3004 = vadd.s32 %v3003, %v3001
  %vm3005 = vcmp.eq.s32.totalorder %v1557, %v3004
  %v3006 = vsel %vm3005, 1, 0
  %v3007 = vcvt.s32.f32 %v3006
  %v3008 = vld [vmem:[%s3] sm:$0xff]
  %v3009 = vld [vmem:[%s3 + $0x8] sm:$0xff]
  %v3010 = vld [vmem:[%s3 + $0x10] sm:$0xff]
  %v3011 = vld [vmem:[%s3 + $0x18] sm:$0xff]
  %v3012 = vld [vmem:[%s3 + $0x20] sm:$0xff]
  %v3013 = vld [vmem:[%s3 + $0x28] sm:$0xff]
  %v3014 = vld [vmem:[%s3 + $0x30] sm:$0xff]
  %v3015 = vld [vmem:[%s3 + $0x38] sm:$0xff]
  %v3016 = vld [vmem:[%s3 + $0x40] sm:$0xff]
  %v3017 = vld [vmem:[%s3 + $0x48] sm:$0xff]
  %v3018 = vld [vmem:[%s3 + $0x50] sm:$0xff]
  %v3019 = vld [vmem:[%s3 + $0x58] sm:$0xff]
  %v3020 = vld [vmem:[%s3 + $0x60] sm:$0xff]
  %v3021 = vld [vmem:[%s3 + $0x68] sm:$0xff]
  %v3022 = vld [vmem:[%s3 + $0x70] sm:$0xff]
  %v3023 = vld [vmem:[%s3 + $0x78] sm:$0xff]
  %3024 = vmatprep.subr.mxu0 0.0
  %3025 = vmatpush1.msra.mxu0 %v3008
  %3026 = vmatprep.subr.mxu0 0.0
  %3027 = vmatpush1.msra.mxu0 %v3009
  %3028 = vmatprep.subr.mxu0 0.0
  %3029 = vmatpush1.msra.mxu0 %v3010
  %3030 = vmatprep.subr.mxu0 0.0
  %3031 = vmatpush1.msra.mxu0 %v3011
  %3032 = vmatprep.subr.mxu0 0.0
  %3033 = vmatpush1.msra.mxu0 %v3012
  %3034 = vmatprep.subr.mxu0 0.0
  %3035 = vmatpush1.msra.mxu0 %v3013
  %3036 = vmatprep.subr.mxu0 0.0
  %3037 = vmatpush1.msra.mxu0 %v3014
  %3038 = vmatprep.subr.mxu0 0.0
  %3039 = vmatpush1.msra.mxu0 %v3015
  %3040 = vmatprep.subr.mxu0 0.0
  %3041 = vmatpush1.msra.mxu0 %v3016
  %3042 = vmatprep.subr.mxu0 0.0
  %3043 = vmatpush1.msra.mxu0 %v3017
  %3044 = vmatprep.subr.mxu0 0.0
  %3045 = vmatpush1.msra.mxu0 %v3018
  %3046 = vmatprep.subr.mxu0 0.0
  %3047 = vmatpush1.msra.mxu0 %v3019
  %3048 = vmatprep.subr.mxu0 0.0
  %3049 = vmatpush1.msra.mxu0 %v3020
  %3050 = vmatprep.subr.mxu0 0.0
  %3051 = vmatpush1.msra.mxu0 %v3021
  %3052 = vmatprep.subr.mxu0 0.0
  %3053 = vmatpush1.msra.mxu0 %v3022
  %3054 = vmatprep.subr.mxu0 0.0
  %3055 = vmatpush1.msra.mxu0 %v3023
  %3056 = vmatprep.subr.mxu0 0.0
  %3057 = vmatpush1.msra.mxu0 0.0
  %3058 = vmatprep.subr.mxu0 0.0
  %3059 = vmatpush1.msra.mxu0 0.0
  %3060 = vmatprep.subr.mxu0 0.0
  %3061 = vmatpush1.msra.mxu0 0.0
  %3062 = vmatprep.subr.mxu0 0.0
  %3063 = vmatpush1.msra.mxu0 0.0
  %3064 = vmatprep.subr.mxu0 0.0
  %3065 = vmatpush1.msra.mxu0 0.0
  %3066 = vmatprep.subr.mxu0 0.0
  %3067 = vmatpush1.msra.mxu0 0.0
  %3068 = vmatprep.subr.mxu0 0.0
  %3069 = vmatpush1.msra.mxu0 0.0
  %3070 = vmatprep.subr.mxu0 0.0
  %3071 = vmatpush1.msra.mxu0 0.0
  %3072 = vmatprep.subr.mxu0 0.0
  %3073 = vmatpush1.msra.mxu0 0.0
  %3074 = vmatprep.subr.mxu0 0.0
  %3075 = vmatpush1.msra.mxu0 0.0
  %3076 = vmatprep.subr.mxu0 0.0
  %3077 = vmatpush1.msra.mxu0 0.0
  %3078 = vmatprep.subr.mxu0 0.0
  %3079 = vmatpush1.msra.mxu0 0.0
  %3080 = vmatprep.subr.mxu0 0.0
  %3081 = vmatpush1.msra.mxu0 0.0
  %3082 = vmatprep.subr.mxu0 0.0
  %3083 = vmatpush1.msra.mxu0 0.0
  %3084 = vmatprep.subr.mxu0 0.0
  %3085 = vmatpush1.msra.mxu0 0.0
  %3086 = vmatprep.subr.mxu0 0.0
  %3087 = vmatpush1.msra.mxu0 0.0
  %3088 = vmatprep.mubr.f32.mxu0 0.0
  %3089 = vmatmul.mubr.f32.gmra.mrb[0].mxu0 %v3007
  %v3090 = vpop.f32.mrb[0].mxu0
  %v3091 = vadd.f32 0.0, %v3090
  %v3092 = vpop.f32.mrb[0].mxu0
  %3093 = vdwg.mxu0
  %v3094 = vld [vmem:[%s4] sm:$0xff]
  %v3095 = vld [vmem:[%s4 + $0x8] sm:$0xff]
  %v3096 = vld [vmem:[%s4 + $0x10] sm:$0xff]
  %v3097 = vld [vmem:[%s4 + $0x18] sm:$0xff]
  %v3098 = vld [vmem:[%s5] sm:$0x1]
  %v3100 = vlaneseq
  %v3101 = vshrl.u32 %v3100, 7
  %v3102 = vsub.s32 0, %v3101
  %v3103 = vrot.slane %v3098, %v3102
  %3105 = vmatprep.subr.mxu0 0.0
  %3106 = vmatpush1.msra.mxu0 %v3094
  %3107 = vmatprep.subr.mxu0 0.0
  %3108 = vmatpush1.msra.mxu0 %v3095
  %3109 = vmatprep.subr.mxu0 0.0
  %3110 = vmatpush1.msra.mxu0 %v3096
  %3111 = vmatprep.subr.mxu0 0.0
  %3112 = vmatpush1.msra.mxu0 %v3097
  %3113 = vmatprep.subr.mxu0 0.0
  %3114 = vmatpush1.msra.mxu0 0.0
  %3115 = vmatprep.subr.mxu0 0.0
  %3116 = vmatpush1.msra.mxu0 0.0
  %3117 = vmatprep.subr.mxu0 0.0
  %3118 = vmatpush1.msra.mxu0 0.0
  %3119 = vmatprep.subr.mxu0 0.0
  %3120 = vmatpush1.msra.mxu0 0.0
  %3121 = vmatprep.subr.mxu0 0.0
  %3122 = vmatpush1.msra.mxu0 0.0
  %3123 = vmatprep.subr.mxu0 0.0
  %3124 = vmatpush1.msra.mxu0 0.0
  %3125 = vmatprep.subr.mxu0 0.0
  %3126 = vmatpush1.msra.mxu0 0.0
  %3127 = vmatprep.subr.mxu0 0.0
  %3128 = vmatpush1.msra.mxu0 0.0
  %3129 = vmatprep.subr.mxu0 0.0
  %3130 = vmatpush1.msra.mxu0 0.0
  %3131 = vmatprep.subr.mxu0 0.0
  %3132 = vmatpush1.msra.mxu0 0.0
  %3133 = vmatprep.subr.mxu0 0.0
  %3134 = vmatpush1.msra.mxu0 0.0
  %3135 = vmatprep.subr.mxu0 0.0
  %3136 = vmatpush1.msra.mxu0 0.0
  %3137 = vmatprep.subr.mxu0 0.0
  %3138 = vmatpush1.msra.mxu0 0.0
  %3139 = vmatprep.subr.mxu0 0.0
  %3140 = vmatpush1.msra.mxu0 0.0
  %3141 = vmatprep.subr.mxu0 0.0
  %3142 = vmatpush1.msra.mxu0 0.0
  %3143 = vmatprep.subr.mxu0 0.0
  %3144 = vmatpush1.msra.mxu0 0.0
  %3145 = vmatprep.subr.mxu0 0.0
  %3146 = vmatpush1.msra.mxu0 0.0
  %3147 = vmatprep.subr.mxu0 0.0
  %3148 = vmatpush1.msra.mxu0 0.0
  %3149 = vmatprep.subr.mxu0 0.0
  %3150 = vmatpush1.msra.mxu0 0.0
  %3151 = vmatprep.subr.mxu0 0.0
  %3152 = vmatpush1.msra.mxu0 0.0
  %3153 = vmatprep.subr.mxu0 0.0
  %3154 = vmatpush1.msra.mxu0 0.0
  %3155 = vmatprep.subr.mxu0 0.0
  %3156 = vmatpush1.msra.mxu0 0.0
  %3157 = vmatprep.subr.mxu0 0.0
  %3158 = vmatpush1.msra.mxu0 0.0
  %3159 = vmatprep.subr.mxu0 0.0
  %3160 = vmatpush1.msra.mxu0 0.0
  %3161 = vmatprep.subr.mxu0 0.0
  %3162 = vmatpush1.msra.mxu0 0.0
  %3163 = vmatprep.subr.mxu0 0.0
  %3164 = vmatpush1.msra.mxu0 0.0
  %3165 = vmatprep.subr.mxu0 0.0
  %3166 = vmatpush1.msra.mxu0 0.0
  %3167 = vmatprep.subr.mxu0 0.0
  %3168 = vmatpush1.msra.mxu0 0.0
  %3169 = vmatprep.mubr.f32.mxu0 0.0
  %3170 = vmatmul.mubr.f32.gmra.mrb[0].mxu0 %v2906
  %v3171 = vpop.f32.mrb[0].mxu0
  %v3172 = vadd.f32 %v3103, %v3171
  %v3173 = vpop.f32.mrb[0].mxu0
  %3174 = vdwg.mxu0
  %3176 = vrot.lane.b32.xlu0 %v3172, 32
  %v3177 = vpop.permute.xlu0 %3176
  %v3179 = vadd.f32 %v3091, %v3177
  %v3180 = vsel %vm1733, %v3179, -inf
  %3181 = vmax.xlane.f32.xlu0 %v3180
  %v3182 = vpop.xlane.xlu0 %3181
  %v3183 = vsub.f32 %v3179, %v3182
  %v3184 = vmul.f32 %v3183, 1.442695
  %v3185 = vpow.pop %v3184
  %v3186 = vsel %vm1733, %v3185, 0.0
  %3187 = vadd.xlane.f32.xlu0 %v3186
  %v3188 = vpop.xlane.xlu0 %3187
  %v3189 = vrcp.pop %v3188
  %v3190 = vmul.f32 %v3185, %v3189
  %v3191 = vld [vmem:[#allocation2] sm:$0xff]
  %3193 = vset.pattern.permute.xlu0 0
  %3194 = vperm.xlu0 %3193, %v3190
  %v3195 = vpop.permute.xlu0 %3194
  %v3197 = vmul.f32 %v3195, %v3191
  %v3198 = vld [vmem:[%s420] sm:$0xff]
  %3199 = vset.pattern.permute.xlu0 1
  %3200 = vperm.xlu0 %3199, %v3190
  %v3201 = vpop.permute.xlu0 %3200
  %v3203 = vmul.f32 %v3201, %v3198
  %v3204 = vadd.f32 %v3197, %v3203
  %v3205 = vld [vmem:[%s609] sm:$0xff]
  %3206 = vset.pattern.permute.xlu0 2
  %3207 = vperm.xlu0 %3206, %v3190
  %v3208 = vpop.permute.xlu0 %3207
  %v3210 = vmul.f32 %v3208, %v3205
  %v3211 = vadd.f32 %v3204, %v3210
  %v3212 = vld [vmem:[%s798] sm:$0xff]
  %3213 = vset.pattern.permute.xlu0 3
  %3214 = vperm.xlu0 %3213, %v3190
  %v3215 = vpop.permute.xlu0 %3214
  %v3217 = vmul.f32 %v3215, %v3212
  %v3218 = vadd.f32 %v3211, %v3217
  %v3219 = vld [vmem:[%s987] sm:$0xff]
  %3220 = vset.pattern.permute.xlu0 4
  %3221 = vperm.xlu0 %3220, %v3190
  %v3222 = vpop.permute.xlu0 %3221
  %v3224 = vmul.f32 %v3222, %v3219
  %v3225 = vadd.f32 %v3218, %v3224
  %v3226 = vld [vmem:[%s1176] sm:$0xff]
  %3227 = vset.pattern.permute.xlu0 5
  %3228 = vperm.xlu0 %3227, %v3190
  %v3229 = vpop.permute.xlu0 %3228
  %v3231 = vmul.f32 %v3229, %v3226
  %v3232 = vadd.f32 %v3225, %v3231
  %v3233 = vld [vmem:[%s1365] sm:$0xff]
  %3234 = vset.pattern.permute.xlu0 6
  %3235 = vperm.xlu0 %3234, %v3190
  %v3236 = vpop.permute.xlu0 %3235
  %v3238 = vmul.f32 %v3236, %v3233
  %v3239 = vadd.f32 %v3232, %v3238
  %v3240 = vld [vmem:[%s1554] sm:$0xff]
  %3241 = vset.pattern.permute.xlu0 7
  %3242 = vperm.xlu0 %3241, %v3190
  %v3243 = vpop.permute.xlu0 %3242
  %v3245 = vmul.f32 %v3243, %v3240
  %v3246 = vadd.f32 %v3239, %v3245
  %3248 = vrot.lane.b32.xlu0 %v3246, 8
  %v3249 = vpop.permute.xlu0 %3248
  %v3251 = vadd.f32 %v3091, %v3249
  %v3252 = vld [vmem:[%s9] sm:$0x1]
  %v3254 = vlaneseq
  %v3255 = vshrl.u32 %v3254, 7
  %v3256 = vsub.s32 0, %v3255
  %v3257 = vrot.slane %v3252, %v3256
  %3258 = vrot.lane.b32.xlu0 %v3257, 8
  %v3259 = vpop.permute.xlu0 %3258
  %v3261 = vadd.f32 %v3251, %v3259
  %v3262 = vmax.f32 %v3261, 0.0
  %v3263 = vld [vmem:[%s6] sm:$0xff]
  %v3264 = vld [vmem:[%s6 + $0x8] sm:$0xff]
  %v3265 = vld [vmem:[%s6 + $0x10] sm:$0xff]
  %v3266 = vld [vmem:[%s6 + $0x18] sm:$0xff]
  %v3267 = vld [vmem:[%s7] sm:$0x1]
  %v3269 = vlaneseq
  %v3270 = vshrl.u32 %v3269, 7
  %v3271 = vsub.s32 0, %v3270
  %v3272 = vrot.slane %v3267, %v3271
  %3275 = vrot.lane.b32.xlu0 %v3262, 120
  %v3276 = vpop.permute.xlu0 %3275
  %v3277 = vsel %vm53, %v3276, 0
  %3279 = vmatprep.subr.mxu0 0.0
  %3280 = vmatpush1.msra.mxu0 %v3263
  %3281 = vmatprep.subr.mxu0 0.0
  %3282 = vmatpush1.msra.mxu0 %v3264
  %3283 = vmatprep.subr.mxu0 0.0
  %3284 = vmatpush1.msra.mxu0 %v3265
  %3285 = vmatprep.subr.mxu0 0.0
  %3286 = vmatpush1.msra.mxu0 %v3266
  %3287 = vmatprep.subr.mxu0 0.0
  %3288 = vmatpush1.msra.mxu0 0.0
  %3289 = vmatprep.subr.mxu0 0.0
  %3290 = vmatpush1.msra.mxu0 0.0
  %3291 = vmatprep.subr.mxu0 0.0
  %3292 = vmatpush1.msra.mxu0 0.0
  %3293 = vmatprep.subr.mxu0 0.0
  %3294 = vmatpush1.msra.mxu0 0.0
  %3295 = vmatprep.subr.mxu0 0.0
  %3296 = vmatpush1.msra.mxu0 0.0
  %3297 = vmatprep.subr.mxu0 0.0
  %3298 = vmatpush1.msra.mxu0 0.0
  %3299 = vmatprep.subr.mxu0 0.0
  %3300 = vmatpush1.msra.mxu0 0.0
  %3301 = vmatprep.subr.mxu0 0.0
  %3302 = vmatpush1.msra.mxu0 0.0
  %3303 = vmatprep.subr.mxu0 0.0
  %3304 = vmatpush1.msra.mxu0 0.0
  %3305 = vmatprep.subr.mxu0 0.0
  %3306 = vmatpush1.msra.mxu0 0.0
  %3307 = vmatprep.subr.mxu0 0.0
  %3308 = vmatpush1.msra.mxu0 0.0
  %3309 = vmatprep.subr.mxu0 0.0
  %3310 = vmatpush1.msra.mxu0 0.0
  %3311 = vmatprep.subr.mxu0 0.0
  %3312 = vmatpush1.msra.mxu0 0.0
  %3313 = vmatprep.subr.mxu0 0.0
  %3314 = vmatpush1.msra.mxu0 0.0
  %3315 = vmatprep.subr.mxu0 0.0
  %3316 = vmatpush1.msra.mxu0 0.0
  %3317 = vmatprep.subr.mxu0 0.0
  %3318 = vmatpush1.msra.mxu0 0.0
  %3319 = vmatprep.subr.mxu0 0.0
  %3320 = vmatpush1.msra.mxu0 0.0
  %3321 = vmatprep.subr.mxu0 0.0
  %3322 = vmatpush1.msra.mxu0 0.0
  %3323 = vmatprep.subr.mxu0 0.0
  %3324 = vmatpush1.msra.mxu0 0.0
  %3325 = vmatprep.subr.mxu0 0.0
  %3326 = vmatpush1.msra.mxu0 0.0
  %3327 = vmatprep.subr.mxu0 0.0
  %3328 = vmatpush1.msra.mxu0 0.0
  %3329 = vmatprep.subr.mxu0 0.0
  %3330 = vmatpush1.msra.mxu0 0.0
  %3331 = vmatprep.subr.mxu0 0.0
  %3332 = vmatpush1.msra.mxu0 0.0
  %3333 = vmatprep.subr.mxu0 0.0
  %3334 = vmatpush1.msra.mxu0 0.0
  %3335 = vmatprep.subr.mxu0 0.0
  %3336 = vmatpush1.msra.mxu0 0.0
  %3337 = vmatprep.subr.mxu0 0.0
  %3338 = vmatpush1.msra.mxu0 0.0
  %3339 = vmatprep.subr.mxu0 0.0
  %3340 = vmatpush1.msra.mxu0 0.0
  %3341 = vmatprep.subr.mxu0 0.0
  %3342 = vmatpush1.msra.mxu0 0.0
  %3343 = vmatprep.mubr.f32.mxu0 0.0
  %3344 = vmatmul.mubr.f32.gmra.mrb[0].mxu0 %v3277
  %v3345 = vpop.f32.mrb[0].mxu0
  %v3346 = vadd.f32 %v3272, %v3345
  %v3347 = vpop.f32.mrb[0].mxu0
  %3348 = vdwg.mxu0
  %v3349 = vadd.f32 %v3346, %v3172
  %v3350 = vxor.u32 %v3349, 2147483648
  %v3351 = vmul.f32 %v3350, 1.442695
  %v3352 = vpow.pop %v3351
  %v3353 = vadd.f32 %v3352, 1.0
  %v3354 = vrcp.pop %v3353
  %v3355 = vmul.f32 1.0, %v3354
  %3356 = vrot.lane.b32.xlu0 %v3172, 64
  %v3357 = vpop.permute.xlu0 %3356
  %v3359 = vmul.f32 %v3355, %v3357
  %3361 = vrot.lane.b32.xlu0 %v3359, 64
  %v3362 = vpop.permute.xlu0 %3361
  %v3364 = vadd.f32 %v3346, %v3362
  %v3365 = vtanh.pop %v3364
  %v3366 = vsub.f32 1.0, %v3355
  %3368 = vrot.lane.b32.xlu0 %v3365, 96
  %v3369 = vpop.permute.xlu0 %3368
  %v3371 = vmul.f32 %v3366, %v3369
  %v3372 = vmul.f32 %v3355, %v2891
  %v3373 = vadd.f32 %v3371, %v3372
  %v3374 = vld [vmem:[%s10] sm:$0xff]
  %v3375 = vld [vmem:[%s10 + $0x8] sm:$0xff]
  %v3376 = vld [vmem:[%s10 + $0x10] sm:$0xff]
  %v3377 = vld [vmem:[%s10 + $0x18] sm:$0xff]
  %v3378 = vld [vmem:[%s11] sm:$0x1]
  %v3380 = vlaneseq
  %v3381 = vshrl.u32 %v3380, 7
  %v3382 = vsub.s32 0, %v3381
  %v3383 = vrot.slane %v3378, %v3382
  %3386 = vrot.lane.b32.xlu0 %v3373, 96
  %v3387 = vpop.permute.xlu0 %3386
  %v3388 = vsel %vm53, %v3387, 0
  %3390 = vmatprep.subr.mxu0 0.0
  %3391 = vmatpush1.msra.mxu0 %v3374
  %3392 = vmatprep.subr.mxu0 0.0
  %3393 = vmatpush1.msra.mxu0 %v3375
  %3394 = vmatprep.subr.mxu0 0.0
  %3395 = vmatpush1.msra.mxu0 %v3376
  %3396 = vmatprep.subr.mxu0 0.0
  %3397 = vmatpush1.msra.mxu0 %v3377
  %3398 = vmatprep.subr.mxu0 0.0
  %3399 = vmatpush1.msra.mxu0 0.0
  %3400 = vmatprep.subr.mxu0 0.0
  %3401 = vmatpush1.msra.mxu0 0.0
  %3402 = vmatprep.subr.mxu0 0.0
  %3403 = vmatpush1.msra.mxu0 0.0
  %3404 = vmatprep.subr.mxu0 0.0
  %3405 = vmatpush1.msra.mxu0 0.0
  %3406 = vmatprep.subr.mxu0 0.0
  %3407 = vmatpush1.msra.mxu0 0.0
  %3408 = vmatprep.subr.mxu0 0.0
  %3409 = vmatpush1.msra.mxu0 0.0
  %3410 = vmatprep.subr.mxu0 0.0
  %3411 = vmatpush1.msra.mxu0 0.0
  %3412 = vmatprep.subr.mxu0 0.0
  %3413 = vmatpush1.msra.mxu0 0.0
  %3414 = vmatprep.subr.mxu0 0.0
  %3415 = vmatpush1.msra.mxu0 0.0
  %3416 = vmatprep.subr.mxu0 0.0
  %3417 = vmatpush1.msra.mxu0 0.0
  %3418 = vmatprep.subr.mxu0 0.0
  %3419 = vmatpush1.msra.mxu0 0.0
  %3420 = vmatprep.subr.mxu0 0.0
  %3421 = vmatpush1.msra.mxu0 0.0
  %3422 = vmatprep.subr.mxu0 0.0
  %3423 = vmatpush1.msra.mxu0 0.0
  %3424 = vmatprep.subr.mxu0 0.0
  %3425 = vmatpush1.msra.mxu0 0.0
  %3426 = vmatprep.subr.mxu0 0.0
  %3427 = vmatpush1.msra.mxu0 0.0
  %3428 = vmatprep.subr.mxu0 0.0
  %3429 = vmatpush1.msra.mxu0 0.0
  %3430 = vmatprep.subr.mxu0 0.0
  %3431 = vmatpush1.msra.mxu0 0.0
  %3432 = vmatprep.subr.mxu0 0.0
  %3433 = vmatpush1.msra.mxu0 0.0
  %3434 = vmatprep.subr.mxu0 0.0
  %3435 = vmatpush1.msra.mxu0 0.0
  %3436 = vmatprep.subr.mxu0 0.0
  %3437 = vmatpush1.msra.mxu0 0.0
  %3438 = vmatprep.subr.mxu0 0.0
  %3439 = vmatpush1.msra.mxu0 0.0
  %3440 = vmatprep.subr.mxu0 0.0
  %3441 = vmatpush1.msra.mxu0 0.0
  %3442 = vmatprep.subr.mxu0 0.0
  %3443 = vmatpush1.msra.mxu0 0.0
  %3444 = vmatprep.subr.mxu0 0.0
  %3445 = vmatpush1.msra.mxu0 0.0
  %3446 = vmatprep.subr.mxu0 0.0
  %3447 = vmatpush1.msra.mxu0 0.0
  %3448 = vmatprep.subr.mxu0 0.0
  %3449 = vmatpush1.msra.mxu0 0.0
  %3450 = vmatprep.subr.mxu0 0.0
  %3451 = vmatpush1.msra.mxu0 0.0
  %3452 = vmatprep.subr.mxu0 0.0
  %3453 = vmatpush1.msra.mxu0 0.0
  %3454 = vmatprep.mubr.f32.mxu0 0.0
  %3455 = vmatmul.mubr.f32.gmra.mrb[0].mxu0 %v3388
  %v3456 = vpop.f32.mrb[0].mxu0
  %v3457 = vadd.f32 %v3383, %v3456
  %v3458 = vpop.f32.mrb[0].mxu0
  %3459 = vdwg.mxu0
  %3460 = vmax.xlane.f32.xlu0 %v3457
  %v3461 = vpop.xlane.xlu0 %3460
  %v3462 = vsub.f32 %v3457, %v3461
  %v3463 = vmul.f32 %v3462, 1.442695
  %v3464 = vpow.pop %v3463
  %3465 = vadd.xlane.f32.xlu0 %v3464
  %v3466 = vpop.xlane.xlu0 %3465
  %v3467 = vlog2.pop %v3466
  %v3468 = vmul.f32 %v3467, 0.6931472
  %v3469 = vsub.f32 %v3462, %v3468
  %3470 = vst [vmem:[%s12 + $0x18] sm:$0xff] %v3469
  %vm3471 = vcmp.eq.f32.partialorder %v3457, %v3461
  %v3472 = vsel %vm3471, %v1557, 128
  %v3473 = vand.u32 %v3472, 65535
  %v3474 = vshra.s32 %v3472, 16
  %v3475 = vcvt.s32.f32 %v3473
  %v3476 = vcvt.s32.f32 %v3474
  %3477 = vmin.xlane.f32.xlu0 %v3476
  %v3478 = vpop.xlane.xlu0 %3477
  %vm3479 = vcmp.eq.f32.partialorder %v3476, %v3478
  %v3480 = vsel %vm3479, %v3475, inf
  %3481 = vmin.xlane.f32.xlu0 %v3480
  %v3482 = vpop.xlane.xlu0 %3481
  %v3483 = vcvt.f32.s32 %v3482
  %v3484 = vcvt.f32.s32 %v3478
  %v3485 = vshll.u32 %v3484, 16
  %v3486 = vadd.s32 %v3485, %v3483
  %vm3487 = vcmp.eq.s32.totalorder %v1557, %v3486
  %v3488 = vsel %vm3487, 1, 0
  %v3489 = vcvt.s32.f32 %v3488
  %v3490 = vld [vmem:[%s3] sm:$0xff]
  %v3491 = vld [vmem:[%s3 + $0x8] sm:$0xff]
  %v3492 = vld [vmem:[%s3 + $0x10] sm:$0xff]
  %v3493 = vld [vmem:[%s3 + $0x18] sm:$0xff]
  %v3494 = vld [vmem:[%s3 + $0x20] sm:$0xff]
  %v3495 = vld [vmem:[%s3 + $0x28] sm:$0xff]
  %v3496 = vld [vmem:[%s3 + $0x30] sm:$0xff]
  %v3497 = vld [vmem:[%s3 + $0x38] sm:$0xff]
  %v3498 = vld [vmem:[%s3 + $0x40] sm:$0xff]
  %v3499 = vld [vmem:[%s3 + $0x48] sm:$0xff]
  %v3500 = vld [vmem:[%s3 + $0x50] sm:$0xff]
  %v3501 = vld [vmem:[%s3 + $0x58] sm:$0xff]
  %v3502 = vld [vmem:[%s3 + $0x60] sm:$0xff]
  %v3503 = vld [vmem:[%s3 + $0x68] sm:$0xff]
  %v3504 = vld [vmem:[%s3 + $0x70] sm:$0xff]
  %v3505 = vld [vmem:[%s3 + $0x78] sm:$0xff]
  %3506 = vmatprep.subr.mxu0 0.0
  %3507 = vmatpush1.msra.mxu0 %v3490
  %3508 = vmatprep.subr.mxu0 0.0
  %3509 = vmatpush1.msra.mxu0 %v3491
  %3510 = vmatprep.subr.mxu0 0.0
  %3511 = vmatpush1.msra.mxu0 %v3492
  %3512 = vmatprep.subr.mxu0 0.0
  %3513 = vmatpush1.msra.mxu0 %v3493
  %3514 = vmatprep.subr.mxu0 0.0
  %3515 = vmatpush1.msra.mxu0 %v3494
  %3516 = vmatprep.subr.mxu0 0.0
  %3517 = vmatpush1.msra.mxu0 %v3495
  %3518 = vmatprep.subr.mxu0 0.0
  %3519 = vmatpush1.msra.mxu0 %v3496
  %3520 = vmatprep.subr.mxu0 0.0
  %3521 = vmatpush1.msra.mxu0 %v3497
  %3522 = vmatprep.subr.mxu0 0.0
  %3523 = vmatpush1.msra.mxu0 %v3498
  %3524 = vmatprep.subr.mxu0 0.0
  %3525 = vmatpush1.msra.mxu0 %v3499
  %3526 = vmatprep.subr.mxu0 0.0
  %3527 = vmatpush1.msra.mxu0 %v3500
  %3528 = vmatprep.subr.mxu0 0.0
  %3529 = vmatpush1.msra.mxu0 %v3501
  %3530 = vmatprep.subr.mxu0 0.0
  %3531 = vmatpush1.msra.mxu0 %v3502
  %3532 = vmatprep.subr.mxu0 0.0
  %3533 = vmatpush1.msra.mxu0 %v3503
  %3534 = vmatprep.subr.mxu0 0.0
  %3535 = vmatpush1.msra.mxu0 %v3504
  %3536 = vmatprep.subr.mxu0 0.0
  %3537 = vmatpush1.msra.mxu0 %v3505
  %3538 = vmatprep.subr.mxu0 0.0
  %3539 = vmatpush1.msra.mxu0 0.0
  %3540 = vmatprep.subr.mxu0 0.0
  %3541 = vmatpush1.msra.mxu0 0.0
  %3542 = vmatprep.subr.mxu0 0.0
  %3543 = vmatpush1.msra.mxu0 0.0
  %3544 = vmatprep.subr.mxu0 0.0
  %3545 = vmatpush1.msra.mxu0 0.0
  %3546 = vmatprep.subr.mxu0 0.0
  %3547 = vmatpush1.msra.mxu0 0.0
  %3548 = vmatprep.subr.mxu0 0.0
  %3549 = vmatpush1.msra.mxu0 0.0
  %3550 = vmatprep.subr.mxu0 0.0
  %3551 = vmatpush1.msra.mxu0 0.0
  %3552 = vmatprep.subr.mxu0 0.0
  %3553 = vmatpush1.msra.mxu0 0.0
  %3554 = vmatprep.subr.mxu0 0.0
  %3555 = vmatpush1.msra.mxu0 0.0
  %3556 = vmatprep.subr.mxu0 0.0
  %3557 = vmatpush1.msra.mxu0 0.0
  %3558 = vmatprep.subr.mxu0 0.0
  %3559 = vmatpush1.msra.mxu0 0.0
  %3560 = vmatprep.subr.mxu0 0.0
  %3561 = vmatpush1.msra.mxu0 0.0
  %3562 = vmatprep.subr.mxu0 0.0
  %3563 = vmatpush1.msra.mxu0 0.0
  %3564 = vmatprep.subr.mxu0 0.0
  %3565 = vmatpush1.msra.mxu0 0.0
  %3566 = vmatprep.subr.mxu0 0.0
  %3567 = vmatpush1.msra.mxu0 0.0
  %3568 = vmatprep.subr.mxu0 0.0
  %3569 = vmatpush1.msra.mxu0 0.0
  %3570 = vmatprep.mubr.f32.mxu0 0.0
  %3571 = vmatmul.mubr.f32.gmra.mrb[0].mxu0 %v3489
  %v3572 = vpop.f32.mrb[0].mxu0
  %v3573 = vadd.f32 0.0, %v3572
  %v3574 = vpop.f32.mrb[0].mxu0
  %3575 = vdwg.mxu0
  %v3576 = vld [vmem:[%s4] sm:$0xff]
  %v3577 = vld [vmem:[%s4 + $0x8] sm:$0xff]
  %v3578 = vld [vmem:[%s4 + $0x10] sm:$0xff]
  %v3579 = vld [vmem:[%s4 + $0x18] sm:$0xff]
  %v3580 = vld [vmem:[%s5] sm:$0x1]
  %v3582 = vlaneseq
  %v3583 = vshrl.u32 %v3582, 7
  %v3584 = vsub.s32 0, %v3583
  %v3585 = vrot.slane %v3580, %v3584
  %3587 = vmatprep.subr.mxu0 0.0
  %3588 = vmatpush1.msra.mxu0 %v3576
  %3589 = vmatprep.subr.mxu0 0.0
  %3590 = vmatpush1.msra.mxu0 %v3577
  %3591 = vmatprep.subr.mxu0 0.0
  %3592 = vmatpush1.msra.mxu0 %v3578
  %3593 = vmatprep.subr.mxu0 0.0
  %3594 = vmatpush1.msra.mxu0 %v3579
  %3595 = vmatprep.subr.mxu0 0.0
  %3596 = vmatpush1.msra.mxu0 0.0
  %3597 = vmatprep.subr.mxu0 0.0
  %3598 = vmatpush1.msra.mxu0 0.0
  %3599 = vmatprep.subr.mxu0 0.0
  %3600 = vmatpush1.msra.mxu0 0.0
  %3601 = vmatprep.subr.mxu0 0.0
  %3602 = vmatpush1.msra.mxu0 0.0
  %3603 = vmatprep.subr.mxu0 0.0
  %3604 = vmatpush1.msra.mxu0 0.0
  %3605 = vmatprep.subr.mxu0 0.0
  %3606 = vmatpush1.msra.mxu0 0.0
  %3607 = vmatprep.subr.mxu0 0.0
  %3608 = vmatpush1.msra.mxu0 0.0
  %3609 = vmatprep.subr.mxu0 0.0
  %3610 = vmatpush1.msra.mxu0 0.0
  %3611 = vmatprep.subr.mxu0 0.0
  %3612 = vmatpush1.msra.mxu0 0.0
  %3613 = vmatprep.subr.mxu0 0.0
  %3614 = vmatpush1.msra.mxu0 0.0
  %3615 = vmatprep.subr.mxu0 0.0
  %3616 = vmatpush1.msra.mxu0 0.0
  %3617 = vmatprep.subr.mxu0 0.0
  %3618 = vmatpush1.msra.mxu0 0.0
  %3619 = vmatprep.subr.mxu0 0.0
  %3620 = vmatpush1.msra.mxu0 0.0
  %3621 = vmatprep.subr.mxu0 0.0
  %3622 = vmatpush1.msra.mxu0 0.0
  %3623 = vmatprep.subr.mxu0 0.0
  %3624 = vmatpush1.msra.mxu0 0.0
  %3625 = vmatprep.subr.mxu0 0.0
  %3626 = vmatpush1.msra.mxu0 0.0
  %3627 = vmatprep.subr.mxu0 0.0
  %3628 = vmatpush1.msra.mxu0 0.0
  %3629 = vmatprep.subr.mxu0 0.0
  %3630 = vmatpush1.msra.mxu0 0.0
  %3631 = vmatprep.subr.mxu0 0.0
  %3632 = vmatpush1.msra.mxu0 0.0
  %3633 = vmatprep.subr.mxu0 0.0
  %3634 = vmatpush1.msra.mxu0 0.0
  %3635 = vmatprep.subr.mxu0 0.0
  %3636 = vmatpush1.msra.mxu0 0.0
  %3637 = vmatprep.subr.mxu0 0.0
  %3638 = vmatpush1.msra.mxu0 0.0
  %3639 = vmatprep.subr.mxu0 0.0
  %3640 = vmatpush1.msra.mxu0 0.0
  %3641 = vmatprep.subr.mxu0 0.0
  %3642 = vmatpush1.msra.mxu0 0.0
  %3643 = vmatprep.subr.mxu0 0.0
  %3644 = vmatpush1.msra.mxu0 0.0
  %3645 = vmatprep.subr.mxu0 0.0
  %3646 = vmatpush1.msra.mxu0 0.0
  %3647 = vmatprep.subr.mxu0 0.0
  %3648 = vmatpush1.msra.mxu0 0.0
  %3649 = vmatprep.subr.mxu0 0.0
  %3650 = vmatpush1.msra.mxu0 0.0
  %3651 = vmatprep.mubr.f32.mxu0 0.0
  %3652 = vmatmul.mubr.f32.gmra.mrb[0].mxu0 %v3388
  %v3653 = vpop.f32.mrb[0].mxu0
  %v3654 = vadd.f32 %v3585, %v3653
  %v3655 = vpop.f32.mrb[0].mxu0
  %3656 = vdwg.mxu0
  %3658 = vrot.lane.b32.xlu0 %v3654, 32
  %v3659 = vpop.permute.xlu0 %3658
  %v3661 = vadd.f32 %v3573, %v3659
  %v3662 = vsel %vm1733, %v3661, -inf
  %3663 = vmax.xlane.f32.xlu0 %v3662
  %v3664 = vpop.xlane.xlu0 %3663
  %v3665 = vsub.f32 %v3661, %v3664
  %v3666 = vmul.f32 %v3665, 1.442695
  %v3667 = vpow.pop %v3666
  %v3668 = vsel %vm1733, %v3667, 0.0
  %3669 = vadd.xlane.f32.xlu0 %v3668
  %v3670 = vpop.xlane.xlu0 %3669
  %v3671 = vrcp.pop %v3670
  %v3672 = vmul.f32 %v3667, %v3671
  %v3673 = vld [vmem:[#allocation2] sm:$0xff]
  %3675 = vset.pattern.permute.xlu0 0
  %3676 = vperm.xlu0 %3675, %v3672
  %v3677 = vpop.permute.xlu0 %3676
  %v3679 = vmul.f32 %v3677, %v3673
  %v3680 = vld [vmem:[%s420] sm:$0xff]
  %3681 = vset.pattern.permute.xlu0 1
  %3682 = vperm.xlu0 %3681, %v3672
  %v3683 = vpop.permute.xlu0 %3682
  %v3685 = vmul.f32 %v3683, %v3680
  %v3686 = vadd.f32 %v3679, %v3685
  %v3687 = vld [vmem:[%s609] sm:$0xff]
  %3688 = vset.pattern.permute.xlu0 2
  %3689 = vperm.xlu0 %3688, %v3672
  %v3690 = vpop.permute.xlu0 %3689
  %v3692 = vmul.f32 %v3690, %v3687
  %v3693 = vadd.f32 %v3686, %v3692
  %v3694 = vld [vmem:[%s798] sm:$0xff]
  %3695 = vset.pattern.permute.xlu0 3
  %3696 = vperm.xlu0 %3695, %v3672
  %v3697 = vpop.permute.xlu0 %3696
  %v3699 = vmul.f32 %v3697, %v3694
  %v3700 = vadd.f32 %v3693, %v3699
  %v3701 = vld [vmem:[%s987] sm:$0xff]
  %3702 = vset.pattern.permute.xlu0 4
  %3703 = vperm.xlu0 %3702, %v3672
  %v3704 = vpop.permute.xlu0 %3703
  %v3706 = vmul.f32 %v3704, %v3701
  %v3707 = vadd.f32 %v3700, %v3706
  %v3708 = vld [vmem:[%s1176] sm:$0xff]
  %3709 = vset.pattern.permute.xlu0 5
  %3710 = vperm.xlu0 %3709, %v3672
  %v3711 = vpop.permute.xlu0 %3710
  %v3713 = vmul.f32 %v3711, %v3708
  %v3714 = vadd.f32 %v3707, %v3713
  %v3715 = vld [vmem:[%s1365] sm:$0xff]
  %3716 = vset.pattern.permute.xlu0 6
  %3717 = vperm.xlu0 %3716, %v3672
  %v3718 = vpop.permute.xlu0 %3717
  %v3720 = vmul.f32 %v3718, %v3715
  %v3721 = vadd.f32 %v3714, %v3720
  %v3722 = vld [vmem:[%s1554] sm:$0xff]
  %3723 = vset.pattern.permute.xlu0 7
  %3724 = vperm.xlu0 %3723, %v3672
  %v3725 = vpop.permute.xlu0 %3724
  %v3727 = vmul.f32 %v3725, %v3722
  %v3728 = vadd.f32 %v3721, %v3727
  %3730 = vrot.lane.b32.xlu0 %v3728, 8
  %v3731 = vpop.permute.xlu0 %3730
  %v3733 = vadd.f32 %v3573, %v3731
  %v3734 = vld [vmem:[%s9] sm:$0x1]
  %v3736 = vlaneseq
  %v3737 = vshrl.u32 %v3736, 7
  %v3738 = vsub.s32 0, %v3737
  %v3739 = vrot.slane %v3734, %v3738
  %3740 = vrot.lane.b32.xlu0 %v3739, 8
  %v3741 = vpop.permute.xlu0 %3740
  %v3743 = vadd.f32 %v3733, %v3741
  %v3744 = vmax.f32 %v3743, 0.0
  %v3745 = vld [vmem:[%s6] sm:$0xff]
  %v3746 = vld [vmem:[%s6 + $0x8] sm:$0xff]
  %v3747 = vld [vmem:[%s6 + $0x10] sm:$0xff]
  %v3748 = vld [vmem:[%s6 + $0x18] sm:$0xff]
  %v3749 = vld [vmem:[%s7] sm:$0x1]
  %v3751 = vlaneseq
  %v3752 = vshrl.u32 %v3751, 7
  %v3753 = vsub.s32 0, %v3752
  %v3754 = vrot.slane %v3749, %v3753
  %3757 = vrot.lane.b32.xlu0 %v3744, 120
  %v3758 = vpop.permute.xlu0 %3757
  %v3759 = vsel %vm53, %v3758, 0
  %3761 = vmatprep.subr.mxu0 0.0
  %3762 = vmatpush1.msra.mxu0 %v3745
  %3763 = vmatprep.subr.mxu0 0.0
  %3764 = vmatpush1.msra.mxu0 %v3746
  %3765 = vmatprep.subr.mxu0 0.0
  %3766 = vmatpush1.msra.mxu0 %v3747
  %3767 = vmatprep.subr.mxu0 0.0
  %3768 = vmatpush1.msra.mxu0 %v3748
  %3769 = vmatprep.subr.mxu0 0.0
  %3770 = vmatpush1.msra.mxu0 0.0
  %3771 = vmatprep.subr.mxu0 0.0
  %3772 = vmatpush1.msra.mxu0 0.0
  %3773 = vmatprep.subr.mxu0 0.0
  %3774 = vmatpush1.msra.mxu0 0.0
  %3775 = vmatprep.subr.mxu0 0.0
  %3776 = vmatpush1.msra.mxu0 0.0
  %3777 = vmatprep.subr.mxu0 0.0
  %3778 = vmatpush1.msra.mxu0 0.0
  %3779 = vmatprep.subr.mxu0 0.0
  %3780 = vmatpush1.msra.mxu0 0.0
  %3781 = vmatprep.subr.mxu0 0.0
  %3782 = vmatpush1.msra.mxu0 0.0
  %3783 = vmatprep.subr.mxu0 0.0
  %3784 = vmatpush1.msra.mxu0 0.0
  %3785 = vmatprep.subr.mxu0 0.0
  %3786 = vmatpush1.msra.mxu0 0.0
  %3787 = vmatprep.subr.mxu0 0.0
  %3788 = vmatpush1.msra.mxu0 0.0
  %3789 = vmatprep.subr.mxu0 0.0
  %3790 = vmatpush1.msra.mxu0 0.0
  %3791 = vmatprep.subr.mxu0 0.0
  %3792 = vmatpush1.msra.mxu0 0.0
  %3793 = vmatprep.subr.mxu0 0.0
  %3794 = vmatpush1.msra.mxu0 0.0
  %3795 = vmatprep.subr.mxu0 0.0
  %3796 = vmatpush1.msra.mxu0 0.0
  %3797 = vmatprep.subr.mxu0 0.0
  %3798 = vmatpush1.msra.mxu0 0.0
  %3799 = vmatprep.subr.mxu0 0.0
  %3800 = vmatpush1.msra.mxu0 0.0
  %3801 = vmatprep.subr.mxu0 0.0
  %3802 = vmatpush1.msra.mxu0 0.0
  %3803 = vmatprep.subr.mxu0 0.0
  %3804 = vmatpush1.msra.mxu0 0.0
  %3805 = vmatprep.subr.mxu0 0.0
  %3806 = vmatpush1.msra.mxu0 0.0
  %3807 = vmatprep.subr.mxu0 0.0
  %3808 = vmatpush1.msra.mxu0 0.0
  %3809 = vmatprep.subr.mxu0 0.0
  %3810 = vmatpush1.msra.mxu0 0.0
  %3811 = vmatprep.subr.mxu0 0.0
  %3812 = vmatpush1.msra.mxu0 0.0
  %3813 = vmatprep.subr.mxu0 0.0
  %3814 = vmatpush1.msra.mxu0 0.0
  %3815 = vmatprep.subr.mxu0 0.0
  %3816 = vmatpush1.msra.mxu0 0.0
  %3817 = vmatprep.subr.mxu0 0.0
  %3818 = vmatpush1.msra.mxu0 0.0
  %3819 = vmatprep.subr.mxu0 0.0
  %3820 = vmatpush1.msra.mxu0 0.0
  %3821 = vmatprep.subr.mxu0 0.0
  %3822 = vmatpush1.msra.mxu0 0.0
  %3823 = vmatprep.subr.mxu0 0.0
  %3824 = vmatpush1.msra.mxu0 0.0
  %3825 = vmatprep.mubr.f32.mxu0 0.0
  %3826 = vmatmul.mubr.f32.gmra.mrb[0].mxu0 %v3759
  %v3827 = vpop.f32.mrb[0].mxu0
  %v3828 = vadd.f32 %v3754, %v3827
  %v3829 = vpop.f32.mrb[0].mxu0
  %3830 = vdwg.mxu0
  %v3831 = vadd.f32 %v3828, %v3654
  %v3832 = vxor.u32 %v3831, 2147483648
  %v3833 = vmul.f32 %v3832, 1.442695
  %v3834 = vpow.pop %v3833
  %v3835 = vadd.f32 %v3834, 1.0
  %v3836 = vrcp.pop %v3835
  %v3837 = vmul.f32 1.0, %v3836
  %3838 = vrot.lane.b32.xlu0 %v3654, 64
  %v3839 = vpop.permute.xlu0 %3838
  %v3841 = vmul.f32 %v3837, %v3839
  %3843 = vrot.lane.b32.xlu0 %v3841, 64
  %v3844 = vpop.permute.xlu0 %3843
  %v3846 = vadd.f32 %v3828, %v3844
  %v3847 = vtanh.pop %v3846
  %v3848 = vsub.f32 1.0, %v3837
  %3850 = vrot.lane.b32.xlu0 %v3847, 96
  %v3851 = vpop.permute.xlu0 %3850
  %v3853 = vmul.f32 %v3848, %v3851
  %v3854 = vmul.f32 %v3837, %v3373
  %v3855 = vadd.f32 %v3853, %v3854
  %v3856 = vld [vmem:[%s10] sm:$0xff]
  %v3857 = vld [vmem:[%s10 + $0x8] sm:$0xff]
  %v3858 = vld [vmem:[%s10 + $0x10] sm:$0xff]
  %v3859 = vld [vmem:[%s10 + $0x18] sm:$0xff]
  %v3860 = vld [vmem:[%s11] sm:$0x1]
  %v3862 = vlaneseq
  %v3863 = vshrl.u32 %v3862, 7
  %v3864 = vsub.s32 0, %v3863
  %v3865 = vrot.slane %v3860, %v3864
  %3868 = vrot.lane.b32.xlu0 %v3855, 96
  %v3869 = vpop.permute.xlu0 %3868
  %v3870 = vsel %vm53, %v3869, 0
  %3872 = vmatprep.subr.mxu0 0.0
  %3873 = vmatpush1.msra.mxu0 %v3856
  %3874 = vmatprep.subr.mxu0 0.0
  %3875 = vmatpush1.msra.mxu0 %v3857
  %3876 = vmatprep.subr.mxu0 0.0
  %3877 = vmatpush1.msra.mxu0 %v3858
  %3878 = vmatprep.subr.mxu0 0.0
  %3879 = vmatpush1.msra.mxu0 %v3859
  %3880 = vmatprep.subr.mxu0 0.0
  %3881 = vmatpush1.msra.mxu0 0.0
  %3882 = vmatprep.subr.mxu0 0.0
  %3883 = vmatpush1.msra.mxu0 0.0
  %3884 = vmatprep.subr.mxu0 0.0
  %3885 = vmatpush1.msra.mxu0 0.0
  %3886 = vmatprep.subr.mxu0 0.0
  %3887 = vmatpush1.msra.mxu0 0.0
  %3888 = vmatprep.subr.mxu0 0.0
  %3889 = vmatpush1.msra.mxu0 0.0
  %3890 = vmatprep.subr.mxu0 0.0
  %3891 = vmatpush1.msra.mxu0 0.0
  %3892 = vmatprep.subr.mxu0 0.0
  %3893 = vmatpush1.msra.mxu0 0.0
  %3894 = vmatprep.subr.mxu0 0.0
  %3895 = vmatpush1.msra.mxu0 0.0
  %3896 = vmatprep.subr.mxu0 0.0
  %3897 = vmatpush1.msra.mxu0 0.0
  %3898 = vmatprep.subr.mxu0 0.0
  %3899 = vmatpush1.msra.mxu0 0.0
  %3900 = vmatprep.subr.mxu0 0.0
  %3901 = vmatpush1.msra.mxu0 0.0
  %3902 = vmatprep.subr.mxu0 0.0
  %3903 = vmatpush1.msra.mxu0 0.0
  %3904 = vmatprep.subr.mxu0 0.0
  %3905 = vmatpush1.msra.mxu0 0.0
  %3906 = vmatprep.subr.mxu0 0.0
  %3907 = vmatpush1.msra.mxu0 0.0
  %3908 = vmatprep.subr.mxu0 0.0
  %3909 = vmatpush1.msra.mxu0 0.0
  %3910 = vmatprep.subr.mxu0 0.0
  %3911 = vmatpush1.msra.mxu0 0.0
  %3912 = vmatprep.subr.mxu0 0.0
  %3913 = vmatpush1.msra.mxu0 0.0
  %3914 = vmatprep.subr.mxu0 0.0
  %3915 = vmatpush1.msra.mxu0 0.0
  %3916 = vmatprep.subr.mxu0 0.0
  %3917 = vmatpush1.msra.mxu0 0.0
  %3918 = vmatprep.subr.mxu0 0.0
  %3919 = vmatpush1.msra.mxu0 0.0
  %3920 = vmatprep.subr.mxu0 0.0
  %3921 = vmatpush1.msra.mxu0 0.0
  %3922 = vmatprep.subr.mxu0 0.0
  %3923 = vmatpush1.msra.mxu0 0.0
  %3924 = vmatprep.subr.mxu0 0.0
  %3925 = vmatpush1.msra.mxu0 0.0
  %3926 = vmatprep.subr.mxu0 0.0
  %3927 = vmatpush1.msra.mxu0 0.0
  %3928 = vmatprep.subr.mxu0 0.0
  %3929 = vmatpush1.msra.mxu0 0.0
  %3930 = vmatprep.subr.mxu0 0.0
  %3931 = vmatpush1.msra.mxu0 0.0
  %3932 = vmatprep.subr.mxu0 0.0
  %3933 = vmatpush1.msra.mxu0 0.0
  %3934 = vmatprep.subr.mxu0 0.0
  %3935 = vmatpush1.msra.mxu0 0.0
  %3936 = vmatprep.mubr.f32.mxu0 0.0
  %3937 = vmatmul.mubr.f32.gmra.mrb[0].mxu0 %v3870
  %v3938 = vpop.f32.mrb[0].mxu0
  %v3939 = vadd.f32 %v3865, %v3938
  %v3940 = vpop.f32.mrb[0].mxu0
  %3941 = vdwg.mxu0
  %3942 = vmax.xlane.f32.xlu0 %v3939
  %v3943 = vpop.xlane.xlu0 %3942
  %v3944 = vsub.f32 %v3939, %v3943
  %v3945 = vmul.f32 %v3944, 1.442695
  %v3946 = vpow.pop %v3945
  %3947 = vadd.xlane.f32.xlu0 %v3946
  %v3948 = vpop.xlane.xlu0 %3947
  %v3949 = vlog2.pop %v3948
  %v3950 = vmul.f32 %v3949, 0.6931472
  %v3951 = vsub.f32 %v3944, %v3950
  %3952 = vst [vmem:[%s12 + $0x20] sm:$0xff] %v3951
  %vm3953 = vcmp.eq.f32.partialorder %v3939, %v3943
  %v3954 = vsel %vm3953, %v1557, 128
  %v3955 = vand.u32 %v3954, 65535
  %v3956 = vshra.s32 %v3954, 16
  %v3957 = vcvt.s32.f32 %v3955
  %v3958 = vcvt.s32.f32 %v3956
  %3959 = vmin.xlane.f32.xlu0 %v3958
  %v3960 = vpop.xlane.xlu0 %3959
  %vm3961 = vcmp.eq.f32.partialorder %v3958, %v3960
  %v3962 = vsel %vm3961, %v3957, inf
  %3963 = vmin.xlane.f32.xlu0 %v3962
  %v3964 = vpop.xlane.xlu0 %3963
  %v3965 = vcvt.f32.s32 %v3964
  %v3966 = vcvt.f32.s32 %v3960
  %v3967 = vshll.u32 %v3966, 16
  %v3968 = vadd.s32 %v3967, %v3965
  %vm3969 = vcmp.eq.s32.totalorder %v1557, %v3968
  %v3970 = vsel %vm3969, 1, 0
  %v3971 = vcvt.s32.f32 %v3970
  %v3972 = vld [vmem:[%s3] sm:$0xff]
  %v3973 = vld [vmem:[%s3 + $0x8] sm:$0xff]
  %v3974 = vld [vmem:[%s3 + $0x10] sm:$0xff]
  %v3975 = vld [vmem:[%s3 + $0x18] sm:$0xff]
  %v3976 = vld [vmem:[%s3 + $0x20] sm:$0xff]
  %v3977 = vld [vmem:[%s3 + $0x28] sm:$0xff]
  %v3978 = vld [vmem:[%s3 + $0x30] sm:$0xff]
  %v3979 = vld [vmem:[%s3 + $0x38] sm:$0xff]
  %v3980 = vld [vmem:[%s3 + $0x40] sm:$0xff]
  %v3981 = vld [vmem:[%s3 + $0x48] sm:$0xff]
  %v3982 = vld [vmem:[%s3 + $0x50] sm:$0xff]
  %v3983 = vld [vmem:[%s3 + $0x58] sm:$0xff]
  %v3984 = vld [vmem:[%s3 + $0x60] sm:$0xff]
  %v3985 = vld [vmem:[%s3 + $0x68] sm:$0xff]
  %v3986 = vld [vmem:[%s3 + $0x70] sm:$0xff]
  %v3987 = vld [vmem:[%s3 + $0x78] sm:$0xff]
  %3988 = vmatprep.subr.mxu0 0.0
  %3989 = vmatpush1.msra.mxu0 %v3972
  %3990 = vmatprep.subr.mxu0 0.0
  %3991 = vmatpush1.msra.mxu0 %v3973
  %3992 = vmatprep.subr.mxu0 0.0
  %3993 = vmatpush1.msra.mxu0 %v3974
  %3994 = vmatprep.subr.mxu0 0.0
  %3995 = vmatpush1.msra.mxu0 %v3975
  %3996 = vmatprep.subr.mxu0 0.0
  %3997 = vmatpush1.msra.mxu0 %v3976
  %3998 = vmatprep.subr.mxu0 0.0
  %3999 = vmatpush1.msra.mxu0 %v3977
  %4000 = vmatprep.subr.mxu0 0.0
  %4001 = vmatpush1.msra.mxu0 %v3978
  %4002 = vmatprep.subr.mxu0 0.0
  %4003 = vmatpush1.msra.mxu0 %v3979
  %4004 = vmatprep.subr.mxu0 0.0
  %4005 = vmatpush1.msra.mxu0 %v3980
  %4006 = vmatprep.subr.mxu0 0.0
  %4007 = vmatpush1.msra.mxu0 %v3981
  %4008 = vmatprep.subr.mxu0 0.0
  %4009 = vmatpush1.msra.mxu0 %v3982
  %4010 = vmatprep.subr.mxu0 0.0
  %4011 = vmatpush1.msra.mxu0 %v3983
  %4012 = vmatprep.subr.mxu0 0.0
  %4013 = vmatpush1.msra.mxu0 %v3984
  %4014 = vmatprep.subr.mxu0 0.0
  %4015 = vmatpush1.msra.mxu0 %v3985
  %4016 = vmatprep.subr.mxu0 0.0
  %4017 = vmatpush1.msra.mxu0 %v3986
  %4018 = vmatprep.subr.mxu0 0.0
  %4019 = vmatpush1.msra.mxu0 %v3987
  %4020 = vmatprep.subr.mxu0 0.0
  %4021 = vmatpush1.msra.mxu0 0.0
  %4022 = vmatprep.subr.mxu0 0.0
  %4023 = vmatpush1.msra.mxu0 0.0
  %4024 = vmatprep.subr.mxu0 0.0
  %4025 = vmatpush1.msra.mxu0 0.0
  %4026 = vmatprep.subr.mxu0 0.0
  %4027 = vmatpush1.msra.mxu0 0.0
  %4028 = vmatprep.subr.mxu0 0.0
  %4029 = vmatpush1.msra.mxu0 0.0
  %4030 = vmatprep.subr.mxu0 0.0
  %4031 = vmatpush1.msra.mxu0 0.0
  %4032 = vmatprep.subr.mxu0 0.0
  %4033 = vmatpush1.msra.mxu0 0.0
  %4034 = vmatprep.subr.mxu0 0.0
  %4035 = vmatpush1.msra.mxu0 0.0
  %4036 = vmatprep.subr.mxu0 0.0
  %4037 = vmatpush1.msra.mxu0 0.0
  %4038 = vmatprep.subr.mxu0 0.0
  %4039 = vmatpush1.msra.mxu0 0.0
  %4040 = vmatprep.subr.mxu0 0.0
  %4041 = vmatpush1.msra.mxu0 0.0
  %4042 = vmatprep.subr.mxu0 0.0
  %4043 = vmatpush1.msra.mxu0 0.0
  %4044 = vmatprep.subr.mxu0 0.0
  %4045 = vmatpush1.msra.mxu0 0.0
  %4046 = vmatprep.subr.mxu0 0.0
  %4047 = vmatpush1.msra.mxu0 0.0
  %4048 = vmatprep.subr.mxu0 0.0
  %4049 = vmatpush1.msra.mxu0 0.0
  %4050 = vmatprep.subr.mxu0 0.0
  %4051 = vmatpush1.msra.mxu0 0.0
  %4052 = vmatprep.mubr.f32.mxu0 0.0
  %4053 = vmatmul.mubr.f32.gmra.mrb[0].mxu0 %v3971
  %v4054 = vpop.f32.mrb[0].mxu0
  %v4055 = vadd.f32 0.0, %v4054
  %v4056 = vpop.f32.mrb[0].mxu0
  %4057 = vdwg.mxu0
  %v4058 = vld [vmem:[%s4] sm:$0xff]
  %v4059 = vld [vmem:[%s4 + $0x8] sm:$0xff]
  %v4060 = vld [vmem:[%s4 + $0x10] sm:$0xff]
  %v4061 = vld [vmem:[%s4 + $0x18] sm:$0xff]
  %v4062 = vld [vmem:[%s5] sm:$0x1]
  %v4064 = vlaneseq
  %v4065 = vshrl.u32 %v4064, 7
  %v4066 = vsub.s32 0, %v4065
  %v4067 = vrot.slane %v4062, %v4066
  %4069 = vmatprep.subr.mxu0 0.0
  %4070 = vmatpush1.msra.mxu0 %v4058
  %4071 = vmatprep.subr.mxu0 0.0
  %4072 = vmatpush1.msra.mxu0 %v4059
  %4073 = vmatprep.subr.mxu0 0.0
  %4074 = vmatpush1.msra.mxu0 %v4060
  %4075 = vmatprep.subr.mxu0 0.0
  %4076 = vmatpush1.msra.mxu0 %v4061
  %4077 = vmatprep.subr.mxu0 0.0
  %4078 = vmatpush1.msra.mxu0 0.0
  %4079 = vmatprep.subr.mxu0 0.0
  %4080 = vmatpush1.msra.mxu0 0.0
  %4081 = vmatprep.subr.mxu0 0.0
  %4082 = vmatpush1.msra.mxu0 0.0
  %4083 = vmatprep.subr.mxu0 0.0
  %4084 = vmatpush1.msra.mxu0 0.0
  %4085 = vmatprep.subr.mxu0 0.0
  %4086 = vmatpush1.msra.mxu0 0.0
  %4087 = vmatprep.subr.mxu0 0.0
  %4088 = vmatpush1.msra.mxu0 0.0
  %4089 = vmatprep.subr.mxu0 0.0
  %4090 = vmatpush1.msra.mxu0 0.0
  %4091 = vmatprep.subr.mxu0 0.0
  %4092 = vmatpush1.msra.mxu0 0.0
  %4093 = vmatprep.subr.mxu0 0.0
  %4094 = vmatpush1.msra.mxu0 0.0
  %4095 = vmatprep.subr.mxu0 0.0
  %4096 = vmatpush1.msra.mxu0 0.0
  %4097 = vmatprep.subr.mxu0 0.0
  %4098 = vmatpush1.msra.mxu0 0.0
  %4099 = vmatprep.subr.mxu0 0.0
  %4100 = vmatpush1.msra.mxu0 0.0
  %4101 = vmatprep.subr.mxu0 0.0
  %4102 = vmatpush1.msra.mxu0 0.0
  %4103 = vmatprep.subr.mxu0 0.0
  %4104 = vmatpush1.msra.mxu0 0.0
  %4105 = vmatprep.subr.mxu0 0.0
  %4106 = vmatpush1.msra.mxu0 0.0
  %4107 = vmatprep.subr.mxu0 0.0
  %4108 = vmatpush1.msra.mxu0 0.0
  %4109 = vmatprep.subr.mxu0 0.0
  %4110 = vmatpush1.msra.mxu0 0.0
  %4111 = vmatprep.subr.mxu0 0.0
  %4112 = vmatpush1.msra.mxu0 0.0
  %4113 = vmatprep.subr.mxu0 0.0
  %4114 = vmatpush1.msra.mxu0 0.0
  %4115 = vmatprep.subr.mxu0 0.0
  %4116 = vmatpush1.msra.mxu0 0.0
  %4117 = vmatprep.subr.mxu0 0.0
  %4118 = vmatpush1.msra.mxu0 0.0
  %4119 = vmatprep.subr.mxu0 0.0
  %4120 = vmatpush1.msra.mxu0 0.0
  %4121 = vmatprep.subr.mxu0 0.0
  %4122 = vmatpush1.msra.mxu0 0.0
  %4123 = vmatprep.subr.mxu0 0.0
  %4124 = vmatpush1.msra.mxu0 0.0
  %4125 = vmatprep.subr.mxu0 0.0
  %4126 = vmatpush1.msra.mxu0 0.0
  %4127 = vmatprep.subr.mxu0 0.0
  %4128 = vmatpush1.msra.mxu0 0.0
  %4129 = vmatprep.subr.mxu0 0.0
  %4130 = vmatpush1.msra.mxu0 0.0
  %4131 = vmatprep.subr.mxu0 0.0
  %4132 = vmatpush1.msra.mxu0 0.0
  %4133 = vmatprep.mubr.f32.mxu0 0.0
  %4134 = vmatmul.mubr.f32.gmra.mrb[0].mxu0 %v3870
  %v4135 = vpop.f32.mrb[0].mxu0
  %v4136 = vadd.f32 %v4067, %v4135
  %v4137 = vpop.f32.mrb[0].mxu0
  %4138 = vdwg.mxu0
  %4140 = vrot.lane.b32.xlu0 %v4136, 32
  %v4141 = vpop.permute.xlu0 %4140
  %v4143 = vadd.f32 %v4055, %v4141
  %v4144 = vsel %vm1733, %v4143, -inf
  %4145 = vmax.xlane.f32.xlu0 %v4144
  %v4146 = vpop.xlane.xlu0 %4145
  %v4147 = vsub.f32 %v4143, %v4146
  %v4148 = vmul.f32 %v4147, 1.442695
  %v4149 = vpow.pop %v4148
  %v4150 = vsel %vm1733, %v4149, 0.0
  %4151 = vadd.xlane.f32.xlu0 %v4150
  %v4152 = vpop.xlane.xlu0 %4151
  %v4153 = vrcp.pop %v4152
  %v4154 = vmul.f32 %v4149, %v4153
  %v4155 = vld [vmem:[#allocation2] sm:$0xff]
  %4157 = vset.pattern.permute.xlu0 0
  %4158 = vperm.xlu0 %4157, %v4154
  %v4159 = vpop.permute.xlu0 %4158
  %v4161 = vmul.f32 %v4159, %v4155
  %v4162 = vld [vmem:[%s420] sm:$0xff]
  %4163 = vset.pattern.permute.xlu0 1
  %4164 = vperm.xlu0 %4163, %v4154
  %v4165 = vpop.permute.xlu0 %4164
  %v4167 = vmul.f32 %v4165, %v4162
  %v4168 = vadd.f32 %v4161, %v4167
  %v4169 = vld [vmem:[%s609] sm:$0xff]
  %4170 = vset.pattern.permute.xlu0 2
  %4171 = vperm.xlu0 %4170, %v4154
  %v4172 = vpop.permute.xlu0 %4171
  %v4174 = vmul.f32 %v4172, %v4169
  %v4175 = vadd.f32 %v4168, %v4174
  %v4176 = vld [vmem:[%s798] sm:$0xff]
  %4177 = vset.pattern.permute.xlu0 3
  %4178 = vperm.xlu0 %4177, %v4154
  %v4179 = vpop.permute.xlu0 %4178
  %v4181 = vmul.f32 %v4179, %v4176
  %v4182 = vadd.f32 %v4175, %v4181
  %v4183 = vld [vmem:[%s987] sm:$0xff]
  %4184 = vset.pattern.permute.xlu0 4
  %4185 = vperm.xlu0 %4184, %v4154
  %v4186 = vpop.permute.xlu0 %4185
  %v4188 = vmul.f32 %v4186, %v4183
  %v4189 = vadd.f32 %v4182, %v4188
  %v4190 = vld [vmem:[%s1176] sm:$0xff]
  %4191 = vset.pattern.permute.xlu0 5
  %4192 = vperm.xlu0 %4191, %v4154
  %v4193 = vpop.permute.xlu0 %4192
  %v4195 = vmul.f32 %v4193, %v4190
  %v4196 = vadd.f32 %v4189, %v4195
  %v4197 = vld [vmem:[%s1365] sm:$0xff]
  %4198 = vset.pattern.permute.xlu0 6
  %4199 = vperm.xlu0 %4198, %v4154
  %v4200 = vpop.permute.xlu0 %4199
  %v4202 = vmul.f32 %v4200, %v4197
  %v4203 = vadd.f32 %v4196, %v4202
  %v4204 = vld [vmem:[%s1554] sm:$0xff]
  %4205 = vset.pattern.permute.xlu0 7
  %4206 = vperm.xlu0 %4205, %v4154
  %v4207 = vpop.permute.xlu0 %4206
  %v4209 = vmul.f32 %v4207, %v4204
  %v4210 = vadd.f32 %v4203, %v4209
  %4212 = vrot.lane.b32.xlu0 %v4210, 8
  %v4213 = vpop.permute.xlu0 %4212
  %v4215 = vadd.f32 %v4055, %v4213
  %v4216 = vld [vmem:[%s9] sm:$0x1]
  %v4218 = vlaneseq
  %v4219 = vshrl.u32 %v4218, 7
  %v4220 = vsub.s32 0, %v4219
  %v4221 = vrot.slane %v4216, %v4220
  %4222 = vrot.lane.b32.xlu0 %v4221, 8
  %v4223 = vpop.permute.xlu0 %4222
  %v4225 = vadd.f32 %v4215, %v4223
  %v4226 = vmax.f32 %v4225, 0.0
  %v4227 = vld [vmem:[%s6] sm:$0xff]
  %v4228 = vld [vmem:[%s6 + $0x8] sm:$0xff]
  %v4229 = vld [vmem:[%s6 + $0x10] sm:$0xff]
  %v4230 = vld [vmem:[%s6 + $0x18] sm:$0xff]
  %v4231 = vld [vmem:[%s7] sm:$0x1]
  %v4233 = vlaneseq
  %v4234 = vshrl.u32 %v4233, 7
  %v4235 = vsub.s32 0, %v4234
  %v4236 = vrot.slane %v4231, %v4235
  %4239 = vrot.lane.b32.xlu0 %v4226, 120
  %v4240 = vpop.permute.xlu0 %4239
  %v4241 = vsel %vm53, %v4240, 0
  %4243 = vmatprep.subr.mxu0 0.0
  %4244 = vmatpush1.msra.mxu0 %v4227
  %4245 = vmatprep.subr.mxu0 0.0
  %4246 = vmatpush1.msra.mxu0 %v4228
  %4247 = vmatprep.subr.mxu0 0.0
  %4248 = vmatpush1.msra.mxu0 %v4229
  %4249 = vmatprep.subr.mxu0 0.0
  %4250 = vmatpush1.msra.mxu0 %v4230
  %4251 = vmatprep.subr.mxu0 0.0
  %4252 = vmatpush1.msra.mxu0 0.0
  %4253 = vmatprep.subr.mxu0 0.0
  %4254 = vmatpush1.msra.mxu0 0.0
  %4255 = vmatprep.subr.mxu0 0.0
  %4256 = vmatpush1.msra.mxu0 0.0
  %4257 = vmatprep.subr.mxu0 0.0
  %4258 = vmatpush1.msra.mxu0 0.0
  %4259 = vmatprep.subr.mxu0 0.0
  %4260 = vmatpush1.msra.mxu0 0.0
  %4261 = vmatprep.subr.mxu0 0.0
  %4262 = vmatpush1.msra.mxu0 0.0
  %4263 = vmatprep.subr.mxu0 0.0
  %4264 = vmatpush1.msra.mxu0 0.0
  %4265 = vmatprep.subr.mxu0 0.0
  %4266 = vmatpush1.msra.mxu0 0.0
  %4267 = vmatprep.subr.mxu0 0.0
  %4268 = vmatpush1.msra.mxu0 0.0
  %4269 = vmatprep.subr.mxu0 0.0
  %4270 = vmatpush1.msra.mxu0 0.0
  %4271 = vmatprep.subr.mxu0 0.0
  %4272 = vmatpush1.msra.mxu0 0.0
  %4273 = vmatprep.subr.mxu0 0.0
  %4274 = vmatpush1.msra.mxu0 0.0
  %4275 = vmatprep.subr.mxu0 0.0
  %4276 = vmatpush1.msra.mxu0 0.0
  %4277 = vmatprep.subr.mxu0 0.0
  %4278 = vmatpush1.msra.mxu0 0.0
  %4279 = vmatprep.subr.mxu0 0.0
  %4280 = vmatpush1.msra.mxu0 0.0
  %4281 = vmatprep.subr.mxu0 0.0
  %4282 = vmatpush1.msra.mxu0 0.0
  %4283 = vmatprep.subr.mxu0 0.0
  %4284 = vmatpush1.msra.mxu0 0.0
  %4285 = vmatprep.subr.mxu0 0.0
  %4286 = vmatpush1.msra.mxu0 0.0
  %4287 = vmatprep.subr.mxu0 0.0
  %4288 = vmatpush1.msra.mxu0 0.0
  %4289 = vmatprep.subr.mxu0 0.0
  %4290 = vmatpush1.msra.mxu0 0.0
  %4291 = vmatprep.subr.mxu0 0.0
  %4292 = vmatpush1.msra.mxu0 0.0
  %4293 = vmatprep.subr.mxu0 0.0
  %4294 = vmatpush1.msra.mxu0 0.0
  %4295 = vmatprep.subr.mxu0 0.0
  %4296 = vmatpush1.msra.mxu0 0.0
  %4297 = vmatprep.subr.mxu0 0.0
  %4298 = vmatpush1.msra.mxu0 0.0
  %4299 = vmatprep.subr.mxu0 0.0
  %4300 = vmatpush1.msra.mxu0 0.0
  %4301 = vmatprep.subr.mxu0 0.0
  %4302 = vmatpush1.msra.mxu0 0.0
  %4303 = vmatprep.subr.mxu0 0.0
  %4304 = vmatpush1.msra.mxu0 0.0
  %4305 = vmatprep.subr.mxu0 0.0
  %4306 = vmatpush1.msra.mxu0 0.0
  %4307 = vmatprep.mubr.f32.mxu0 0.0
  %4308 = vmatmul.mubr.f32.gmra.mrb[0].mxu0 %v4241
  %v4309 = vpop.f32.mrb[0].mxu0
  %v4310 = vadd.f32 %v4236, %v4309
  %v4311 = vpop.f32.mrb[0].mxu0
  %4312 = vdwg.mxu0
  %v4313 = vadd.f32 %v4310, %v4136
  %v4314 = vxor.u32 %v4313, 2147483648
  %v4315 = vmul.f32 %v4314, 1.442695
  %v4316 = vpow.pop %v4315
  %v4317 = vadd.f32 %v4316, 1.0
  %v4318 = vrcp.pop %v4317
  %v4319 = vmul.f32 1.0, %v4318
  %4320 = vrot.lane.b32.xlu0 %v4136, 64
  %v4321 = vpop.permute.xlu0 %4320
  %v4323 = vmul.f32 %v4319, %v4321
  %4325 = vrot.lane.b32.xlu0 %v4323, 64
  %v4326 = vpop.permute.xlu0 %4325
  %v4328 = vadd.f32 %v4310, %v4326
  %v4329 = vtanh.pop %v4328
  %v4330 = vsub.f32 1.0, %v4319
  %4332 = vrot.lane.b32.xlu0 %v4329, 96
  %v4333 = vpop.permute.xlu0 %4332
  %v4335 = vmul.f32 %v4330, %v4333
  %v4336 = vmul.f32 %v4319, %v3855
  %v4337 = vadd.f32 %v4335, %v4336
  %v4338 = vld [vmem:[%s10] sm:$0xff]
  %v4339 = vld [vmem:[%s10 + $0x8] sm:$0xff]
  %v4340 = vld [vmem:[%s10 + $0x10] sm:$0xff]
  %v4341 = vld [vmem:[%s10 + $0x18] sm:$0xff]
  %v4342 = vld [vmem:[%s11] sm:$0x1]
  %v4344 = vlaneseq
  %v4345 = vshrl.u32 %v4344, 7
  %v4346 = vsub.s32 0, %v4345
  %v4347 = vrot.slane %v4342, %v4346
  %4350 = vrot.lane.b32.xlu0 %v4337, 96
  %v4351 = vpop.permute.xlu0 %4350
  %v4352 = vsel %vm53, %v4351, 0
  %4354 = vmatprep.subr.mxu0 0.0
  %4355 = vmatpush1.msra.mxu0 %v4338
  %4356 = vmatprep.subr.mxu0 0.0
  %4357 = vmatpush1.msra.mxu0 %v4339
  %4358 = vmatprep.subr.mxu0 0.0
  %4359 = vmatpush1.msra.mxu0 %v4340
  %4360 = vmatprep.subr.mxu0 0.0
  %4361 = vmatpush1.msra.mxu0 %v4341
  %4362 = vmatprep.subr.mxu0 0.0
  %4363 = vmatpush1.msra.mxu0 0.0
  %4364 = vmatprep.subr.mxu0 0.0
  %4365 = vmatpush1.msra.mxu0 0.0
  %4366 = vmatprep.subr.mxu0 0.0
  %4367 = vmatpush1.msra.mxu0 0.0
  %4368 = vmatprep.subr.mxu0 0.0
  %4369 = vmatpush1.msra.mxu0 0.0
  %4370 = vmatprep.subr.mxu0 0.0
  %4371 = vmatpush1.msra.mxu0 0.0
  %4372 = vmatprep.subr.mxu0 0.0
  %4373 = vmatpush1.msra.mxu0 0.0
  %4374 = vmatprep.subr.mxu0 0.0
  %4375 = vmatpush1.msra.mxu0 0.0
  %4376 = vmatprep.subr.mxu0 0.0
  %4377 = vmatpush1.msra.mxu0 0.0
  %4378 = vmatprep.subr.mxu0 0.0
  %4379 = vmatpush1.msra.mxu0 0.0
  %4380 = vmatprep.subr.mxu0 0.0
  %4381 = vmatpush1.msra.mxu0 0.0
  %4382 = vmatprep.subr.mxu0 0.0
  %4383 = vmatpush1.msra.mxu0 0.0
  %4384 = vmatprep.subr.mxu0 0.0
  %4385 = vmatpush1.msra.mxu0 0.0
  %4386 = vmatprep.subr.mxu0 0.0
  %4387 = vmatpush1.msra.mxu0 0.0
  %4388 = vmatprep.subr.mxu0 0.0
  %4389 = vmatpush1.msra.mxu0 0.0
  %4390 = vmatprep.subr.mxu0 0.0
  %4391 = vmatpush1.msra.mxu0 0.0
  %4392 = vmatprep.subr.mxu0 0.0
  %4393 = vmatpush1.msra.mxu0 0.0
  %4394 = vmatprep.subr.mxu0 0.0
  %4395 = vmatpush1.msra.mxu0 0.0
  %4396 = vmatprep.subr.mxu0 0.0
  %4397 = vmatpush1.msra.mxu0 0.0
  %4398 = vmatprep.subr.mxu0 0.0
  %4399 = vmatpush1.msra.mxu0 0.0
  %4400 = vmatprep.subr.mxu0 0.0
  %4401 = vmatpush1.msra.mxu0 0.0
  %4402 = vmatprep.subr.mxu0 0.0
  %4403 = vmatpush1.msra.mxu0 0.0
  %4404 = vmatprep.subr.mxu0 0.0
  %4405 = vmatpush1.msra.mxu0 0.0
  %4406 = vmatprep.subr.mxu0 0.0
  %4407 = vmatpush1.msra.mxu0 0.0
  %4408 = vmatprep.subr.mxu0 0.0
  %4409 = vmatpush1.msra.mxu0 0.0
  %4410 = vmatprep.subr.mxu0 0.0
  %4411 = vmatpush1.msra.mxu0 0.0
  %4412 = vmatprep.subr.mxu0 0.0
  %4413 = vmatpush1.msra.mxu0 0.0
  %4414 = vmatprep.subr.mxu0 0.0
  %4415 = vmatpush1.msra.mxu0 0.0
  %4416 = vmatprep.subr.mxu0 0.0
  %4417 = vmatpush1.msra.mxu0 0.0
  %4418 = vmatprep.mubr.f32.mxu0 0.0
  %4419 = vmatmul.mubr.f32.gmra.mrb[0].mxu0 %v4352
  %v4420 = vpop.f32.mrb[0].mxu0
  %v4421 = vadd.f32 %v4347, %v4420
  %v4422 = vpop.f32.mrb[0].mxu0
  %4423 = vdwg.mxu0
  %4424 = vmax.xlane.f32.xlu0 %v4421
  %v4425 = vpop.xlane.xlu0 %4424
  %v4426 = vsub.f32 %v4421, %v4425
  %v4427 = vmul.f32 %v4426, 1.442695
  %v4428 = vpow.pop %v4427
  %4429 = vadd.xlane.f32.xlu0 %v4428
  %v4430 = vpop.xlane.xlu0 %4429
  %v4431 = vlog2.pop %v4430
  %v4432 = vmul.f32 %v4431, 0.6931472
  %v4433 = vsub.f32 %v4426, %v4432
  %4434 = vst [vmem:[%s12 + $0x28] sm:$0xff] %v4433
  %vm4435 = vcmp.eq.f32.partialorder %v4421, %v4425
  %v4436 = vsel %vm4435, %v1557, 128
  %v4437 = vand.u32 %v4436, 65535
  %v4438 = vshra.s32 %v4436, 16
  %v4439 = vcvt.s32.f32 %v4437
  %v4440 = vcvt.s32.f32 %v4438
  %4441 = vmin.xlane.f32.xlu0 %v4440
  %v4442 = vpop.xlane.xlu0 %4441
  %vm4443 = vcmp.eq.f32.partialorder %v4440, %v4442
  %v4444 = vsel %vm4443, %v4439, inf
  %4445 = vmin.xlane.f32.xlu0 %v4444
  %v4446 = vpop.xlane.xlu0 %4445
  %v4447 = vcvt.f32.s32 %v4446
  %v4448 = vcvt.f32.s32 %v4442
  %v4449 = vshll.u32 %v4448, 16
  %v4450 = vadd.s32 %v4449, %v4447
  %vm4451 = vcmp.eq.s32.totalorder %v1557, %v4450
  %v4452 = vsel %vm4451, 1, 0
  %v4453 = vcvt.s32.f32 %v4452
  %v4454 = vld [vmem:[%s3] sm:$0xff]
  %v4455 = vld [vmem:[%s3 + $0x8] sm:$0xff]
  %v4456 = vld [vmem:[%s3 + $0x10] sm:$0xff]
  %v4457 = vld [vmem:[%s3 + $0x18] sm:$0xff]
  %v4458 = vld [vmem:[%s3 + $0x20] sm:$0xff]
  %v4459 = vld [vmem:[%s3 + $0x28] sm:$0xff]
  %v4460 = vld [vmem:[%s3 + $0x30] sm:$0xff]
  %v4461 = vld [vmem:[%s3 + $0x38] sm:$0xff]
  %v4462 = vld [vmem:[%s3 + $0x40] sm:$0xff]
  %v4463 = vld [vmem:[%s3 + $0x48] sm:$0xff]
  %v4464 = vld [vmem:[%s3 + $0x50] sm:$0xff]
  %v4465 = vld [vmem:[%s3 + $0x58] sm:$0xff]
  %v4466 = vld [vmem:[%s3 + $0x60] sm:$0xff]
  %v4467 = vld [vmem:[%s3 + $0x68] sm:$0xff]
  %v4468 = vld [vmem:[%s3 + $0x70] sm:$0xff]
  %v4469 = vld [vmem:[%s3 + $0x78] sm:$0xff]
  %4470 = vmatprep.subr.mxu0 0.0
  %4471 = vmatpush1.msra.mxu0 %v4454
  %4472 = vmatprep.subr.mxu0 0.0
  %4473 = vmatpush1.msra.mxu0 %v4455
  %4474 = vmatprep.subr.mxu0 0.0
  %4475 = vmatpush1.msra.mxu0 %v4456
  %4476 = vmatprep.subr.mxu0 0.0
  %4477 = vmatpush1.msra.mxu0 %v4457
  %4478 = vmatprep.subr.mxu0 0.0
  %4479 = vmatpush1.msra.mxu0 %v4458
  %4480 = vmatprep.subr.mxu0 0.0
  %4481 = vmatpush1.msra.mxu0 %v4459
  %4482 = vmatprep.subr.mxu0 0.0
  %4483 = vmatpush1.msra.mxu0 %v4460
  %4484 = vmatprep.subr.mxu0 0.0
  %4485 = vmatpush1.msra.mxu0 %v4461
  %4486 = vmatprep.subr.mxu0 0.0
  %4487 = vmatpush1.msra.mxu0 %v4462
  %4488 = vmatprep.subr.mxu0 0.0
  %4489 = vmatpush1.msra.mxu0 %v4463
  %4490 = vmatprep.subr.mxu0 0.0
  %4491 = vmatpush1.msra.mxu0 %v4464
  %4492 = vmatprep.subr.mxu0 0.0
  %4493 = vmatpush1.msra.mxu0 %v4465
  %4494 = vmatprep.subr.mxu0 0.0
  %4495 = vmatpush1.msra.mxu0 %v4466
  %4496 = vmatprep.subr.mxu0 0.0
  %4497 = vmatpush1.msra.mxu0 %v4467
  %4498 = vmatprep.subr.mxu0 0.0
  %4499 = vmatpush1.msra.mxu0 %v4468
  %4500 = vmatprep.subr.mxu0 0.0
  %4501 = vmatpush1.msra.mxu0 %v4469
  %4502 = vmatprep.subr.mxu0 0.0
  %4503 = vmatpush1.msra.mxu0 0.0
  %4504 = vmatprep.subr.mxu0 0.0
  %4505 = vmatpush1.msra.mxu0 0.0
  %4506 = vmatprep.subr.mxu0 0.0
  %4507 = vmatpush1.msra.mxu0 0.0
  %4508 = vmatprep.subr.mxu0 0.0
  %4509 = vmatpush1.msra.mxu0 0.0
  %4510 = vmatprep.subr.mxu0 0.0
  %4511 = vmatpush1.msra.mxu0 0.0
  %4512 = vmatprep.subr.mxu0 0.0
  %4513 = vmatpush1.msra.mxu0 0.0
  %4514 = vmatprep.subr.mxu0 0.0
  %4515 = vmatpush1.msra.mxu0 0.0
  %4516 = vmatprep.subr.mxu0 0.0
  %4517 = vmatpush1.msra.mxu0 0.0
  %4518 = vmatprep.subr.mxu0 0.0
  %4519 = vmatpush1.msra.mxu0 0.0
  %4520 = vmatprep.subr.mxu0 0.0
  %4521 = vmatpush1.msra.mxu0 0.0
  %4522 = vmatprep.subr.mxu0 0.0
  %4523 = vmatpush1.msra.mxu0 0.0
  %4524 = vmatprep.subr.mxu0 0.0
  %4525 = vmatpush1.msra.mxu0 0.0
  %4526 = vmatprep.subr.mxu0 0.0
  %4527 = vmatpush1.msra.mxu0 0.0
  %4528 = vmatprep.subr.mxu0 0.0
  %4529 = vmatpush1.msra.mxu0 0.0
  %4530 = vmatprep.subr.mxu0 0.0
  %4531 = vmatpush1.msra.mxu0 0.0
  %4532 = vmatprep.subr.mxu0 0.0
  %4533 = vmatpush1.msra.mxu0 0.0
  %4534 = vmatprep.mubr.f32.mxu0 0.0
  %4535 = vmatmul.mubr.f32.gmra.mrb[0].mxu0 %v4453
  %v4536 = vpop.f32.mrb[0].mxu0
  %v4537 = vadd.f32 0.0, %v4536
  %v4538 = vpop.f32.mrb[0].mxu0
  %4539 = vdwg.mxu0
  %v4540 = vld [vmem:[%s4] sm:$0xff]
  %v4541 = vld [vmem:[%s4 + $0x8] sm:$0xff]
  %v4542 = vld [vmem:[%s4 + $0x10] sm:$0xff]
  %v4543 = vld [vmem:[%s4 + $0x18] sm:$0xff]
  %v4544 = vld [vmem:[%s5] sm:$0x1]
  %v4546 = vlaneseq
  %v4547 = vshrl.u32 %v4546, 7
  %v4548 = vsub.s32 0, %v4547
  %v4549 = vrot.slane %v4544, %v4548
  %4551 = vmatprep.subr.mxu0 0.0
  %4552 = vmatpush1.msra.mxu0 %v4540
  %4553 = vmatprep.subr.mxu0 0.0
  %4554 = vmatpush1.msra.mxu0 %v4541
  %4555 = vmatprep.subr.mxu0 0.0
  %4556 = vmatpush1.msra.mxu0 %v4542
  %4557 = vmatprep.subr.mxu0 0.0
  %4558 = vmatpush1.msra.mxu0 %v4543
  %4559 = vmatprep.subr.mxu0 0.0
  %4560 = vmatpush1.msra.mxu0 0.0
  %4561 = vmatprep.subr.mxu0 0.0
  %4562 = vmatpush1.msra.mxu0 0.0
  %4563 = vmatprep.subr.mxu0 0.0
  %4564 = vmatpush1.msra.mxu0 0.0
  %4565 = vmatprep.subr.mxu0 0.0
  %4566 = vmatpush1.msra.mxu0 0.0
  %4567 = vmatprep.subr.mxu0 0.0
  %4568 = vmatpush1.msra.mxu0 0.0
  %4569 = vmatprep.subr.mxu0 0.0
  %4570 = vmatpush1.msra.mxu0 0.0
  %4571 = vmatprep.subr.mxu0 0.0
  %4572 = vmatpush1.msra.mxu0 0.0
  %4573 = vmatprep.subr.mxu0 0.0
  %4574 = vmatpush1.msra.mxu0 0.0
  %4575 = vmatprep.subr.mxu0 0.0
  %4576 = vmatpush1.msra.mxu0 0.0
  %4577 = vmatprep.subr.mxu0 0.0
  %4578 = vmatpush1.msra.mxu0 0.0
  %4579 = vmatprep.subr.mxu0 0.0
  %4580 = vmatpush1.msra.mxu0 0.0
  %4581 = vmatprep.subr.mxu0 0.0
  %4582 = vmatpush1.msra.mxu0 0.0
  %4583 = vmatprep.subr.mxu0 0.0
  %4584 = vmatpush1.msra.mxu0 0.0
  %4585 = vmatprep.subr.mxu0 0.0
  %4586 = vmatpush1.msra.mxu0 0.0
  %4587 = vmatprep.subr.mxu0 0.0
  %4588 = vmatpush1.msra.mxu0 0.0
  %4589 = vmatprep.subr.mxu0 0.0
  %4590 = vmatpush1.msra.mxu0 0.0
  %4591 = vmatprep.subr.mxu0 0.0
  %4592 = vmatpush1.msra.mxu0 0.0
  %4593 = vmatprep.subr.mxu0 0.0
  %4594 = vmatpush1.msra.mxu0 0.0
  %4595 = vmatprep.subr.mxu0 0.0
  %4596 = vmatpush1.msra.mxu0 0.0
  %4597 = vmatprep.subr.mxu0 0.0
  %4598 = vmatpush1.msra.mxu0 0.0
  %4599 = vmatprep.subr.mxu0 0.0
  %4600 = vmatpush1.msra.mxu0 0.0
  %4601 = vmatprep.subr.mxu0 0.0
  %4602 = vmatpush1.msra.mxu0 0.0
  %4603 = vmatprep.subr.mxu0 0.0
  %4604 = vmatpush1.msra.mxu0 0.0
  %4605 = vmatprep.subr.mxu0 0.0
  %4606 = vmatpush1.msra.mxu0 0.0
  %4607 = vmatprep.subr.mxu0 0.0
  %4608 = vmatpush1.msra.mxu0 0.0
  %4609 = vmatprep.subr.mxu0 0.0
  %4610 = vmatpush1.msra.mxu0 0.0
  %4611 = vmatprep.subr.mxu0 0.0
  %4612 = vmatpush1.msra.mxu0 0.0
  %4613 = vmatprep.subr.mxu0 0.0
  %4614 = vmatpush1.msra.mxu0 0.0
  %4615 = vmatprep.mubr.f32.mxu0 0.0
  %4616 = vmatmul.mubr.f32.gmra.mrb[0].mxu0 %v4352
  %v4617 = vpop.f32.mrb[0].mxu0
  %v4618 = vadd.f32 %v4549, %v4617
  %v4619 = vpop.f32.mrb[0].mxu0
  %4620 = vdwg.mxu0
  %4622 = vrot.lane.b32.xlu0 %v4618, 32
  %v4623 = vpop.permute.xlu0 %4622
  %v4625 = vadd.f32 %v4537, %v4623
  %v4626 = vsel %vm1733, %v4625, -inf
  %4627 = vmax.xlane.f32.xlu0 %v4626
  %v4628 = vpop.xlane.xlu0 %4627
  %v4629 = vsub.f32 %v4625, %v4628
  %v4630 = vmul.f32 %v4629, 1.442695
  %v4631 = vpow.pop %v4630
  %v4632 = vsel %vm1733, %v4631, 0.0
  %4633 = vadd.xlane.f32.xlu0 %v4632
  %v4634 = vpop.xlane.xlu0 %4633
  %v4635 = vrcp.pop %v4634
  %v4636 = vmul.f32 %v4631, %v4635
  %v4637 = vld [vmem:[#allocation2] sm:$0xff]
  %4639 = vset.pattern.permute.xlu0 0
  %4640 = vperm.xlu0 %4639, %v4636
  %v4641 = vpop.permute.xlu0 %4640
  %v4643 = vmul.f32 %v4641, %v4637
  %v4644 = vld [vmem:[%s420] sm:$0xff]
  %4645 = vset.pattern.permute.xlu0 1
  %4646 = vperm.xlu0 %4645, %v4636
  %v4647 = vpop.permute.xlu0 %4646
  %v4649 = vmul.f32 %v4647, %v4644
  %v4650 = vadd.f32 %v4643, %v4649
  %v4651 = vld [vmem:[%s609] sm:$0xff]
  %4652 = vset.pattern.permute.xlu0 2
  %4653 = vperm.xlu0 %4652, %v4636
  %v4654 = vpop.permute.xlu0 %4653
  %v4656 = vmul.f32 %v4654, %v4651
  %v4657 = vadd.f32 %v4650, %v4656
  %v4658 = vld [vmem:[%s798] sm:$0xff]
  %4659 = vset.pattern.permute.xlu0 3
  %4660 = vperm.xlu0 %4659, %v4636
  %v4661 = vpop.permute.xlu0 %4660
  %v4663 = vmul.f32 %v4661, %v4658
  %v4664 = vadd.f32 %v4657, %v4663
  %v4665 = vld [vmem:[%s987] sm:$0xff]
  %4666 = vset.pattern.permute.xlu0 4
  %4667 = vperm.xlu0 %4666, %v4636
  %v4668 = vpop.permute.xlu0 %4667
  %v4670 = vmul.f32 %v4668, %v4665
  %v4671 = vadd.f32 %v4664, %v4670
  %v4672 = vld [vmem:[%s1176] sm:$0xff]
  %4673 = vset.pattern.permute.xlu0 5
  %4674 = vperm.xlu0 %4673, %v4636
  %v4675 = vpop.permute.xlu0 %4674
  %v4677 = vmul.f32 %v4675, %v4672
  %v4678 = vadd.f32 %v4671, %v4677
  %v4679 = vld [vmem:[%s1365] sm:$0xff]
  %4680 = vset.pattern.permute.xlu0 6
  %4681 = vperm.xlu0 %4680, %v4636
  %v4682 = vpop.permute.xlu0 %4681
  %v4684 = vmul.f32 %v4682, %v4679
  %v4685 = vadd.f32 %v4678, %v4684
  %v4686 = vld [vmem:[%s1554] sm:$0xff]
  %4687 = vset.pattern.permute.xlu0 7
  %4688 = vperm.xlu0 %4687, %v4636
  %v4689 = vpop.permute.xlu0 %4688
  %v4691 = vmul.f32 %v4689, %v4686
  %v4692 = vadd.f32 %v4685, %v4691
  %4694 = vrot.lane.b32.xlu0 %v4692, 8
  %v4695 = vpop.permute.xlu0 %4694
  %v4697 = vadd.f32 %v4537, %v4695
  %v4698 = vld [vmem:[%s9] sm:$0x1]
  %v4700 = vlaneseq
  %v4701 = vshrl.u32 %v4700, 7
  %v4702 = vsub.s32 0, %v4701
  %v4703 = vrot.slane %v4698, %v4702
  %4704 = vrot.lane.b32.xlu0 %v4703, 8
  %v4705 = vpop.permute.xlu0 %4704
  %v4707 = vadd.f32 %v4697, %v4705
  %v4708 = vmax.f32 %v4707, 0.0
  %v4709 = vld [vmem:[%s6] sm:$0xff]
  %v4710 = vld [vmem:[%s6 + $0x8] sm:$0xff]
  %v4711 = vld [vmem:[%s6 + $0x10] sm:$0xff]
  %v4712 = vld [vmem:[%s6 + $0x18] sm:$0xff]
  %v4713 = vld [vmem:[%s7] sm:$0x1]
  %v4715 = vlaneseq
  %v4716 = vshrl.u32 %v4715, 7
  %v4717 = vsub.s32 0, %v4716
  %v4718 = vrot.slane %v4713, %v4717
  %4721 = vrot.lane.b32.xlu0 %v4708, 120
  %v4722 = vpop.permute.xlu0 %4721
  %v4723 = vsel %vm53, %v4722, 0
  %4725 = vmatprep.subr.mxu0 0.0
  %4726 = vmatpush1.msra.mxu0 %v4709
  %4727 = vmatprep.subr.mxu0 0.0
  %4728 = vmatpush1.msra.mxu0 %v4710
  %4729 = vmatprep.subr.mxu0 0.0
  %4730 = vmatpush1.msra.mxu0 %v4711
  %4731 = vmatprep.subr.mxu0 0.0
  %4732 = vmatpush1.msra.mxu0 %v4712
  %4733 = vmatprep.subr.mxu0 0.0
  %4734 = vmatpush1.msra.mxu0 0.0
  %4735 = vmatprep.subr.mxu0 0.0
  %4736 = vmatpush1.msra.mxu0 0.0
  %4737 = vmatprep.subr.mxu0 0.0
  %4738 = vmatpush1.msra.mxu0 0.0
  %4739 = vmatprep.subr.mxu0 0.0
  %4740 = vmatpush1.msra.mxu0 0.0
  %4741 = vmatprep.subr.mxu0 0.0
  %4742 = vmatpush1.msra.mxu0 0.0
  %4743 = vmatprep.subr.mxu0 0.0
  %4744 = vmatpush1.msra.mxu0 0.0
  %4745 = vmatprep.subr.mxu0 0.0
  %4746 = vmatpush1.msra.mxu0 0.0
  %4747 = vmatprep.subr.mxu0 0.0
  %4748 = vmatpush1.msra.mxu0 0.0
  %4749 = vmatprep.subr.mxu0 0.0
  %4750 = vmatpush1.msra.mxu0 0.0
  %4751 = vmatprep.subr.mxu0 0.0
  %4752 = vmatpush1.msra.mxu0 0.0
  %4753 = vmatprep.subr.mxu0 0.0
  %4754 = vmatpush1.msra.mxu0 0.0
  %4755 = vmatprep.subr.mxu0 0.0
  %4756 = vmatpush1.msra.mxu0 0.0
  %4757 = vmatprep.subr.mxu0 0.0
  %4758 = vmatpush1.msra.mxu0 0.0
  %4759 = vmatprep.subr.mxu0 0.0
  %4760 = vmatpush1.msra.mxu0 0.0
  %4761 = vmatprep.subr.mxu0 0.0
  %4762 = vmatpush1.msra.mxu0 0.0
  %4763 = vmatprep.subr.mxu0 0.0
  %4764 = vmatpush1.msra.mxu0 0.0
  %4765 = vmatprep.subr.mxu0 0.0
  %4766 = vmatpush1.msra.mxu0 0.0
  %4767 = vmatprep.subr.mxu0 0.0
  %4768 = vmatpush1.msra.mxu0 0.0
  %4769 = vmatprep.subr.mxu0 0.0
  %4770 = vmatpush1.msra.mxu0 0.0
  %4771 = vmatprep.subr.mxu0 0.0
  %4772 = vmatpush1.msra.mxu0 0.0
  %4773 = vmatprep.subr.mxu0 0.0
  %4774 = vmatpush1.msra.mxu0 0.0
  %4775 = vmatprep.subr.mxu0 0.0
  %4776 = vmatpush1.msra.mxu0 0.0
  %4777 = vmatprep.subr.mxu0 0.0
  %4778 = vmatpush1.msra.mxu0 0.0
  %4779 = vmatprep.subr.mxu0 0.0
  %4780 = vmatpush1.msra.mxu0 0.0
  %4781 = vmatprep.subr.mxu0 0.0
  %4782 = vmatpush1.msra.mxu0 0.0
  %4783 = vmatprep.subr.mxu0 0.0
  %4784 = vmatpush1.msra.mxu0 0.0
  %4785 = vmatprep.subr.mxu0 0.0
  %4786 = vmatpush1.msra.mxu0 0.0
  %4787 = vmatprep.subr.mxu0 0.0
  %4788 = vmatpush1.msra.mxu0 0.0
  %4789 = vmatprep.mubr.f32.mxu0 0.0
  %4790 = vmatmul.mubr.f32.gmra.mrb[0].mxu0 %v4723
  %v4791 = vpop.f32.mrb[0].mxu0
  %v4792 = vadd.f32 %v4718, %v4791
  %v4793 = vpop.f32.mrb[0].mxu0
  %4794 = vdwg.mxu0
  %v4795 = vadd.f32 %v4792, %v4618
  %v4796 = vxor.u32 %v4795, 2147483648
  %v4797 = vmul.f32 %v4796, 1.442695
  %v4798 = vpow.pop %v4797
  %v4799 = vadd.f32 %v4798, 1.0
  %v4800 = vrcp.pop %v4799
  %v4801 = vmul.f32 1.0, %v4800
  %4802 = vrot.lane.b32.xlu0 %v4618, 64
  %v4803 = vpop.permute.xlu0 %4802
  %v4805 = vmul.f32 %v4801, %v4803
  %4807 = vrot.lane.b32.xlu0 %v4805, 64
  %v4808 = vpop.permute.xlu0 %4807
  %v4810 = vadd.f32 %v4792, %v4808
  %v4811 = vtanh.pop %v4810
  %v4812 = vsub.f32 1.0, %v4801
  %4814 = vrot.lane.b32.xlu0 %v4811, 96
  %v4815 = vpop.permute.xlu0 %4814
  %v4817 = vmul.f32 %v4812, %v4815
  %v4818 = vmul.f32 %v4801, %v4337
  %v4819 = vadd.f32 %v4817, %v4818
  %v4820 = vld [vmem:[%s10] sm:$0xff]
  %v4821 = vld [vmem:[%s10 + $0x8] sm:$0xff]
  %v4822 = vld [vmem:[%s10 + $0x10] sm:$0xff]
  %v4823 = vld [vmem:[%s10 + $0x18] sm:$0xff]
  %v4824 = vld [vmem:[%s11] sm:$0x1]
  %v4826 = vlaneseq
  %v4827 = vshrl.u32 %v4826, 7
  %v4828 = vsub.s32 0, %v4827
  %v4829 = vrot.slane %v4824, %v4828
  %4832 = vrot.lane.b32.xlu0 %v4819, 96
  %v4833 = vpop.permute.xlu0 %4832
  %v4834 = vsel %vm53, %v4833, 0
  %4836 = vmatprep.subr.mxu0 0.0
  %4837 = vmatpush1.msra.mxu0 %v4820
  %4838 = vmatprep.subr.mxu0 0.0
  %4839 = vmatpush1.msra.mxu0 %v4821
  %4840 = vmatprep.subr.mxu0 0.0
  %4841 = vmatpush1.msra.mxu0 %v4822
  %4842 = vmatprep.subr.mxu0 0.0
  %4843 = vmatpush1.msra.mxu0 %v4823
  %4844 = vmatprep.subr.mxu0 0.0
  %4845 = vmatpush1.msra.mxu0 0.0
  %4846 = vmatprep.subr.mxu0 0.0
  %4847 = vmatpush1.msra.mxu0 0.0
  %4848 = vmatprep.subr.mxu0 0.0
  %4849 = vmatpush1.msra.mxu0 0.0
  %4850 = vmatprep.subr.mxu0 0.0
  %4851 = vmatpush1.msra.mxu0 0.0
  %4852 = vmatprep.subr.mxu0 0.0
  %4853 = vmatpush1.msra.mxu0 0.0
  %4854 = vmatprep.subr.mxu0 0.0
  %4855 = vmatpush1.msra.mxu0 0.0
  %4856 = vmatprep.subr.mxu0 0.0
  %4857 = vmatpush1.msra.mxu0 0.0
  %4858 = vmatprep.subr.mxu0 0.0
  %4859 = vmatpush1.msra.mxu0 0.0
  %4860 = vmatprep.subr.mxu0 0.0
  %4861 = vmatpush1.msra.mxu0 0.0
  %4862 = vmatprep.subr.mxu0 0.0
  %4863 = vmatpush1.msra.mxu0 0.0
  %4864 = vmatprep.subr.mxu0 0.0
  %4865 = vmatpush1.msra.mxu0 0.0
  %4866 = vmatprep.subr.mxu0 0.0
  %4867 = vmatpush1.msra.mxu0 0.0
  %4868 = vmatprep.subr.mxu0 0.0
  %4869 = vmatpush1.msra.mxu0 0.0
  %4870 = vmatprep.subr.mxu0 0.0
  %4871 = vmatpush1.msra.mxu0 0.0
  %4872 = vmatprep.subr.mxu0 0.0
  %4873 = vmatpush1.msra.mxu0 0.0
  %4874 = vmatprep.subr.mxu0 0.0
  %4875 = vmatpush1.msra.mxu0 0.0
  %4876 = vmatprep.subr.mxu0 0.0
  %4877 = vmatpush1.msra.mxu0 0.0
  %4878 = vmatprep.subr.mxu0 0.0
  %4879 = vmatpush1.msra.mxu0 0.0
  %4880 = vmatprep.subr.mxu0 0.0
  %4881 = vmatpush1.msra.mxu0 0.0
  %4882 = vmatprep.subr.mxu0 0.0
  %4883 = vmatpush1.msra.mxu0 0.0
  %4884 = vmatprep.subr.mxu0 0.0
  %4885 = vmatpush1.msra.mxu0 0.0
  %4886 = vmatprep.subr.mxu0 0.0
  %4887 = vmatpush1.msra.mxu0 0.0
  %4888 = vmatprep.subr.mxu0 0.0
  %4889 = vmatpush1.msra.mxu0 0.0
  %4890 = vmatprep.subr.mxu0 0.0
  %4891 = vmatpush1.msra.mxu0 0.0
  %4892 = vmatprep.subr.mxu0 0.0
  %4893 = vmatpush1.msra.mxu0 0.0
  %4894 = vmatprep.subr.mxu0 0.0
  %4895 = vmatpush1.msra.mxu0 0.0
  %4896 = vmatprep.subr.mxu0 0.0
  %4897 = vmatpush1.msra.mxu0 0.0
  %4898 = vmatprep.subr.mxu0 0.0
  %4899 = vmatpush1.msra.mxu0 0.0
  %4900 = vmatprep.mubr.f32.mxu0 0.0
  %4901 = vmatmul.mubr.f32.gmra.mrb[0].mxu0 %v4834
  %v4902 = vpop.f32.mrb[0].mxu0
  %v4903 = vadd.f32 %v4829, %v4902
  %v4904 = vpop.f32.mrb[0].mxu0
  %4905 = vdwg.mxu0
  %4906 = vmax.xlane.f32.xlu0 %v4903
  %v4907 = vpop.xlane.xlu0 %4906
  %v4908 = vsub.f32 %v4903, %v4907
  %v4909 = vmul.f32 %v4908, 1.442695
  %v4910 = vpow.pop %v4909
  %4911 = vadd.xlane.f32.xlu0 %v4910
  %v4912 = vpop.xlane.xlu0 %4911
  %v4913 = vlog2.pop %v4912
  %v4914 = vmul.f32 %v4913, 0.6931472
  %v4915 = vsub.f32 %v4908, %v4914
  %4916 = vst [vmem:[%s12 + $0x30] sm:$0xff] %v4915
  %vm4917 = vcmp.eq.f32.partialorder %v4903, %v4907
  %v4918 = vsel %vm4917, %v1557, 128
  %v4919 = vand.u32 %v4918, 65535
  %v4920 = vshra.s32 %v4918, 16
  %v4921 = vcvt.s32.f32 %v4919
  %v4922 = vcvt.s32.f32 %v4920
  %4923 = vmin.xlane.f32.xlu0 %v4922
  %v4924 = vpop.xlane.xlu0 %4923
  %vm4925 = vcmp.eq.f32.partialorder %v4922, %v4924
  %v4926 = vsel %vm4925, %v4921, inf
  %4927 = vmin.xlane.f32.xlu0 %v4926
  %v4928 = vpop.xlane.xlu0 %4927
  %v4929 = vcvt.f32.s32 %v4928
  %v4930 = vcvt.f32.s32 %v4924
  %v4931 = vshll.u32 %v4930, 16
  %v4932 = vadd.s32 %v4931, %v4929
  %vm4933 = vcmp.eq.s32.totalorder %v1557, %v4932
  %v4934 = vsel %vm4933, 1, 0
  %v4935 = vcvt.s32.f32 %v4934
  %v4936 = vld [vmem:[%s3] sm:$0xff]
  %v4937 = vld [vmem:[%s3 + $0x8] sm:$0xff]
  %v4938 = vld [vmem:[%s3 + $0x10] sm:$0xff]
  %v4939 = vld [vmem:[%s3 + $0x18] sm:$0xff]
  %v4940 = vld [vmem:[%s3 + $0x20] sm:$0xff]
  %v4941 = vld [vmem:[%s3 + $0x28] sm:$0xff]
  %v4942 = vld [vmem:[%s3 + $0x30] sm:$0xff]
  %v4943 = vld [vmem:[%s3 + $0x38] sm:$0xff]
  %v4944 = vld [vmem:[%s3 + $0x40] sm:$0xff]
  %v4945 = vld [vmem:[%s3 + $0x48] sm:$0xff]
  %v4946 = vld [vmem:[%s3 + $0x50] sm:$0xff]
  %v4947 = vld [vmem:[%s3 + $0x58] sm:$0xff]
  %v4948 = vld [vmem:[%s3 + $0x60] sm:$0xff]
  %v4949 = vld [vmem:[%s3 + $0x68] sm:$0xff]
  %v4950 = vld [vmem:[%s3 + $0x70] sm:$0xff]
  %v4951 = vld [vmem:[%s3 + $0x78] sm:$0xff]
  %4952 = vmatprep.subr.mxu0 0.0
  %4953 = vmatpush1.msra.mxu0 %v4936
  %4954 = vmatprep.subr.mxu0 0.0
  %4955 = vmatpush1.msra.mxu0 %v4937
  %4956 = vmatprep.subr.mxu0 0.0
  %4957 = vmatpush1.msra.mxu0 %v4938
  %4958 = vmatprep.subr.mxu0 0.0
  %4959 = vmatpush1.msra.mxu0 %v4939
  %4960 = vmatprep.subr.mxu0 0.0
  %4961 = vmatpush1.msra.mxu0 %v4940
  %4962 = vmatprep.subr.mxu0 0.0
  %4963 = vmatpush1.msra.mxu0 %v4941
  %4964 = vmatprep.subr.mxu0 0.0
  %4965 = vmatpush1.msra.mxu0 %v4942
  %4966 = vmatprep.subr.mxu0 0.0
  %4967 = vmatpush1.msra.mxu0 %v4943
  %4968 = vmatprep.subr.mxu0 0.0
  %4969 = vmatpush1.msra.mxu0 %v4944
  %4970 = vmatprep.subr.mxu0 0.0
  %4971 = vmatpush1.msra.mxu0 %v4945
  %4972 = vmatprep.subr.mxu0 0.0
  %4973 = vmatpush1.msra.mxu0 %v4946
  %4974 = vmatprep.subr.mxu0 0.0
  %4975 = vmatpush1.msra.mxu0 %v4947
  %4976 = vmatprep.subr.mxu0 0.0
  %4977 = vmatpush1.msra.mxu0 %v4948
  %4978 = vmatprep.subr.mxu0 0.0
  %4979 = vmatpush1.msra.mxu0 %v4949
  %4980 = vmatprep.subr.mxu0 0.0
  %4981 = vmatpush1.msra.mxu0 %v4950
  %4982 = vmatprep.subr.mxu0 0.0
  %4983 = vmatpush1.msra.mxu0 %v4951
  %4984 = vmatprep.subr.mxu0 0.0
  %4985 = vmatpush1.msra.mxu0 0.0
  %4986 = vmatprep.subr.mxu0 0.0
  %4987 = vmatpush1.msra.mxu0 0.0
  %4988 = vmatprep.subr.mxu0 0.0
  %4989 = vmatpush1.msra.mxu0 0.0
  %4990 = vmatprep.subr.mxu0 0.0
  %4991 = vmatpush1.msra.mxu0 0.0
  %4992 = vmatprep.subr.mxu0 0.0
  %4993 = vmatpush1.msra.mxu0 0.0
  %4994 = vmatprep.subr.mxu0 0.0
  %4995 = vmatpush1.msra.mxu0 0.0
  %4996 = vmatprep.subr.mxu0 0.0
  %4997 = vmatpush1.msra.mxu0 0.0
  %4998 = vmatprep.subr.mxu0 0.0
  %4999 = vmatpush1.msra.mxu0 0.0
  %5000 = vmatprep.subr.mxu0 0.0
  %5001 = vmatpush1.msra.mxu0 0.0
  %5002 = vmatprep.subr.mxu0 0.0
  %5003 = vmatpush1.msra.mxu0 0.0
  %5004 = vmatprep.subr.mxu0 0.0
  %5005 = vmatpush1.msra.mxu0 0.0
  %5006 = vmatprep.subr.mxu0 0.0
  %5007 = vmatpush1.msra.mxu0 0.0
  %5008 = vmatprep.subr.mxu0 0.0
  %5009 = vmatpush1.msra.mxu0 0.0
  %5010 = vmatprep.subr.mxu0 0.0
  %5011 = vmatpush1.msra.mxu0 0.0
  %5012 = vmatprep.subr.mxu0 0.0
  %5013 = vmatpush1.msra.mxu0 0.0
  %5014 = vmatprep.subr.mxu0 0.0
  %5015 = vmatpush1.msra.mxu0 0.0
  %5016 = vmatprep.mubr.f32.mxu0 0.0
  %5017 = vmatmul.mubr.f32.gmra.mrb[0].mxu0 %v4935
  %v5018 = vpop.f32.mrb[0].mxu0
  %v5019 = vadd.f32 0.0, %v5018
  %v5020 = vpop.f32.mrb[0].mxu0
  %5021 = vdwg.mxu0
  %v5022 = vld [vmem:[%s4] sm:$0xff]
  %v5023 = vld [vmem:[%s4 + $0x8] sm:$0xff]
  %v5024 = vld [vmem:[%s4 + $0x10] sm:$0xff]
  %v5025 = vld [vmem:[%s4 + $0x18] sm:$0xff]
  %v5026 = vld [vmem:[%s5] sm:$0x1]
  %v5028 = vlaneseq
  %v5029 = vshrl.u32 %v5028, 7
  %v5030 = vsub.s32 0, %v5029
  %v5031 = vrot.slane %v5026, %v5030
  %5033 = vmatprep.subr.mxu0 0.0
  %5034 = vmatpush1.msra.mxu0 %v5022
  %5035 = vmatprep.subr.mxu0 0.0
  %5036 = vmatpush1.msra.mxu0 %v5023
  %5037 = vmatprep.subr.mxu0 0.0
  %5038 = vmatpush1.msra.mxu0 %v5024
  %5039 = vmatprep.subr.mxu0 0.0
  %5040 = vmatpush1.msra.mxu0 %v5025
  %5041 = vmatprep.subr.mxu0 0.0
  %5042 = vmatpush1.msra.mxu0 0.0
  %5043 = vmatprep.subr.mxu0 0.0
  %5044 = vmatpush1.msra.mxu0 0.0
  %5045 = vmatprep.subr.mxu0 0.0
  %5046 = vmatpush1.msra.mxu0 0.0
  %5047 = vmatprep.subr.mxu0 0.0
  %5048 = vmatpush1.msra.mxu0 0.0
  %5049 = vmatprep.subr.mxu0 0.0
  %5050 = vmatpush1.msra.mxu0 0.0
  %5051 = vmatprep.subr.mxu0 0.0
  %5052 = vmatpush1.msra.mxu0 0.0
  %5053 = vmatprep.subr.mxu0 0.0
  %5054 = vmatpush1.msra.mxu0 0.0
  %5055 = vmatprep.subr.mxu0 0.0
  %5056 = vmatpush1.msra.mxu0 0.0
  %5057 = vmatprep.subr.mxu0 0.0
  %5058 = vmatpush1.msra.mxu0 0.0
  %5059 = vmatprep.subr.mxu0 0.0
  %5060 = vmatpush1.msra.mxu0 0.0
  %5061 = vmatprep.subr.mxu0 0.0
  %5062 = vmatpush1.msra.mxu0 0.0
  %5063 = vmatprep.subr.mxu0 0.0
  %5064 = vmatpush1.msra.mxu0 0.0
  %5065 = vmatprep.subr.mxu0 0.0
  %5066 = vmatpush1.msra.mxu0 0.0
  %5067 = vmatprep.subr.mxu0 0.0
  %5068 = vmatpush1.msra.mxu0 0.0
  %5069 = vmatprep.subr.mxu0 0.0
  %5070 = vmatpush1.msra.mxu0 0.0
  %5071 = vmatprep.subr.mxu0 0.0
  %5072 = vmatpush1.msra.mxu0 0.0
  %5073 = vmatprep.subr.mxu0 0.0
  %5074 = vmatpush1.msra.mxu0 0.0
  %5075 = vmatprep.subr.mxu0 0.0
  %5076 = vmatpush1.msra.mxu0 0.0
  %5077 = vmatprep.subr.mxu0 0.0
  %5078 = vmatpush1.msra.mxu0 0.0
  %5079 = vmatprep.subr.mxu0 0.0
  %5080 = vmatpush1.msra.mxu0 0.0
  %5081 = vmatprep.subr.mxu0 0.0
  %5082 = vmatpush1.msra.mxu0 0.0
  %5083 = vmatprep.subr.mxu0 0.0
  %5084 = vmatpush1.msra.mxu0 0.0
  %5085 = vmatprep.subr.mxu0 0.0
  %5086 = vmatpush1.msra.mxu0 0.0
  %5087 = vmatprep.subr.mxu0 0.0
  %5088 = vmatpush1.msra.mxu0 0.0
  %5089 = vmatprep.subr.mxu0 0.0
  %5090 = vmatpush1.msra.mxu0 0.0
  %5091 = vmatprep.subr.mxu0 0.0
  %5092 = vmatpush1.msra.mxu0 0.0
  %5093 = vmatprep.subr.mxu0 0.0
  %5094 = vmatpush1.msra.mxu0 0.0
  %5095 = vmatprep.subr.mxu0 0.0
  %5096 = vmatpush1.msra.mxu0 0.0
  %5097 = vmatprep.mubr.f32.mxu0 0.0
  %5098 = vmatmul.mubr.f32.gmra.mrb[0].mxu0 %v4834
  %v5099 = vpop.f32.mrb[0].mxu0
  %v5100 = vadd.f32 %v5031, %v5099
  %v5101 = vpop.f32.mrb[0].mxu0
  %5102 = vdwg.mxu0
  %5104 = vrot.lane.b32.xlu0 %v5100, 32
  %v5105 = vpop.permute.xlu0 %5104
  %v5107 = vadd.f32 %v5019, %v5105
  %v5108 = vsel %vm1733, %v5107, -inf
  %5109 = vmax.xlane.f32.xlu0 %v5108
  %v5110 = vpop.xlane.xlu0 %5109
  %v5111 = vsub.f32 %v5107, %v5110
  %v5112 = vmul.f32 %v5111, 1.442695
  %v5113 = vpow.pop %v5112
  %v5114 = vsel %vm1733, %v5113, 0.0
  %5115 = vadd.xlane.f32.xlu0 %v5114
  %v5116 = vpop.xlane.xlu0 %5115
  %v5117 = vrcp.pop %v5116
  %v5118 = vmul.f32 %v5113, %v5117
  %v5119 = vld [vmem:[#allocation2] sm:$0xff]
  %5121 = vset.pattern.permute.xlu0 0
  %5122 = vperm.xlu0 %5121, %v5118
  %v5123 = vpop.permute.xlu0 %5122
  %v5125 = vmul.f32 %v5123, %v5119
  %v5126 = vld [vmem:[%s420] sm:$0xff]
  %5127 = vset.pattern.permute.xlu0 1
  %5128 = vperm.xlu0 %5127, %v5118
  %v5129 = vpop.permute.xlu0 %5128
  %v5131 = vmul.f32 %v5129, %v5126
  %v5132 = vadd.f32 %v5125, %v5131
  %v5133 = vld [vmem:[%s609] sm:$0xff]
  %5134 = vset.pattern.permute.xlu0 2
  %5135 = vperm.xlu0 %5134, %v5118
  %v5136 = vpop.permute.xlu0 %5135
  %v5138 = vmul.f32 %v5136, %v5133
  %v5139 = vadd.f32 %v5132, %v5138
  %v5140 = vld [vmem:[%s798] sm:$0xff]
  %5141 = vset.pattern.permute.xlu0 3
  %5142 = vperm.xlu0 %5141, %v5118
  %v5143 = vpop.permute.xlu0 %5142
  %v5145 = vmul.f32 %v5143, %v5140
  %v5146 = vadd.f32 %v5139, %v5145
  %v5147 = vld [vmem:[%s987] sm:$0xff]
  %5148 = vset.pattern.permute.xlu0 4
  %5149 = vperm.xlu0 %5148, %v5118
  %v5150 = vpop.permute.xlu0 %5149
  %v5152 = vmul.f32 %v5150, %v5147
  %v5153 = vadd.f32 %v5146, %v5152
  %v5154 = vld [vmem:[%s1176] sm:$0xff]
  %5155 = vset.pattern.permute.xlu0 5
  %5156 = vperm.xlu0 %5155, %v5118
  %v5157 = vpop.permute.xlu0 %5156
  %v5159 = vmul.f32 %v5157, %v5154
  %v5160 = vadd.f32 %v5153, %v5159
  %v5161 = vld [vmem:[%s1365] sm:$0xff]
  %5162 = vset.pattern.permute.xlu0 6
  %5163 = vperm.xlu0 %5162, %v5118
  %v5164 = vpop.permute.xlu0 %5163
  %v5166 = vmul.f32 %v5164, %v5161
  %v5167 = vadd.f32 %v5160, %v5166
  %v5168 = vld [vmem:[%s1554] sm:$0xff]
  %5169 = vset.pattern.permute.xlu0 7
  %5170 = vperm.xlu0 %5169, %v5118
  %v5171 = vpop.permute.xlu0 %5170
  %v5173 = vmul.f32 %v5171, %v5168
  %v5174 = vadd.f32 %v5167, %v5173
  %5176 = vrot.lane.b32.xlu0 %v5174, 8
  %v5177 = vpop.permute.xlu0 %5176
  %v5179 = vadd.f32 %v5019, %v5177
  %v5180 = vld [vmem:[%s9] sm:$0x1]
  %v5182 = vlaneseq
  %v5183 = vshrl.u32 %v5182, 7
  %v5184 = vsub.s32 0, %v5183
  %v5185 = vrot.slane %v5180, %v5184
  %5186 = vrot.lane.b32.xlu0 %v5185, 8
  %v5187 = vpop.permute.xlu0 %5186
  %v5189 = vadd.f32 %v5179, %v5187
  %v5190 = vmax.f32 %v5189, 0.0
  %v5191 = vld [vmem:[%s6] sm:$0xff]
  %v5192 = vld [vmem:[%s6 + $0x8] sm:$0xff]
  %v5193 = vld [vmem:[%s6 + $0x10] sm:$0xff]
  %v5194 = vld [vmem:[%s6 + $0x18] sm:$0xff]
  %v5195 = vld [vmem:[%s7] sm:$0x1]
  %v5197 = vlaneseq
  %v5198 = vshrl.u32 %v5197, 7
  %v5199 = vsub.s32 0, %v5198
  %v5200 = vrot.slane %v5195, %v5199
  %5203 = vrot.lane.b32.xlu0 %v5190, 120
  %v5204 = vpop.permute.xlu0 %5203
  %v5205 = vsel %vm53, %v5204, 0
  %5207 = vmatprep.subr.mxu0 0.0
  %5208 = vmatpush1.msra.mxu0 %v5191
  %5209 = vmatprep.subr.mxu0 0.0
  %5210 = vmatpush1.msra.mxu0 %v5192
  %5211 = vmatprep.subr.mxu0 0.0
  %5212 = vmatpush1.msra.mxu0 %v5193
  %5213 = vmatprep.subr.mxu0 0.0
  %5214 = vmatpush1.msra.mxu0 %v5194
  %5215 = vmatprep.subr.mxu0 0.0
  %5216 = vmatpush1.msra.mxu0 0.0
  %5217 = vmatprep.subr.mxu0 0.0
  %5218 = vmatpush1.msra.mxu0 0.0
  %5219 = vmatprep.subr.mxu0 0.0
  %5220 = vmatpush1.msra.mxu0 0.0
  %5221 = vmatprep.subr.mxu0 0.0
  %5222 = vmatpush1.msra.mxu0 0.0
  %5223 = vmatprep.subr.mxu0 0.0
  %5224 = vmatpush1.msra.mxu0 0.0
  %5225 = vmatprep.subr.mxu0 0.0
  %5226 = vmatpush1.msra.mxu0 0.0
  %5227 = vmatprep.subr.mxu0 0.0
  %5228 = vmatpush1.msra.mxu0 0.0
  %5229 = vmatprep.subr.mxu0 0.0
  %5230 = vmatpush1.msra.mxu0 0.0
  %5231 = vmatprep.subr.mxu0 0.0
  %5232 = vmatpush1.msra.mxu0 0.0
  %5233 = vmatprep.subr.mxu0 0.0
  %5234 = vmatpush1.msra.mxu0 0.0
  %5235 = vmatprep.subr.mxu0 0.0
  %5236 = vmatpush1.msra.mxu0 0.0
  %5237 = vmatprep.subr.mxu0 0.0
  %5238 = vmatpush1.msra.mxu0 0.0
  %5239 = vmatprep.subr.mxu0 0.0
  %5240 = vmatpush1.msra.mxu0 0.0
  %5241 = vmatprep.subr.mxu0 0.0
  %5242 = vmatpush1.msra.mxu0 0.0
  %5243 = vmatprep.subr.mxu0 0.0
  %5244 = vmatpush1.msra.mxu0 0.0
  %5245 = vmatprep.subr.mxu0 0.0
  %5246 = vmatpush1.msra.mxu0 0.0
  %5247 = vmatprep.subr.mxu0 0.0
  %5248 = vmatpush1.msra.mxu0 0.0
  %5249 = vmatprep.subr.mxu0 0.0
  %5250 = vmatpush1.msra.mxu0 0.0
  %5251 = vmatprep.subr.mxu0 0.0
  %5252 = vmatpush1.msra.mxu0 0.0
  %5253 = vmatprep.subr.mxu0 0.0
  %5254 = vmatpush1.msra.mxu0 0.0
  %5255 = vmatprep.subr.mxu0 0.0
  %5256 = vmatpush1.msra.mxu0 0.0
  %5257 = vmatprep.subr.mxu0 0.0
  %5258 = vmatpush1.msra.mxu0 0.0
  %5259 = vmatprep.subr.mxu0 0.0
  %5260 = vmatpush1.msra.mxu0 0.0
  %5261 = vmatprep.subr.mxu0 0.0
  %5262 = vmatpush1.msra.mxu0 0.0
  %5263 = vmatprep.subr.mxu0 0.0
  %5264 = vmatpush1.msra.mxu0 0.0
  %5265 = vmatprep.subr.mxu0 0.0
  %5266 = vmatpush1.msra.mxu0 0.0
  %5267 = vmatprep.subr.mxu0 0.0
  %5268 = vmatpush1.msra.mxu0 0.0
  %5269 = vmatprep.subr.mxu0 0.0
  %5270 = vmatpush1.msra.mxu0 0.0
  %5271 = vmatprep.mubr.f32.mxu0 0.0
  %5272 = vmatmul.mubr.f32.gmra.mrb[0].mxu0 %v5205
  %v5273 = vpop.f32.mrb[0].mxu0
  %v5274 = vadd.f32 %v5200, %v5273
  %v5275 = vpop.f32.mrb[0].mxu0
  %5276 = vdwg.mxu0
  %v5277 = vadd.f32 %v5274, %v5100
  %v5278 = vxor.u32 %v5277, 2147483648
  %v5279 = vmul.f32 %v5278, 1.442695
  %v5280 = vpow.pop %v5279
  %v5281 = vadd.f32 %v5280, 1.0
  %v5282 = vrcp.pop %v5281
  %v5283 = vmul.f32 1.0, %v5282
  %5284 = vrot.lane.b32.xlu0 %v5100, 64
  %v5285 = vpop.permute.xlu0 %5284
  %v5287 = vmul.f32 %v5283, %v5285
  %5289 = vrot.lane.b32.xlu0 %v5287, 64
  %v5290 = vpop.permute.xlu0 %5289
  %v5292 = vadd.f32 %v5274, %v5290
  %v5293 = vtanh.pop %v5292
  %v5294 = vsub.f32 1.0, %v5283
  %5296 = vrot.lane.b32.xlu0 %v5293, 96
  %v5297 = vpop.permute.xlu0 %5296
  %v5299 = vmul.f32 %v5294, %v5297
  %v5300 = vmul.f32 %v5283, %v4819
  %v5301 = vadd.f32 %v5299, %v5300
  %v5302 = vld [vmem:[%s10] sm:$0xff]
  %v5303 = vld [vmem:[%s10 + $0x8] sm:$0xff]
  %v5304 = vld [vmem:[%s10 + $0x10] sm:$0xff]
  %v5305 = vld [vmem:[%s10 + $0x18] sm:$0xff]
  %v5306 = vld [vmem:[%s11] sm:$0x1]
  %v5308 = vlaneseq
  %v5309 = vshrl.u32 %v5308, 7
  %v5310 = vsub.s32 0, %v5309
  %v5311 = vrot.slane %v5306, %v5310
  %5314 = vrot.lane.b32.xlu0 %v5301, 96
  %v5315 = vpop.permute.xlu0 %5314
  %v5316 = vsel %vm53, %v5315, 0
  %5318 = vmatprep.subr.mxu0 0.0
  %5319 = vmatpush1.msra.mxu0 %v5302
  %5320 = vmatprep.subr.mxu0 0.0
  %5321 = vmatpush1.msra.mxu0 %v5303
  %5322 = vmatprep.subr.mxu0 0.0
  %5323 = vmatpush1.msra.mxu0 %v5304
  %5324 = vmatprep.subr.mxu0 0.0
  %5325 = vmatpush1.msra.mxu0 %v5305
  %5326 = vmatprep.subr.mxu0 0.0
  %5327 = vmatpush1.msra.mxu0 0.0
  %5328 = vmatprep.subr.mxu0 0.0
  %5329 = vmatpush1.msra.mxu0 0.0
  %5330 = vmatprep.subr.mxu0 0.0
  %5331 = vmatpush1.msra.mxu0 0.0
  %5332 = vmatprep.subr.mxu0 0.0
  %5333 = vmatpush1.msra.mxu0 0.0
  %5334 = vmatprep.subr.mxu0 0.0
  %5335 = vmatpush1.msra.mxu0 0.0
  %5336 = vmatprep.subr.mxu0 0.0
  %5337 = vmatpush1.msra.mxu0 0.0
  %5338 = vmatprep.subr.mxu0 0.0
  %5339 = vmatpush1.msra.mxu0 0.0
  %5340 = vmatprep.subr.mxu0 0.0
  %5341 = vmatpush1.msra.mxu0 0.0
  %5342 = vmatprep.subr.mxu0 0.0
  %5343 = vmatpush1.msra.mxu0 0.0
  %5344 = vmatprep.subr.mxu0 0.0
  %5345 = vmatpush1.msra.mxu0 0.0
  %5346 = vmatprep.subr.mxu0 0.0
  %5347 = vmatpush1.msra.mxu0 0.0
  %5348 = vmatprep.subr.mxu0 0.0
  %5349 = vmatpush1.msra.mxu0 0.0
  %5350 = vmatprep.subr.mxu0 0.0
  %5351 = vmatpush1.msra.mxu0 0.0
  %5352 = vmatprep.subr.mxu0 0.0
  %5353 = vmatpush1.msra.mxu0 0.0
  %5354 = vmatprep.subr.mxu0 0.0
  %5355 = vmatpush1.msra.mxu0 0.0
  %5356 = vmatprep.subr.mxu0 0.0
  %5357 = vmatpush1.msra.mxu0 0.0
  %5358 = vmatprep.subr.mxu0 0.0
  %5359 = vmatpush1.msra.mxu0 0.0
  %5360 = vmatprep.subr.mxu0 0.0
  %5361 = vmatpush1.msra.mxu0 0.0
  %5362 = vmatprep.subr.mxu0 0.0
  %5363 = vmatpush1.msra.mxu0 0.0
  %5364 = vmatprep.subr.mxu0 0.0
  %5365 = vmatpush1.msra.mxu0 0.0
  %5366 = vmatprep.subr.mxu0 0.0
  %5367 = vmatpush1.msra.mxu0 0.0
  %5368 = vmatprep.subr.mxu0 0.0
  %5369 = vmatpush1.msra.mxu0 0.0
  %5370 = vmatprep.subr.mxu0 0.0
  %5371 = vmatpush1.msra.mxu0 0.0
  %5372 = vmatprep.subr.mxu0 0.0
  %5373 = vmatpush1.msra.mxu0 0.0
  %5374 = vmatprep.subr.mxu0 0.0
  %5375 = vmatpush1.msra.mxu0 0.0
  %5376 = vmatprep.subr.mxu0 0.0
  %5377 = vmatpush1.msra.mxu0 0.0
  %5378 = vmatprep.subr.mxu0 0.0
  %5379 = vmatpush1.msra.mxu0 0.0
  %5380 = vmatprep.subr.mxu0 0.0
  %5381 = vmatpush1.msra.mxu0 0.0
  %5382 = vmatprep.mubr.f32.mxu0 0.0
  %5383 = vmatmul.mubr.f32.gmra.mrb[0].mxu0 %v5316
  %v5384 = vpop.f32.mrb[0].mxu0
  %v5385 = vadd.f32 %v5311, %v5384
  %v5386 = vpop.f32.mrb[0].mxu0
  %5387 = vdwg.mxu0
  %5388 = vmax.xlane.f32.xlu0 %v5385
  %v5389 = vpop.xlane.xlu0 %5388
  %v5390 = vsub.f32 %v5385, %v5389
  %v5391 = vmul.f32 %v5390, 1.442695
  %v5392 = vpow.pop %v5391
  %5393 = vadd.xlane.f32.xlu0 %v5392
  %v5394 = vpop.xlane.xlu0 %5393
  %v5395 = vlog2.pop %v5394
  %v5396 = vmul.f32 %v5395, 0.6931472
  %v5397 = vsub.f32 %v5390, %v5396
  %5398 = vst [vmem:[%s12 + $0x38] sm:$0xff] %v5397
  // Predicated region
  $region50: #{attention_forward.1} parent=0 // pred_check
    _
  $region51: #{attention_forward.1} parent=0 // pred_check_branch
    %5400 = sbr.rel (0) target = $region53
  $region52: #{attention_forward.1} parent=0 // pred_region
    _
  $region53: #{attention_forward.1} parent=0 // pred_fallthru
    _
  // Predicated region
  $region54: #{attention_forward.1} parent=0 // pred_check
    _
  $region55: #{attention_forward.1} parent=0 // pred_check_branch
    %5402 = sbr.rel (0) target = $region57
  $region56: #{attention_forward.1} parent=0 // pred_region
    _
  $region57: #{attention_forward.1} parent=0 // pred_fallthru
    _

</llo_original>
